<compile_context>
chip_gen: v5e
topology: v5e:2x2
jax: 0.10.0
libtpu: 0.0.40
codegen_flags: <defaults>
</compile_context>

<pallas_src>
import jax
import jax.numpy as jnp
from jax.experimental import pallas as pl
from jax.experimental.pallas import tpu as pltpu

H = W = 7
HW = H * W            # 49 spatial positions
CIN = 128
COUT = 32
CPRE = 1152           # channels preceding the conv output in the concat (640 + 16*32)
CCAT = 1216
KHW = 9               # 3x3 taps
PAD = 8               # zero rows padded above/below the flattened conv input
BLK = 128             # BN channel-block width (lane width)
EPS = 1e-5


def _bn_block(x, g, b):
    """Training-mode BatchNorm over the sublane (spatial) axis for one channel block."""
    inv_n = 1.0 / float(HW)
    mean = jnp.sum(x, axis=0, keepdims=True) * inv_n
    d = x - mean
    var = jnp.sum(d * d, axis=0, keepdims=True) * inv_n       # biased variance
    return d * (jax.lax.rsqrt(var + EPS) * g) + b


def fused_kernel(xflat_ref, w_ref, pre_ref, x495_ref, g_ref, b_ref, o_ref, xpad_s):
    # xflat_ref : (HW, CIN)        flattened HWC conv input
    # w_ref     : (KHW*CIN, COUT)  raw conv taps, (kh, kw, cin) x cout
    # pre_ref   : (HW, CPRE)       channels 0..1151 of the concat
    # x495_ref  : (HW, COUT)       channels 1184..1215 of the concat
    # g_ref/b_ref : (1, CCAT)      BN affine params; o_ref : (HW, CCAT)
    # xpad_s    : (HW + 2*PAD, CIN) VMEM scratch (zero-padded conv input)

    # ---- build the zero-padded conv input in VMEM (vertical 'same' padding) ----
    xpad_s[...] = jnp.zeros_like(xpad_s)
    xpad_s[PAD:PAD + HW, :] = xflat_ref[...]

    # ---- horizontal boundary masks from an in-kernel iota (no mask DMA input) ----
    ridx = jax.lax.broadcasted_iota(jnp.int32, (HW, 1), 0)
    left = ridx == 0
    right = ridx == (W - 1)
    for r in range(1, H):
        left = jnp.logical_or(left, ridx == r * W)
        right = jnp.logical_or(right, ridx == r * W + (W - 1))
    mask_l = 1.0 - left.astype(jnp.float32)    # zero column c=0 for taps with dc=-1
    mask_r = 1.0 - right.astype(jnp.float32)   # zero column c=6 for taps with dc=+1

    # ---- 3x3 conv (same padding): 9 per-tap K=128 MXU dots, f32 accumulator ----
    # TODO(synk): Precision.HIGHEST kept to stay well inside the 2e-3 tolerance;
    #             DEFAULT precision is a candidate speedup on v5e/v6e per review.
    acc = jnp.zeros((HW, COUT), jnp.float32)
    for kh in range(3):
        for kw in range(3):
            k = kh * 3 + kw
            start = PAD + (kh - 1) * W + (kw - 1)
            t = xpad_s[start:start + HW, :]               # (HW, CIN)
            if kw == 0:
                t = t * mask_l
            elif kw == 2:
                t = t * mask_r
            acc = acc + jnp.dot(t, w_ref[k * CIN:(k + 1) * CIN, :],
                                preferred_element_type=jnp.float32,
                                precision=jax.lax.Precision.HIGHEST)

    # ---- BatchNorm on the 1152 preceding channels, 128-lane block at a time ----
    # TODO(synk): running_mean / running_var buffer updates of training-mode BN
    #             are not materialized; only the forward activation is returned.
    for blk in range(CPRE // BLK):
        c0 = blk * BLK
        o_ref[:, c0:c0 + BLK] = _bn_block(pre_ref[:, c0:c0 + BLK],
                                          g_ref[:, c0:c0 + BLK],
                                          b_ref[:, c0:c0 + BLK])

    # ---- tail = [conv | x495]: BN + single lane-aligned 64-wide store at 1152 ----
    tail = jnp.concatenate([acc, x495_ref[...]], axis=-1)            # (HW, 64)
    o_ref[:, CPRE:CCAT] = _bn_block(tail, g_ref[:, CPRE:CCAT], b_ref[:, CPRE:CCAT])


def fused_call(xflat, w2, pre_t, x495_t, gamma2, beta2):
    return pl.pallas_call(
        fused_kernel,
        out_shape=jax.ShapeDtypeStruct((HW, CCAT), jnp.float32),
        grid=(1,),
        in_specs=[
            pl.BlockSpec((HW, CIN), lambda i: (0, 0)),
            pl.BlockSpec((KHW * CIN, COUT), lambda i: (0, 0)),
            pl.BlockSpec((HW, CPRE), lambda i: (0, 0)),
            pl.BlockSpec((HW, COUT), lambda i: (0, 0)),
            pl.BlockSpec((1, CCAT), lambda i: (0, 0)),
            pl.BlockSpec((1, CCAT), lambda i: (0, 0)),
        ],
        out_specs=pl.BlockSpec((HW, CCAT), lambda i: (0, 0)),
        scratch_shapes=[pltpu.VMEM((HW + 2 * PAD, CIN), jnp.float32)],
        compiler_params=pltpu.CompilerParams(dimension_semantics=("arbitrary",)),
    )(xflat, w2, pre_t, x495_t, gamma2, beta2)


@jax.jit
def forward(x487, x369, x32_list, x495, w2, gamma, beta):
    # conv input: NCHW -> (HW, CIN); padding is done inside the kernel.
    xflat = jnp.transpose(x487[0], (1, 2, 0)).reshape(HW, CIN)

    # channels that precede the conv output in the concat, laid out (HW, C).
    # TODO(synk): these transposes / concat and the final output transpose are
    #             wrapper layout plumbing imposed by the NCHW module boundary;
    #             they would be fused into neighboring kernels in a full model.
    pre = jnp.concatenate([x369] + list(x32_list), axis=1)           # (1, 1152, 7, 7)
    pre_t = jnp.transpose(pre[0], (1, 2, 0)).reshape(HW, CPRE)
    x495_t = jnp.transpose(x495[0], (1, 2, 0)).reshape(HW, COUT)

    out = fused_call(xflat, w2, pre_t, x495_t,
                     gamma.reshape(1, CCAT), beta.reshape(1, CCAT))  # (49, 1216)
    return jnp.transpose(out, (1, 0)).reshape(1, CCAT, H, W)


if __name__ == "__main__":
    key = jax.random.PRNGKey(0)
    keys = jax.random.split(key, 20)

    x487 = jax.random.normal(keys[0], (1, 128, 7, 7), jnp.float32)
    x369 = jax.random.normal(keys[1], (1, 640, 7, 7), jnp.float32)
    x32s = [jax.random.normal(keys[2 + i], (1, 32, 7, 7), jnp.float32) for i in range(16)]
    x495 = jax.random.normal(keys[18], (1, 32, 7, 7), jnp.float32)

    # deterministic parameter init (shapes per module __init__)
    w_conv = jax.random.normal(keys[19], (32, 128, 3, 3), jnp.float32) * 0.05
    gamma = jnp.ones((CCAT,), jnp.float32)   # BatchNorm2d default affine weight
    beta = jnp.zeros((CCAT,), jnp.float32)   # BatchNorm2d default affine bias

    # weight preprocessing done ONCE, outside the per-call (jitted) path:
    # OIHW -> (kh, kw, cin) x cout -> (1152, 32)
    w2 = jnp.transpose(w_conv, (2, 3, 1, 0)).reshape(KHW * CIN, COUT)

    x497 = jax.block_until_ready(forward(x487, x369, x32s, x495, w2, gamma, beta))
    assert x497.shape == (1, CCAT, 7, 7)

    # pure-JAX reference for sanity
    ref_conv = jax.lax.conv_general_dilated(
        x487, w_conv, window_strides=(1, 1), padding=((1, 1), (1, 1)),
        dimension_numbers=('NCHW', 'OIHW', 'NCHW'),
        precision=jax.lax.Precision.HIGHEST)
    ref_cat = jnp.concatenate([x369] + x32s + [ref_conv, x495], axis=1)
    mean = jnp.mean(ref_cat, axis=(0, 2, 3), keepdims=True)
    var = jnp.mean((ref_cat - mean) ** 2, axis=(0, 2, 3), keepdims=True)
    ref = ((ref_cat - mean) * jax.lax.rsqrt(var + EPS)
           * gamma[None, :, None, None] + beta[None, :, None, None])
    assert jnp.allclose(x497, ref, rtol=2e-3, atol=2e-3), "mismatch vs reference"

    print("KERNEL_OK")
</pallas_src>

<mosaic_0001>
module attributes {stable_mosaic.version = 11 : i64} {
  func.func @fused_kernel(%arg0: i32, %arg1: memref<49x128xf32, #tpu.memory_space<vmem>>, %arg2: memref<1152x32xf32, #tpu.memory_space<vmem>>, %arg3: memref<49x1152xf32, #tpu.memory_space<vmem>>, %arg4: memref<49x32xf32, #tpu.memory_space<vmem>>, %arg5: memref<1x1216xf32, #tpu.memory_space<vmem>>, %arg6: memref<1x1216xf32, #tpu.memory_space<vmem>>, %arg7: memref<49x1216xf32, #tpu.memory_space<vmem>>, %arg8: memref<65x128xf32, #tpu.memory_space<vmem>>) attributes {dimension_semantics = [#tpu.dimension_semantics<arbitrary>], iteration_bounds = array<i64: 1>, scalar_prefetch = 0 : i64, scratch_operands = 1 : i64, tpu.core_type = #tpu.core_type<tc>, window_params = [{pipeline_mode = #tpu.pipeline_mode<synchronous>, transform_indices = @transform_0, window_bounds = array<i64: 49, 128>}, {pipeline_mode = #tpu.pipeline_mode<synchronous>, transform_indices = @transform_1, window_bounds = array<i64: 1152, 32>}, {pipeline_mode = #tpu.pipeline_mode<synchronous>, transform_indices = @transform_2, window_bounds = array<i64: 49, 1152>}, {pipeline_mode = #tpu.pipeline_mode<synchronous>, transform_indices = @transform_3, window_bounds = array<i64: 49, 32>}, {pipeline_mode = #tpu.pipeline_mode<synchronous>, transform_indices = @transform_4, window_bounds = array<i64: 1, 1216>}, {pipeline_mode = #tpu.pipeline_mode<synchronous>, transform_indices = @transform_5, window_bounds = array<i64: 1, 1216>}, {pipeline_mode = #tpu.pipeline_mode<synchronous>, transform_indices = @transform_6, window_bounds = array<i64: 49, 1216>}]} {
    %cst = arith.constant 0.000000e+00 : f32
    %0 = vector.broadcast %cst : f32 to vector<65x128xf32>
    %c0 = arith.constant 0 : index
    %c0_0 = arith.constant 0 : index
    %1 = vector.load %arg8[%c0, %c0_0] : memref<65x128xf32, #tpu.memory_space<vmem>>, vector<65x128xf32>
    tpu.vector_store %arg8[%c0, %c0_0], %0 {strides = array<i32>} : memref<65x128xf32, #tpu.memory_space<vmem>>, vector<65x128xf32>,
    %c0_1 = arith.constant 0 : index
    %c0_2 = arith.constant 0 : index
    %2 = vector.load %arg1[%c0_1, %c0_2] : memref<49x128xf32, #tpu.memory_space<vmem>>, vector<49x128xf32>
    %c8 = arith.constant 8 : index
    %c0_3 = arith.constant 0 : index
    %3 = vector.load %arg8[%c8, %c0_3] : memref<65x128xf32, #tpu.memory_space<vmem>>, vector<49x128xf32>
    tpu.vector_store %arg8[%c8, %c0_3], %2 {strides = array<i32>} : memref<65x128xf32, #tpu.memory_space<vmem>>, vector<49x128xf32>,
    %4 = tpu.iota {dimensions = array<i32: 0>} : vector<49x1xi32>
    %c0_i32 = arith.constant 0 : i32
    %5 = vector.broadcast %c0_i32 : i32 to vector<49x1xi32>
    %6 = arith.cmpi eq, %4, %5 : vector<49x1xi32>
    %c6_i32 = arith.constant 6 : i32
    %7 = vector.broadcast %c6_i32 : i32 to vector<49x1xi32>
    %8 = arith.cmpi eq, %4, %7 : vector<49x1xi32>
    %c7_i32 = arith.constant 7 : i32
    %9 = vector.broadcast %c7_i32 : i32 to vector<49x1xi32>
    %10 = arith.cmpi eq, %4, %9 : vector<49x1xi32>
    %11 = arith.ori %6, %10 : vector<49x1xi1>
    %c13_i32 = arith.constant 13 : i32
    %12 = vector.broadcast %c13_i32 : i32 to vector<49x1xi32>
    %13 = arith.cmpi eq, %4, %12 : vector<49x1xi32>
    %14 = arith.ori %8, %13 : vector<49x1xi1>
    %c14_i32 = arith.constant 14 : i32
    %15 = vector.broadcast %c14_i32 : i32 to vector<49x1xi32>
    %16 = arith.cmpi eq, %4, %15 : vector<49x1xi32>
    %17 = arith.ori %11, %16 : vector<49x1xi1>
    %c20_i32 = arith.constant 20 : i32
    %18 = vector.broadcast %c20_i32 : i32 to vector<49x1xi32>
    %19 = arith.cmpi eq, %4, %18 : vector<49x1xi32>
    %20 = arith.ori %14, %19 : vector<49x1xi1>
    %c21_i32 = arith.constant 21 : i32
    %21 = vector.broadcast %c21_i32 : i32 to vector<49x1xi32>
    %22 = arith.cmpi eq, %4, %21 : vector<49x1xi32>
    %23 = arith.ori %17, %22 : vector<49x1xi1>
    %c27_i32 = arith.constant 27 : i32
    %24 = vector.broadcast %c27_i32 : i32 to vector<49x1xi32>
    %25 = arith.cmpi eq, %4, %24 : vector<49x1xi32>
    %26 = arith.ori %20, %25 : vector<49x1xi1>
    %c28_i32 = arith.constant 28 : i32
    %27 = vector.broadcast %c28_i32 : i32 to vector<49x1xi32>
    %28 = arith.cmpi eq, %4, %27 : vector<49x1xi32>
    %29 = arith.ori %23, %28 : vector<49x1xi1>
    %c34_i32 = arith.constant 34 : i32
    %30 = vector.broadcast %c34_i32 : i32 to vector<49x1xi32>
    %31 = arith.cmpi eq, %4, %30 : vector<49x1xi32>
    %32 = arith.ori %26, %31 : vector<49x1xi1>
    %c35_i32 = arith.constant 35 : i32
    %33 = vector.broadcast %c35_i32 : i32 to vector<49x1xi32>
    %34 = arith.cmpi eq, %4, %33 : vector<49x1xi32>
    %35 = arith.ori %29, %34 : vector<49x1xi1>
    %c41_i32 = arith.constant 41 : i32
    %36 = vector.broadcast %c41_i32 : i32 to vector<49x1xi32>
    %37 = arith.cmpi eq, %4, %36 : vector<49x1xi32>
    %38 = arith.ori %32, %37 : vector<49x1xi1>
    %c42_i32 = arith.constant 42 : i32
    %39 = vector.broadcast %c42_i32 : i32 to vector<49x1xi32>
    %40 = arith.cmpi eq, %4, %39 : vector<49x1xi32>
    %41 = arith.ori %35, %40 : vector<49x1xi1>
    %c48_i32 = arith.constant 48 : i32
    %42 = vector.broadcast %c48_i32 : i32 to vector<49x1xi32>
    %43 = arith.cmpi eq, %4, %42 : vector<49x1xi32>
    %44 = arith.ori %38, %43 : vector<49x1xi1>
    %45 = arith.extui %41 : vector<49x1xi1> to vector<49x1xi32>
    %46 = arith.sitofp %45 : vector<49x1xi32> to vector<49x1xf32>
    %cst_4 = arith.constant 1.000000e+00 : f32
    %47 = vector.broadcast %cst_4 : f32 to vector<49x1xf32>
    %48 = arith.subf %47, %46 : vector<49x1xf32>
    %49 = arith.extui %44 : vector<49x1xi1> to vector<49x1xi32>
    %50 = arith.sitofp %49 : vector<49x1xi32> to vector<49x1xf32>
    %cst_5 = arith.constant 1.000000e+00 : f32
    %51 = vector.broadcast %cst_5 : f32 to vector<49x1xf32>
    %52 = arith.subf %51, %50 : vector<49x1xf32>
    %cst_6 = arith.constant 0.000000e+00 : f32
    %53 = vector.broadcast %cst_6 : f32 to vector<49x32xf32>
    %c0_7 = arith.constant 0 : index
    %c0_8 = arith.constant 0 : index
    %54 = vector.load %arg8[%c0_7, %c0_8] : memref<65x128xf32, #tpu.memory_space<vmem>>, vector<49x128xf32>
    %55 = vector.broadcast %48 : vector<49x1xf32> to vector<49x128xf32>
    %56 = arith.mulf %54, %55 : vector<49x128xf32>
    %c0_9 = arith.constant 0 : index
    %c0_10 = arith.constant 0 : index
    %57 = vector.load %arg2[%c0_9, %c0_10] : memref<1152x32xf32, #tpu.memory_space<vmem>>, vector<128x32xf32>
    %cst_11 = arith.constant dense<0.000000e+00> : vector<49x32xf32>
    %58 = tpu.matmul %56, %57, %cst_11 {dimension_numbers = #tpu.dot_dimension_numbers<[1], [0], [0], [1], [0, 0, 1, 1], [], []>, precision = #tpu.contract_precision<fp32>} : vector<49x128xf32>, vector<128x32xf32>, vector<49x32xf32> -> vector<49x32xf32>
    %59 = arith.addf %53, %58 : vector<49x32xf32>
    %c1 = arith.constant 1 : index
    %c0_12 = arith.constant 0 : index
    %60 = vector.load %arg8[%c1, %c0_12] : memref<65x128xf32, #tpu.memory_space<vmem>>, vector<49x128xf32>
    %c128 = arith.constant 128 : index
    %c0_13 = arith.constant 0 : index
    %61 = vector.load %arg2[%c128, %c0_13] : memref<1152x32xf32, #tpu.memory_space<vmem>>, vector<128x32xf32>
    %cst_14 = arith.constant dense<0.000000e+00> : vector<49x32xf32>
    %62 = tpu.matmul %60, %61, %cst_14 {dimension_numbers = #tpu.dot_dimension_numbers<[1], [0], [0], [1], [0, 0, 1, 1], [], []>, precision = #tpu.contract_precision<fp32>} : vector<49x128xf32>, vector<128x32xf32>, vector<49x32xf32> -> vector<49x32xf32>
    %63 = arith.addf %59, %62 : vector<49x32xf32>
    %c2 = arith.constant 2 : index
    %c0_15 = arith.constant 0 : index
    %64 = vector.load %arg8[%c2, %c0_15] : memref<65x128xf32, #tpu.memory_space<vmem>>, vector<49x128xf32>
    %65 = vector.broadcast %52 : vector<49x1xf32> to vector<49x128xf32>
    %66 = arith.mulf %64, %65 : vector<49x128xf32>
    %c256 = arith.constant 256 : index
    %c0_16 = arith.constant 0 : index
    %67 = vector.load %arg2[%c256, %c0_16] : memref<1152x32xf32, #tpu.memory_space<vmem>>, vector<128x32xf32>
    %cst_17 = arith.constant dense<0.000000e+00> : vector<49x32xf32>
    %68 = tpu.matmul %66, %67, %cst_17 {dimension_numbers = #tpu.dot_dimension_numbers<[1], [0], [0], [1], [0, 0, 1, 1], [], []>, precision = #tpu.contract_precision<fp32>} : vector<49x128xf32>, vector<128x32xf32>, vector<49x32xf32> -> vector<49x32xf32>
    %69 = arith.addf %63, %68 : vector<49x32xf32>
    %c7 = arith.constant 7 : index
    %c0_18 = arith.constant 0 : index
    %70 = vector.load %arg8[%c7, %c0_18] : memref<65x128xf32, #tpu.memory_space<vmem>>, vector<49x128xf32>
    %71 = vector.broadcast %48 : vector<49x1xf32> to vector<49x128xf32>
    %72 = arith.mulf %70, %71 : vector<49x128xf32>
    %c384 = arith.constant 384 : index
    %c0_19 = arith.constant 0 : index
    %73 = vector.load %arg2[%c384, %c0_19] : memref<1152x32xf32, #tpu.memory_space<vmem>>, vector<128x32xf32>
    %cst_20 = arith.constant dense<0.000000e+00> : vector<49x32xf32>
    %74 = tpu.matmul %72, %73, %cst_20 {dimension_numbers = #tpu.dot_dimension_numbers<[1], [0], [0], [1], [0, 0, 1, 1], [], []>, precision = #tpu.contract_precision<fp32>} : vector<49x128xf32>, vector<128x32xf32>, vector<49x32xf32> -> vector<49x32xf32>
    %75 = arith.addf %69, %74 : vector<49x32xf32>
    %c8_21 = arith.constant 8 : index
    %c0_22 = arith.constant 0 : index
    %76 = vector.load %arg8[%c8_21, %c0_22] : memref<65x128xf32, #tpu.memory_space<vmem>>, vector<49x128xf32>
    %c512 = arith.constant 512 : index
    %c0_23 = arith.constant 0 : index
    %77 = vector.load %arg2[%c512, %c0_23] : memref<1152x32xf32, #tpu.memory_space<vmem>>, vector<128x32xf32>
    %cst_24 = arith.constant dense<0.000000e+00> : vector<49x32xf32>
    %78 = tpu.matmul %76, %77, %cst_24 {dimension_numbers = #tpu.dot_dimension_numbers<[1], [0], [0], [1], [0, 0, 1, 1], [], []>, precision = #tpu.contract_precision<fp32>} : vector<49x128xf32>, vector<128x32xf32>, vector<49x32xf32> -> vector<49x32xf32>
    %79 = arith.addf %75, %78 : vector<49x32xf32>
    %c9 = arith.constant 9 : index
    %c0_25 = arith.constant 0 : index
    %80 = vector.load %arg8[%c9, %c0_25] : memref<65x128xf32, #tpu.memory_space<vmem>>, vector<49x128xf32>
    %81 = vector.broadcast %52 : vector<49x1xf32> to vector<49x128xf32>
    %82 = arith.mulf %80, %81 : vector<49x128xf32>
    %c640 = arith.constant 640 : index
    %c0_26 = arith.constant 0 : index
    %83 = vector.load %arg2[%c640, %c0_26] : memref<1152x32xf32, #tpu.memory_space<vmem>>, vector<128x32xf32>
    %cst_27 = arith.constant dense<0.000000e+00> : vector<49x32xf32>
    %84 = tpu.matmul %82, %83, %cst_27 {dimension_numbers = #tpu.dot_dimension_numbers<[1], [0], [0], [1], [0, 0, 1, 1], [], []>, precision = #tpu.contract_precision<fp32>} : vector<49x128xf32>, vector<128x32xf32>, vector<49x32xf32> -> vector<49x32xf32>
    %85 = arith.addf %79, %84 : vector<49x32xf32>
    %c14 = arith.constant 14 : index
    %c0_28 = arith.constant 0 : index
    %86 = vector.load %arg8[%c14, %c0_28] : memref<65x128xf32, #tpu.memory_space<vmem>>, vector<49x128xf32>
    %87 = vector.broadcast %48 : vector<49x1xf32> to vector<49x128xf32>
    %88 = arith.mulf %86, %87 : vector<49x128xf32>
    %c768 = arith.constant 768 : index
    %c0_29 = arith.constant 0 : index
    %89 = vector.load %arg2[%c768, %c0_29] : memref<1152x32xf32, #tpu.memory_space<vmem>>, vector<128x32xf32>
    %cst_30 = arith.constant dense<0.000000e+00> : vector<49x32xf32>
    %90 = tpu.matmul %88, %89, %cst_30 {dimension_numbers = #tpu.dot_dimension_numbers<[1], [0], [0], [1], [0, 0, 1, 1], [], []>, precision = #tpu.contract_precision<fp32>} : vector<49x128xf32>, vector<128x32xf32>, vector<49x32xf32> -> vector<49x32xf32>
    %91 = arith.addf %85, %90 : vector<49x32xf32>
    %c15 = arith.constant 15 : index
    %c0_31 = arith.constant 0 : index
    %92 = vector.load %arg8[%c15, %c0_31] : memref<65x128xf32, #tpu.memory_space<vmem>>, vector<49x128xf32>
    %c896 = arith.constant 896 : index
    %c0_32 = arith.constant 0 : index
    %93 = vector.load %arg2[%c896, %c0_32] : memref<1152x32xf32, #tpu.memory_space<vmem>>, vector<128x32xf32>
    %cst_33 = arith.constant dense<0.000000e+00> : vector<49x32xf32>
    %94 = tpu.matmul %92, %93, %cst_33 {dimension_numbers = #tpu.dot_dimension_numbers<[1], [0], [0], [1], [0, 0, 1, 1], [], []>, precision = #tpu.contract_precision<fp32>} : vector<49x128xf32>, vector<128x32xf32>, vector<49x32xf32> -> vector<49x32xf32>
    %95 = arith.addf %91, %94 : vector<49x32xf32>
    %c16 = arith.constant 16 : index
    %c0_34 = arith.constant 0 : index
    %96 = vector.load %arg8[%c16, %c0_34] : memref<65x128xf32, #tpu.memory_space<vmem>>, vector<49x128xf32>
    %97 = vector.broadcast %52 : vector<49x1xf32> to vector<49x128xf32>
    %98 = arith.mulf %96, %97 : vector<49x128xf32>
    %c1024 = arith.constant 1024 : index
    %c0_35 = arith.constant 0 : index
    %99 = vector.load %arg2[%c1024, %c0_35] : memref<1152x32xf32, #tpu.memory_space<vmem>>, vector<128x32xf32>
    %cst_36 = arith.constant dense<0.000000e+00> : vector<49x32xf32>
    %100 = tpu.matmul %98, %99, %cst_36 {dimension_numbers = #tpu.dot_dimension_numbers<[1], [0], [0], [1], [0, 0, 1, 1], [], []>, precision = #tpu.contract_precision<fp32>} : vector<49x128xf32>, vector<128x32xf32>, vector<49x32xf32> -> vector<49x32xf32>
    %101 = arith.addf %95, %100 : vector<49x32xf32>
    %c0_37 = arith.constant 0 : index
    %c0_38 = arith.constant 0 : index
    %102 = vector.load %arg3[%c0_37, %c0_38] : memref<49x1152xf32, #tpu.memory_space<vmem>>, vector<49x128xf32>
    %c0_39 = arith.constant 0 : index
    %c0_40 = arith.constant 0 : index
    %103 = vector.load %arg5[%c0_39, %c0_40] : memref<1x1216xf32, #tpu.memory_space<vmem>>, vector<1x128xf32>
    %c0_41 = arith.constant 0 : index
    %c0_42 = arith.constant 0 : index
    %104 = vector.load %arg6[%c0_41, %c0_42] : memref<1x1216xf32, #tpu.memory_space<vmem>>, vector<1x128xf32>
    %cst_43 = arith.constant dense<0.000000e+00> : vector<128xf32>
    %105 = vector.multi_reduction <add>, %102, %cst_43 [0] : vector<49x128xf32> to vector<128xf32>
    %106 = vector.shape_cast %105 : vector<128xf32> to vector<1x128xf32>
    %cst_44 = arith.constant 0.0204081628 : f32
    %107 = vector.broadcast %cst_44 : f32 to vector<1x128xf32>
    %108 = arith.mulf %106, %107 : vector<1x128xf32>
    %109 = vector.broadcast %108 : vector<1x128xf32> to vector<49x128xf32>
    %110 = arith.subf %102, %109 : vector<49x128xf32>
    %111 = arith.mulf %110, %110 : vector<49x128xf32>
    %cst_45 = arith.constant dense<0.000000e+00> : vector<128xf32>
    %112 = vector.multi_reduction <add>, %111, %cst_45 [0] : vector<49x128xf32> to vector<128xf32>
    %113 = vector.shape_cast %112 : vector<128xf32> to vector<1x128xf32>
    %cst_46 = arith.constant 0.0204081628 : f32
    %114 = vector.broadcast %cst_46 : f32 to vector<1x128xf32>
    %115 = arith.mulf %113, %114 : vector<1x128xf32>
    %cst_47 = arith.constant 9.99999974E-6 : f32
    %116 = vector.broadcast %cst_47 : f32 to vector<1x128xf32>
    %117 = arith.addf %115, %116 : vector<1x128xf32>
    %118 = math.rsqrt %117 : vector<1x128xf32>
    %119 = arith.mulf %118, %103 : vector<1x128xf32>
    %120 = vector.broadcast %119 : vector<1x128xf32> to vector<49x128xf32>
    %121 = arith.mulf %110, %120 : vector<49x128xf32>
    %122 = vector.broadcast %104 : vector<1x128xf32> to vector<49x128xf32>
    %123 = arith.addf %121, %122 : vector<49x128xf32>
    %c0_48 = arith.constant 0 : index
    %c0_49 = arith.constant 0 : index
    %124 = vector.load %arg7[%c0_48, %c0_49] : memref<49x1216xf32, #tpu.memory_space<vmem>>, vector<49x128xf32>
    tpu.vector_store %arg7[%c0_48, %c0_49], %123 {strides = array<i32>} : memref<49x1216xf32, #tpu.memory_space<vmem>>, vector<49x128xf32>,
    %c0_50 = arith.constant 0 : index
    %c128_51 = arith.constant 128 : index
    %125 = vector.load %arg3[%c0_50, %c128_51] : memref<49x1152xf32, #tpu.memory_space<vmem>>, vector<49x128xf32>
    %c0_52 = arith.constant 0 : index
    %c128_53 = arith.constant 128 : index
    %126 = vector.load %arg5[%c0_52, %c128_53] : memref<1x1216xf32, #tpu.memory_space<vmem>>, vector<1x128xf32>
    %c0_54 = arith.constant 0 : index
    %c128_55 = arith.constant 128 : index
    %127 = vector.load %arg6[%c0_54, %c128_55] : memref<1x1216xf32, #tpu.memory_space<vmem>>, vector<1x128xf32>
    %cst_56 = arith.constant dense<0.000000e+00> : vector<128xf32>
    %128 = vector.multi_reduction <add>, %125, %cst_56 [0] : vector<49x128xf32> to vector<128xf32>
    %129 = vector.shape_cast %128 : vector<128xf32> to vector<1x128xf32>
    %cst_57 = arith.constant 0.0204081628 : f32
    %130 = vector.broadcast %cst_57 : f32 to vector<1x128xf32>
    %131 = arith.mulf %129, %130 : vector<1x128xf32>
    %132 = vector.broadcast %131 : vector<1x128xf32> to vector<49x128xf32>
    %133 = arith.subf %125, %132 : vector<49x128xf32>
    %134 = arith.mulf %133, %133 : vector<49x128xf32>
    %cst_58 = arith.constant dense<0.000000e+00> : vector<128xf32>
    %135 = vector.multi_reduction <add>, %134, %cst_58 [0] : vector<49x128xf32> to vector<128xf32>
    %136 = vector.shape_cast %135 : vector<128xf32> to vector<1x128xf32>
    %cst_59 = arith.constant 0.0204081628 : f32
    %137 = vector.broadcast %cst_59 : f32 to vector<1x128xf32>
    %138 = arith.mulf %136, %137 : vector<1x128xf32>
    %cst_60 = arith.constant 9.99999974E-6 : f32
    %139 = vector.broadcast %cst_60 : f32 to vector<1x128xf32>
    %140 = arith.addf %138, %139 : vector<1x128xf32>
    %141 = math.rsqrt %140 : vector<1x128xf32>
    %142 = arith.mulf %141, %126 : vector<1x128xf32>
    %143 = vector.broadcast %142 : vector<1x128xf32> to vector<49x128xf32>
    %144 = arith.mulf %133, %143 : vector<49x128xf32>
    %145 = vector.broadcast %127 : vector<1x128xf32> to vector<49x128xf32>
    %146 = arith.addf %144, %145 : vector<49x128xf32>
    %c0_61 = arith.constant 0 : index
    %c128_62 = arith.constant 128 : index
    %147 = vector.load %arg7[%c0_61, %c128_62] : memref<49x1216xf32, #tpu.memory_space<vmem>>, vector<49x128xf32>
    tpu.vector_store %arg7[%c0_61, %c128_62], %146 {strides = array<i32>} : memref<49x1216xf32, #tpu.memory_space<vmem>>, vector<49x128xf32>,
    %c0_63 = arith.constant 0 : index
    %c256_64 = arith.constant 256 : index
    %148 = vector.load %arg3[%c0_63, %c256_64] : memref<49x1152xf32, #tpu.memory_space<vmem>>, vector<49x128xf32>
    %c0_65 = arith.constant 0 : index
    %c256_66 = arith.constant 256 : index
    %149 = vector.load %arg5[%c0_65, %c256_66] : memref<1x1216xf32, #tpu.memory_space<vmem>>, vector<1x128xf32>
    %c0_67 = arith.constant 0 : index
    %c256_68 = arith.constant 256 : index
    %150 = vector.load %arg6[%c0_67, %c256_68] : memref<1x1216xf32, #tpu.memory_space<vmem>>, vector<1x128xf32>
    %cst_69 = arith.constant dense<0.000000e+00> : vector<128xf32>
    %151 = vector.multi_reduction <add>, %148, %cst_69 [0] : vector<49x128xf32> to vector<128xf32>
    %152 = vector.shape_cast %151 : vector<128xf32> to vector<1x128xf32>
    %cst_70 = arith.constant 0.0204081628 : f32
    %153 = vector.broadcast %cst_70 : f32 to vector<1x128xf32>
    %154 = arith.mulf %152, %153 : vector<1x128xf32>
    %155 = vector.broadcast %154 : vector<1x128xf32> to vector<49x128xf32>
    %156 = arith.subf %148, %155 : vector<49x128xf32>
    %157 = arith.mulf %156, %156 : vector<49x128xf32>
    %cst_71 = arith.constant dense<0.000000e+00> : vector<128xf32>
    %158 = vector.multi_reduction <add>, %157, %cst_71 [0] : vector<49x128xf32> to vector<128xf32>
    %159 = vector.shape_cast %158 : vector<128xf32> to vector<1x128xf32>
    %cst_72 = arith.constant 0.0204081628 : f32
    %160 = vector.broadcast %cst_72 : f32 to vector<1x128xf32>
    %161 = arith.mulf %159, %160 : vector<1x128xf32>
    %cst_73 = arith.constant 9.99999974E-6 : f32
    %162 = vector.broadcast %cst_73 : f32 to vector<1x128xf32>
    %163 = arith.addf %161, %162 : vector<1x128xf32>
    %164 = math.rsqrt %163 : vector<1x128xf32>
    %165 = arith.mulf %164, %149 : vector<1x128xf32>
    %166 = vector.broadcast %165 : vector<1x128xf32> to vector<49x128xf32>
    %167 = arith.mulf %156, %166 : vector<49x128xf32>
    %168 = vector.broadcast %150 : vector<1x128xf32> to vector<49x128xf32>
    %169 = arith.addf %167, %168 : vector<49x128xf32>
    %c0_74 = arith.constant 0 : index
    %c256_75 = arith.constant 256 : index
    %170 = vector.load %arg7[%c0_74, %c256_75] : memref<49x1216xf32, #tpu.memory_space<vmem>>, vector<49x128xf32>
    tpu.vector_store %arg7[%c0_74, %c256_75], %169 {strides = array<i32>} : memref<49x1216xf32, #tpu.memory_space<vmem>>, vector<49x128xf32>,
    %c0_76 = arith.constant 0 : index
    %c384_77 = arith.constant 384 : index
    %171 = vector.load %arg3[%c0_76, %c384_77] : memref<49x1152xf32, #tpu.memory_space<vmem>>, vector<49x128xf32>
    %c0_78 = arith.constant 0 : index
    %c384_79 = arith.constant 384 : index
    %172 = vector.load %arg5[%c0_78, %c384_79] : memref<1x1216xf32, #tpu.memory_space<vmem>>, vector<1x128xf32>
    %c0_80 = arith.constant 0 : index
    %c384_81 = arith.constant 384 : index
    %173 = vector.load %arg6[%c0_80, %c384_81] : memref<1x1216xf32, #tpu.memory_space<vmem>>, vector<1x128xf32>
    %cst_82 = arith.constant dense<0.000000e+00> : vector<128xf32>
    %174 = vector.multi_reduction <add>, %171, %cst_82 [0] : vector<49x128xf32> to vector<128xf32>
    %175 = vector.shape_cast %174 : vector<128xf32> to vector<1x128xf32>
    %cst_83 = arith.constant 0.0204081628 : f32
    %176 = vector.broadcast %cst_83 : f32 to vector<1x128xf32>
    %177 = arith.mulf %175, %176 : vector<1x128xf32>
    %178 = vector.broadcast %177 : vector<1x128xf32> to vector<49x128xf32>
    %179 = arith.subf %171, %178 : vector<49x128xf32>
    %180 = arith.mulf %179, %179 : vector<49x128xf32>
    %cst_84 = arith.constant dense<0.000000e+00> : vector<128xf32>
    %181 = vector.multi_reduction <add>, %180, %cst_84 [0] : vector<49x128xf32> to vector<128xf32>
    %182 = vector.shape_cast %181 : vector<128xf32> to vector<1x128xf32>
    %cst_85 = arith.constant 0.0204081628 : f32
    %183 = vector.broadcast %cst_85 : f32 to vector<1x128xf32>
    %184 = arith.mulf %182, %183 : vector<1x128xf32>
    %cst_86 = arith.constant 9.99999974E-6 : f32
    %185 = vector.broadcast %cst_86 : f32 to vector<1x128xf32>
    %186 = arith.addf %184, %185 : vector<1x128xf32>
    %187 = math.rsqrt %186 : vector<1x128xf32>
    %188 = arith.mulf %187, %172 : vector<1x128xf32>
    %189 = vector.broadcast %188 : vector<1x128xf32> to vector<49x128xf32>
    %190 = arith.mulf %179, %189 : vector<49x128xf32>
    %191 = vector.broadcast %173 : vector<1x128xf32> to vector<49x128xf32>
    %192 = arith.addf %190, %191 : vector<49x128xf32>
    %c0_87 = arith.constant 0 : index
    %c384_88 = arith.constant 384 : index
    %193 = vector.load %arg7[%c0_87, %c384_88] : memref<49x1216xf32, #tpu.memory_space<vmem>>, vector<49x128xf32>
    tpu.vector_store %arg7[%c0_87, %c384_88], %192 {strides = array<i32>} : memref<49x1216xf32, #tpu.memory_space<vmem>>, vector<49x128xf32>,
    %c0_89 = arith.constant 0 : index
    %c512_90 = arith.constant 512 : index
    %194 = vector.load %arg3[%c0_89, %c512_90] : memref<49x1152xf32, #tpu.memory_space<vmem>>, vector<49x128xf32>
    %c0_91 = arith.constant 0 : index
    %c512_92 = arith.constant 512 : index
    %195 = vector.load %arg5[%c0_91, %c512_92] : memref<1x1216xf32, #tpu.memory_space<vmem>>, vector<1x128xf32>
    %c0_93 = arith.constant 0 : index
    %c512_94 = arith.constant 512 : index
    %196 = vector.load %arg6[%c0_93, %c512_94] : memref<1x1216xf32, #tpu.memory_space<vmem>>, vector<1x128xf32>
    %cst_95 = arith.constant dense<0.000000e+00> : vector<128xf32>
    %197 = vector.multi_reduction <add>, %194, %cst_95 [0] : vector<49x128xf32> to vector<128xf32>
    %198 = vector.shape_cast %197 : vector<128xf32> to vector<1x128xf32>
    %cst_96 = arith.constant 0.0204081628 : f32
    %199 = vector.broadcast %cst_96 : f32 to vector<1x128xf32>
    %200 = arith.mulf %198, %199 : vector<1x128xf32>
    %201 = vector.broadcast %200 : vector<1x128xf32> to vector<49x128xf32>
    %202 = arith.subf %194, %201 : vector<49x128xf32>
    %203 = arith.mulf %202, %202 : vector<49x128xf32>
    %cst_97 = arith.constant dense<0.000000e+00> : vector<128xf32>
    %204 = vector.multi_reduction <add>, %203, %cst_97 [0] : vector<49x128xf32> to vector<128xf32>
    %205 = vector.shape_cast %204 : vector<128xf32> to vector<1x128xf32>
    %cst_98 = arith.constant 0.0204081628 : f32
    %206 = vector.broadcast %cst_98 : f32 to vector<1x128xf32>
    %207 = arith.mulf %205, %206 : vector<1x128xf32>
    %cst_99 = arith.constant 9.99999974E-6 : f32
    %208 = vector.broadcast %cst_99 : f32 to vector<1x128xf32>
    %209 = arith.addf %207, %208 : vector<1x128xf32>
    %210 = math.rsqrt %209 : vector<1x128xf32>
    %211 = arith.mulf %210, %195 : vector<1x128xf32>
    %212 = vector.broadcast %211 : vector<1x128xf32> to vector<49x128xf32>
    %213 = arith.mulf %202, %212 : vector<49x128xf32>
    %214 = vector.broadcast %196 : vector<1x128xf32> to vector<49x128xf32>
    %215 = arith.addf %213, %214 : vector<49x128xf32>
    %c0_100 = arith.constant 0 : index
    %c512_101 = arith.constant 512 : index
    %216 = vector.load %arg7[%c0_100, %c512_101] : memref<49x1216xf32, #tpu.memory_space<vmem>>, vector<49x128xf32>
    tpu.vector_store %arg7[%c0_100, %c512_101], %215 {strides = array<i32>} : memref<49x1216xf32, #tpu.memory_space<vmem>>, vector<49x128xf32>,
    %c0_102 = arith.constant 0 : index
    %c640_103 = arith.constant 640 : index
    %217 = vector.load %arg3[%c0_102, %c640_103] : memref<49x1152xf32, #tpu.memory_space<vmem>>, vector<49x128xf32>
    %c0_104 = arith.constant 0 : index
    %c640_105 = arith.constant 640 : index
    %218 = vector.load %arg5[%c0_104, %c640_105] : memref<1x1216xf32, #tpu.memory_space<vmem>>, vector<1x128xf32>
    %c0_106 = arith.constant 0 : index
    %c640_107 = arith.constant 640 : index
    %219 = vector.load %arg6[%c0_106, %c640_107] : memref<1x1216xf32, #tpu.memory_space<vmem>>, vector<1x128xf32>
    %cst_108 = arith.constant dense<0.000000e+00> : vector<128xf32>
    %220 = vector.multi_reduction <add>, %217, %cst_108 [0] : vector<49x128xf32> to vector<128xf32>
    %221 = vector.shape_cast %220 : vector<128xf32> to vector<1x128xf32>
    %cst_109 = arith.constant 0.0204081628 : f32
    %222 = vector.broadcast %cst_109 : f32 to vector<1x128xf32>
    %223 = arith.mulf %221, %222 : vector<1x128xf32>
    %224 = vector.broadcast %223 : vector<1x128xf32> to vector<49x128xf32>
    %225 = arith.subf %217, %224 : vector<49x128xf32>
    %226 = arith.mulf %225, %225 : vector<49x128xf32>
    %cst_110 = arith.constant dense<0.000000e+00> : vector<128xf32>
    %227 = vector.multi_reduction <add>, %226, %cst_110 [0] : vector<49x128xf32> to vector<128xf32>
    %228 = vector.shape_cast %227 : vector<128xf32> to vector<1x128xf32>
    %cst_111 = arith.constant 0.0204081628 : f32
    %229 = vector.broadcast %cst_111 : f32 to vector<1x128xf32>
    %230 = arith.mulf %228, %229 : vector<1x128xf32>
    %cst_112 = arith.constant 9.99999974E-6 : f32
    %231 = vector.broadcast %cst_112 : f32 to vector<1x128xf32>
    %232 = arith.addf %230, %231 : vector<1x128xf32>
    %233 = math.rsqrt %232 : vector<1x128xf32>
    %234 = arith.mulf %233, %218 : vector<1x128xf32>
    %235 = vector.broadcast %234 : vector<1x128xf32> to vector<49x128xf32>
    %236 = arith.mulf %225, %235 : vector<49x128xf32>
    %237 = vector.broadcast %219 : vector<1x128xf32> to vector<49x128xf32>
    %238 = arith.addf %236, %237 : vector<49x128xf32>
    %c0_113 = arith.constant 0 : index
    %c640_114 = arith.constant 640 : index
    %239 = vector.load %arg7[%c0_113, %c640_114] : memref<49x1216xf32, #tpu.memory_space<vmem>>, vector<49x128xf32>
    tpu.vector_store %arg7[%c0_113, %c640_114], %238 {strides = array<i32>} : memref<49x1216xf32, #tpu.memory_space<vmem>>, vector<49x128xf32>,
    %c0_115 = arith.constant 0 : index
    %c768_116 = arith.constant 768 : index
    %240 = vector.load %arg3[%c0_115, %c768_116] : memref<49x1152xf32, #tpu.memory_space<vmem>>, vector<49x128xf32>
    %c0_117 = arith.constant 0 : index
    %c768_118 = arith.constant 768 : index
    %241 = vector.load %arg5[%c0_117, %c768_118] : memref<1x1216xf32, #tpu.memory_space<vmem>>, vector<1x128xf32>
    %c0_119 = arith.constant 0 : index
    %c768_120 = arith.constant 768 : index
    %242 = vector.load %arg6[%c0_119, %c768_120] : memref<1x1216xf32, #tpu.memory_space<vmem>>, vector<1x128xf32>
    %cst_121 = arith.constant dense<0.000000e+00> : vector<128xf32>
    %243 = vector.multi_reduction <add>, %240, %cst_121 [0] : vector<49x128xf32> to vector<128xf32>
    %244 = vector.shape_cast %243 : vector<128xf32> to vector<1x128xf32>
    %cst_122 = arith.constant 0.0204081628 : f32
    %245 = vector.broadcast %cst_122 : f32 to vector<1x128xf32>
    %246 = arith.mulf %244, %245 : vector<1x128xf32>
    %247 = vector.broadcast %246 : vector<1x128xf32> to vector<49x128xf32>
    %248 = arith.subf %240, %247 : vector<49x128xf32>
    %249 = arith.mulf %248, %248 : vector<49x128xf32>
    %cst_123 = arith.constant dense<0.000000e+00> : vector<128xf32>
    %250 = vector.multi_reduction <add>, %249, %cst_123 [0] : vector<49x128xf32> to vector<128xf32>
    %251 = vector.shape_cast %250 : vector<128xf32> to vector<1x128xf32>
    %cst_124 = arith.constant 0.0204081628 : f32
    %252 = vector.broadcast %cst_124 : f32 to vector<1x128xf32>
    %253 = arith.mulf %251, %252 : vector<1x128xf32>
    %cst_125 = arith.constant 9.99999974E-6 : f32
    %254 = vector.broadcast %cst_125 : f32 to vector<1x128xf32>
    %255 = arith.addf %253, %254 : vector<1x128xf32>
    %256 = math.rsqrt %255 : vector<1x128xf32>
    %257 = arith.mulf %256, %241 : vector<1x128xf32>
    %258 = vector.broadcast %257 : vector<1x128xf32> to vector<49x128xf32>
    %259 = arith.mulf %248, %258 : vector<49x128xf32>
    %260 = vector.broadcast %242 : vector<1x128xf32> to vector<49x128xf32>
    %261 = arith.addf %259, %260 : vector<49x128xf32>
    %c0_126 = arith.constant 0 : index
    %c768_127 = arith.constant 768 : index
    %262 = vector.load %arg7[%c0_126, %c768_127] : memref<49x1216xf32, #tpu.memory_space<vmem>>, vector<49x128xf32>
    tpu.vector_store %arg7[%c0_126, %c768_127], %261 {strides = array<i32>} : memref<49x1216xf32, #tpu.memory_space<vmem>>, vector<49x128xf32>,
    %c0_128 = arith.constant 0 : index
    %c896_129 = arith.constant 896 : index
    %263 = vector.load %arg3[%c0_128, %c896_129] : memref<49x1152xf32, #tpu.memory_space<vmem>>, vector<49x128xf32>
    %c0_130 = arith.constant 0 : index
    %c896_131 = arith.constant 896 : index
    %264 = vector.load %arg5[%c0_130, %c896_131] : memref<1x1216xf32, #tpu.memory_space<vmem>>, vector<1x128xf32>
    %c0_132 = arith.constant 0 : index
    %c896_133 = arith.constant 896 : index
    %265 = vector.load %arg6[%c0_132, %c896_133] : memref<1x1216xf32, #tpu.memory_space<vmem>>, vector<1x128xf32>
    %cst_134 = arith.constant dense<0.000000e+00> : vector<128xf32>
    %266 = vector.multi_reduction <add>, %263, %cst_134 [0] : vector<49x128xf32> to vector<128xf32>
    %267 = vector.shape_cast %266 : vector<128xf32> to vector<1x128xf32>
    %cst_135 = arith.constant 0.0204081628 : f32
    %268 = vector.broadcast %cst_135 : f32 to vector<1x128xf32>
    %269 = arith.mulf %267, %268 : vector<1x128xf32>
    %270 = vector.broadcast %269 : vector<1x128xf32> to vector<49x128xf32>
    %271 = arith.subf %263, %270 : vector<49x128xf32>
    %272 = arith.mulf %271, %271 : vector<49x128xf32>
    %cst_136 = arith.constant dense<0.000000e+00> : vector<128xf32>
    %273 = vector.multi_reduction <add>, %272, %cst_136 [0] : vector<49x128xf32> to vector<128xf32>
    %274 = vector.shape_cast %273 : vector<128xf32> to vector<1x128xf32>
    %cst_137 = arith.constant 0.0204081628 : f32
    %275 = vector.broadcast %cst_137 : f32 to vector<1x128xf32>
    %276 = arith.mulf %274, %275 : vector<1x128xf32>
    %cst_138 = arith.constant 9.99999974E-6 : f32
    %277 = vector.broadcast %cst_138 : f32 to vector<1x128xf32>
    %278 = arith.addf %276, %277 : vector<1x128xf32>
    %279 = math.rsqrt %278 : vector<1x128xf32>
    %280 = arith.mulf %279, %264 : vector<1x128xf32>
    %281 = vector.broadcast %280 : vector<1x128xf32> to vector<49x128xf32>
    %282 = arith.mulf %271, %281 : vector<49x128xf32>
    %283 = vector.broadcast %265 : vector<1x128xf32> to vector<49x128xf32>
    %284 = arith.addf %282, %283 : vector<49x128xf32>
    %c0_139 = arith.constant 0 : index
    %c896_140 = arith.constant 896 : index
    %285 = vector.load %arg7[%c0_139, %c896_140] : memref<49x1216xf32, #tpu.memory_space<vmem>>, vector<49x128xf32>
    tpu.vector_store %arg7[%c0_139, %c896_140], %284 {strides = array<i32>} : memref<49x1216xf32, #tpu.memory_space<vmem>>, vector<49x128xf32>,
    %c0_141 = arith.constant 0 : index
    %c1024_142 = arith.constant 1024 : index
    %286 = vector.load %arg3[%c0_141, %c1024_142] : memref<49x1152xf32, #tpu.memory_space<vmem>>, vector<49x128xf32>
    %c0_143 = arith.constant 0 : index
    %c1024_144 = arith.constant 1024 : index
    %287 = vector.load %arg5[%c0_143, %c1024_144] : memref<1x1216xf32, #tpu.memory_space<vmem>>, vector<1x128xf32>
    %c0_145 = arith.constant 0 : index
    %c1024_146 = arith.constant 1024 : index
    %288 = vector.load %arg6[%c0_145, %c1024_146] : memref<1x1216xf32, #tpu.memory_space<vmem>>, vector<1x128xf32>
    %cst_147 = arith.constant dense<0.000000e+00> : vector<128xf32>
    %289 = vector.multi_reduction <add>, %286, %cst_147 [0] : vector<49x128xf32> to vector<128xf32>
    %290 = vector.shape_cast %289 : vector<128xf32> to vector<1x128xf32>
    %cst_148 = arith.constant 0.0204081628 : f32
    %291 = vector.broadcast %cst_148 : f32 to vector<1x128xf32>
    %292 = arith.mulf %290, %291 : vector<1x128xf32>
    %293 = vector.broadcast %292 : vector<1x128xf32> to vector<49x128xf32>
    %294 = arith.subf %286, %293 : vector<49x128xf32>
    %295 = arith.mulf %294, %294 : vector<49x128xf32>
    %cst_149 = arith.constant dense<0.000000e+00> : vector<128xf32>
    %296 = vector.multi_reduction <add>, %295, %cst_149 [0] : vector<49x128xf32> to vector<128xf32>
    %297 = vector.shape_cast %296 : vector<128xf32> to vector<1x128xf32>
    %cst_150 = arith.constant 0.0204081628 : f32
    %298 = vector.broadcast %cst_150 : f32 to vector<1x128xf32>
    %299 = arith.mulf %297, %298 : vector<1x128xf32>
    %cst_151 = arith.constant 9.99999974E-6 : f32
    %300 = vector.broadcast %cst_151 : f32 to vector<1x128xf32>
    %301 = arith.addf %299, %300 : vector<1x128xf32>
    %302 = math.rsqrt %301 : vector<1x128xf32>
    %303 = arith.mulf %302, %287 : vector<1x128xf32>
    %304 = vector.broadcast %303 : vector<1x128xf32> to vector<49x128xf32>
    %305 = arith.mulf %294, %304 : vector<49x128xf32>
    %306 = vector.broadcast %288 : vector<1x128xf32> to vector<49x128xf32>
    %307 = arith.addf %305, %306 : vector<49x128xf32>
    %c0_152 = arith.constant 0 : index
    %c1024_153 = arith.constant 1024 : index
    %308 = vector.load %arg7[%c0_152, %c1024_153] : memref<49x1216xf32, #tpu.memory_space<vmem>>, vector<49x128xf32>
    tpu.vector_store %arg7[%c0_152, %c1024_153], %307 {strides = array<i32>} : memref<49x1216xf32, #tpu.memory_space<vmem>>, vector<49x128xf32>,
    %c0_154 = arith.constant 0 : index
    %c0_155 = arith.constant 0 : index
    %309 = vector.load %arg4[%c0_154, %c0_155] : memref<49x32xf32, #tpu.memory_space<vmem>>, vector<49x32xf32>
    %310 = tpu.concatenate %101, %309 in 1 : vector<49x32xf32>, vector<49x32xf32> -> vector<49x64xf32>
    %c0_156 = arith.constant 0 : index
    %c1152 = arith.constant 1152 : index
    %311 = vector.load %arg5[%c0_156, %c1152] : memref<1x1216xf32, #tpu.memory_space<vmem>>, vector<1x64xf32>
    %c0_157 = arith.constant 0 : index
    %c1152_158 = arith.constant 1152 : index
    %312 = vector.load %arg6[%c0_157, %c1152_158] : memref<1x1216xf32, #tpu.memory_space<vmem>>, vector<1x64xf32>
    %cst_159 = arith.constant dense<0.000000e+00> : vector<64xf32>
    %313 = vector.multi_reduction <add>, %310, %cst_159 [0] : vector<49x64xf32> to vector<64xf32>
    %314 = vector.shape_cast %313 : vector<64xf32> to vector<1x64xf32>
    %cst_160 = arith.constant 0.0204081628 : f32
    %315 = vector.broadcast %cst_160 : f32 to vector<1x64xf32>
    %316 = arith.mulf %314, %315 : vector<1x64xf32>
    %317 = vector.broadcast %316 : vector<1x64xf32> to vector<49x64xf32>
    %318 = arith.subf %310, %317 : vector<49x64xf32>
    %319 = arith.mulf %318, %318 : vector<49x64xf32>
    %cst_161 = arith.constant dense<0.000000e+00> : vector<64xf32>
    %320 = vector.multi_reduction <add>, %319, %cst_161 [0] : vector<49x64xf32> to vector<64xf32>
    %321 = vector.shape_cast %320 : vector<64xf32> to vector<1x64xf32>
    %cst_162 = arith.constant 0.0204081628 : f32
    %322 = vector.broadcast %cst_162 : f32 to vector<1x64xf32>
    %323 = arith.mulf %321, %322 : vector<1x64xf32>
    %cst_163 = arith.constant 9.99999974E-6 : f32
    %324 = vector.broadcast %cst_163 : f32 to vector<1x64xf32>
    %325 = arith.addf %323, %324 : vector<1x64xf32>
    %326 = math.rsqrt %325 : vector<1x64xf32>
    %327 = arith.mulf %326, %311 : vector<1x64xf32>
    %328 = vector.broadcast %327 : vector<1x64xf32> to vector<49x64xf32>
    %329 = arith.mulf %318, %328 : vector<49x64xf32>
    %330 = vector.broadcast %312 : vector<1x64xf32> to vector<49x64xf32>
    %331 = arith.addf %329, %330 : vector<49x64xf32>
    %c0_164 = arith.constant 0 : index
    %c1152_165 = arith.constant 1152 : index
    %332 = vector.load %arg7[%c0_164, %c1152_165] : memref<49x1216xf32, #tpu.memory_space<vmem>>, vector<49x64xf32>
    tpu.vector_store %arg7[%c0_164, %c1152_165], %331 {strides = array<i32>} : memref<49x1216xf32, #tpu.memory_space<vmem>>, vector<49x64xf32>,
    return
  }
  func.func @transform_0(%arg0: i32) -> (i32, i32) {
    %c0_i32 = arith.constant 0 : i32
    %c0_i32_0 = arith.constant 0 : i32
    %c0_i32_1 = arith.constant 0 : i32
    return %c0_i32, %c0_i32_0 : i32, i32
  }
  func.func @transform_1(%arg0: i32) -> (i32, i32) {
    %c0_i32 = arith.constant 0 : i32
    %c0_i32_0 = arith.constant 0 : i32
    %c0_i32_1 = arith.constant 0 : i32
    return %c0_i32, %c0_i32_0 : i32, i32
  }
  func.func @transform_2(%arg0: i32) -> (i32, i32) {
    %c0_i32 = arith.constant 0 : i32
    %c0_i32_0 = arith.constant 0 : i32
    %c0_i32_1 = arith.constant 0 : i32
    return %c0_i32, %c0_i32_0 : i32, i32
  }
  func.func @transform_3(%arg0: i32) -> (i32, i32) {
    %c0_i32 = arith.constant 0 : i32
    %c0_i32_0 = arith.constant 0 : i32
    %c0_i32_1 = arith.constant 0 : i32
    return %c0_i32, %c0_i32_0 : i32, i32
  }
  func.func @transform_4(%arg0: i32) -> (i32, i32) {
    %c0_i32 = arith.constant 0 : i32
    %c0_i32_0 = arith.constant 0 : i32
    %c0_i32_1 = arith.constant 0 : i32
    return %c0_i32, %c0_i32_0 : i32, i32
  }
  func.func @transform_5(%arg0: i32) -> (i32, i32) {
    %c0_i32 = arith.constant 0 : i32
    %c0_i32_0 = arith.constant 0 : i32
    %c0_i32_1 = arith.constant 0 : i32
    return %c0_i32, %c0_i32_0 : i32, i32
  }
  func.func @transform_6(%arg0: i32) -> (i32, i32) {
    %c0_i32 = arith.constant 0 : i32
    %c0_i32_0 = arith.constant 0 : i32
    %c0_i32_1 = arith.constant 0 : i32
    return %c0_i32, %c0_i32_0 : i32, i32
  }
}

</mosaic_0001>

<llo_original>
// kernel: forward.1
$region0: #{forward.1}
  #allocation0 [shape = 'u32[]', space=smem, size = 0x4, offset = 0x4, fixed_abs, tag = 'smem constant byte address 0x4 - core index']
  #allocation1 [shape = 'u32[72,128]{1,0:T(1,128)}', space=vmem, size = 0x9000, scoped, tag = 'internal scratch']
  #allocation2 [shape = 'f32[65,128]{1,0:T(8,128)}', space=vmem, size = 0x9000, scoped, tag = 'scratch operand']
  %s0 = inlined_call_operand.vmem [shape: f32[49,128], index: 0, kind: input, shape index: {}]
  %s1 = inlined_call_operand.vmem [shape: f32[1152,32], index: 1, kind: input, shape index: {}]
  %s2 = inlined_call_operand.vmem [shape: f32[49,1152], index: 2, kind: input, shape index: {}]
  %s3 = inlined_call_operand.vmem [shape: f32[49,32], index: 3, kind: input, shape index: {}]
  %s4 = inlined_call_operand.vmem [shape: f32[1,1216], index: 4, kind: input, shape index: {}]
  %s5 = inlined_call_operand.vmem [shape: f32[1,1216], index: 5, kind: input, shape index: {}]
  %s6 = inlined_call_operand.vmem [shape: f32[49,1216], index: 6, kind: output, shape index: {}]
  %s7 = sld [smem:[#allocation0]]
  $region34: #{forward.1} parent=0
    _
  %s9 = ssub.s32 1, %s7
  %s10 = scalar_select 0, %s9, %s7
  // Predicated region
  $region2: #{forward.1} parent=0 // pred_check
    _
  $region3: #{forward.1} parent=0 // pred_check_branch
    %12 = sbr.rel (0) target = $region5
  $region4: #{forward.1} parent=0 // pred_region
    _
  $region5: #{forward.1} parent=0 // pred_fallthru
    _
  // Predicated region
  $region6: #{forward.1} parent=0 // pred_check
    _
  $region7: #{forward.1} parent=0 // pred_check_branch
    %14 = sbr.rel (0) target = $region9
  $region8: #{forward.1} parent=0 // pred_region
    _
  $region9: #{forward.1} parent=0 // pred_fallthru
    _
  // Predicated region
  $region10: #{forward.1} parent=0 // pred_check
    _
  $region11: #{forward.1} parent=0 // pred_check_branch
    %16 = sbr.rel (0) target = $region13
  $region12: #{forward.1} parent=0 // pred_region
    _
  $region13: #{forward.1} parent=0 // pred_fallthru
    _
  // Predicated region
  $region14: #{forward.1} parent=0 // pred_check
    _
  $region15: #{forward.1} parent=0 // pred_check_branch
    %18 = sbr.rel (0) target = $region17
  $region16: #{forward.1} parent=0 // pred_region
    _
  $region17: #{forward.1} parent=0 // pred_fallthru
    _
  // Predicated region
  $region18: #{forward.1} parent=0 // pred_check
    _
  $region19: #{forward.1} parent=0 // pred_check_branch
    %20 = sbr.rel (0) target = $region21
  $region20: #{forward.1} parent=0 // pred_region
    _
  $region21: #{forward.1} parent=0 // pred_fallthru
    _
  // Predicated region
  $region22: #{forward.1} parent=0 // pred_check
    _
  $region23: #{forward.1} parent=0 // pred_check_branch
    %22 = sbr.rel (0) target = $region25
  $region24: #{forward.1} parent=0 // pred_region
    _
  $region25: #{forward.1} parent=0 // pred_fallthru
    _
  %23 = vst [vmem:[#allocation2] sm:$0xff] 0.0
  %24 = vst [vmem:[#allocation2 + $0x8] sm:$0xff] 0.0
  %25 = vst [vmem:[#allocation2 + $0x10] sm:$0xff] 0.0
  %26 = vst [vmem:[#allocation2 + $0x18] sm:$0xff] 0.0
  %27 = vst [vmem:[#allocation2 + $0x20] sm:$0xff] 0.0
  %28 = vst [vmem:[#allocation2 + $0x28] sm:$0xff] 0.0
  %29 = vst [vmem:[#allocation2 + $0x30] sm:$0xff] 0.0
  %30 = vst [vmem:[#allocation2 + $0x38] sm:$0xff] 0.0
  %31 = vst [vmem:[#allocation2 + $0x40] sm:$0x1] 0.0
  %v32 = vld [vmem:[%s0] sm:$0xff]
  %v33 = vld [vmem:[%s0 + $0x8] sm:$0xff]
  %v34 = vld [vmem:[%s0 + $0x10] sm:$0xff]
  %v35 = vld [vmem:[%s0 + $0x18] sm:$0xff]
  %v36 = vld [vmem:[%s0 + $0x20] sm:$0xff]
  %v37 = vld [vmem:[%s0 + $0x28] sm:$0xff]
  %v38 = vld [vmem:[%s0 + $0x30] sm:$0x1]
  %39 = vst [vmem:[#allocation2 + $0x8] sm:$0xff] %v32
  %40 = vst [vmem:[#allocation2 + $0x10] sm:$0xff] %v33
  %41 = vst [vmem:[#allocation2 + $0x18] sm:$0xff] %v34
  %42 = vst [vmem:[#allocation2 + $0x20] sm:$0xff] %v35
  %43 = vst [vmem:[#allocation2 + $0x28] sm:$0xff] %v36
  %44 = vst [vmem:[#allocation2 + $0x30] sm:$0xff] %v37
  %45 = vst [vmem:[#allocation2 + $0x38] sm:$0x1] %v38
  %v46 = vlaneseq
  %v47 = vshrl.u32 %v46, 7
  %v48 = vadd.s32 %v47, 8
  %v49 = vadd.s32 %v47, 16
  %v50 = vadd.s32 %v47, 24
  %v51 = vadd.s32 %v47, 32
  %v52 = vadd.s32 %v47, 40
  %v53 = vadd.s32 %v47, 48
  %vm54 = vcmp.eq.s32.totalorder %v47, 0
  %vm55 = vcmp.eq.s32.totalorder %v48, 0
  %vm56 = vcmp.eq.s32.totalorder %v49, 0
  %vm57 = vcmp.eq.s32.totalorder %v50, 0
  %vm58 = vcmp.eq.s32.totalorder %v51, 0
  %vm59 = vcmp.eq.s32.totalorder %v52, 0
  %vm60 = vcmp.eq.s32.totalorder %v53, 0
  %vm61 = vcmp.eq.s32.totalorder %v47, 6
  %vm62 = vcmp.eq.s32.totalorder %v48, 6
  %vm63 = vcmp.eq.s32.totalorder %v49, 6
  %vm64 = vcmp.eq.s32.totalorder %v50, 6
  %vm65 = vcmp.eq.s32.totalorder %v51, 6
  %vm66 = vcmp.eq.s32.totalorder %v52, 6
  %vm67 = vcmp.eq.s32.totalorder %v53, 6
  %vm68 = vcmp.eq.s32.totalorder %v47, 7
  %vm69 = vcmp.eq.s32.totalorder %v48, 7
  %vm70 = vcmp.eq.s32.totalorder %v49, 7
  %vm71 = vcmp.eq.s32.totalorder %v50, 7
  %vm72 = vcmp.eq.s32.totalorder %v51, 7
  %vm73 = vcmp.eq.s32.totalorder %v52, 7
  %vm74 = vcmp.eq.s32.totalorder %v53, 7
  %vm75 = vmor %vm54, %vm68
  %vm76 = vmor %vm55, %vm69
  %vm77 = vmor %vm56, %vm70
  %vm78 = vmor %vm57, %vm71
  %vm79 = vmor %vm58, %vm72
  %vm80 = vmor %vm59, %vm73
  %vm81 = vmor %vm60, %vm74
  %vm82 = vcmp.eq.s32.totalorder %v47, 13
  %vm83 = vcmp.eq.s32.totalorder %v48, 13
  %vm84 = vcmp.eq.s32.totalorder %v49, 13
  %vm85 = vcmp.eq.s32.totalorder %v50, 13
  %vm86 = vcmp.eq.s32.totalorder %v51, 13
  %vm87 = vcmp.eq.s32.totalorder %v52, 13
  %vm88 = vcmp.eq.s32.totalorder %v53, 13
  %vm89 = vmor %vm61, %vm82
  %vm90 = vmor %vm62, %vm83
  %vm91 = vmor %vm63, %vm84
  %vm92 = vmor %vm64, %vm85
  %vm93 = vmor %vm65, %vm86
  %vm94 = vmor %vm66, %vm87
  %vm95 = vmor %vm67, %vm88
  %vm96 = vcmp.eq.s32.totalorder %v47, 14
  %vm97 = vcmp.eq.s32.totalorder %v48, 14
  %vm98 = vcmp.eq.s32.totalorder %v49, 14
  %vm99 = vcmp.eq.s32.totalorder %v50, 14
  %vm100 = vcmp.eq.s32.totalorder %v51, 14
  %vm101 = vcmp.eq.s32.totalorder %v52, 14
  %vm102 = vcmp.eq.s32.totalorder %v53, 14
  %vm103 = vmor %vm75, %vm96
  %vm104 = vmor %vm76, %vm97
  %vm105 = vmor %vm77, %vm98
  %vm106 = vmor %vm78, %vm99
  %vm107 = vmor %vm79, %vm100
  %vm108 = vmor %vm80, %vm101
  %vm109 = vmor %vm81, %vm102
  %vm110 = vcmp.eq.s32.totalorder %v47, 20
  %vm111 = vcmp.eq.s32.totalorder %v48, 20
  %vm112 = vcmp.eq.s32.totalorder %v49, 20
  %vm113 = vcmp.eq.s32.totalorder %v50, 20
  %vm114 = vcmp.eq.s32.totalorder %v51, 20
  %vm115 = vcmp.eq.s32.totalorder %v52, 20
  %vm116 = vcmp.eq.s32.totalorder %v53, 20
  %vm117 = vmor %vm89, %vm110
  %vm118 = vmor %vm90, %vm111
  %vm119 = vmor %vm91, %vm112
  %vm120 = vmor %vm92, %vm113
  %vm121 = vmor %vm93, %vm114
  %vm122 = vmor %vm94, %vm115
  %vm123 = vmor %vm95, %vm116
  %vm124 = vcmp.eq.s32.totalorder %v47, 21
  %vm125 = vcmp.eq.s32.totalorder %v48, 21
  %vm126 = vcmp.eq.s32.totalorder %v49, 21
  %vm127 = vcmp.eq.s32.totalorder %v50, 21
  %vm128 = vcmp.eq.s32.totalorder %v51, 21
  %vm129 = vcmp.eq.s32.totalorder %v52, 21
  %vm130 = vcmp.eq.s32.totalorder %v53, 21
  %vm131 = vmor %vm103, %vm124
  %vm132 = vmor %vm104, %vm125
  %vm133 = vmor %vm105, %vm126
  %vm134 = vmor %vm106, %vm127
  %vm135 = vmor %vm107, %vm128
  %vm136 = vmor %vm108, %vm129
  %vm137 = vmor %vm109, %vm130
  %vm138 = vcmp.eq.s32.totalorder %v47, 27
  %vm139 = vcmp.eq.s32.totalorder %v48, 27
  %vm140 = vcmp.eq.s32.totalorder %v49, 27
  %vm141 = vcmp.eq.s32.totalorder %v50, 27
  %vm142 = vcmp.eq.s32.totalorder %v51, 27
  %vm143 = vcmp.eq.s32.totalorder %v52, 27
  %vm144 = vcmp.eq.s32.totalorder %v53, 27
  %vm145 = vmor %vm117, %vm138
  %vm146 = vmor %vm118, %vm139
  %vm147 = vmor %vm119, %vm140
  %vm148 = vmor %vm120, %vm141
  %vm149 = vmor %vm121, %vm142
  %vm150 = vmor %vm122, %vm143
  %vm151 = vmor %vm123, %vm144
  %vm152 = vcmp.eq.s32.totalorder %v47, 28
  %vm153 = vcmp.eq.s32.totalorder %v48, 28
  %vm154 = vcmp.eq.s32.totalorder %v49, 28
  %vm155 = vcmp.eq.s32.totalorder %v50, 28
  %vm156 = vcmp.eq.s32.totalorder %v51, 28
  %vm157 = vcmp.eq.s32.totalorder %v52, 28
  %vm158 = vcmp.eq.s32.totalorder %v53, 28
  %vm159 = vmor %vm131, %vm152
  %vm160 = vmor %vm132, %vm153
  %vm161 = vmor %vm133, %vm154
  %vm162 = vmor %vm134, %vm155
  %vm163 = vmor %vm135, %vm156
  %vm164 = vmor %vm136, %vm157
  %vm165 = vmor %vm137, %vm158
  %vm166 = vcmp.eq.s32.totalorder %v47, 34
  %vm167 = vcmp.eq.s32.totalorder %v48, 34
  %vm168 = vcmp.eq.s32.totalorder %v49, 34
  %vm169 = vcmp.eq.s32.totalorder %v50, 34
  %vm170 = vcmp.eq.s32.totalorder %v51, 34
  %vm171 = vcmp.eq.s32.totalorder %v52, 34
  %vm172 = vcmp.eq.s32.totalorder %v53, 34
  %vm173 = vmor %vm145, %vm166
  %vm174 = vmor %vm146, %vm167
  %vm175 = vmor %vm147, %vm168
  %vm176 = vmor %vm148, %vm169
  %vm177 = vmor %vm149, %vm170
  %vm178 = vmor %vm150, %vm171
  %vm179 = vmor %vm151, %vm172
  %vm180 = vcmp.eq.s32.totalorder %v47, 35
  %vm181 = vcmp.eq.s32.totalorder %v48, 35
  %vm182 = vcmp.eq.s32.totalorder %v49, 35
  %vm183 = vcmp.eq.s32.totalorder %v50, 35
  %vm184 = vcmp.eq.s32.totalorder %v51, 35
  %vm185 = vcmp.eq.s32.totalorder %v52, 35
  %vm186 = vcmp.eq.s32.totalorder %v53, 35
  %vm187 = vmor %vm159, %vm180
  %vm188 = vmor %vm160, %vm181
  %vm189 = vmor %vm161, %vm182
  %vm190 = vmor %vm162, %vm183
  %vm191 = vmor %vm163, %vm184
  %vm192 = vmor %vm164, %vm185
  %vm193 = vmor %vm165, %vm186
  %vm194 = vcmp.eq.s32.totalorder %v47, 41
  %vm195 = vcmp.eq.s32.totalorder %v48, 41
  %vm196 = vcmp.eq.s32.totalorder %v49, 41
  %vm197 = vcmp.eq.s32.totalorder %v50, 41
  %vm198 = vcmp.eq.s32.totalorder %v51, 41
  %vm199 = vcmp.eq.s32.totalorder %v52, 41
  %vm200 = vcmp.eq.s32.totalorder %v53, 41
  %vm201 = vmor %vm173, %vm194
  %vm202 = vmor %vm174, %vm195
  %vm203 = vmor %vm175, %vm196
  %vm204 = vmor %vm176, %vm197
  %vm205 = vmor %vm177, %vm198
  %vm206 = vmor %vm178, %vm199
  %vm207 = vmor %vm179, %vm200
  %vm208 = vcmp.eq.s32.totalorder %v47, 42
  %vm209 = vcmp.eq.s32.totalorder %v48, 42
  %vm210 = vcmp.eq.s32.totalorder %v49, 42
  %vm211 = vcmp.eq.s32.totalorder %v50, 42
  %vm212 = vcmp.eq.s32.totalorder %v51, 42
  %vm213 = vcmp.eq.s32.totalorder %v52, 42
  %vm214 = vcmp.eq.s32.totalorder %v53, 42
  %vm215 = vmor %vm187, %vm208
  %vm216 = vmor %vm188, %vm209
  %vm217 = vmor %vm189, %vm210
  %vm218 = vmor %vm190, %vm211
  %vm219 = vmor %vm191, %vm212
  %vm220 = vmor %vm192, %vm213
  %vm221 = vmor %vm193, %vm214
  %vm222 = vcmp.eq.s32.totalorder %v47, 48
  %vm223 = vcmp.eq.s32.totalorder %v48, 48
  %vm224 = vcmp.eq.s32.totalorder %v49, 48
  %vm225 = vcmp.eq.s32.totalorder %v50, 48
  %vm226 = vcmp.eq.s32.totalorder %v51, 48
  %vm227 = vcmp.eq.s32.totalorder %v52, 48
  %vm228 = vcmp.eq.s32.totalorder %v53, 48
  %vm229 = vmor %vm201, %vm222
  %vm230 = vmor %vm202, %vm223
  %vm231 = vmor %vm203, %vm224
  %vm232 = vmor %vm204, %vm225
  %vm233 = vmor %vm205, %vm226
  %vm234 = vmor %vm206, %vm227
  %vm235 = vmor %vm207, %vm228
  %v236 = vsel %vm215, 1, 0
  %v237 = vsel %vm216, 1, 0
  %v238 = vsel %vm217, 1, 0
  %v239 = vsel %vm218, 1, 0
  %v240 = vsel %vm219, 1, 0
  %v241 = vsel %vm220, 1, 0
  %v242 = vsel %vm221, 1, 0
  %v243 = vcvt.s32.f32 %v236
  %v244 = vcvt.s32.f32 %v237
  %v245 = vcvt.s32.f32 %v238
  %v246 = vcvt.s32.f32 %v239
  %v247 = vcvt.s32.f32 %v240
  %v248 = vcvt.s32.f32 %v241
  %v249 = vcvt.s32.f32 %v242
  %v250 = vsub.f32 1.0, %v243
  %v251 = vsub.f32 1.0, %v244
  %v252 = vsub.f32 1.0, %v245
  %v253 = vsub.f32 1.0, %v246
  %v254 = vsub.f32 1.0, %v247
  %v255 = vsub.f32 1.0, %v248
  %v256 = vsub.f32 1.0, %v249
  %v257 = vsel %vm229, 1, 0
  %v258 = vsel %vm230, 1, 0
  %v259 = vsel %vm231, 1, 0
  %v260 = vsel %vm232, 1, 0
  %v261 = vsel %vm233, 1, 0
  %v262 = vsel %vm234, 1, 0
  %v263 = vsel %vm235, 1, 0
  %v264 = vcvt.s32.f32 %v257
  %v265 = vcvt.s32.f32 %v258
  %v266 = vcvt.s32.f32 %v259
  %v267 = vcvt.s32.f32 %v260
  %v268 = vcvt.s32.f32 %v261
  %v269 = vcvt.s32.f32 %v262
  %v270 = vcvt.s32.f32 %v263
  %v271 = vsub.f32 1.0, %v264
  %v272 = vsub.f32 1.0, %v265
  %v273 = vsub.f32 1.0, %v266
  %v274 = vsub.f32 1.0, %v267
  %v275 = vsub.f32 1.0, %v268
  %v276 = vsub.f32 1.0, %v269
  %v277 = vsub.f32 1.0, %v270
  %v278 = vld [vmem:[#allocation2] sm:$0xff]
  %v279 = vld [vmem:[#allocation2 + $0x8] sm:$0xff]
  %v280 = vld [vmem:[#allocation2 + $0x10] sm:$0xff]
  %v281 = vld [vmem:[#allocation2 + $0x18] sm:$0xff]
  %v282 = vld [vmem:[#allocation2 + $0x20] sm:$0xff]
  %v283 = vld [vmem:[#allocation2 + $0x28] sm:$0xff]
  %v284 = vld [vmem:[#allocation2 + $0x30] sm:$0x1]
  %v285 = vmul.f32 %v278, %v250
  %v286 = vmul.f32 %v279, %v251
  %v287 = vmul.f32 %v280, %v252
  %v288 = vmul.f32 %v281, %v253
  %v289 = vmul.f32 %v282, %v254
  %v290 = vmul.f32 %v283, %v255
  %v291 = vmul.f32 %v284, %v256
  %v292 = vld [vmem:[%s1] sm:$0xff]
  %v293 = vld [vmem:[%s1 + $0x8] sm:$0xff]
  %v294 = vld [vmem:[%s1 + $0x10] sm:$0xff]
  %v295 = vld [vmem:[%s1 + $0x18] sm:$0xff]
  %v296 = vld [vmem:[%s1 + $0x20] sm:$0xff]
  %v297 = vld [vmem:[%s1 + $0x28] sm:$0xff]
  %v298 = vld [vmem:[%s1 + $0x30] sm:$0xff]
  %v299 = vld [vmem:[%s1 + $0x38] sm:$0xff]
  %v300 = vld [vmem:[%s1 + $0x40] sm:$0xff]
  %v301 = vld [vmem:[%s1 + $0x48] sm:$0xff]
  %v302 = vld [vmem:[%s1 + $0x50] sm:$0xff]
  %v303 = vld [vmem:[%s1 + $0x58] sm:$0xff]
  %v304 = vld [vmem:[%s1 + $0x60] sm:$0xff]
  %v305 = vld [vmem:[%s1 + $0x68] sm:$0xff]
  %v306 = vld [vmem:[%s1 + $0x70] sm:$0xff]
  %v307 = vld [vmem:[%s1 + $0x78] sm:$0xff]
  %v308 = vld [vmem:[#allocation2 + $0x1] sm:$0xff]
  %v309 = vld [vmem:[#allocation2 + $0x9] sm:$0xff]
  %v310 = vld [vmem:[#allocation2 + $0x11] sm:$0xff]
  %v311 = vld [vmem:[#allocation2 + $0x19] sm:$0xff]
  %v312 = vld [vmem:[#allocation2 + $0x21] sm:$0xff]
  %v313 = vld [vmem:[#allocation2 + $0x29] sm:$0xff]
  %v314 = vld [vmem:[#allocation2 + $0x31] sm:$0x1]
  %v315 = vld [vmem:[%s1 + $0x80] sm:$0xff]
  %v316 = vld [vmem:[%s1 + $0x88] sm:$0xff]
  %v317 = vld [vmem:[%s1 + $0x90] sm:$0xff]
  %v318 = vld [vmem:[%s1 + $0x98] sm:$0xff]
  %v319 = vld [vmem:[%s1 + $0xa0] sm:$0xff]
  %v320 = vld [vmem:[%s1 + $0xa8] sm:$0xff]
  %v321 = vld [vmem:[%s1 + $0xb0] sm:$0xff]
  %v322 = vld [vmem:[%s1 + $0xb8] sm:$0xff]
  %v323 = vld [vmem:[%s1 + $0xc0] sm:$0xff]
  %v324 = vld [vmem:[%s1 + $0xc8] sm:$0xff]
  %v325 = vld [vmem:[%s1 + $0xd0] sm:$0xff]
  %v326 = vld [vmem:[%s1 + $0xd8] sm:$0xff]
  %v327 = vld [vmem:[%s1 + $0xe0] sm:$0xff]
  %v328 = vld [vmem:[%s1 + $0xe8] sm:$0xff]
  %v329 = vld [vmem:[%s1 + $0xf0] sm:$0xff]
  %v330 = vld [vmem:[%s1 + $0xf8] sm:$0xff]
  %v331 = vand.u32 %v330, 4294901760
  %332 = vmatpush.msra.mxu0 %v331
  %v333 = vand.u32 %v329, 4294901760
  %334 = vmatpush.msra.mxu0 %v333
  %v335 = vand.u32 %v328, 4294901760
  %336 = vmatpush.msra.mxu0 %v335
  %v337 = vand.u32 %v327, 4294901760
  %338 = vmatpush.msra.mxu0 %v337
  %v339 = vand.u32 %v326, 4294901760
  %340 = vmatpush.msra.mxu0 %v339
  %v341 = vand.u32 %v325, 4294901760
  %342 = vmatpush.msra.mxu0 %v341
  %v343 = vand.u32 %v324, 4294901760
  %344 = vmatpush.msra.mxu0 %v343
  %v345 = vand.u32 %v323, 4294901760
  %346 = vmatpush.msra.mxu0 %v345
  %v347 = vand.u32 %v322, 4294901760
  %348 = vmatpush.msra.mxu0 %v347
  %v349 = vand.u32 %v321, 4294901760
  %350 = vmatpush.msra.mxu0 %v349
  %v351 = vand.u32 %v320, 4294901760
  %352 = vmatpush.msra.mxu0 %v351
  %v353 = vand.u32 %v319, 4294901760
  %354 = vmatpush.msra.mxu0 %v353
  %v355 = vand.u32 %v318, 4294901760
  %356 = vmatpush.msra.mxu0 %v355
  %v357 = vand.u32 %v317, 4294901760
  %358 = vmatpush.msra.mxu0 %v357
  %v359 = vand.u32 %v316, 4294901760
  %360 = vmatpush.msra.mxu0 %v359
  %v361 = vand.u32 %v315, 4294901760
  %362 = vmatpush.msra.mxu0 %v361
  %v363 = vand.u32 %v308, 4294901760
  %v364 = vsub.f32 %v308, %v363
  %v365 = vand.u32 %v364, 4294901760
  %v366 = vsub.f32 %v364, %v365
  %v367 = vand.u32 %v366, 4294901760
  %368 = vmatmul.f32.gmra.mxu0 %v367
  %v369 = vpop.f32.mrf.mxu0
  %v370 = vadd.f32 0.0, %v369
  %v371 = vand.u32 %v309, 4294901760
  %v372 = vsub.f32 %v309, %v371
  %v373 = vand.u32 %v372, 4294901760
  %v374 = vsub.f32 %v372, %v373
  %v375 = vand.u32 %v374, 4294901760
  %376 = vmatmul.f32.gmra.mxu0 %v375
  %v377 = vpop.f32.mrf.mxu0
  %v378 = vadd.f32 0.0, %v377
  %v379 = vand.u32 %v310, 4294901760
  %v380 = vsub.f32 %v310, %v379
  %v381 = vand.u32 %v380, 4294901760
  %v382 = vsub.f32 %v380, %v381
  %v383 = vand.u32 %v382, 4294901760
  %384 = vmatmul.f32.gmra.mxu0 %v383
  %v385 = vpop.f32.mrf.mxu0
  %v386 = vadd.f32 0.0, %v385
  %v387 = vand.u32 %v311, 4294901760
  %v388 = vsub.f32 %v311, %v387
  %v389 = vand.u32 %v388, 4294901760
  %v390 = vsub.f32 %v388, %v389
  %v391 = vand.u32 %v390, 4294901760
  %392 = vmatmul.f32.gmra.mxu0 %v391
  %v393 = vpop.f32.mrf.mxu0
  %v394 = vadd.f32 0.0, %v393
  %v395 = vand.u32 %v312, 4294901760
  %v396 = vsub.f32 %v312, %v395
  %v397 = vand.u32 %v396, 4294901760
  %v398 = vsub.f32 %v396, %v397
  %v399 = vand.u32 %v398, 4294901760
  %400 = vmatmul.f32.gmra.mxu0 %v399
  %v401 = vpop.f32.mrf.mxu0
  %v402 = vadd.f32 0.0, %v401
  %v403 = vand.u32 %v313, 4294901760
  %v404 = vsub.f32 %v313, %v403
  %v405 = vand.u32 %v404, 4294901760
  %v406 = vsub.f32 %v404, %v405
  %v407 = vand.u32 %v406, 4294901760
  %408 = vmatmul.f32.gmra.mxu0 %v407
  %v409 = vpop.f32.mrf.mxu0
  %v410 = vadd.f32 0.0, %v409
  %v411 = vand.u32 %v314, 4294901760
  %v412 = vsub.f32 %v314, %v411
  %v413 = vand.u32 %v412, 4294901760
  %v414 = vsub.f32 %v412, %v413
  %v415 = vand.u32 %v414, 4294901760
  %416 = vmatmul.f32.gmra.mxu0 %v415
  %v417 = vpop.f32.mrf.mxu0
  %v418 = vadd.f32 0.0, %v417
  %419 = vdwg.mxu0
  %v420 = vand.u32 %v330, 4294901760
  %v421 = vsub.f32 %v330, %v420
  %v422 = vand.u32 %v421, 4294901760
  %v423 = vsub.f32 %v421, %v422
  %v424 = vand.u32 %v423, 4294901760
  %425 = vmatpush.msra.mxu0 %v424
  %v426 = vand.u32 %v329, 4294901760
  %v427 = vsub.f32 %v329, %v426
  %v428 = vand.u32 %v427, 4294901760
  %v429 = vsub.f32 %v427, %v428
  %v430 = vand.u32 %v429, 4294901760
  %431 = vmatpush.msra.mxu0 %v430
  %v432 = vand.u32 %v328, 4294901760
  %v433 = vsub.f32 %v328, %v432
  %v434 = vand.u32 %v433, 4294901760
  %v435 = vsub.f32 %v433, %v434
  %v436 = vand.u32 %v435, 4294901760
  %437 = vmatpush.msra.mxu0 %v436
  %v438 = vand.u32 %v327, 4294901760
  %v439 = vsub.f32 %v327, %v438
  %v440 = vand.u32 %v439, 4294901760
  %v441 = vsub.f32 %v439, %v440
  %v442 = vand.u32 %v441, 4294901760
  %443 = vmatpush.msra.mxu0 %v442
  %v444 = vand.u32 %v326, 4294901760
  %v445 = vsub.f32 %v326, %v444
  %v446 = vand.u32 %v445, 4294901760
  %v447 = vsub.f32 %v445, %v446
  %v448 = vand.u32 %v447, 4294901760
  %449 = vmatpush.msra.mxu0 %v448
  %v450 = vand.u32 %v325, 4294901760
  %v451 = vsub.f32 %v325, %v450
  %v452 = vand.u32 %v451, 4294901760
  %v453 = vsub.f32 %v451, %v452
  %v454 = vand.u32 %v453, 4294901760
  %455 = vmatpush.msra.mxu0 %v454
  %v456 = vand.u32 %v324, 4294901760
  %v457 = vsub.f32 %v324, %v456
  %v458 = vand.u32 %v457, 4294901760
  %v459 = vsub.f32 %v457, %v458
  %v460 = vand.u32 %v459, 4294901760
  %461 = vmatpush.msra.mxu0 %v460
  %v462 = vand.u32 %v323, 4294901760
  %v463 = vsub.f32 %v323, %v462
  %v464 = vand.u32 %v463, 4294901760
  %v465 = vsub.f32 %v463, %v464
  %v466 = vand.u32 %v465, 4294901760
  %467 = vmatpush.msra.mxu0 %v466
  %v468 = vand.u32 %v322, 4294901760
  %v469 = vsub.f32 %v322, %v468
  %v470 = vand.u32 %v469, 4294901760
  %v471 = vsub.f32 %v469, %v470
  %v472 = vand.u32 %v471, 4294901760
  %473 = vmatpush.msra.mxu0 %v472
  %v474 = vand.u32 %v321, 4294901760
  %v475 = vsub.f32 %v321, %v474
  %v476 = vand.u32 %v475, 4294901760
  %v477 = vsub.f32 %v475, %v476
  %v478 = vand.u32 %v477, 4294901760
  %479 = vmatpush.msra.mxu0 %v478
  %v480 = vand.u32 %v320, 4294901760
  %v481 = vsub.f32 %v320, %v480
  %v482 = vand.u32 %v481, 4294901760
  %v483 = vsub.f32 %v481, %v482
  %v484 = vand.u32 %v483, 4294901760
  %485 = vmatpush.msra.mxu0 %v484
  %v486 = vand.u32 %v319, 4294901760
  %v487 = vsub.f32 %v319, %v486
  %v488 = vand.u32 %v487, 4294901760
  %v489 = vsub.f32 %v487, %v488
  %v490 = vand.u32 %v489, 4294901760
  %491 = vmatpush.msra.mxu0 %v490
  %v492 = vand.u32 %v318, 4294901760
  %v493 = vsub.f32 %v318, %v492
  %v494 = vand.u32 %v493, 4294901760
  %v495 = vsub.f32 %v493, %v494
  %v496 = vand.u32 %v495, 4294901760
  %497 = vmatpush.msra.mxu0 %v496
  %v498 = vand.u32 %v317, 4294901760
  %v499 = vsub.f32 %v317, %v498
  %v500 = vand.u32 %v499, 4294901760
  %v501 = vsub.f32 %v499, %v500
  %v502 = vand.u32 %v501, 4294901760
  %503 = vmatpush.msra.mxu0 %v502
  %v504 = vand.u32 %v316, 4294901760
  %v505 = vsub.f32 %v316, %v504
  %v506 = vand.u32 %v505, 4294901760
  %v507 = vsub.f32 %v505, %v506
  %v508 = vand.u32 %v507, 4294901760
  %509 = vmatpush.msra.mxu0 %v508
  %v510 = vand.u32 %v315, 4294901760
  %v511 = vsub.f32 %v315, %v510
  %v512 = vand.u32 %v511, 4294901760
  %v513 = vsub.f32 %v511, %v512
  %v514 = vand.u32 %v513, 4294901760
  %515 = vmatpush.msra.mxu0 %v514
  %v516 = vand.u32 %v308, 4294901760
  %517 = vmatmul.f32.gmra.mxu0 %v516
  %v518 = vpop.f32.mrf.mxu0
  %v519 = vadd.f32 %v370, %v518
  %v520 = vand.u32 %v309, 4294901760
  %521 = vmatmul.f32.gmra.mxu0 %v520
  %v522 = vpop.f32.mrf.mxu0
  %v523 = vadd.f32 %v378, %v522
  %v524 = vand.u32 %v310, 4294901760
  %525 = vmatmul.f32.gmra.mxu0 %v524
  %v526 = vpop.f32.mrf.mxu0
  %v527 = vadd.f32 %v386, %v526
  %v528 = vand.u32 %v311, 4294901760
  %529 = vmatmul.f32.gmra.mxu0 %v528
  %v530 = vpop.f32.mrf.mxu0
  %v531 = vadd.f32 %v394, %v530
  %v532 = vand.u32 %v312, 4294901760
  %533 = vmatmul.f32.gmra.mxu0 %v532
  %v534 = vpop.f32.mrf.mxu0
  %v535 = vadd.f32 %v402, %v534
  %v536 = vand.u32 %v313, 4294901760
  %537 = vmatmul.f32.gmra.mxu0 %v536
  %v538 = vpop.f32.mrf.mxu0
  %v539 = vadd.f32 %v410, %v538
  %v540 = vand.u32 %v314, 4294901760
  %541 = vmatmul.f32.gmra.mxu0 %v540
  %v542 = vpop.f32.mrf.mxu0
  %v543 = vadd.f32 %v418, %v542
  %544 = vdwg.mxu0
  %v545 = vand.u32 %v330, 4294901760
  %v546 = vsub.f32 %v330, %v545
  %547 = vmatpush.msra.mxu0 %v546
  %v548 = vand.u32 %v329, 4294901760
  %v549 = vsub.f32 %v329, %v548
  %550 = vmatpush.msra.mxu0 %v549
  %v551 = vand.u32 %v328, 4294901760
  %v552 = vsub.f32 %v328, %v551
  %553 = vmatpush.msra.mxu0 %v552
  %v554 = vand.u32 %v327, 4294901760
  %v555 = vsub.f32 %v327, %v554
  %556 = vmatpush.msra.mxu0 %v555
  %v557 = vand.u32 %v326, 4294901760
  %v558 = vsub.f32 %v326, %v557
  %559 = vmatpush.msra.mxu0 %v558
  %v560 = vand.u32 %v325, 4294901760
  %v561 = vsub.f32 %v325, %v560
  %562 = vmatpush.msra.mxu0 %v561
  %v563 = vand.u32 %v324, 4294901760
  %v564 = vsub.f32 %v324, %v563
  %565 = vmatpush.msra.mxu0 %v564
  %v566 = vand.u32 %v323, 4294901760
  %v567 = vsub.f32 %v323, %v566
  %568 = vmatpush.msra.mxu0 %v567
  %v569 = vand.u32 %v322, 4294901760
  %v570 = vsub.f32 %v322, %v569
  %571 = vmatpush.msra.mxu0 %v570
  %v572 = vand.u32 %v321, 4294901760
  %v573 = vsub.f32 %v321, %v572
  %574 = vmatpush.msra.mxu0 %v573
  %v575 = vand.u32 %v320, 4294901760
  %v576 = vsub.f32 %v320, %v575
  %577 = vmatpush.msra.mxu0 %v576
  %v578 = vand.u32 %v319, 4294901760
  %v579 = vsub.f32 %v319, %v578
  %580 = vmatpush.msra.mxu0 %v579
  %v581 = vand.u32 %v318, 4294901760
  %v582 = vsub.f32 %v318, %v581
  %583 = vmatpush.msra.mxu0 %v582
  %v584 = vand.u32 %v317, 4294901760
  %v585 = vsub.f32 %v317, %v584
  %586 = vmatpush.msra.mxu0 %v585
  %v587 = vand.u32 %v316, 4294901760
  %v588 = vsub.f32 %v316, %v587
  %589 = vmatpush.msra.mxu0 %v588
  %v590 = vand.u32 %v315, 4294901760
  %v591 = vsub.f32 %v315, %v590
  %592 = vmatpush.msra.mxu0 %v591
  %v593 = vand.u32 %v308, 4294901760
  %v594 = vsub.f32 %v308, %v593
  %595 = vmatmul.f32.gmra.mxu0 %v594
  %v596 = vpop.f32.mrf.mxu0
  %v597 = vadd.f32 %v519, %v596
  %v598 = vand.u32 %v309, 4294901760
  %v599 = vsub.f32 %v309, %v598
  %600 = vmatmul.f32.gmra.mxu0 %v599
  %v601 = vpop.f32.mrf.mxu0
  %v602 = vadd.f32 %v523, %v601
  %v603 = vand.u32 %v310, 4294901760
  %v604 = vsub.f32 %v310, %v603
  %605 = vmatmul.f32.gmra.mxu0 %v604
  %v606 = vpop.f32.mrf.mxu0
  %v607 = vadd.f32 %v527, %v606
  %v608 = vand.u32 %v311, 4294901760
  %v609 = vsub.f32 %v311, %v608
  %610 = vmatmul.f32.gmra.mxu0 %v609
  %v611 = vpop.f32.mrf.mxu0
  %v612 = vadd.f32 %v531, %v611
  %v613 = vand.u32 %v312, 4294901760
  %v614 = vsub.f32 %v312, %v613
  %615 = vmatmul.f32.gmra.mxu0 %v614
  %v616 = vpop.f32.mrf.mxu0
  %v617 = vadd.f32 %v535, %v616
  %v618 = vand.u32 %v313, 4294901760
  %v619 = vsub.f32 %v313, %v618
  %620 = vmatmul.f32.gmra.mxu0 %v619
  %v621 = vpop.f32.mrf.mxu0
  %v622 = vadd.f32 %v539, %v621
  %v623 = vand.u32 %v314, 4294901760
  %v624 = vsub.f32 %v314, %v623
  %625 = vmatmul.f32.gmra.mxu0 %v624
  %v626 = vpop.f32.mrf.mxu0
  %v627 = vadd.f32 %v543, %v626
  %628 = vdwg.mxu0
  %v629 = vand.u32 %v330, 4294901760
  %630 = vmatpush.msra.mxu0 %v629
  %v631 = vand.u32 %v329, 4294901760
  %632 = vmatpush.msra.mxu0 %v631
  %v633 = vand.u32 %v328, 4294901760
  %634 = vmatpush.msra.mxu0 %v633
  %v635 = vand.u32 %v327, 4294901760
  %636 = vmatpush.msra.mxu0 %v635
  %v637 = vand.u32 %v326, 4294901760
  %638 = vmatpush.msra.mxu0 %v637
  %v639 = vand.u32 %v325, 4294901760
  %640 = vmatpush.msra.mxu0 %v639
  %v641 = vand.u32 %v324, 4294901760
  %642 = vmatpush.msra.mxu0 %v641
  %v643 = vand.u32 %v323, 4294901760
  %644 = vmatpush.msra.mxu0 %v643
  %v645 = vand.u32 %v322, 4294901760
  %646 = vmatpush.msra.mxu0 %v645
  %v647 = vand.u32 %v321, 4294901760
  %648 = vmatpush.msra.mxu0 %v647
  %v649 = vand.u32 %v320, 4294901760
  %650 = vmatpush.msra.mxu0 %v649
  %v651 = vand.u32 %v319, 4294901760
  %652 = vmatpush.msra.mxu0 %v651
  %v653 = vand.u32 %v318, 4294901760
  %654 = vmatpush.msra.mxu0 %v653
  %v655 = vand.u32 %v317, 4294901760
  %656 = vmatpush.msra.mxu0 %v655
  %v657 = vand.u32 %v316, 4294901760
  %658 = vmatpush.msra.mxu0 %v657
  %v659 = vand.u32 %v315, 4294901760
  %660 = vmatpush.msra.mxu0 %v659
  %v661 = vand.u32 %v308, 4294901760
  %v662 = vsub.f32 %v308, %v661
  %v663 = vand.u32 %v662, 4294901760
  %664 = vmatmul.f32.gmra.mxu0 %v663
  %v665 = vpop.f32.mrf.mxu0
  %v666 = vadd.f32 %v597, %v665
  %v667 = vand.u32 %v309, 4294901760
  %v668 = vsub.f32 %v309, %v667
  %v669 = vand.u32 %v668, 4294901760
  %670 = vmatmul.f32.gmra.mxu0 %v669
  %v671 = vpop.f32.mrf.mxu0
  %v672 = vadd.f32 %v602, %v671
  %v673 = vand.u32 %v310, 4294901760
  %v674 = vsub.f32 %v310, %v673
  %v675 = vand.u32 %v674, 4294901760
  %676 = vmatmul.f32.gmra.mxu0 %v675
  %v677 = vpop.f32.mrf.mxu0
  %v678 = vadd.f32 %v607, %v677
  %v679 = vand.u32 %v311, 4294901760
  %v680 = vsub.f32 %v311, %v679
  %v681 = vand.u32 %v680, 4294901760
  %682 = vmatmul.f32.gmra.mxu0 %v681
  %v683 = vpop.f32.mrf.mxu0
  %v684 = vadd.f32 %v612, %v683
  %v685 = vand.u32 %v312, 4294901760
  %v686 = vsub.f32 %v312, %v685
  %v687 = vand.u32 %v686, 4294901760
  %688 = vmatmul.f32.gmra.mxu0 %v687
  %v689 = vpop.f32.mrf.mxu0
  %v690 = vadd.f32 %v617, %v689
  %v691 = vand.u32 %v313, 4294901760
  %v692 = vsub.f32 %v313, %v691
  %v693 = vand.u32 %v692, 4294901760
  %694 = vmatmul.f32.gmra.mxu0 %v693
  %v695 = vpop.f32.mrf.mxu0
  %v696 = vadd.f32 %v622, %v695
  %v697 = vand.u32 %v314, 4294901760
  %v698 = vsub.f32 %v314, %v697
  %v699 = vand.u32 %v698, 4294901760
  %700 = vmatmul.f32.gmra.mxu0 %v699
  %v701 = vpop.f32.mrf.mxu0
  %v702 = vadd.f32 %v627, %v701
  %703 = vdwg.mxu0
  %v704 = vand.u32 %v330, 4294901760
  %v705 = vsub.f32 %v330, %v704
  %v706 = vand.u32 %v705, 4294901760
  %707 = vmatpush.msra.mxu0 %v706
  %v708 = vand.u32 %v329, 4294901760
  %v709 = vsub.f32 %v329, %v708
  %v710 = vand.u32 %v709, 4294901760
  %711 = vmatpush.msra.mxu0 %v710
  %v712 = vand.u32 %v328, 4294901760
  %v713 = vsub.f32 %v328, %v712
  %v714 = vand.u32 %v713, 4294901760
  %715 = vmatpush.msra.mxu0 %v714
  %v716 = vand.u32 %v327, 4294901760
  %v717 = vsub.f32 %v327, %v716
  %v718 = vand.u32 %v717, 4294901760
  %719 = vmatpush.msra.mxu0 %v718
  %v720 = vand.u32 %v326, 4294901760
  %v721 = vsub.f32 %v326, %v720
  %v722 = vand.u32 %v721, 4294901760
  %723 = vmatpush.msra.mxu0 %v722
  %v724 = vand.u32 %v325, 4294901760
  %v725 = vsub.f32 %v325, %v724
  %v726 = vand.u32 %v725, 4294901760
  %727 = vmatpush.msra.mxu0 %v726
  %v728 = vand.u32 %v324, 4294901760
  %v729 = vsub.f32 %v324, %v728
  %v730 = vand.u32 %v729, 4294901760
  %731 = vmatpush.msra.mxu0 %v730
  %v732 = vand.u32 %v323, 4294901760
  %v733 = vsub.f32 %v323, %v732
  %v734 = vand.u32 %v733, 4294901760
  %735 = vmatpush.msra.mxu0 %v734
  %v736 = vand.u32 %v322, 4294901760
  %v737 = vsub.f32 %v322, %v736
  %v738 = vand.u32 %v737, 4294901760
  %739 = vmatpush.msra.mxu0 %v738
  %v740 = vand.u32 %v321, 4294901760
  %v741 = vsub.f32 %v321, %v740
  %v742 = vand.u32 %v741, 4294901760
  %743 = vmatpush.msra.mxu0 %v742
  %v744 = vand.u32 %v320, 4294901760
  %v745 = vsub.f32 %v320, %v744
  %v746 = vand.u32 %v745, 4294901760
  %747 = vmatpush.msra.mxu0 %v746
  %v748 = vand.u32 %v319, 4294901760
  %v749 = vsub.f32 %v319, %v748
  %v750 = vand.u32 %v749, 4294901760
  %751 = vmatpush.msra.mxu0 %v750
  %v752 = vand.u32 %v318, 4294901760
  %v753 = vsub.f32 %v318, %v752
  %v754 = vand.u32 %v753, 4294901760
  %755 = vmatpush.msra.mxu0 %v754
  %v756 = vand.u32 %v317, 4294901760
  %v757 = vsub.f32 %v317, %v756
  %v758 = vand.u32 %v757, 4294901760
  %759 = vmatpush.msra.mxu0 %v758
  %v760 = vand.u32 %v316, 4294901760
  %v761 = vsub.f32 %v316, %v760
  %v762 = vand.u32 %v761, 4294901760
  %763 = vmatpush.msra.mxu0 %v762
  %v764 = vand.u32 %v315, 4294901760
  %v765 = vsub.f32 %v315, %v764
  %v766 = vand.u32 %v765, 4294901760
  %767 = vmatpush.msra.mxu0 %v766
  %v768 = vand.u32 %v308, 4294901760
  %769 = vmatmul.f32.gmra.mxu0 %v768
  %v770 = vpop.f32.mrf.mxu0
  %v771 = vadd.f32 %v666, %v770
  %v772 = vand.u32 %v309, 4294901760
  %773 = vmatmul.f32.gmra.mxu0 %v772
  %v774 = vpop.f32.mrf.mxu0
  %v775 = vadd.f32 %v672, %v774
  %v776 = vand.u32 %v310, 4294901760
  %777 = vmatmul.f32.gmra.mxu0 %v776
  %v778 = vpop.f32.mrf.mxu0
  %v779 = vadd.f32 %v678, %v778
  %v780 = vand.u32 %v311, 4294901760
  %781 = vmatmul.f32.gmra.mxu0 %v780
  %v782 = vpop.f32.mrf.mxu0
  %v783 = vadd.f32 %v684, %v782
  %v784 = vand.u32 %v312, 4294901760
  %785 = vmatmul.f32.gmra.mxu0 %v784
  %v786 = vpop.f32.mrf.mxu0
  %v787 = vadd.f32 %v690, %v786
  %v788 = vand.u32 %v313, 4294901760
  %789 = vmatmul.f32.gmra.mxu0 %v788
  %v790 = vpop.f32.mrf.mxu0
  %v791 = vadd.f32 %v696, %v790
  %v792 = vand.u32 %v314, 4294901760
  %793 = vmatmul.f32.gmra.mxu0 %v792
  %v794 = vpop.f32.mrf.mxu0
  %v795 = vadd.f32 %v702, %v794
  %796 = vdwg.mxu0
  %v797 = vand.u32 %v330, 4294901760
  %798 = vmatpush.msra.mxu0 %v797
  %v799 = vand.u32 %v329, 4294901760
  %800 = vmatpush.msra.mxu0 %v799
  %v801 = vand.u32 %v328, 4294901760
  %802 = vmatpush.msra.mxu0 %v801
  %v803 = vand.u32 %v327, 4294901760
  %804 = vmatpush.msra.mxu0 %v803
  %v805 = vand.u32 %v326, 4294901760
  %806 = vmatpush.msra.mxu0 %v805
  %v807 = vand.u32 %v325, 4294901760
  %808 = vmatpush.msra.mxu0 %v807
  %v809 = vand.u32 %v324, 4294901760
  %810 = vmatpush.msra.mxu0 %v809
  %v811 = vand.u32 %v323, 4294901760
  %812 = vmatpush.msra.mxu0 %v811
  %v813 = vand.u32 %v322, 4294901760
  %814 = vmatpush.msra.mxu0 %v813
  %v815 = vand.u32 %v321, 4294901760
  %816 = vmatpush.msra.mxu0 %v815
  %v817 = vand.u32 %v320, 4294901760
  %818 = vmatpush.msra.mxu0 %v817
  %v819 = vand.u32 %v319, 4294901760
  %820 = vmatpush.msra.mxu0 %v819
  %v821 = vand.u32 %v318, 4294901760
  %822 = vmatpush.msra.mxu0 %v821
  %v823 = vand.u32 %v317, 4294901760
  %824 = vmatpush.msra.mxu0 %v823
  %v825 = vand.u32 %v316, 4294901760
  %826 = vmatpush.msra.mxu0 %v825
  %v827 = vand.u32 %v315, 4294901760
  %828 = vmatpush.msra.mxu0 %v827
  %v829 = vand.u32 %v308, 4294901760
  %830 = vmatmul.f32.gmra.mxu0 %v829
  %v831 = vpop.f32.mrf.mxu0
  %v832 = vadd.f32 %v771, %v831
  %v833 = vand.u32 %v309, 4294901760
  %834 = vmatmul.f32.gmra.mxu0 %v833
  %v835 = vpop.f32.mrf.mxu0
  %v836 = vadd.f32 %v775, %v835
  %v837 = vand.u32 %v310, 4294901760
  %838 = vmatmul.f32.gmra.mxu0 %v837
  %v839 = vpop.f32.mrf.mxu0
  %v840 = vadd.f32 %v779, %v839
  %v841 = vand.u32 %v311, 4294901760
  %842 = vmatmul.f32.gmra.mxu0 %v841
  %v843 = vpop.f32.mrf.mxu0
  %v844 = vadd.f32 %v783, %v843
  %v845 = vand.u32 %v312, 4294901760
  %846 = vmatmul.f32.gmra.mxu0 %v845
  %v847 = vpop.f32.mrf.mxu0
  %v848 = vadd.f32 %v787, %v847
  %v849 = vand.u32 %v313, 4294901760
  %850 = vmatmul.f32.gmra.mxu0 %v849
  %v851 = vpop.f32.mrf.mxu0
  %v852 = vadd.f32 %v791, %v851
  %v853 = vand.u32 %v314, 4294901760
  %854 = vmatmul.f32.gmra.mxu0 %v853
  %v855 = vpop.f32.mrf.mxu0
  %v856 = vadd.f32 %v795, %v855
  %857 = vdwg.mxu0
  %v858 = vand.u32 %v307, 4294901760
  %859 = vmatpush.msra.mxu0 %v858
  %v860 = vand.u32 %v306, 4294901760
  %861 = vmatpush.msra.mxu0 %v860
  %v862 = vand.u32 %v305, 4294901760
  %863 = vmatpush.msra.mxu0 %v862
  %v864 = vand.u32 %v304, 4294901760
  %865 = vmatpush.msra.mxu0 %v864
  %v866 = vand.u32 %v303, 4294901760
  %867 = vmatpush.msra.mxu0 %v866
  %v868 = vand.u32 %v302, 4294901760
  %869 = vmatpush.msra.mxu0 %v868
  %v870 = vand.u32 %v301, 4294901760
  %871 = vmatpush.msra.mxu0 %v870
  %v872 = vand.u32 %v300, 4294901760
  %873 = vmatpush.msra.mxu0 %v872
  %v874 = vand.u32 %v299, 4294901760
  %875 = vmatpush.msra.mxu0 %v874
  %v876 = vand.u32 %v298, 4294901760
  %877 = vmatpush.msra.mxu0 %v876
  %v878 = vand.u32 %v297, 4294901760
  %879 = vmatpush.msra.mxu0 %v878
  %v880 = vand.u32 %v296, 4294901760
  %881 = vmatpush.msra.mxu0 %v880
  %v882 = vand.u32 %v295, 4294901760
  %883 = vmatpush.msra.mxu0 %v882
  %v884 = vand.u32 %v294, 4294901760
  %885 = vmatpush.msra.mxu0 %v884
  %v886 = vand.u32 %v293, 4294901760
  %887 = vmatpush.msra.mxu0 %v886
  %v888 = vand.u32 %v292, 4294901760
  %889 = vmatpush.msra.mxu0 %v888
  %v890 = vand.u32 %v285, 4294901760
  %v891 = vsub.f32 %v285, %v890
  %v892 = vand.u32 %v891, 4294901760
  %v893 = vsub.f32 %v891, %v892
  %v894 = vand.u32 %v893, 4294901760
  %895 = vmatmul.f32.gmra.mxu0 %v894
  %v896 = vpop.f32.mrf.mxu0
  %v897 = vadd.f32 %v832, %v896
  %v898 = vand.u32 %v286, 4294901760
  %v899 = vsub.f32 %v286, %v898
  %v900 = vand.u32 %v899, 4294901760
  %v901 = vsub.f32 %v899, %v900
  %v902 = vand.u32 %v901, 4294901760
  %903 = vmatmul.f32.gmra.mxu0 %v902
  %v904 = vpop.f32.mrf.mxu0
  %v905 = vadd.f32 %v836, %v904
  %v906 = vand.u32 %v287, 4294901760
  %v907 = vsub.f32 %v287, %v906
  %v908 = vand.u32 %v907, 4294901760
  %v909 = vsub.f32 %v907, %v908
  %v910 = vand.u32 %v909, 4294901760
  %911 = vmatmul.f32.gmra.mxu0 %v910
  %v912 = vpop.f32.mrf.mxu0
  %v913 = vadd.f32 %v840, %v912
  %v914 = vand.u32 %v288, 4294901760
  %v915 = vsub.f32 %v288, %v914
  %v916 = vand.u32 %v915, 4294901760
  %v917 = vsub.f32 %v915, %v916
  %v918 = vand.u32 %v917, 4294901760
  %919 = vmatmul.f32.gmra.mxu0 %v918
  %v920 = vpop.f32.mrf.mxu0
  %v921 = vadd.f32 %v844, %v920
  %v922 = vand.u32 %v289, 4294901760
  %v923 = vsub.f32 %v289, %v922
  %v924 = vand.u32 %v923, 4294901760
  %v925 = vsub.f32 %v923, %v924
  %v926 = vand.u32 %v925, 4294901760
  %927 = vmatmul.f32.gmra.mxu0 %v926
  %v928 = vpop.f32.mrf.mxu0
  %v929 = vadd.f32 %v848, %v928
  %v930 = vand.u32 %v290, 4294901760
  %v931 = vsub.f32 %v290, %v930
  %v932 = vand.u32 %v931, 4294901760
  %v933 = vsub.f32 %v931, %v932
  %v934 = vand.u32 %v933, 4294901760
  %935 = vmatmul.f32.gmra.mxu0 %v934
  %v936 = vpop.f32.mrf.mxu0
  %v937 = vadd.f32 %v852, %v936
  %v938 = vand.u32 %v291, 4294901760
  %v939 = vsub.f32 %v291, %v938
  %v940 = vand.u32 %v939, 4294901760
  %v941 = vsub.f32 %v939, %v940
  %v942 = vand.u32 %v941, 4294901760
  %943 = vmatmul.f32.gmra.mxu0 %v942
  %v944 = vpop.f32.mrf.mxu0
  %v945 = vadd.f32 %v856, %v944
  %946 = vdwg.mxu0
  %v947 = vand.u32 %v307, 4294901760
  %v948 = vsub.f32 %v307, %v947
  %v949 = vand.u32 %v948, 4294901760
  %v950 = vsub.f32 %v948, %v949
  %v951 = vand.u32 %v950, 4294901760
  %952 = vmatpush.msra.mxu0 %v951
  %v953 = vand.u32 %v306, 4294901760
  %v954 = vsub.f32 %v306, %v953
  %v955 = vand.u32 %v954, 4294901760
  %v956 = vsub.f32 %v954, %v955
  %v957 = vand.u32 %v956, 4294901760
  %958 = vmatpush.msra.mxu0 %v957
  %v959 = vand.u32 %v305, 4294901760
  %v960 = vsub.f32 %v305, %v959
  %v961 = vand.u32 %v960, 4294901760
  %v962 = vsub.f32 %v960, %v961
  %v963 = vand.u32 %v962, 4294901760
  %964 = vmatpush.msra.mxu0 %v963
  %v965 = vand.u32 %v304, 4294901760
  %v966 = vsub.f32 %v304, %v965
  %v967 = vand.u32 %v966, 4294901760
  %v968 = vsub.f32 %v966, %v967
  %v969 = vand.u32 %v968, 4294901760
  %970 = vmatpush.msra.mxu0 %v969
  %v971 = vand.u32 %v303, 4294901760
  %v972 = vsub.f32 %v303, %v971
  %v973 = vand.u32 %v972, 4294901760
  %v974 = vsub.f32 %v972, %v973
  %v975 = vand.u32 %v974, 4294901760
  %976 = vmatpush.msra.mxu0 %v975
  %v977 = vand.u32 %v302, 4294901760
  %v978 = vsub.f32 %v302, %v977
  %v979 = vand.u32 %v978, 4294901760
  %v980 = vsub.f32 %v978, %v979
  %v981 = vand.u32 %v980, 4294901760
  %982 = vmatpush.msra.mxu0 %v981
  %v983 = vand.u32 %v301, 4294901760
  %v984 = vsub.f32 %v301, %v983
  %v985 = vand.u32 %v984, 4294901760
  %v986 = vsub.f32 %v984, %v985
  %v987 = vand.u32 %v986, 4294901760
  %988 = vmatpush.msra.mxu0 %v987
  %v989 = vand.u32 %v300, 4294901760
  %v990 = vsub.f32 %v300, %v989
  %v991 = vand.u32 %v990, 4294901760
  %v992 = vsub.f32 %v990, %v991
  %v993 = vand.u32 %v992, 4294901760
  %994 = vmatpush.msra.mxu0 %v993
  %v995 = vand.u32 %v299, 4294901760
  %v996 = vsub.f32 %v299, %v995
  %v997 = vand.u32 %v996, 4294901760
  %v998 = vsub.f32 %v996, %v997
  %v999 = vand.u32 %v998, 4294901760
  %1000 = vmatpush.msra.mxu0 %v999
  %v1001 = vand.u32 %v298, 4294901760
  %v1002 = vsub.f32 %v298, %v1001
  %v1003 = vand.u32 %v1002, 4294901760
  %v1004 = vsub.f32 %v1002, %v1003
  %v1005 = vand.u32 %v1004, 4294901760
  %1006 = vmatpush.msra.mxu0 %v1005
  %v1007 = vand.u32 %v297, 4294901760
  %v1008 = vsub.f32 %v297, %v1007
  %v1009 = vand.u32 %v1008, 4294901760
  %v1010 = vsub.f32 %v1008, %v1009
  %v1011 = vand.u32 %v1010, 4294901760
  %1012 = vmatpush.msra.mxu0 %v1011
  %v1013 = vand.u32 %v296, 4294901760
  %v1014 = vsub.f32 %v296, %v1013
  %v1015 = vand.u32 %v1014, 4294901760
  %v1016 = vsub.f32 %v1014, %v1015
  %v1017 = vand.u32 %v1016, 4294901760
  %1018 = vmatpush.msra.mxu0 %v1017
  %v1019 = vand.u32 %v295, 4294901760
  %v1020 = vsub.f32 %v295, %v1019
  %v1021 = vand.u32 %v1020, 4294901760
  %v1022 = vsub.f32 %v1020, %v1021
  %v1023 = vand.u32 %v1022, 4294901760
  %1024 = vmatpush.msra.mxu0 %v1023
  %v1025 = vand.u32 %v294, 4294901760
  %v1026 = vsub.f32 %v294, %v1025
  %v1027 = vand.u32 %v1026, 4294901760
  %v1028 = vsub.f32 %v1026, %v1027
  %v1029 = vand.u32 %v1028, 4294901760
  %1030 = vmatpush.msra.mxu0 %v1029
  %v1031 = vand.u32 %v293, 4294901760
  %v1032 = vsub.f32 %v293, %v1031
  %v1033 = vand.u32 %v1032, 4294901760
  %v1034 = vsub.f32 %v1032, %v1033
  %v1035 = vand.u32 %v1034, 4294901760
  %1036 = vmatpush.msra.mxu0 %v1035
  %v1037 = vand.u32 %v292, 4294901760
  %v1038 = vsub.f32 %v292, %v1037
  %v1039 = vand.u32 %v1038, 4294901760
  %v1040 = vsub.f32 %v1038, %v1039
  %v1041 = vand.u32 %v1040, 4294901760
  %1042 = vmatpush.msra.mxu0 %v1041
  %v1043 = vand.u32 %v285, 4294901760
  %1044 = vmatmul.f32.gmra.mxu0 %v1043
  %v1045 = vpop.f32.mrf.mxu0
  %v1046 = vadd.f32 %v897, %v1045
  %v1047 = vand.u32 %v286, 4294901760
  %1048 = vmatmul.f32.gmra.mxu0 %v1047
  %v1049 = vpop.f32.mrf.mxu0
  %v1050 = vadd.f32 %v905, %v1049
  %v1051 = vand.u32 %v287, 4294901760
  %1052 = vmatmul.f32.gmra.mxu0 %v1051
  %v1053 = vpop.f32.mrf.mxu0
  %v1054 = vadd.f32 %v913, %v1053
  %v1055 = vand.u32 %v288, 4294901760
  %1056 = vmatmul.f32.gmra.mxu0 %v1055
  %v1057 = vpop.f32.mrf.mxu0
  %v1058 = vadd.f32 %v921, %v1057
  %v1059 = vand.u32 %v289, 4294901760
  %1060 = vmatmul.f32.gmra.mxu0 %v1059
  %v1061 = vpop.f32.mrf.mxu0
  %v1062 = vadd.f32 %v929, %v1061
  %v1063 = vand.u32 %v290, 4294901760
  %1064 = vmatmul.f32.gmra.mxu0 %v1063
  %v1065 = vpop.f32.mrf.mxu0
  %v1066 = vadd.f32 %v937, %v1065
  %v1067 = vand.u32 %v291, 4294901760
  %1068 = vmatmul.f32.gmra.mxu0 %v1067
  %v1069 = vpop.f32.mrf.mxu0
  %v1070 = vadd.f32 %v945, %v1069
  %1071 = vdwg.mxu0
  %v1072 = vand.u32 %v307, 4294901760
  %v1073 = vsub.f32 %v307, %v1072
  %1074 = vmatpush.msra.mxu0 %v1073
  %v1075 = vand.u32 %v306, 4294901760
  %v1076 = vsub.f32 %v306, %v1075
  %1077 = vmatpush.msra.mxu0 %v1076
  %v1078 = vand.u32 %v305, 4294901760
  %v1079 = vsub.f32 %v305, %v1078
  %1080 = vmatpush.msra.mxu0 %v1079
  %v1081 = vand.u32 %v304, 4294901760
  %v1082 = vsub.f32 %v304, %v1081
  %1083 = vmatpush.msra.mxu0 %v1082
  %v1084 = vand.u32 %v303, 4294901760
  %v1085 = vsub.f32 %v303, %v1084
  %1086 = vmatpush.msra.mxu0 %v1085
  %v1087 = vand.u32 %v302, 4294901760
  %v1088 = vsub.f32 %v302, %v1087
  %1089 = vmatpush.msra.mxu0 %v1088
  %v1090 = vand.u32 %v301, 4294901760
  %v1091 = vsub.f32 %v301, %v1090
  %1092 = vmatpush.msra.mxu0 %v1091
  %v1093 = vand.u32 %v300, 4294901760
  %v1094 = vsub.f32 %v300, %v1093
  %1095 = vmatpush.msra.mxu0 %v1094
  %v1096 = vand.u32 %v299, 4294901760
  %v1097 = vsub.f32 %v299, %v1096
  %1098 = vmatpush.msra.mxu0 %v1097
  %v1099 = vand.u32 %v298, 4294901760
  %v1100 = vsub.f32 %v298, %v1099
  %1101 = vmatpush.msra.mxu0 %v1100
  %v1102 = vand.u32 %v297, 4294901760
  %v1103 = vsub.f32 %v297, %v1102
  %1104 = vmatpush.msra.mxu0 %v1103
  %v1105 = vand.u32 %v296, 4294901760
  %v1106 = vsub.f32 %v296, %v1105
  %1107 = vmatpush.msra.mxu0 %v1106
  %v1108 = vand.u32 %v295, 4294901760
  %v1109 = vsub.f32 %v295, %v1108
  %1110 = vmatpush.msra.mxu0 %v1109
  %v1111 = vand.u32 %v294, 4294901760
  %v1112 = vsub.f32 %v294, %v1111
  %1113 = vmatpush.msra.mxu0 %v1112
  %v1114 = vand.u32 %v293, 4294901760
  %v1115 = vsub.f32 %v293, %v1114
  %1116 = vmatpush.msra.mxu0 %v1115
  %v1117 = vand.u32 %v292, 4294901760
  %v1118 = vsub.f32 %v292, %v1117
  %1119 = vmatpush.msra.mxu0 %v1118
  %v1120 = vand.u32 %v285, 4294901760
  %v1121 = vsub.f32 %v285, %v1120
  %1122 = vmatmul.f32.gmra.mxu0 %v1121
  %v1123 = vpop.f32.mrf.mxu0
  %v1124 = vadd.f32 %v1046, %v1123
  %v1125 = vand.u32 %v286, 4294901760
  %v1126 = vsub.f32 %v286, %v1125
  %1127 = vmatmul.f32.gmra.mxu0 %v1126
  %v1128 = vpop.f32.mrf.mxu0
  %v1129 = vadd.f32 %v1050, %v1128
  %v1130 = vand.u32 %v287, 4294901760
  %v1131 = vsub.f32 %v287, %v1130
  %1132 = vmatmul.f32.gmra.mxu0 %v1131
  %v1133 = vpop.f32.mrf.mxu0
  %v1134 = vadd.f32 %v1054, %v1133
  %v1135 = vand.u32 %v288, 4294901760
  %v1136 = vsub.f32 %v288, %v1135
  %1137 = vmatmul.f32.gmra.mxu0 %v1136
  %v1138 = vpop.f32.mrf.mxu0
  %v1139 = vadd.f32 %v1058, %v1138
  %v1140 = vand.u32 %v289, 4294901760
  %v1141 = vsub.f32 %v289, %v1140
  %1142 = vmatmul.f32.gmra.mxu0 %v1141
  %v1143 = vpop.f32.mrf.mxu0
  %v1144 = vadd.f32 %v1062, %v1143
  %v1145 = vand.u32 %v290, 4294901760
  %v1146 = vsub.f32 %v290, %v1145
  %1147 = vmatmul.f32.gmra.mxu0 %v1146
  %v1148 = vpop.f32.mrf.mxu0
  %v1149 = vadd.f32 %v1066, %v1148
  %v1150 = vand.u32 %v291, 4294901760
  %v1151 = vsub.f32 %v291, %v1150
  %1152 = vmatmul.f32.gmra.mxu0 %v1151
  %v1153 = vpop.f32.mrf.mxu0
  %v1154 = vadd.f32 %v1070, %v1153
  %1155 = vdwg.mxu0
  %v1156 = vand.u32 %v307, 4294901760
  %1157 = vmatpush.msra.mxu0 %v1156
  %v1158 = vand.u32 %v306, 4294901760
  %1159 = vmatpush.msra.mxu0 %v1158
  %v1160 = vand.u32 %v305, 4294901760
  %1161 = vmatpush.msra.mxu0 %v1160
  %v1162 = vand.u32 %v304, 4294901760
  %1163 = vmatpush.msra.mxu0 %v1162
  %v1164 = vand.u32 %v303, 4294901760
  %1165 = vmatpush.msra.mxu0 %v1164
  %v1166 = vand.u32 %v302, 4294901760
  %1167 = vmatpush.msra.mxu0 %v1166
  %v1168 = vand.u32 %v301, 4294901760
  %1169 = vmatpush.msra.mxu0 %v1168
  %v1170 = vand.u32 %v300, 4294901760
  %1171 = vmatpush.msra.mxu0 %v1170
  %v1172 = vand.u32 %v299, 4294901760
  %1173 = vmatpush.msra.mxu0 %v1172
  %v1174 = vand.u32 %v298, 4294901760
  %1175 = vmatpush.msra.mxu0 %v1174
  %v1176 = vand.u32 %v297, 4294901760
  %1177 = vmatpush.msra.mxu0 %v1176
  %v1178 = vand.u32 %v296, 4294901760
  %1179 = vmatpush.msra.mxu0 %v1178
  %v1180 = vand.u32 %v295, 4294901760
  %1181 = vmatpush.msra.mxu0 %v1180
  %v1182 = vand.u32 %v294, 4294901760
  %1183 = vmatpush.msra.mxu0 %v1182
  %v1184 = vand.u32 %v293, 4294901760
  %1185 = vmatpush.msra.mxu0 %v1184
  %v1186 = vand.u32 %v292, 4294901760
  %1187 = vmatpush.msra.mxu0 %v1186
  %v1188 = vand.u32 %v285, 4294901760
  %v1189 = vsub.f32 %v285, %v1188
  %v1190 = vand.u32 %v1189, 4294901760
  %1191 = vmatmul.f32.gmra.mxu0 %v1190
  %v1192 = vpop.f32.mrf.mxu0
  %v1193 = vadd.f32 %v1124, %v1192
  %v1194 = vand.u32 %v286, 4294901760
  %v1195 = vsub.f32 %v286, %v1194
  %v1196 = vand.u32 %v1195, 4294901760
  %1197 = vmatmul.f32.gmra.mxu0 %v1196
  %v1198 = vpop.f32.mrf.mxu0
  %v1199 = vadd.f32 %v1129, %v1198
  %v1200 = vand.u32 %v287, 4294901760
  %v1201 = vsub.f32 %v287, %v1200
  %v1202 = vand.u32 %v1201, 4294901760
  %1203 = vmatmul.f32.gmra.mxu0 %v1202
  %v1204 = vpop.f32.mrf.mxu0
  %v1205 = vadd.f32 %v1134, %v1204
  %v1206 = vand.u32 %v288, 4294901760
  %v1207 = vsub.f32 %v288, %v1206
  %v1208 = vand.u32 %v1207, 4294901760
  %1209 = vmatmul.f32.gmra.mxu0 %v1208
  %v1210 = vpop.f32.mrf.mxu0
  %v1211 = vadd.f32 %v1139, %v1210
  %v1212 = vand.u32 %v289, 4294901760
  %v1213 = vsub.f32 %v289, %v1212
  %v1214 = vand.u32 %v1213, 4294901760
  %1215 = vmatmul.f32.gmra.mxu0 %v1214
  %v1216 = vpop.f32.mrf.mxu0
  %v1217 = vadd.f32 %v1144, %v1216
  %v1218 = vand.u32 %v290, 4294901760
  %v1219 = vsub.f32 %v290, %v1218
  %v1220 = vand.u32 %v1219, 4294901760
  %1221 = vmatmul.f32.gmra.mxu0 %v1220
  %v1222 = vpop.f32.mrf.mxu0
  %v1223 = vadd.f32 %v1149, %v1222
  %v1224 = vand.u32 %v291, 4294901760
  %v1225 = vsub.f32 %v291, %v1224
  %v1226 = vand.u32 %v1225, 4294901760
  %1227 = vmatmul.f32.gmra.mxu0 %v1226
  %v1228 = vpop.f32.mrf.mxu0
  %v1229 = vadd.f32 %v1154, %v1228
  %1230 = vdwg.mxu0
  %v1231 = vand.u32 %v307, 4294901760
  %v1232 = vsub.f32 %v307, %v1231
  %v1233 = vand.u32 %v1232, 4294901760
  %1234 = vmatpush.msra.mxu0 %v1233
  %v1235 = vand.u32 %v306, 4294901760
  %v1236 = vsub.f32 %v306, %v1235
  %v1237 = vand.u32 %v1236, 4294901760
  %1238 = vmatpush.msra.mxu0 %v1237
  %v1239 = vand.u32 %v305, 4294901760
  %v1240 = vsub.f32 %v305, %v1239
  %v1241 = vand.u32 %v1240, 4294901760
  %1242 = vmatpush.msra.mxu0 %v1241
  %v1243 = vand.u32 %v304, 4294901760
  %v1244 = vsub.f32 %v304, %v1243
  %v1245 = vand.u32 %v1244, 4294901760
  %1246 = vmatpush.msra.mxu0 %v1245
  %v1247 = vand.u32 %v303, 4294901760
  %v1248 = vsub.f32 %v303, %v1247
  %v1249 = vand.u32 %v1248, 4294901760
  %1250 = vmatpush.msra.mxu0 %v1249
  %v1251 = vand.u32 %v302, 4294901760
  %v1252 = vsub.f32 %v302, %v1251
  %v1253 = vand.u32 %v1252, 4294901760
  %1254 = vmatpush.msra.mxu0 %v1253
  %v1255 = vand.u32 %v301, 4294901760
  %v1256 = vsub.f32 %v301, %v1255
  %v1257 = vand.u32 %v1256, 4294901760
  %1258 = vmatpush.msra.mxu0 %v1257
  %v1259 = vand.u32 %v300, 4294901760
  %v1260 = vsub.f32 %v300, %v1259
  %v1261 = vand.u32 %v1260, 4294901760
  %1262 = vmatpush.msra.mxu0 %v1261
  %v1263 = vand.u32 %v299, 4294901760
  %v1264 = vsub.f32 %v299, %v1263
  %v1265 = vand.u32 %v1264, 4294901760
  %1266 = vmatpush.msra.mxu0 %v1265
  %v1267 = vand.u32 %v298, 4294901760
  %v1268 = vsub.f32 %v298, %v1267
  %v1269 = vand.u32 %v1268, 4294901760
  %1270 = vmatpush.msra.mxu0 %v1269
  %v1271 = vand.u32 %v297, 4294901760
  %v1272 = vsub.f32 %v297, %v1271
  %v1273 = vand.u32 %v1272, 4294901760
  %1274 = vmatpush.msra.mxu0 %v1273
  %v1275 = vand.u32 %v296, 4294901760
  %v1276 = vsub.f32 %v296, %v1275
  %v1277 = vand.u32 %v1276, 4294901760
  %1278 = vmatpush.msra.mxu0 %v1277
  %v1279 = vand.u32 %v295, 4294901760
  %v1280 = vsub.f32 %v295, %v1279
  %v1281 = vand.u32 %v1280, 4294901760
  %1282 = vmatpush.msra.mxu0 %v1281
  %v1283 = vand.u32 %v294, 4294901760
  %v1284 = vsub.f32 %v294, %v1283
  %v1285 = vand.u32 %v1284, 4294901760
  %1286 = vmatpush.msra.mxu0 %v1285
  %v1287 = vand.u32 %v293, 4294901760
  %v1288 = vsub.f32 %v293, %v1287
  %v1289 = vand.u32 %v1288, 4294901760
  %1290 = vmatpush.msra.mxu0 %v1289
  %v1291 = vand.u32 %v292, 4294901760
  %v1292 = vsub.f32 %v292, %v1291
  %v1293 = vand.u32 %v1292, 4294901760
  %1294 = vmatpush.msra.mxu0 %v1293
  %v1295 = vand.u32 %v285, 4294901760
  %1296 = vmatmul.f32.gmra.mxu0 %v1295
  %v1297 = vpop.f32.mrf.mxu0
  %v1298 = vadd.f32 %v1193, %v1297
  %v1299 = vand.u32 %v286, 4294901760
  %1300 = vmatmul.f32.gmra.mxu0 %v1299
  %v1301 = vpop.f32.mrf.mxu0
  %v1302 = vadd.f32 %v1199, %v1301
  %v1303 = vand.u32 %v287, 4294901760
  %1304 = vmatmul.f32.gmra.mxu0 %v1303
  %v1305 = vpop.f32.mrf.mxu0
  %v1306 = vadd.f32 %v1205, %v1305
  %v1307 = vand.u32 %v288, 4294901760
  %1308 = vmatmul.f32.gmra.mxu0 %v1307
  %v1309 = vpop.f32.mrf.mxu0
  %v1310 = vadd.f32 %v1211, %v1309
  %v1311 = vand.u32 %v289, 4294901760
  %1312 = vmatmul.f32.gmra.mxu0 %v1311
  %v1313 = vpop.f32.mrf.mxu0
  %v1314 = vadd.f32 %v1217, %v1313
  %v1315 = vand.u32 %v290, 4294901760
  %1316 = vmatmul.f32.gmra.mxu0 %v1315
  %v1317 = vpop.f32.mrf.mxu0
  %v1318 = vadd.f32 %v1223, %v1317
  %v1319 = vand.u32 %v291, 4294901760
  %1320 = vmatmul.f32.gmra.mxu0 %v1319
  %v1321 = vpop.f32.mrf.mxu0
  %v1322 = vadd.f32 %v1229, %v1321
  %1323 = vdwg.mxu0
  %v1324 = vand.u32 %v307, 4294901760
  %1325 = vmatpush.msra.mxu0 %v1324
  %v1326 = vand.u32 %v306, 4294901760
  %1327 = vmatpush.msra.mxu0 %v1326
  %v1328 = vand.u32 %v305, 4294901760
  %1329 = vmatpush.msra.mxu0 %v1328
  %v1330 = vand.u32 %v304, 4294901760
  %1331 = vmatpush.msra.mxu0 %v1330
  %v1332 = vand.u32 %v303, 4294901760
  %1333 = vmatpush.msra.mxu0 %v1332
  %v1334 = vand.u32 %v302, 4294901760
  %1335 = vmatpush.msra.mxu0 %v1334
  %v1336 = vand.u32 %v301, 4294901760
  %1337 = vmatpush.msra.mxu0 %v1336
  %v1338 = vand.u32 %v300, 4294901760
  %1339 = vmatpush.msra.mxu0 %v1338
  %v1340 = vand.u32 %v299, 4294901760
  %1341 = vmatpush.msra.mxu0 %v1340
  %v1342 = vand.u32 %v298, 4294901760
  %1343 = vmatpush.msra.mxu0 %v1342
  %v1344 = vand.u32 %v297, 4294901760
  %1345 = vmatpush.msra.mxu0 %v1344
  %v1346 = vand.u32 %v296, 4294901760
  %1347 = vmatpush.msra.mxu0 %v1346
  %v1348 = vand.u32 %v295, 4294901760
  %1349 = vmatpush.msra.mxu0 %v1348
  %v1350 = vand.u32 %v294, 4294901760
  %1351 = vmatpush.msra.mxu0 %v1350
  %v1352 = vand.u32 %v293, 4294901760
  %1353 = vmatpush.msra.mxu0 %v1352
  %v1354 = vand.u32 %v292, 4294901760
  %1355 = vmatpush.msra.mxu0 %v1354
  %v1356 = vand.u32 %v285, 4294901760
  %1357 = vmatmul.f32.gmra.mxu0 %v1356
  %v1358 = vpop.f32.mrf.mxu0
  %v1359 = vadd.f32 %v1298, %v1358
  %v1360 = vand.u32 %v286, 4294901760
  %1361 = vmatmul.f32.gmra.mxu0 %v1360
  %v1362 = vpop.f32.mrf.mxu0
  %v1363 = vadd.f32 %v1302, %v1362
  %v1364 = vand.u32 %v287, 4294901760
  %1365 = vmatmul.f32.gmra.mxu0 %v1364
  %v1366 = vpop.f32.mrf.mxu0
  %v1367 = vadd.f32 %v1306, %v1366
  %v1368 = vand.u32 %v288, 4294901760
  %1369 = vmatmul.f32.gmra.mxu0 %v1368
  %v1370 = vpop.f32.mrf.mxu0
  %v1371 = vadd.f32 %v1310, %v1370
  %v1372 = vand.u32 %v289, 4294901760
  %1373 = vmatmul.f32.gmra.mxu0 %v1372
  %v1374 = vpop.f32.mrf.mxu0
  %v1375 = vadd.f32 %v1314, %v1374
  %v1376 = vand.u32 %v290, 4294901760
  %1377 = vmatmul.f32.gmra.mxu0 %v1376
  %v1378 = vpop.f32.mrf.mxu0
  %v1379 = vadd.f32 %v1318, %v1378
  %v1380 = vand.u32 %v291, 4294901760
  %1381 = vmatmul.f32.gmra.mxu0 %v1380
  %v1382 = vpop.f32.mrf.mxu0
  %v1383 = vadd.f32 %v1322, %v1382
  %1384 = vdwg.mxu0
  %v1385 = vld [vmem:[#allocation2 + $0x2] sm:$0xff]
  %v1386 = vld [vmem:[#allocation2 + $0xa] sm:$0xff]
  %v1387 = vld [vmem:[#allocation2 + $0x12] sm:$0xff]
  %v1388 = vld [vmem:[#allocation2 + $0x1a] sm:$0xff]
  %v1389 = vld [vmem:[#allocation2 + $0x22] sm:$0xff]
  %v1390 = vld [vmem:[#allocation2 + $0x2a] sm:$0xff]
  %v1391 = vld [vmem:[#allocation2 + $0x32] sm:$0x1]
  %v1392 = vmul.f32 %v1385, %v271
  %v1393 = vmul.f32 %v1386, %v272
  %v1394 = vmul.f32 %v1387, %v273
  %v1395 = vmul.f32 %v1388, %v274
  %v1396 = vmul.f32 %v1389, %v275
  %v1397 = vmul.f32 %v1390, %v276
  %v1398 = vmul.f32 %v1391, %v277
  %v1399 = vld [vmem:[%s1 + $0x100] sm:$0xff]
  %v1400 = vld [vmem:[%s1 + $0x108] sm:$0xff]
  %v1401 = vld [vmem:[%s1 + $0x110] sm:$0xff]
  %v1402 = vld [vmem:[%s1 + $0x118] sm:$0xff]
  %v1403 = vld [vmem:[%s1 + $0x120] sm:$0xff]
  %v1404 = vld [vmem:[%s1 + $0x128] sm:$0xff]
  %v1405 = vld [vmem:[%s1 + $0x130] sm:$0xff]
  %v1406 = vld [vmem:[%s1 + $0x138] sm:$0xff]
  %v1407 = vld [vmem:[%s1 + $0x140] sm:$0xff]
  %v1408 = vld [vmem:[%s1 + $0x148] sm:$0xff]
  %v1409 = vld [vmem:[%s1 + $0x150] sm:$0xff]
  %v1410 = vld [vmem:[%s1 + $0x158] sm:$0xff]
  %v1411 = vld [vmem:[%s1 + $0x160] sm:$0xff]
  %v1412 = vld [vmem:[%s1 + $0x168] sm:$0xff]
  %v1413 = vld [vmem:[%s1 + $0x170] sm:$0xff]
  %v1414 = vld [vmem:[%s1 + $0x178] sm:$0xff]
  %v1415 = vand.u32 %v1414, 4294901760
  %1416 = vmatpush.msra.mxu0 %v1415
  %v1417 = vand.u32 %v1413, 4294901760
  %1418 = vmatpush.msra.mxu0 %v1417
  %v1419 = vand.u32 %v1412, 4294901760
  %1420 = vmatpush.msra.mxu0 %v1419
  %v1421 = vand.u32 %v1411, 4294901760
  %1422 = vmatpush.msra.mxu0 %v1421
  %v1423 = vand.u32 %v1410, 4294901760
  %1424 = vmatpush.msra.mxu0 %v1423
  %v1425 = vand.u32 %v1409, 4294901760
  %1426 = vmatpush.msra.mxu0 %v1425
  %v1427 = vand.u32 %v1408, 4294901760
  %1428 = vmatpush.msra.mxu0 %v1427
  %v1429 = vand.u32 %v1407, 4294901760
  %1430 = vmatpush.msra.mxu0 %v1429
  %v1431 = vand.u32 %v1406, 4294901760
  %1432 = vmatpush.msra.mxu0 %v1431
  %v1433 = vand.u32 %v1405, 4294901760
  %1434 = vmatpush.msra.mxu0 %v1433
  %v1435 = vand.u32 %v1404, 4294901760
  %1436 = vmatpush.msra.mxu0 %v1435
  %v1437 = vand.u32 %v1403, 4294901760
  %1438 = vmatpush.msra.mxu0 %v1437
  %v1439 = vand.u32 %v1402, 4294901760
  %1440 = vmatpush.msra.mxu0 %v1439
  %v1441 = vand.u32 %v1401, 4294901760
  %1442 = vmatpush.msra.mxu0 %v1441
  %v1443 = vand.u32 %v1400, 4294901760
  %1444 = vmatpush.msra.mxu0 %v1443
  %v1445 = vand.u32 %v1399, 4294901760
  %1446 = vmatpush.msra.mxu0 %v1445
  %v1447 = vand.u32 %v1392, 4294901760
  %v1448 = vsub.f32 %v1392, %v1447
  %v1449 = vand.u32 %v1448, 4294901760
  %v1450 = vsub.f32 %v1448, %v1449
  %v1451 = vand.u32 %v1450, 4294901760
  %1452 = vmatmul.f32.gmra.mxu0 %v1451
  %v1453 = vpop.f32.mrf.mxu0
  %v1454 = vadd.f32 0.0, %v1453
  %v1455 = vand.u32 %v1393, 4294901760
  %v1456 = vsub.f32 %v1393, %v1455
  %v1457 = vand.u32 %v1456, 4294901760
  %v1458 = vsub.f32 %v1456, %v1457
  %v1459 = vand.u32 %v1458, 4294901760
  %1460 = vmatmul.f32.gmra.mxu0 %v1459
  %v1461 = vpop.f32.mrf.mxu0
  %v1462 = vadd.f32 0.0, %v1461
  %v1463 = vand.u32 %v1394, 4294901760
  %v1464 = vsub.f32 %v1394, %v1463
  %v1465 = vand.u32 %v1464, 4294901760
  %v1466 = vsub.f32 %v1464, %v1465
  %v1467 = vand.u32 %v1466, 4294901760
  %1468 = vmatmul.f32.gmra.mxu0 %v1467
  %v1469 = vpop.f32.mrf.mxu0
  %v1470 = vadd.f32 0.0, %v1469
  %v1471 = vand.u32 %v1395, 4294901760
  %v1472 = vsub.f32 %v1395, %v1471
  %v1473 = vand.u32 %v1472, 4294901760
  %v1474 = vsub.f32 %v1472, %v1473
  %v1475 = vand.u32 %v1474, 4294901760
  %1476 = vmatmul.f32.gmra.mxu0 %v1475
  %v1477 = vpop.f32.mrf.mxu0
  %v1478 = vadd.f32 0.0, %v1477
  %v1479 = vand.u32 %v1396, 4294901760
  %v1480 = vsub.f32 %v1396, %v1479
  %v1481 = vand.u32 %v1480, 4294901760
  %v1482 = vsub.f32 %v1480, %v1481
  %v1483 = vand.u32 %v1482, 4294901760
  %1484 = vmatmul.f32.gmra.mxu0 %v1483
  %v1485 = vpop.f32.mrf.mxu0
  %v1486 = vadd.f32 0.0, %v1485
  %v1487 = vand.u32 %v1397, 4294901760
  %v1488 = vsub.f32 %v1397, %v1487
  %v1489 = vand.u32 %v1488, 4294901760
  %v1490 = vsub.f32 %v1488, %v1489
  %v1491 = vand.u32 %v1490, 4294901760
  %1492 = vmatmul.f32.gmra.mxu0 %v1491
  %v1493 = vpop.f32.mrf.mxu0
  %v1494 = vadd.f32 0.0, %v1493
  %v1495 = vand.u32 %v1398, 4294901760
  %v1496 = vsub.f32 %v1398, %v1495
  %v1497 = vand.u32 %v1496, 4294901760
  %v1498 = vsub.f32 %v1496, %v1497
  %v1499 = vand.u32 %v1498, 4294901760
  %1500 = vmatmul.f32.gmra.mxu0 %v1499
  %v1501 = vpop.f32.mrf.mxu0
  %v1502 = vadd.f32 0.0, %v1501
  %1503 = vdwg.mxu0
  %v1504 = vand.u32 %v1414, 4294901760
  %v1505 = vsub.f32 %v1414, %v1504
  %v1506 = vand.u32 %v1505, 4294901760
  %v1507 = vsub.f32 %v1505, %v1506
  %v1508 = vand.u32 %v1507, 4294901760
  %1509 = vmatpush.msra.mxu0 %v1508
  %v1510 = vand.u32 %v1413, 4294901760
  %v1511 = vsub.f32 %v1413, %v1510
  %v1512 = vand.u32 %v1511, 4294901760
  %v1513 = vsub.f32 %v1511, %v1512
  %v1514 = vand.u32 %v1513, 4294901760
  %1515 = vmatpush.msra.mxu0 %v1514
  %v1516 = vand.u32 %v1412, 4294901760
  %v1517 = vsub.f32 %v1412, %v1516
  %v1518 = vand.u32 %v1517, 4294901760
  %v1519 = vsub.f32 %v1517, %v1518
  %v1520 = vand.u32 %v1519, 4294901760
  %1521 = vmatpush.msra.mxu0 %v1520
  %v1522 = vand.u32 %v1411, 4294901760
  %v1523 = vsub.f32 %v1411, %v1522
  %v1524 = vand.u32 %v1523, 4294901760
  %v1525 = vsub.f32 %v1523, %v1524
  %v1526 = vand.u32 %v1525, 4294901760
  %1527 = vmatpush.msra.mxu0 %v1526
  %v1528 = vand.u32 %v1410, 4294901760
  %v1529 = vsub.f32 %v1410, %v1528
  %v1530 = vand.u32 %v1529, 4294901760
  %v1531 = vsub.f32 %v1529, %v1530
  %v1532 = vand.u32 %v1531, 4294901760
  %1533 = vmatpush.msra.mxu0 %v1532
  %v1534 = vand.u32 %v1409, 4294901760
  %v1535 = vsub.f32 %v1409, %v1534
  %v1536 = vand.u32 %v1535, 4294901760
  %v1537 = vsub.f32 %v1535, %v1536
  %v1538 = vand.u32 %v1537, 4294901760
  %1539 = vmatpush.msra.mxu0 %v1538
  %v1540 = vand.u32 %v1408, 4294901760
  %v1541 = vsub.f32 %v1408, %v1540
  %v1542 = vand.u32 %v1541, 4294901760
  %v1543 = vsub.f32 %v1541, %v1542
  %v1544 = vand.u32 %v1543, 4294901760
  %1545 = vmatpush.msra.mxu0 %v1544
  %v1546 = vand.u32 %v1407, 4294901760
  %v1547 = vsub.f32 %v1407, %v1546
  %v1548 = vand.u32 %v1547, 4294901760
  %v1549 = vsub.f32 %v1547, %v1548
  %v1550 = vand.u32 %v1549, 4294901760
  %1551 = vmatpush.msra.mxu0 %v1550
  %v1552 = vand.u32 %v1406, 4294901760
  %v1553 = vsub.f32 %v1406, %v1552
  %v1554 = vand.u32 %v1553, 4294901760
  %v1555 = vsub.f32 %v1553, %v1554
  %v1556 = vand.u32 %v1555, 4294901760
  %1557 = vmatpush.msra.mxu0 %v1556
  %v1558 = vand.u32 %v1405, 4294901760
  %v1559 = vsub.f32 %v1405, %v1558
  %v1560 = vand.u32 %v1559, 4294901760
  %v1561 = vsub.f32 %v1559, %v1560
  %v1562 = vand.u32 %v1561, 4294901760
  %1563 = vmatpush.msra.mxu0 %v1562
  %v1564 = vand.u32 %v1404, 4294901760
  %v1565 = vsub.f32 %v1404, %v1564
  %v1566 = vand.u32 %v1565, 4294901760
  %v1567 = vsub.f32 %v1565, %v1566
  %v1568 = vand.u32 %v1567, 4294901760
  %1569 = vmatpush.msra.mxu0 %v1568
  %v1570 = vand.u32 %v1403, 4294901760
  %v1571 = vsub.f32 %v1403, %v1570
  %v1572 = vand.u32 %v1571, 4294901760
  %v1573 = vsub.f32 %v1571, %v1572
  %v1574 = vand.u32 %v1573, 4294901760
  %1575 = vmatpush.msra.mxu0 %v1574
  %v1576 = vand.u32 %v1402, 4294901760
  %v1577 = vsub.f32 %v1402, %v1576
  %v1578 = vand.u32 %v1577, 4294901760
  %v1579 = vsub.f32 %v1577, %v1578
  %v1580 = vand.u32 %v1579, 4294901760
  %1581 = vmatpush.msra.mxu0 %v1580
  %v1582 = vand.u32 %v1401, 4294901760
  %v1583 = vsub.f32 %v1401, %v1582
  %v1584 = vand.u32 %v1583, 4294901760
  %v1585 = vsub.f32 %v1583, %v1584
  %v1586 = vand.u32 %v1585, 4294901760
  %1587 = vmatpush.msra.mxu0 %v1586
  %v1588 = vand.u32 %v1400, 4294901760
  %v1589 = vsub.f32 %v1400, %v1588
  %v1590 = vand.u32 %v1589, 4294901760
  %v1591 = vsub.f32 %v1589, %v1590
  %v1592 = vand.u32 %v1591, 4294901760
  %1593 = vmatpush.msra.mxu0 %v1592
  %v1594 = vand.u32 %v1399, 4294901760
  %v1595 = vsub.f32 %v1399, %v1594
  %v1596 = vand.u32 %v1595, 4294901760
  %v1597 = vsub.f32 %v1595, %v1596
  %v1598 = vand.u32 %v1597, 4294901760
  %1599 = vmatpush.msra.mxu0 %v1598
  %v1600 = vand.u32 %v1392, 4294901760
  %1601 = vmatmul.f32.gmra.mxu0 %v1600
  %v1602 = vpop.f32.mrf.mxu0
  %v1603 = vadd.f32 %v1454, %v1602
  %v1604 = vand.u32 %v1393, 4294901760
  %1605 = vmatmul.f32.gmra.mxu0 %v1604
  %v1606 = vpop.f32.mrf.mxu0
  %v1607 = vadd.f32 %v1462, %v1606
  %v1608 = vand.u32 %v1394, 4294901760
  %1609 = vmatmul.f32.gmra.mxu0 %v1608
  %v1610 = vpop.f32.mrf.mxu0
  %v1611 = vadd.f32 %v1470, %v1610
  %v1612 = vand.u32 %v1395, 4294901760
  %1613 = vmatmul.f32.gmra.mxu0 %v1612
  %v1614 = vpop.f32.mrf.mxu0
  %v1615 = vadd.f32 %v1478, %v1614
  %v1616 = vand.u32 %v1396, 4294901760
  %1617 = vmatmul.f32.gmra.mxu0 %v1616
  %v1618 = vpop.f32.mrf.mxu0
  %v1619 = vadd.f32 %v1486, %v1618
  %v1620 = vand.u32 %v1397, 4294901760
  %1621 = vmatmul.f32.gmra.mxu0 %v1620
  %v1622 = vpop.f32.mrf.mxu0
  %v1623 = vadd.f32 %v1494, %v1622
  %v1624 = vand.u32 %v1398, 4294901760
  %1625 = vmatmul.f32.gmra.mxu0 %v1624
  %v1626 = vpop.f32.mrf.mxu0
  %v1627 = vadd.f32 %v1502, %v1626
  %1628 = vdwg.mxu0
  %v1629 = vand.u32 %v1414, 4294901760
  %v1630 = vsub.f32 %v1414, %v1629
  %1631 = vmatpush.msra.mxu0 %v1630
  %v1632 = vand.u32 %v1413, 4294901760
  %v1633 = vsub.f32 %v1413, %v1632
  %1634 = vmatpush.msra.mxu0 %v1633
  %v1635 = vand.u32 %v1412, 4294901760
  %v1636 = vsub.f32 %v1412, %v1635
  %1637 = vmatpush.msra.mxu0 %v1636
  %v1638 = vand.u32 %v1411, 4294901760
  %v1639 = vsub.f32 %v1411, %v1638
  %1640 = vmatpush.msra.mxu0 %v1639
  %v1641 = vand.u32 %v1410, 4294901760
  %v1642 = vsub.f32 %v1410, %v1641
  %1643 = vmatpush.msra.mxu0 %v1642
  %v1644 = vand.u32 %v1409, 4294901760
  %v1645 = vsub.f32 %v1409, %v1644
  %1646 = vmatpush.msra.mxu0 %v1645
  %v1647 = vand.u32 %v1408, 4294901760
  %v1648 = vsub.f32 %v1408, %v1647
  %1649 = vmatpush.msra.mxu0 %v1648
  %v1650 = vand.u32 %v1407, 4294901760
  %v1651 = vsub.f32 %v1407, %v1650
  %1652 = vmatpush.msra.mxu0 %v1651
  %v1653 = vand.u32 %v1406, 4294901760
  %v1654 = vsub.f32 %v1406, %v1653
  %1655 = vmatpush.msra.mxu0 %v1654
  %v1656 = vand.u32 %v1405, 4294901760
  %v1657 = vsub.f32 %v1405, %v1656
  %1658 = vmatpush.msra.mxu0 %v1657
  %v1659 = vand.u32 %v1404, 4294901760
  %v1660 = vsub.f32 %v1404, %v1659
  %1661 = vmatpush.msra.mxu0 %v1660
  %v1662 = vand.u32 %v1403, 4294901760
  %v1663 = vsub.f32 %v1403, %v1662
  %1664 = vmatpush.msra.mxu0 %v1663
  %v1665 = vand.u32 %v1402, 4294901760
  %v1666 = vsub.f32 %v1402, %v1665
  %1667 = vmatpush.msra.mxu0 %v1666
  %v1668 = vand.u32 %v1401, 4294901760
  %v1669 = vsub.f32 %v1401, %v1668
  %1670 = vmatpush.msra.mxu0 %v1669
  %v1671 = vand.u32 %v1400, 4294901760
  %v1672 = vsub.f32 %v1400, %v1671
  %1673 = vmatpush.msra.mxu0 %v1672
  %v1674 = vand.u32 %v1399, 4294901760
  %v1675 = vsub.f32 %v1399, %v1674
  %1676 = vmatpush.msra.mxu0 %v1675
  %v1677 = vand.u32 %v1392, 4294901760
  %v1678 = vsub.f32 %v1392, %v1677
  %1679 = vmatmul.f32.gmra.mxu0 %v1678
  %v1680 = vpop.f32.mrf.mxu0
  %v1681 = vadd.f32 %v1603, %v1680
  %v1682 = vand.u32 %v1393, 4294901760
  %v1683 = vsub.f32 %v1393, %v1682
  %1684 = vmatmul.f32.gmra.mxu0 %v1683
  %v1685 = vpop.f32.mrf.mxu0
  %v1686 = vadd.f32 %v1607, %v1685
  %v1687 = vand.u32 %v1394, 4294901760
  %v1688 = vsub.f32 %v1394, %v1687
  %1689 = vmatmul.f32.gmra.mxu0 %v1688
  %v1690 = vpop.f32.mrf.mxu0
  %v1691 = vadd.f32 %v1611, %v1690
  %v1692 = vand.u32 %v1395, 4294901760
  %v1693 = vsub.f32 %v1395, %v1692
  %1694 = vmatmul.f32.gmra.mxu0 %v1693
  %v1695 = vpop.f32.mrf.mxu0
  %v1696 = vadd.f32 %v1615, %v1695
  %v1697 = vand.u32 %v1396, 4294901760
  %v1698 = vsub.f32 %v1396, %v1697
  %1699 = vmatmul.f32.gmra.mxu0 %v1698
  %v1700 = vpop.f32.mrf.mxu0
  %v1701 = vadd.f32 %v1619, %v1700
  %v1702 = vand.u32 %v1397, 4294901760
  %v1703 = vsub.f32 %v1397, %v1702
  %1704 = vmatmul.f32.gmra.mxu0 %v1703
  %v1705 = vpop.f32.mrf.mxu0
  %v1706 = vadd.f32 %v1623, %v1705
  %v1707 = vand.u32 %v1398, 4294901760
  %v1708 = vsub.f32 %v1398, %v1707
  %1709 = vmatmul.f32.gmra.mxu0 %v1708
  %v1710 = vpop.f32.mrf.mxu0
  %v1711 = vadd.f32 %v1627, %v1710
  %1712 = vdwg.mxu0
  %v1713 = vand.u32 %v1414, 4294901760
  %1714 = vmatpush.msra.mxu0 %v1713
  %v1715 = vand.u32 %v1413, 4294901760
  %1716 = vmatpush.msra.mxu0 %v1715
  %v1717 = vand.u32 %v1412, 4294901760
  %1718 = vmatpush.msra.mxu0 %v1717
  %v1719 = vand.u32 %v1411, 4294901760
  %1720 = vmatpush.msra.mxu0 %v1719
  %v1721 = vand.u32 %v1410, 4294901760
  %1722 = vmatpush.msra.mxu0 %v1721
  %v1723 = vand.u32 %v1409, 4294901760
  %1724 = vmatpush.msra.mxu0 %v1723
  %v1725 = vand.u32 %v1408, 4294901760
  %1726 = vmatpush.msra.mxu0 %v1725
  %v1727 = vand.u32 %v1407, 4294901760
  %1728 = vmatpush.msra.mxu0 %v1727
  %v1729 = vand.u32 %v1406, 4294901760
  %1730 = vmatpush.msra.mxu0 %v1729
  %v1731 = vand.u32 %v1405, 4294901760
  %1732 = vmatpush.msra.mxu0 %v1731
  %v1733 = vand.u32 %v1404, 4294901760
  %1734 = vmatpush.msra.mxu0 %v1733
  %v1735 = vand.u32 %v1403, 4294901760
  %1736 = vmatpush.msra.mxu0 %v1735
  %v1737 = vand.u32 %v1402, 4294901760
  %1738 = vmatpush.msra.mxu0 %v1737
  %v1739 = vand.u32 %v1401, 4294901760
  %1740 = vmatpush.msra.mxu0 %v1739
  %v1741 = vand.u32 %v1400, 4294901760
  %1742 = vmatpush.msra.mxu0 %v1741
  %v1743 = vand.u32 %v1399, 4294901760
  %1744 = vmatpush.msra.mxu0 %v1743
  %v1745 = vand.u32 %v1392, 4294901760
  %v1746 = vsub.f32 %v1392, %v1745
  %v1747 = vand.u32 %v1746, 4294901760
  %1748 = vmatmul.f32.gmra.mxu0 %v1747
  %v1749 = vpop.f32.mrf.mxu0
  %v1750 = vadd.f32 %v1681, %v1749
  %v1751 = vand.u32 %v1393, 4294901760
  %v1752 = vsub.f32 %v1393, %v1751
  %v1753 = vand.u32 %v1752, 4294901760
  %1754 = vmatmul.f32.gmra.mxu0 %v1753
  %v1755 = vpop.f32.mrf.mxu0
  %v1756 = vadd.f32 %v1686, %v1755
  %v1757 = vand.u32 %v1394, 4294901760
  %v1758 = vsub.f32 %v1394, %v1757
  %v1759 = vand.u32 %v1758, 4294901760
  %1760 = vmatmul.f32.gmra.mxu0 %v1759
  %v1761 = vpop.f32.mrf.mxu0
  %v1762 = vadd.f32 %v1691, %v1761
  %v1763 = vand.u32 %v1395, 4294901760
  %v1764 = vsub.f32 %v1395, %v1763
  %v1765 = vand.u32 %v1764, 4294901760
  %1766 = vmatmul.f32.gmra.mxu0 %v1765
  %v1767 = vpop.f32.mrf.mxu0
  %v1768 = vadd.f32 %v1696, %v1767
  %v1769 = vand.u32 %v1396, 4294901760
  %v1770 = vsub.f32 %v1396, %v1769
  %v1771 = vand.u32 %v1770, 4294901760
  %1772 = vmatmul.f32.gmra.mxu0 %v1771
  %v1773 = vpop.f32.mrf.mxu0
  %v1774 = vadd.f32 %v1701, %v1773
  %v1775 = vand.u32 %v1397, 4294901760
  %v1776 = vsub.f32 %v1397, %v1775
  %v1777 = vand.u32 %v1776, 4294901760
  %1778 = vmatmul.f32.gmra.mxu0 %v1777
  %v1779 = vpop.f32.mrf.mxu0
  %v1780 = vadd.f32 %v1706, %v1779
  %v1781 = vand.u32 %v1398, 4294901760
  %v1782 = vsub.f32 %v1398, %v1781
  %v1783 = vand.u32 %v1782, 4294901760
  %1784 = vmatmul.f32.gmra.mxu0 %v1783
  %v1785 = vpop.f32.mrf.mxu0
  %v1786 = vadd.f32 %v1711, %v1785
  %1787 = vdwg.mxu0
  %v1788 = vand.u32 %v1414, 4294901760
  %v1789 = vsub.f32 %v1414, %v1788
  %v1790 = vand.u32 %v1789, 4294901760
  %1791 = vmatpush.msra.mxu0 %v1790
  %v1792 = vand.u32 %v1413, 4294901760
  %v1793 = vsub.f32 %v1413, %v1792
  %v1794 = vand.u32 %v1793, 4294901760
  %1795 = vmatpush.msra.mxu0 %v1794
  %v1796 = vand.u32 %v1412, 4294901760
  %v1797 = vsub.f32 %v1412, %v1796
  %v1798 = vand.u32 %v1797, 4294901760
  %1799 = vmatpush.msra.mxu0 %v1798
  %v1800 = vand.u32 %v1411, 4294901760
  %v1801 = vsub.f32 %v1411, %v1800
  %v1802 = vand.u32 %v1801, 4294901760
  %1803 = vmatpush.msra.mxu0 %v1802
  %v1804 = vand.u32 %v1410, 4294901760
  %v1805 = vsub.f32 %v1410, %v1804
  %v1806 = vand.u32 %v1805, 4294901760
  %1807 = vmatpush.msra.mxu0 %v1806
  %v1808 = vand.u32 %v1409, 4294901760
  %v1809 = vsub.f32 %v1409, %v1808
  %v1810 = vand.u32 %v1809, 4294901760
  %1811 = vmatpush.msra.mxu0 %v1810
  %v1812 = vand.u32 %v1408, 4294901760
  %v1813 = vsub.f32 %v1408, %v1812
  %v1814 = vand.u32 %v1813, 4294901760
  %1815 = vmatpush.msra.mxu0 %v1814
  %v1816 = vand.u32 %v1407, 4294901760
  %v1817 = vsub.f32 %v1407, %v1816
  %v1818 = vand.u32 %v1817, 4294901760
  %1819 = vmatpush.msra.mxu0 %v1818
  %v1820 = vand.u32 %v1406, 4294901760
  %v1821 = vsub.f32 %v1406, %v1820
  %v1822 = vand.u32 %v1821, 4294901760
  %1823 = vmatpush.msra.mxu0 %v1822
  %v1824 = vand.u32 %v1405, 4294901760
  %v1825 = vsub.f32 %v1405, %v1824
  %v1826 = vand.u32 %v1825, 4294901760
  %1827 = vmatpush.msra.mxu0 %v1826
  %v1828 = vand.u32 %v1404, 4294901760
  %v1829 = vsub.f32 %v1404, %v1828
  %v1830 = vand.u32 %v1829, 4294901760
  %1831 = vmatpush.msra.mxu0 %v1830
  %v1832 = vand.u32 %v1403, 4294901760
  %v1833 = vsub.f32 %v1403, %v1832
  %v1834 = vand.u32 %v1833, 4294901760
  %1835 = vmatpush.msra.mxu0 %v1834
  %v1836 = vand.u32 %v1402, 4294901760
  %v1837 = vsub.f32 %v1402, %v1836
  %v1838 = vand.u32 %v1837, 4294901760
  %1839 = vmatpush.msra.mxu0 %v1838
  %v1840 = vand.u32 %v1401, 4294901760
  %v1841 = vsub.f32 %v1401, %v1840
  %v1842 = vand.u32 %v1841, 4294901760
  %1843 = vmatpush.msra.mxu0 %v1842
  %v1844 = vand.u32 %v1400, 4294901760
  %v1845 = vsub.f32 %v1400, %v1844
  %v1846 = vand.u32 %v1845, 4294901760
  %1847 = vmatpush.msra.mxu0 %v1846
  %v1848 = vand.u32 %v1399, 4294901760
  %v1849 = vsub.f32 %v1399, %v1848
  %v1850 = vand.u32 %v1849, 4294901760
  %1851 = vmatpush.msra.mxu0 %v1850
  %v1852 = vand.u32 %v1392, 4294901760
  %1853 = vmatmul.f32.gmra.mxu0 %v1852
  %v1854 = vpop.f32.mrf.mxu0
  %v1855 = vadd.f32 %v1750, %v1854
  %v1856 = vand.u32 %v1393, 4294901760
  %1857 = vmatmul.f32.gmra.mxu0 %v1856
  %v1858 = vpop.f32.mrf.mxu0
  %v1859 = vadd.f32 %v1756, %v1858
  %v1860 = vand.u32 %v1394, 4294901760
  %1861 = vmatmul.f32.gmra.mxu0 %v1860
  %v1862 = vpop.f32.mrf.mxu0
  %v1863 = vadd.f32 %v1762, %v1862
  %v1864 = vand.u32 %v1395, 4294901760
  %1865 = vmatmul.f32.gmra.mxu0 %v1864
  %v1866 = vpop.f32.mrf.mxu0
  %v1867 = vadd.f32 %v1768, %v1866
  %v1868 = vand.u32 %v1396, 4294901760
  %1869 = vmatmul.f32.gmra.mxu0 %v1868
  %v1870 = vpop.f32.mrf.mxu0
  %v1871 = vadd.f32 %v1774, %v1870
  %v1872 = vand.u32 %v1397, 4294901760
  %1873 = vmatmul.f32.gmra.mxu0 %v1872
  %v1874 = vpop.f32.mrf.mxu0
  %v1875 = vadd.f32 %v1780, %v1874
  %v1876 = vand.u32 %v1398, 4294901760
  %1877 = vmatmul.f32.gmra.mxu0 %v1876
  %v1878 = vpop.f32.mrf.mxu0
  %v1879 = vadd.f32 %v1786, %v1878
  %1880 = vdwg.mxu0
  %v1881 = vand.u32 %v1414, 4294901760
  %1882 = vmatpush.msra.mxu0 %v1881
  %v1883 = vand.u32 %v1413, 4294901760
  %1884 = vmatpush.msra.mxu0 %v1883
  %v1885 = vand.u32 %v1412, 4294901760
  %1886 = vmatpush.msra.mxu0 %v1885
  %v1887 = vand.u32 %v1411, 4294901760
  %1888 = vmatpush.msra.mxu0 %v1887
  %v1889 = vand.u32 %v1410, 4294901760
  %1890 = vmatpush.msra.mxu0 %v1889
  %v1891 = vand.u32 %v1409, 4294901760
  %1892 = vmatpush.msra.mxu0 %v1891
  %v1893 = vand.u32 %v1408, 4294901760
  %1894 = vmatpush.msra.mxu0 %v1893
  %v1895 = vand.u32 %v1407, 4294901760
  %1896 = vmatpush.msra.mxu0 %v1895
  %v1897 = vand.u32 %v1406, 4294901760
  %1898 = vmatpush.msra.mxu0 %v1897
  %v1899 = vand.u32 %v1405, 4294901760
  %1900 = vmatpush.msra.mxu0 %v1899
  %v1901 = vand.u32 %v1404, 4294901760
  %1902 = vmatpush.msra.mxu0 %v1901
  %v1903 = vand.u32 %v1403, 4294901760
  %1904 = vmatpush.msra.mxu0 %v1903
  %v1905 = vand.u32 %v1402, 4294901760
  %1906 = vmatpush.msra.mxu0 %v1905
  %v1907 = vand.u32 %v1401, 4294901760
  %1908 = vmatpush.msra.mxu0 %v1907
  %v1909 = vand.u32 %v1400, 4294901760
  %1910 = vmatpush.msra.mxu0 %v1909
  %v1911 = vand.u32 %v1399, 4294901760
  %1912 = vmatpush.msra.mxu0 %v1911
  %v1913 = vand.u32 %v1392, 4294901760
  %1914 = vmatmul.f32.gmra.mxu0 %v1913
  %v1915 = vpop.f32.mrf.mxu0
  %v1916 = vadd.f32 %v1855, %v1915
  %v1917 = vand.u32 %v1393, 4294901760
  %1918 = vmatmul.f32.gmra.mxu0 %v1917
  %v1919 = vpop.f32.mrf.mxu0
  %v1920 = vadd.f32 %v1859, %v1919
  %v1921 = vand.u32 %v1394, 4294901760
  %1922 = vmatmul.f32.gmra.mxu0 %v1921
  %v1923 = vpop.f32.mrf.mxu0
  %v1924 = vadd.f32 %v1863, %v1923
  %v1925 = vand.u32 %v1395, 4294901760
  %1926 = vmatmul.f32.gmra.mxu0 %v1925
  %v1927 = vpop.f32.mrf.mxu0
  %v1928 = vadd.f32 %v1867, %v1927
  %v1929 = vand.u32 %v1396, 4294901760
  %1930 = vmatmul.f32.gmra.mxu0 %v1929
  %v1931 = vpop.f32.mrf.mxu0
  %v1932 = vadd.f32 %v1871, %v1931
  %v1933 = vand.u32 %v1397, 4294901760
  %1934 = vmatmul.f32.gmra.mxu0 %v1933
  %v1935 = vpop.f32.mrf.mxu0
  %v1936 = vadd.f32 %v1875, %v1935
  %v1937 = vand.u32 %v1398, 4294901760
  %1938 = vmatmul.f32.gmra.mxu0 %v1937
  %v1939 = vpop.f32.mrf.mxu0
  %v1940 = vadd.f32 %v1879, %v1939
  %1941 = vdwg.mxu0
  %v1942 = vadd.f32 %v1359, %v1916
  %v1943 = vadd.f32 %v1363, %v1920
  %v1944 = vadd.f32 %v1367, %v1924
  %v1945 = vadd.f32 %v1371, %v1928
  %v1946 = vadd.f32 %v1375, %v1932
  %v1947 = vadd.f32 %v1379, %v1936
  %v1948 = vadd.f32 %v1383, %v1940
  %v1949 = vld [vmem:[#allocation2 + $0x7] sm:$0xff]
  %v1950 = vld [vmem:[#allocation2 + $0xf] sm:$0xff]
  %v1951 = vld [vmem:[#allocation2 + $0x17] sm:$0xff]
  %v1952 = vld [vmem:[#allocation2 + $0x1f] sm:$0xff]
  %v1953 = vld [vmem:[#allocation2 + $0x27] sm:$0xff]
  %v1954 = vld [vmem:[#allocation2 + $0x2f] sm:$0xff]
  %v1955 = vld [vmem:[#allocation2 + $0x37] sm:$0x1]
  %v1956 = vmul.f32 %v1949, %v250
  %v1957 = vmul.f32 %v1950, %v251
  %v1958 = vmul.f32 %v1951, %v252
  %v1959 = vmul.f32 %v1952, %v253
  %v1960 = vmul.f32 %v1953, %v254
  %v1961 = vmul.f32 %v1954, %v255
  %v1962 = vmul.f32 %v1955, %v256
  %v1963 = vld [vmem:[%s1 + $0x180] sm:$0xff]
  %v1964 = vld [vmem:[%s1 + $0x188] sm:$0xff]
  %v1965 = vld [vmem:[%s1 + $0x190] sm:$0xff]
  %v1966 = vld [vmem:[%s1 + $0x198] sm:$0xff]
  %v1967 = vld [vmem:[%s1 + $0x1a0] sm:$0xff]
  %v1968 = vld [vmem:[%s1 + $0x1a8] sm:$0xff]
  %v1969 = vld [vmem:[%s1 + $0x1b0] sm:$0xff]
  %v1970 = vld [vmem:[%s1 + $0x1b8] sm:$0xff]
  %v1971 = vld [vmem:[%s1 + $0x1c0] sm:$0xff]
  %v1972 = vld [vmem:[%s1 + $0x1c8] sm:$0xff]
  %v1973 = vld [vmem:[%s1 + $0x1d0] sm:$0xff]
  %v1974 = vld [vmem:[%s1 + $0x1d8] sm:$0xff]
  %v1975 = vld [vmem:[%s1 + $0x1e0] sm:$0xff]
  %v1976 = vld [vmem:[%s1 + $0x1e8] sm:$0xff]
  %v1977 = vld [vmem:[%s1 + $0x1f0] sm:$0xff]
  %v1978 = vld [vmem:[%s1 + $0x1f8] sm:$0xff]
  %v1979 = vand.u32 %v1978, 4294901760
  %1980 = vmatpush.msra.mxu0 %v1979
  %v1981 = vand.u32 %v1977, 4294901760
  %1982 = vmatpush.msra.mxu0 %v1981
  %v1983 = vand.u32 %v1976, 4294901760
  %1984 = vmatpush.msra.mxu0 %v1983
  %v1985 = vand.u32 %v1975, 4294901760
  %1986 = vmatpush.msra.mxu0 %v1985
  %v1987 = vand.u32 %v1974, 4294901760
  %1988 = vmatpush.msra.mxu0 %v1987
  %v1989 = vand.u32 %v1973, 4294901760
  %1990 = vmatpush.msra.mxu0 %v1989
  %v1991 = vand.u32 %v1972, 4294901760
  %1992 = vmatpush.msra.mxu0 %v1991
  %v1993 = vand.u32 %v1971, 4294901760
  %1994 = vmatpush.msra.mxu0 %v1993
  %v1995 = vand.u32 %v1970, 4294901760
  %1996 = vmatpush.msra.mxu0 %v1995
  %v1997 = vand.u32 %v1969, 4294901760
  %1998 = vmatpush.msra.mxu0 %v1997
  %v1999 = vand.u32 %v1968, 4294901760
  %2000 = vmatpush.msra.mxu0 %v1999
  %v2001 = vand.u32 %v1967, 4294901760
  %2002 = vmatpush.msra.mxu0 %v2001
  %v2003 = vand.u32 %v1966, 4294901760
  %2004 = vmatpush.msra.mxu0 %v2003
  %v2005 = vand.u32 %v1965, 4294901760
  %2006 = vmatpush.msra.mxu0 %v2005
  %v2007 = vand.u32 %v1964, 4294901760
  %2008 = vmatpush.msra.mxu0 %v2007
  %v2009 = vand.u32 %v1963, 4294901760
  %2010 = vmatpush.msra.mxu0 %v2009
  %v2011 = vand.u32 %v1956, 4294901760
  %v2012 = vsub.f32 %v1956, %v2011
  %v2013 = vand.u32 %v2012, 4294901760
  %v2014 = vsub.f32 %v2012, %v2013
  %v2015 = vand.u32 %v2014, 4294901760
  %2016 = vmatmul.f32.gmra.mxu0 %v2015
  %v2017 = vpop.f32.mrf.mxu0
  %v2018 = vadd.f32 0.0, %v2017
  %v2019 = vand.u32 %v1957, 4294901760
  %v2020 = vsub.f32 %v1957, %v2019
  %v2021 = vand.u32 %v2020, 4294901760
  %v2022 = vsub.f32 %v2020, %v2021
  %v2023 = vand.u32 %v2022, 4294901760
  %2024 = vmatmul.f32.gmra.mxu0 %v2023
  %v2025 = vpop.f32.mrf.mxu0
  %v2026 = vadd.f32 0.0, %v2025
  %v2027 = vand.u32 %v1958, 4294901760
  %v2028 = vsub.f32 %v1958, %v2027
  %v2029 = vand.u32 %v2028, 4294901760
  %v2030 = vsub.f32 %v2028, %v2029
  %v2031 = vand.u32 %v2030, 4294901760
  %2032 = vmatmul.f32.gmra.mxu0 %v2031
  %v2033 = vpop.f32.mrf.mxu0
  %v2034 = vadd.f32 0.0, %v2033
  %v2035 = vand.u32 %v1959, 4294901760
  %v2036 = vsub.f32 %v1959, %v2035
  %v2037 = vand.u32 %v2036, 4294901760
  %v2038 = vsub.f32 %v2036, %v2037
  %v2039 = vand.u32 %v2038, 4294901760
  %2040 = vmatmul.f32.gmra.mxu0 %v2039
  %v2041 = vpop.f32.mrf.mxu0
  %v2042 = vadd.f32 0.0, %v2041
  %v2043 = vand.u32 %v1960, 4294901760
  %v2044 = vsub.f32 %v1960, %v2043
  %v2045 = vand.u32 %v2044, 4294901760
  %v2046 = vsub.f32 %v2044, %v2045
  %v2047 = vand.u32 %v2046, 4294901760
  %2048 = vmatmul.f32.gmra.mxu0 %v2047
  %v2049 = vpop.f32.mrf.mxu0
  %v2050 = vadd.f32 0.0, %v2049
  %v2051 = vand.u32 %v1961, 4294901760
  %v2052 = vsub.f32 %v1961, %v2051
  %v2053 = vand.u32 %v2052, 4294901760
  %v2054 = vsub.f32 %v2052, %v2053
  %v2055 = vand.u32 %v2054, 4294901760
  %2056 = vmatmul.f32.gmra.mxu0 %v2055
  %v2057 = vpop.f32.mrf.mxu0
  %v2058 = vadd.f32 0.0, %v2057
  %v2059 = vand.u32 %v1962, 4294901760
  %v2060 = vsub.f32 %v1962, %v2059
  %v2061 = vand.u32 %v2060, 4294901760
  %v2062 = vsub.f32 %v2060, %v2061
  %v2063 = vand.u32 %v2062, 4294901760
  %2064 = vmatmul.f32.gmra.mxu0 %v2063
  %v2065 = vpop.f32.mrf.mxu0
  %v2066 = vadd.f32 0.0, %v2065
  %2067 = vdwg.mxu0
  %v2068 = vand.u32 %v1978, 4294901760
  %v2069 = vsub.f32 %v1978, %v2068
  %v2070 = vand.u32 %v2069, 4294901760
  %v2071 = vsub.f32 %v2069, %v2070
  %v2072 = vand.u32 %v2071, 4294901760
  %2073 = vmatpush.msra.mxu0 %v2072
  %v2074 = vand.u32 %v1977, 4294901760
  %v2075 = vsub.f32 %v1977, %v2074
  %v2076 = vand.u32 %v2075, 4294901760
  %v2077 = vsub.f32 %v2075, %v2076
  %v2078 = vand.u32 %v2077, 4294901760
  %2079 = vmatpush.msra.mxu0 %v2078
  %v2080 = vand.u32 %v1976, 4294901760
  %v2081 = vsub.f32 %v1976, %v2080
  %v2082 = vand.u32 %v2081, 4294901760
  %v2083 = vsub.f32 %v2081, %v2082
  %v2084 = vand.u32 %v2083, 4294901760
  %2085 = vmatpush.msra.mxu0 %v2084
  %v2086 = vand.u32 %v1975, 4294901760
  %v2087 = vsub.f32 %v1975, %v2086
  %v2088 = vand.u32 %v2087, 4294901760
  %v2089 = vsub.f32 %v2087, %v2088
  %v2090 = vand.u32 %v2089, 4294901760
  %2091 = vmatpush.msra.mxu0 %v2090
  %v2092 = vand.u32 %v1974, 4294901760
  %v2093 = vsub.f32 %v1974, %v2092
  %v2094 = vand.u32 %v2093, 4294901760
  %v2095 = vsub.f32 %v2093, %v2094
  %v2096 = vand.u32 %v2095, 4294901760
  %2097 = vmatpush.msra.mxu0 %v2096
  %v2098 = vand.u32 %v1973, 4294901760
  %v2099 = vsub.f32 %v1973, %v2098
  %v2100 = vand.u32 %v2099, 4294901760
  %v2101 = vsub.f32 %v2099, %v2100
  %v2102 = vand.u32 %v2101, 4294901760
  %2103 = vmatpush.msra.mxu0 %v2102
  %v2104 = vand.u32 %v1972, 4294901760
  %v2105 = vsub.f32 %v1972, %v2104
  %v2106 = vand.u32 %v2105, 4294901760
  %v2107 = vsub.f32 %v2105, %v2106
  %v2108 = vand.u32 %v2107, 4294901760
  %2109 = vmatpush.msra.mxu0 %v2108
  %v2110 = vand.u32 %v1971, 4294901760
  %v2111 = vsub.f32 %v1971, %v2110
  %v2112 = vand.u32 %v2111, 4294901760
  %v2113 = vsub.f32 %v2111, %v2112
  %v2114 = vand.u32 %v2113, 4294901760
  %2115 = vmatpush.msra.mxu0 %v2114
  %v2116 = vand.u32 %v1970, 4294901760
  %v2117 = vsub.f32 %v1970, %v2116
  %v2118 = vand.u32 %v2117, 4294901760
  %v2119 = vsub.f32 %v2117, %v2118
  %v2120 = vand.u32 %v2119, 4294901760
  %2121 = vmatpush.msra.mxu0 %v2120
  %v2122 = vand.u32 %v1969, 4294901760
  %v2123 = vsub.f32 %v1969, %v2122
  %v2124 = vand.u32 %v2123, 4294901760
  %v2125 = vsub.f32 %v2123, %v2124
  %v2126 = vand.u32 %v2125, 4294901760
  %2127 = vmatpush.msra.mxu0 %v2126
  %v2128 = vand.u32 %v1968, 4294901760
  %v2129 = vsub.f32 %v1968, %v2128
  %v2130 = vand.u32 %v2129, 4294901760
  %v2131 = vsub.f32 %v2129, %v2130
  %v2132 = vand.u32 %v2131, 4294901760
  %2133 = vmatpush.msra.mxu0 %v2132
  %v2134 = vand.u32 %v1967, 4294901760
  %v2135 = vsub.f32 %v1967, %v2134
  %v2136 = vand.u32 %v2135, 4294901760
  %v2137 = vsub.f32 %v2135, %v2136
  %v2138 = vand.u32 %v2137, 4294901760
  %2139 = vmatpush.msra.mxu0 %v2138
  %v2140 = vand.u32 %v1966, 4294901760
  %v2141 = vsub.f32 %v1966, %v2140
  %v2142 = vand.u32 %v2141, 4294901760
  %v2143 = vsub.f32 %v2141, %v2142
  %v2144 = vand.u32 %v2143, 4294901760
  %2145 = vmatpush.msra.mxu0 %v2144
  %v2146 = vand.u32 %v1965, 4294901760
  %v2147 = vsub.f32 %v1965, %v2146
  %v2148 = vand.u32 %v2147, 4294901760
  %v2149 = vsub.f32 %v2147, %v2148
  %v2150 = vand.u32 %v2149, 4294901760
  %2151 = vmatpush.msra.mxu0 %v2150
  %v2152 = vand.u32 %v1964, 4294901760
  %v2153 = vsub.f32 %v1964, %v2152
  %v2154 = vand.u32 %v2153, 4294901760
  %v2155 = vsub.f32 %v2153, %v2154
  %v2156 = vand.u32 %v2155, 4294901760
  %2157 = vmatpush.msra.mxu0 %v2156
  %v2158 = vand.u32 %v1963, 4294901760
  %v2159 = vsub.f32 %v1963, %v2158
  %v2160 = vand.u32 %v2159, 4294901760
  %v2161 = vsub.f32 %v2159, %v2160
  %v2162 = vand.u32 %v2161, 4294901760
  %2163 = vmatpush.msra.mxu0 %v2162
  %v2164 = vand.u32 %v1956, 4294901760
  %2165 = vmatmul.f32.gmra.mxu0 %v2164
  %v2166 = vpop.f32.mrf.mxu0
  %v2167 = vadd.f32 %v2018, %v2166
  %v2168 = vand.u32 %v1957, 4294901760
  %2169 = vmatmul.f32.gmra.mxu0 %v2168
  %v2170 = vpop.f32.mrf.mxu0
  %v2171 = vadd.f32 %v2026, %v2170
  %v2172 = vand.u32 %v1958, 4294901760
  %2173 = vmatmul.f32.gmra.mxu0 %v2172
  %v2174 = vpop.f32.mrf.mxu0
  %v2175 = vadd.f32 %v2034, %v2174
  %v2176 = vand.u32 %v1959, 4294901760
  %2177 = vmatmul.f32.gmra.mxu0 %v2176
  %v2178 = vpop.f32.mrf.mxu0
  %v2179 = vadd.f32 %v2042, %v2178
  %v2180 = vand.u32 %v1960, 4294901760
  %2181 = vmatmul.f32.gmra.mxu0 %v2180
  %v2182 = vpop.f32.mrf.mxu0
  %v2183 = vadd.f32 %v2050, %v2182
  %v2184 = vand.u32 %v1961, 4294901760
  %2185 = vmatmul.f32.gmra.mxu0 %v2184
  %v2186 = vpop.f32.mrf.mxu0
  %v2187 = vadd.f32 %v2058, %v2186
  %v2188 = vand.u32 %v1962, 4294901760
  %2189 = vmatmul.f32.gmra.mxu0 %v2188
  %v2190 = vpop.f32.mrf.mxu0
  %v2191 = vadd.f32 %v2066, %v2190
  %2192 = vdwg.mxu0
  %v2193 = vand.u32 %v1978, 4294901760
  %v2194 = vsub.f32 %v1978, %v2193
  %2195 = vmatpush.msra.mxu0 %v2194
  %v2196 = vand.u32 %v1977, 4294901760
  %v2197 = vsub.f32 %v1977, %v2196
  %2198 = vmatpush.msra.mxu0 %v2197
  %v2199 = vand.u32 %v1976, 4294901760
  %v2200 = vsub.f32 %v1976, %v2199
  %2201 = vmatpush.msra.mxu0 %v2200
  %v2202 = vand.u32 %v1975, 4294901760
  %v2203 = vsub.f32 %v1975, %v2202
  %2204 = vmatpush.msra.mxu0 %v2203
  %v2205 = vand.u32 %v1974, 4294901760
  %v2206 = vsub.f32 %v1974, %v2205
  %2207 = vmatpush.msra.mxu0 %v2206
  %v2208 = vand.u32 %v1973, 4294901760
  %v2209 = vsub.f32 %v1973, %v2208
  %2210 = vmatpush.msra.mxu0 %v2209
  %v2211 = vand.u32 %v1972, 4294901760
  %v2212 = vsub.f32 %v1972, %v2211
  %2213 = vmatpush.msra.mxu0 %v2212
  %v2214 = vand.u32 %v1971, 4294901760
  %v2215 = vsub.f32 %v1971, %v2214
  %2216 = vmatpush.msra.mxu0 %v2215
  %v2217 = vand.u32 %v1970, 4294901760
  %v2218 = vsub.f32 %v1970, %v2217
  %2219 = vmatpush.msra.mxu0 %v2218
  %v2220 = vand.u32 %v1969, 4294901760
  %v2221 = vsub.f32 %v1969, %v2220
  %2222 = vmatpush.msra.mxu0 %v2221
  %v2223 = vand.u32 %v1968, 4294901760
  %v2224 = vsub.f32 %v1968, %v2223
  %2225 = vmatpush.msra.mxu0 %v2224
  %v2226 = vand.u32 %v1967, 4294901760
  %v2227 = vsub.f32 %v1967, %v2226
  %2228 = vmatpush.msra.mxu0 %v2227
  %v2229 = vand.u32 %v1966, 4294901760
  %v2230 = vsub.f32 %v1966, %v2229
  %2231 = vmatpush.msra.mxu0 %v2230
  %v2232 = vand.u32 %v1965, 4294901760
  %v2233 = vsub.f32 %v1965, %v2232
  %2234 = vmatpush.msra.mxu0 %v2233
  %v2235 = vand.u32 %v1964, 4294901760
  %v2236 = vsub.f32 %v1964, %v2235
  %2237 = vmatpush.msra.mxu0 %v2236
  %v2238 = vand.u32 %v1963, 4294901760
  %v2239 = vsub.f32 %v1963, %v2238
  %2240 = vmatpush.msra.mxu0 %v2239
  %v2241 = vand.u32 %v1956, 4294901760
  %v2242 = vsub.f32 %v1956, %v2241
  %2243 = vmatmul.f32.gmra.mxu0 %v2242
  %v2244 = vpop.f32.mrf.mxu0
  %v2245 = vadd.f32 %v2167, %v2244
  %v2246 = vand.u32 %v1957, 4294901760
  %v2247 = vsub.f32 %v1957, %v2246
  %2248 = vmatmul.f32.gmra.mxu0 %v2247
  %v2249 = vpop.f32.mrf.mxu0
  %v2250 = vadd.f32 %v2171, %v2249
  %v2251 = vand.u32 %v1958, 4294901760
  %v2252 = vsub.f32 %v1958, %v2251
  %2253 = vmatmul.f32.gmra.mxu0 %v2252
  %v2254 = vpop.f32.mrf.mxu0
  %v2255 = vadd.f32 %v2175, %v2254
  %v2256 = vand.u32 %v1959, 4294901760
  %v2257 = vsub.f32 %v1959, %v2256
  %2258 = vmatmul.f32.gmra.mxu0 %v2257
  %v2259 = vpop.f32.mrf.mxu0
  %v2260 = vadd.f32 %v2179, %v2259
  %v2261 = vand.u32 %v1960, 4294901760
  %v2262 = vsub.f32 %v1960, %v2261
  %2263 = vmatmul.f32.gmra.mxu0 %v2262
  %v2264 = vpop.f32.mrf.mxu0
  %v2265 = vadd.f32 %v2183, %v2264
  %v2266 = vand.u32 %v1961, 4294901760
  %v2267 = vsub.f32 %v1961, %v2266
  %2268 = vmatmul.f32.gmra.mxu0 %v2267
  %v2269 = vpop.f32.mrf.mxu0
  %v2270 = vadd.f32 %v2187, %v2269
  %v2271 = vand.u32 %v1962, 4294901760
  %v2272 = vsub.f32 %v1962, %v2271
  %2273 = vmatmul.f32.gmra.mxu0 %v2272
  %v2274 = vpop.f32.mrf.mxu0
  %v2275 = vadd.f32 %v2191, %v2274
  %2276 = vdwg.mxu0
  %v2277 = vand.u32 %v1978, 4294901760
  %2278 = vmatpush.msra.mxu0 %v2277
  %v2279 = vand.u32 %v1977, 4294901760
  %2280 = vmatpush.msra.mxu0 %v2279
  %v2281 = vand.u32 %v1976, 4294901760
  %2282 = vmatpush.msra.mxu0 %v2281
  %v2283 = vand.u32 %v1975, 4294901760
  %2284 = vmatpush.msra.mxu0 %v2283
  %v2285 = vand.u32 %v1974, 4294901760
  %2286 = vmatpush.msra.mxu0 %v2285
  %v2287 = vand.u32 %v1973, 4294901760
  %2288 = vmatpush.msra.mxu0 %v2287
  %v2289 = vand.u32 %v1972, 4294901760
  %2290 = vmatpush.msra.mxu0 %v2289
  %v2291 = vand.u32 %v1971, 4294901760
  %2292 = vmatpush.msra.mxu0 %v2291
  %v2293 = vand.u32 %v1970, 4294901760
  %2294 = vmatpush.msra.mxu0 %v2293
  %v2295 = vand.u32 %v1969, 4294901760
  %2296 = vmatpush.msra.mxu0 %v2295
  %v2297 = vand.u32 %v1968, 4294901760
  %2298 = vmatpush.msra.mxu0 %v2297
  %v2299 = vand.u32 %v1967, 4294901760
  %2300 = vmatpush.msra.mxu0 %v2299
  %v2301 = vand.u32 %v1966, 4294901760
  %2302 = vmatpush.msra.mxu0 %v2301
  %v2303 = vand.u32 %v1965, 4294901760
  %2304 = vmatpush.msra.mxu0 %v2303
  %v2305 = vand.u32 %v1964, 4294901760
  %2306 = vmatpush.msra.mxu0 %v2305
  %v2307 = vand.u32 %v1963, 4294901760
  %2308 = vmatpush.msra.mxu0 %v2307
  %v2309 = vand.u32 %v1956, 4294901760
  %v2310 = vsub.f32 %v1956, %v2309
  %v2311 = vand.u32 %v2310, 4294901760
  %2312 = vmatmul.f32.gmra.mxu0 %v2311
  %v2313 = vpop.f32.mrf.mxu0
  %v2314 = vadd.f32 %v2245, %v2313
  %v2315 = vand.u32 %v1957, 4294901760
  %v2316 = vsub.f32 %v1957, %v2315
  %v2317 = vand.u32 %v2316, 4294901760
  %2318 = vmatmul.f32.gmra.mxu0 %v2317
  %v2319 = vpop.f32.mrf.mxu0
  %v2320 = vadd.f32 %v2250, %v2319
  %v2321 = vand.u32 %v1958, 4294901760
  %v2322 = vsub.f32 %v1958, %v2321
  %v2323 = vand.u32 %v2322, 4294901760
  %2324 = vmatmul.f32.gmra.mxu0 %v2323
  %v2325 = vpop.f32.mrf.mxu0
  %v2326 = vadd.f32 %v2255, %v2325
  %v2327 = vand.u32 %v1959, 4294901760
  %v2328 = vsub.f32 %v1959, %v2327
  %v2329 = vand.u32 %v2328, 4294901760
  %2330 = vmatmul.f32.gmra.mxu0 %v2329
  %v2331 = vpop.f32.mrf.mxu0
  %v2332 = vadd.f32 %v2260, %v2331
  %v2333 = vand.u32 %v1960, 4294901760
  %v2334 = vsub.f32 %v1960, %v2333
  %v2335 = vand.u32 %v2334, 4294901760
  %2336 = vmatmul.f32.gmra.mxu0 %v2335
  %v2337 = vpop.f32.mrf.mxu0
  %v2338 = vadd.f32 %v2265, %v2337
  %v2339 = vand.u32 %v1961, 4294901760
  %v2340 = vsub.f32 %v1961, %v2339
  %v2341 = vand.u32 %v2340, 4294901760
  %2342 = vmatmul.f32.gmra.mxu0 %v2341
  %v2343 = vpop.f32.mrf.mxu0
  %v2344 = vadd.f32 %v2270, %v2343
  %v2345 = vand.u32 %v1962, 4294901760
  %v2346 = vsub.f32 %v1962, %v2345
  %v2347 = vand.u32 %v2346, 4294901760
  %2348 = vmatmul.f32.gmra.mxu0 %v2347
  %v2349 = vpop.f32.mrf.mxu0
  %v2350 = vadd.f32 %v2275, %v2349
  %2351 = vdwg.mxu0
  %v2352 = vand.u32 %v1978, 4294901760
  %v2353 = vsub.f32 %v1978, %v2352
  %v2354 = vand.u32 %v2353, 4294901760
  %2355 = vmatpush.msra.mxu0 %v2354
  %v2356 = vand.u32 %v1977, 4294901760
  %v2357 = vsub.f32 %v1977, %v2356
  %v2358 = vand.u32 %v2357, 4294901760
  %2359 = vmatpush.msra.mxu0 %v2358
  %v2360 = vand.u32 %v1976, 4294901760
  %v2361 = vsub.f32 %v1976, %v2360
  %v2362 = vand.u32 %v2361, 4294901760
  %2363 = vmatpush.msra.mxu0 %v2362
  %v2364 = vand.u32 %v1975, 4294901760
  %v2365 = vsub.f32 %v1975, %v2364
  %v2366 = vand.u32 %v2365, 4294901760
  %2367 = vmatpush.msra.mxu0 %v2366
  %v2368 = vand.u32 %v1974, 4294901760
  %v2369 = vsub.f32 %v1974, %v2368
  %v2370 = vand.u32 %v2369, 4294901760
  %2371 = vmatpush.msra.mxu0 %v2370
  %v2372 = vand.u32 %v1973, 4294901760
  %v2373 = vsub.f32 %v1973, %v2372
  %v2374 = vand.u32 %v2373, 4294901760
  %2375 = vmatpush.msra.mxu0 %v2374
  %v2376 = vand.u32 %v1972, 4294901760
  %v2377 = vsub.f32 %v1972, %v2376
  %v2378 = vand.u32 %v2377, 4294901760
  %2379 = vmatpush.msra.mxu0 %v2378
  %v2380 = vand.u32 %v1971, 4294901760
  %v2381 = vsub.f32 %v1971, %v2380
  %v2382 = vand.u32 %v2381, 4294901760
  %2383 = vmatpush.msra.mxu0 %v2382
  %v2384 = vand.u32 %v1970, 4294901760
  %v2385 = vsub.f32 %v1970, %v2384
  %v2386 = vand.u32 %v2385, 4294901760
  %2387 = vmatpush.msra.mxu0 %v2386
  %v2388 = vand.u32 %v1969, 4294901760
  %v2389 = vsub.f32 %v1969, %v2388
  %v2390 = vand.u32 %v2389, 4294901760
  %2391 = vmatpush.msra.mxu0 %v2390
  %v2392 = vand.u32 %v1968, 4294901760
  %v2393 = vsub.f32 %v1968, %v2392
  %v2394 = vand.u32 %v2393, 4294901760
  %2395 = vmatpush.msra.mxu0 %v2394
  %v2396 = vand.u32 %v1967, 4294901760
  %v2397 = vsub.f32 %v1967, %v2396
  %v2398 = vand.u32 %v2397, 4294901760
  %2399 = vmatpush.msra.mxu0 %v2398
  %v2400 = vand.u32 %v1966, 4294901760
  %v2401 = vsub.f32 %v1966, %v2400
  %v2402 = vand.u32 %v2401, 4294901760
  %2403 = vmatpush.msra.mxu0 %v2402
  %v2404 = vand.u32 %v1965, 4294901760
  %v2405 = vsub.f32 %v1965, %v2404
  %v2406 = vand.u32 %v2405, 4294901760
  %2407 = vmatpush.msra.mxu0 %v2406
  %v2408 = vand.u32 %v1964, 4294901760
  %v2409 = vsub.f32 %v1964, %v2408
  %v2410 = vand.u32 %v2409, 4294901760
  %2411 = vmatpush.msra.mxu0 %v2410
  %v2412 = vand.u32 %v1963, 4294901760
  %v2413 = vsub.f32 %v1963, %v2412
  %v2414 = vand.u32 %v2413, 4294901760
  %2415 = vmatpush.msra.mxu0 %v2414
  %v2416 = vand.u32 %v1956, 4294901760
  %2417 = vmatmul.f32.gmra.mxu0 %v2416
  %v2418 = vpop.f32.mrf.mxu0
  %v2419 = vadd.f32 %v2314, %v2418
  %v2420 = vand.u32 %v1957, 4294901760
  %2421 = vmatmul.f32.gmra.mxu0 %v2420
  %v2422 = vpop.f32.mrf.mxu0
  %v2423 = vadd.f32 %v2320, %v2422
  %v2424 = vand.u32 %v1958, 4294901760
  %2425 = vmatmul.f32.gmra.mxu0 %v2424
  %v2426 = vpop.f32.mrf.mxu0
  %v2427 = vadd.f32 %v2326, %v2426
  %v2428 = vand.u32 %v1959, 4294901760
  %2429 = vmatmul.f32.gmra.mxu0 %v2428
  %v2430 = vpop.f32.mrf.mxu0
  %v2431 = vadd.f32 %v2332, %v2430
  %v2432 = vand.u32 %v1960, 4294901760
  %2433 = vmatmul.f32.gmra.mxu0 %v2432
  %v2434 = vpop.f32.mrf.mxu0
  %v2435 = vadd.f32 %v2338, %v2434
  %v2436 = vand.u32 %v1961, 4294901760
  %2437 = vmatmul.f32.gmra.mxu0 %v2436
  %v2438 = vpop.f32.mrf.mxu0
  %v2439 = vadd.f32 %v2344, %v2438
  %v2440 = vand.u32 %v1962, 4294901760
  %2441 = vmatmul.f32.gmra.mxu0 %v2440
  %v2442 = vpop.f32.mrf.mxu0
  %v2443 = vadd.f32 %v2350, %v2442
  %2444 = vdwg.mxu0
  %v2445 = vand.u32 %v1978, 4294901760
  %2446 = vmatpush.msra.mxu0 %v2445
  %v2447 = vand.u32 %v1977, 4294901760
  %2448 = vmatpush.msra.mxu0 %v2447
  %v2449 = vand.u32 %v1976, 4294901760
  %2450 = vmatpush.msra.mxu0 %v2449
  %v2451 = vand.u32 %v1975, 4294901760
  %2452 = vmatpush.msra.mxu0 %v2451
  %v2453 = vand.u32 %v1974, 4294901760
  %2454 = vmatpush.msra.mxu0 %v2453
  %v2455 = vand.u32 %v1973, 4294901760
  %2456 = vmatpush.msra.mxu0 %v2455
  %v2457 = vand.u32 %v1972, 4294901760
  %2458 = vmatpush.msra.mxu0 %v2457
  %v2459 = vand.u32 %v1971, 4294901760
  %2460 = vmatpush.msra.mxu0 %v2459
  %v2461 = vand.u32 %v1970, 4294901760
  %2462 = vmatpush.msra.mxu0 %v2461
  %v2463 = vand.u32 %v1969, 4294901760
  %2464 = vmatpush.msra.mxu0 %v2463
  %v2465 = vand.u32 %v1968, 4294901760
  %2466 = vmatpush.msra.mxu0 %v2465
  %v2467 = vand.u32 %v1967, 4294901760
  %2468 = vmatpush.msra.mxu0 %v2467
  %v2469 = vand.u32 %v1966, 4294901760
  %2470 = vmatpush.msra.mxu0 %v2469
  %v2471 = vand.u32 %v1965, 4294901760
  %2472 = vmatpush.msra.mxu0 %v2471
  %v2473 = vand.u32 %v1964, 4294901760
  %2474 = vmatpush.msra.mxu0 %v2473
  %v2475 = vand.u32 %v1963, 4294901760
  %2476 = vmatpush.msra.mxu0 %v2475
  %v2477 = vand.u32 %v1956, 4294901760
  %2478 = vmatmul.f32.gmra.mxu0 %v2477
  %v2479 = vpop.f32.mrf.mxu0
  %v2480 = vadd.f32 %v2419, %v2479
  %v2481 = vand.u32 %v1957, 4294901760
  %2482 = vmatmul.f32.gmra.mxu0 %v2481
  %v2483 = vpop.f32.mrf.mxu0
  %v2484 = vadd.f32 %v2423, %v2483
  %v2485 = vand.u32 %v1958, 4294901760
  %2486 = vmatmul.f32.gmra.mxu0 %v2485
  %v2487 = vpop.f32.mrf.mxu0
  %v2488 = vadd.f32 %v2427, %v2487
  %v2489 = vand.u32 %v1959, 4294901760
  %2490 = vmatmul.f32.gmra.mxu0 %v2489
  %v2491 = vpop.f32.mrf.mxu0
  %v2492 = vadd.f32 %v2431, %v2491
  %v2493 = vand.u32 %v1960, 4294901760
  %2494 = vmatmul.f32.gmra.mxu0 %v2493
  %v2495 = vpop.f32.mrf.mxu0
  %v2496 = vadd.f32 %v2435, %v2495
  %v2497 = vand.u32 %v1961, 4294901760
  %2498 = vmatmul.f32.gmra.mxu0 %v2497
  %v2499 = vpop.f32.mrf.mxu0
  %v2500 = vadd.f32 %v2439, %v2499
  %v2501 = vand.u32 %v1962, 4294901760
  %2502 = vmatmul.f32.gmra.mxu0 %v2501
  %v2503 = vpop.f32.mrf.mxu0
  %v2504 = vadd.f32 %v2443, %v2503
  %2505 = vdwg.mxu0
  %v2506 = vadd.f32 %v1942, %v2480
  %v2507 = vadd.f32 %v1943, %v2484
  %v2508 = vadd.f32 %v1944, %v2488
  %v2509 = vadd.f32 %v1945, %v2492
  %v2510 = vadd.f32 %v1946, %v2496
  %v2511 = vadd.f32 %v1947, %v2500
  %v2512 = vadd.f32 %v1948, %v2504
  %v2513 = vld [vmem:[#allocation2 + $0x8] sm:$0xff]
  %v2514 = vld [vmem:[#allocation2 + $0x10] sm:$0xff]
  %v2515 = vld [vmem:[#allocation2 + $0x18] sm:$0xff]
  %v2516 = vld [vmem:[#allocation2 + $0x20] sm:$0xff]
  %v2517 = vld [vmem:[#allocation2 + $0x28] sm:$0xff]
  %v2518 = vld [vmem:[#allocation2 + $0x30] sm:$0xff]
  %v2519 = vld [vmem:[#allocation2 + $0x38] sm:$0x1]
  %v2520 = vld [vmem:[%s1 + $0x200] sm:$0xff]
  %v2521 = vld [vmem:[%s1 + $0x208] sm:$0xff]
  %v2522 = vld [vmem:[%s1 + $0x210] sm:$0xff]
  %v2523 = vld [vmem:[%s1 + $0x218] sm:$0xff]
  %v2524 = vld [vmem:[%s1 + $0x220] sm:$0xff]
  %v2525 = vld [vmem:[%s1 + $0x228] sm:$0xff]
  %v2526 = vld [vmem:[%s1 + $0x230] sm:$0xff]
  %v2527 = vld [vmem:[%s1 + $0x238] sm:$0xff]
  %v2528 = vld [vmem:[%s1 + $0x240] sm:$0xff]
  %v2529 = vld [vmem:[%s1 + $0x248] sm:$0xff]
  %v2530 = vld [vmem:[%s1 + $0x250] sm:$0xff]
  %v2531 = vld [vmem:[%s1 + $0x258] sm:$0xff]
  %v2532 = vld [vmem:[%s1 + $0x260] sm:$0xff]
  %v2533 = vld [vmem:[%s1 + $0x268] sm:$0xff]
  %v2534 = vld [vmem:[%s1 + $0x270] sm:$0xff]
  %v2535 = vld [vmem:[%s1 + $0x278] sm:$0xff]
  %v2536 = vand.u32 %v2535, 4294901760
  %2537 = vmatpush.msra.mxu0 %v2536
  %v2538 = vand.u32 %v2534, 4294901760
  %2539 = vmatpush.msra.mxu0 %v2538
  %v2540 = vand.u32 %v2533, 4294901760
  %2541 = vmatpush.msra.mxu0 %v2540
  %v2542 = vand.u32 %v2532, 4294901760
  %2543 = vmatpush.msra.mxu0 %v2542
  %v2544 = vand.u32 %v2531, 4294901760
  %2545 = vmatpush.msra.mxu0 %v2544
  %v2546 = vand.u32 %v2530, 4294901760
  %2547 = vmatpush.msra.mxu0 %v2546
  %v2548 = vand.u32 %v2529, 4294901760
  %2549 = vmatpush.msra.mxu0 %v2548
  %v2550 = vand.u32 %v2528, 4294901760
  %2551 = vmatpush.msra.mxu0 %v2550
  %v2552 = vand.u32 %v2527, 4294901760
  %2553 = vmatpush.msra.mxu0 %v2552
  %v2554 = vand.u32 %v2526, 4294901760
  %2555 = vmatpush.msra.mxu0 %v2554
  %v2556 = vand.u32 %v2525, 4294901760
  %2557 = vmatpush.msra.mxu0 %v2556
  %v2558 = vand.u32 %v2524, 4294901760
  %2559 = vmatpush.msra.mxu0 %v2558
  %v2560 = vand.u32 %v2523, 4294901760
  %2561 = vmatpush.msra.mxu0 %v2560
  %v2562 = vand.u32 %v2522, 4294901760
  %2563 = vmatpush.msra.mxu0 %v2562
  %v2564 = vand.u32 %v2521, 4294901760
  %2565 = vmatpush.msra.mxu0 %v2564
  %v2566 = vand.u32 %v2520, 4294901760
  %2567 = vmatpush.msra.mxu0 %v2566
  %v2568 = vand.u32 %v2513, 4294901760
  %v2569 = vsub.f32 %v2513, %v2568
  %v2570 = vand.u32 %v2569, 4294901760
  %v2571 = vsub.f32 %v2569, %v2570
  %v2572 = vand.u32 %v2571, 4294901760
  %2573 = vmatmul.f32.gmra.mxu0 %v2572
  %v2574 = vpop.f32.mrf.mxu0
  %v2575 = vadd.f32 0.0, %v2574
  %v2576 = vand.u32 %v2514, 4294901760
  %v2577 = vsub.f32 %v2514, %v2576
  %v2578 = vand.u32 %v2577, 4294901760
  %v2579 = vsub.f32 %v2577, %v2578
  %v2580 = vand.u32 %v2579, 4294901760
  %2581 = vmatmul.f32.gmra.mxu0 %v2580
  %v2582 = vpop.f32.mrf.mxu0
  %v2583 = vadd.f32 0.0, %v2582
  %v2584 = vand.u32 %v2515, 4294901760
  %v2585 = vsub.f32 %v2515, %v2584
  %v2586 = vand.u32 %v2585, 4294901760
  %v2587 = vsub.f32 %v2585, %v2586
  %v2588 = vand.u32 %v2587, 4294901760
  %2589 = vmatmul.f32.gmra.mxu0 %v2588
  %v2590 = vpop.f32.mrf.mxu0
  %v2591 = vadd.f32 0.0, %v2590
  %v2592 = vand.u32 %v2516, 4294901760
  %v2593 = vsub.f32 %v2516, %v2592
  %v2594 = vand.u32 %v2593, 4294901760
  %v2595 = vsub.f32 %v2593, %v2594
  %v2596 = vand.u32 %v2595, 4294901760
  %2597 = vmatmul.f32.gmra.mxu0 %v2596
  %v2598 = vpop.f32.mrf.mxu0
  %v2599 = vadd.f32 0.0, %v2598
  %v2600 = vand.u32 %v2517, 4294901760
  %v2601 = vsub.f32 %v2517, %v2600
  %v2602 = vand.u32 %v2601, 4294901760
  %v2603 = vsub.f32 %v2601, %v2602
  %v2604 = vand.u32 %v2603, 4294901760
  %2605 = vmatmul.f32.gmra.mxu0 %v2604
  %v2606 = vpop.f32.mrf.mxu0
  %v2607 = vadd.f32 0.0, %v2606
  %v2608 = vand.u32 %v2518, 4294901760
  %v2609 = vsub.f32 %v2518, %v2608
  %v2610 = vand.u32 %v2609, 4294901760
  %v2611 = vsub.f32 %v2609, %v2610
  %v2612 = vand.u32 %v2611, 4294901760
  %2613 = vmatmul.f32.gmra.mxu0 %v2612
  %v2614 = vpop.f32.mrf.mxu0
  %v2615 = vadd.f32 0.0, %v2614
  %v2616 = vand.u32 %v2519, 4294901760
  %v2617 = vsub.f32 %v2519, %v2616
  %v2618 = vand.u32 %v2617, 4294901760
  %v2619 = vsub.f32 %v2617, %v2618
  %v2620 = vand.u32 %v2619, 4294901760
  %2621 = vmatmul.f32.gmra.mxu0 %v2620
  %v2622 = vpop.f32.mrf.mxu0
  %v2623 = vadd.f32 0.0, %v2622
  %2624 = vdwg.mxu0
  %v2625 = vand.u32 %v2535, 4294901760
  %v2626 = vsub.f32 %v2535, %v2625
  %v2627 = vand.u32 %v2626, 4294901760
  %v2628 = vsub.f32 %v2626, %v2627
  %v2629 = vand.u32 %v2628, 4294901760
  %2630 = vmatpush.msra.mxu0 %v2629
  %v2631 = vand.u32 %v2534, 4294901760
  %v2632 = vsub.f32 %v2534, %v2631
  %v2633 = vand.u32 %v2632, 4294901760
  %v2634 = vsub.f32 %v2632, %v2633
  %v2635 = vand.u32 %v2634, 4294901760
  %2636 = vmatpush.msra.mxu0 %v2635
  %v2637 = vand.u32 %v2533, 4294901760
  %v2638 = vsub.f32 %v2533, %v2637
  %v2639 = vand.u32 %v2638, 4294901760
  %v2640 = vsub.f32 %v2638, %v2639
  %v2641 = vand.u32 %v2640, 4294901760
  %2642 = vmatpush.msra.mxu0 %v2641
  %v2643 = vand.u32 %v2532, 4294901760
  %v2644 = vsub.f32 %v2532, %v2643
  %v2645 = vand.u32 %v2644, 4294901760
  %v2646 = vsub.f32 %v2644, %v2645
  %v2647 = vand.u32 %v2646, 4294901760
  %2648 = vmatpush.msra.mxu0 %v2647
  %v2649 = vand.u32 %v2531, 4294901760
  %v2650 = vsub.f32 %v2531, %v2649
  %v2651 = vand.u32 %v2650, 4294901760
  %v2652 = vsub.f32 %v2650, %v2651
  %v2653 = vand.u32 %v2652, 4294901760
  %2654 = vmatpush.msra.mxu0 %v2653
  %v2655 = vand.u32 %v2530, 4294901760
  %v2656 = vsub.f32 %v2530, %v2655
  %v2657 = vand.u32 %v2656, 4294901760
  %v2658 = vsub.f32 %v2656, %v2657
  %v2659 = vand.u32 %v2658, 4294901760
  %2660 = vmatpush.msra.mxu0 %v2659
  %v2661 = vand.u32 %v2529, 4294901760
  %v2662 = vsub.f32 %v2529, %v2661
  %v2663 = vand.u32 %v2662, 4294901760
  %v2664 = vsub.f32 %v2662, %v2663
  %v2665 = vand.u32 %v2664, 4294901760
  %2666 = vmatpush.msra.mxu0 %v2665
  %v2667 = vand.u32 %v2528, 4294901760
  %v2668 = vsub.f32 %v2528, %v2667
  %v2669 = vand.u32 %v2668, 4294901760
  %v2670 = vsub.f32 %v2668, %v2669
  %v2671 = vand.u32 %v2670, 4294901760
  %2672 = vmatpush.msra.mxu0 %v2671
  %v2673 = vand.u32 %v2527, 4294901760
  %v2674 = vsub.f32 %v2527, %v2673
  %v2675 = vand.u32 %v2674, 4294901760
  %v2676 = vsub.f32 %v2674, %v2675
  %v2677 = vand.u32 %v2676, 4294901760
  %2678 = vmatpush.msra.mxu0 %v2677
  %v2679 = vand.u32 %v2526, 4294901760
  %v2680 = vsub.f32 %v2526, %v2679
  %v2681 = vand.u32 %v2680, 4294901760
  %v2682 = vsub.f32 %v2680, %v2681
  %v2683 = vand.u32 %v2682, 4294901760
  %2684 = vmatpush.msra.mxu0 %v2683
  %v2685 = vand.u32 %v2525, 4294901760
  %v2686 = vsub.f32 %v2525, %v2685
  %v2687 = vand.u32 %v2686, 4294901760
  %v2688 = vsub.f32 %v2686, %v2687
  %v2689 = vand.u32 %v2688, 4294901760
  %2690 = vmatpush.msra.mxu0 %v2689
  %v2691 = vand.u32 %v2524, 4294901760
  %v2692 = vsub.f32 %v2524, %v2691
  %v2693 = vand.u32 %v2692, 4294901760
  %v2694 = vsub.f32 %v2692, %v2693
  %v2695 = vand.u32 %v2694, 4294901760
  %2696 = vmatpush.msra.mxu0 %v2695
  %v2697 = vand.u32 %v2523, 4294901760
  %v2698 = vsub.f32 %v2523, %v2697
  %v2699 = vand.u32 %v2698, 4294901760
  %v2700 = vsub.f32 %v2698, %v2699
  %v2701 = vand.u32 %v2700, 4294901760
  %2702 = vmatpush.msra.mxu0 %v2701
  %v2703 = vand.u32 %v2522, 4294901760
  %v2704 = vsub.f32 %v2522, %v2703
  %v2705 = vand.u32 %v2704, 4294901760
  %v2706 = vsub.f32 %v2704, %v2705
  %v2707 = vand.u32 %v2706, 4294901760
  %2708 = vmatpush.msra.mxu0 %v2707
  %v2709 = vand.u32 %v2521, 4294901760
  %v2710 = vsub.f32 %v2521, %v2709
  %v2711 = vand.u32 %v2710, 4294901760
  %v2712 = vsub.f32 %v2710, %v2711
  %v2713 = vand.u32 %v2712, 4294901760
  %2714 = vmatpush.msra.mxu0 %v2713
  %v2715 = vand.u32 %v2520, 4294901760
  %v2716 = vsub.f32 %v2520, %v2715
  %v2717 = vand.u32 %v2716, 4294901760
  %v2718 = vsub.f32 %v2716, %v2717
  %v2719 = vand.u32 %v2718, 4294901760
  %2720 = vmatpush.msra.mxu0 %v2719
  %v2721 = vand.u32 %v2513, 4294901760
  %2722 = vmatmul.f32.gmra.mxu0 %v2721
  %v2723 = vpop.f32.mrf.mxu0
  %v2724 = vadd.f32 %v2575, %v2723
  %v2725 = vand.u32 %v2514, 4294901760
  %2726 = vmatmul.f32.gmra.mxu0 %v2725
  %v2727 = vpop.f32.mrf.mxu0
  %v2728 = vadd.f32 %v2583, %v2727
  %v2729 = vand.u32 %v2515, 4294901760
  %2730 = vmatmul.f32.gmra.mxu0 %v2729
  %v2731 = vpop.f32.mrf.mxu0
  %v2732 = vadd.f32 %v2591, %v2731
  %v2733 = vand.u32 %v2516, 4294901760
  %2734 = vmatmul.f32.gmra.mxu0 %v2733
  %v2735 = vpop.f32.mrf.mxu0
  %v2736 = vadd.f32 %v2599, %v2735
  %v2737 = vand.u32 %v2517, 4294901760
  %2738 = vmatmul.f32.gmra.mxu0 %v2737
  %v2739 = vpop.f32.mrf.mxu0
  %v2740 = vadd.f32 %v2607, %v2739
  %v2741 = vand.u32 %v2518, 4294901760
  %2742 = vmatmul.f32.gmra.mxu0 %v2741
  %v2743 = vpop.f32.mrf.mxu0
  %v2744 = vadd.f32 %v2615, %v2743
  %v2745 = vand.u32 %v2519, 4294901760
  %2746 = vmatmul.f32.gmra.mxu0 %v2745
  %v2747 = vpop.f32.mrf.mxu0
  %v2748 = vadd.f32 %v2623, %v2747
  %2749 = vdwg.mxu0
  %v2750 = vand.u32 %v2535, 4294901760
  %v2751 = vsub.f32 %v2535, %v2750
  %2752 = vmatpush.msra.mxu0 %v2751
  %v2753 = vand.u32 %v2534, 4294901760
  %v2754 = vsub.f32 %v2534, %v2753
  %2755 = vmatpush.msra.mxu0 %v2754
  %v2756 = vand.u32 %v2533, 4294901760
  %v2757 = vsub.f32 %v2533, %v2756
  %2758 = vmatpush.msra.mxu0 %v2757
  %v2759 = vand.u32 %v2532, 4294901760
  %v2760 = vsub.f32 %v2532, %v2759
  %2761 = vmatpush.msra.mxu0 %v2760
  %v2762 = vand.u32 %v2531, 4294901760
  %v2763 = vsub.f32 %v2531, %v2762
  %2764 = vmatpush.msra.mxu0 %v2763
  %v2765 = vand.u32 %v2530, 4294901760
  %v2766 = vsub.f32 %v2530, %v2765
  %2767 = vmatpush.msra.mxu0 %v2766
  %v2768 = vand.u32 %v2529, 4294901760
  %v2769 = vsub.f32 %v2529, %v2768
  %2770 = vmatpush.msra.mxu0 %v2769
  %v2771 = vand.u32 %v2528, 4294901760
  %v2772 = vsub.f32 %v2528, %v2771
  %2773 = vmatpush.msra.mxu0 %v2772
  %v2774 = vand.u32 %v2527, 4294901760
  %v2775 = vsub.f32 %v2527, %v2774
  %2776 = vmatpush.msra.mxu0 %v2775
  %v2777 = vand.u32 %v2526, 4294901760
  %v2778 = vsub.f32 %v2526, %v2777
  %2779 = vmatpush.msra.mxu0 %v2778
  %v2780 = vand.u32 %v2525, 4294901760
  %v2781 = vsub.f32 %v2525, %v2780
  %2782 = vmatpush.msra.mxu0 %v2781
  %v2783 = vand.u32 %v2524, 4294901760
  %v2784 = vsub.f32 %v2524, %v2783
  %2785 = vmatpush.msra.mxu0 %v2784
  %v2786 = vand.u32 %v2523, 4294901760
  %v2787 = vsub.f32 %v2523, %v2786
  %2788 = vmatpush.msra.mxu0 %v2787
  %v2789 = vand.u32 %v2522, 4294901760
  %v2790 = vsub.f32 %v2522, %v2789
  %2791 = vmatpush.msra.mxu0 %v2790
  %v2792 = vand.u32 %v2521, 4294901760
  %v2793 = vsub.f32 %v2521, %v2792
  %2794 = vmatpush.msra.mxu0 %v2793
  %v2795 = vand.u32 %v2520, 4294901760
  %v2796 = vsub.f32 %v2520, %v2795
  %2797 = vmatpush.msra.mxu0 %v2796
  %v2798 = vand.u32 %v2513, 4294901760
  %v2799 = vsub.f32 %v2513, %v2798
  %2800 = vmatmul.f32.gmra.mxu0 %v2799
  %v2801 = vpop.f32.mrf.mxu0
  %v2802 = vadd.f32 %v2724, %v2801
  %v2803 = vand.u32 %v2514, 4294901760
  %v2804 = vsub.f32 %v2514, %v2803
  %2805 = vmatmul.f32.gmra.mxu0 %v2804
  %v2806 = vpop.f32.mrf.mxu0
  %v2807 = vadd.f32 %v2728, %v2806
  %v2808 = vand.u32 %v2515, 4294901760
  %v2809 = vsub.f32 %v2515, %v2808
  %2810 = vmatmul.f32.gmra.mxu0 %v2809
  %v2811 = vpop.f32.mrf.mxu0
  %v2812 = vadd.f32 %v2732, %v2811
  %v2813 = vand.u32 %v2516, 4294901760
  %v2814 = vsub.f32 %v2516, %v2813
  %2815 = vmatmul.f32.gmra.mxu0 %v2814
  %v2816 = vpop.f32.mrf.mxu0
  %v2817 = vadd.f32 %v2736, %v2816
  %v2818 = vand.u32 %v2517, 4294901760
  %v2819 = vsub.f32 %v2517, %v2818
  %2820 = vmatmul.f32.gmra.mxu0 %v2819
  %v2821 = vpop.f32.mrf.mxu0
  %v2822 = vadd.f32 %v2740, %v2821
  %v2823 = vand.u32 %v2518, 4294901760
  %v2824 = vsub.f32 %v2518, %v2823
  %2825 = vmatmul.f32.gmra.mxu0 %v2824
  %v2826 = vpop.f32.mrf.mxu0
  %v2827 = vadd.f32 %v2744, %v2826
  %v2828 = vand.u32 %v2519, 4294901760
  %v2829 = vsub.f32 %v2519, %v2828
  %2830 = vmatmul.f32.gmra.mxu0 %v2829
  %v2831 = vpop.f32.mrf.mxu0
  %v2832 = vadd.f32 %v2748, %v2831
  %2833 = vdwg.mxu0
  %v2834 = vand.u32 %v2535, 4294901760
  %2835 = vmatpush.msra.mxu0 %v2834
  %v2836 = vand.u32 %v2534, 4294901760
  %2837 = vmatpush.msra.mxu0 %v2836
  %v2838 = vand.u32 %v2533, 4294901760
  %2839 = vmatpush.msra.mxu0 %v2838
  %v2840 = vand.u32 %v2532, 4294901760
  %2841 = vmatpush.msra.mxu0 %v2840
  %v2842 = vand.u32 %v2531, 4294901760
  %2843 = vmatpush.msra.mxu0 %v2842
  %v2844 = vand.u32 %v2530, 4294901760
  %2845 = vmatpush.msra.mxu0 %v2844
  %v2846 = vand.u32 %v2529, 4294901760
  %2847 = vmatpush.msra.mxu0 %v2846
  %v2848 = vand.u32 %v2528, 4294901760
  %2849 = vmatpush.msra.mxu0 %v2848
  %v2850 = vand.u32 %v2527, 4294901760
  %2851 = vmatpush.msra.mxu0 %v2850
  %v2852 = vand.u32 %v2526, 4294901760
  %2853 = vmatpush.msra.mxu0 %v2852
  %v2854 = vand.u32 %v2525, 4294901760
  %2855 = vmatpush.msra.mxu0 %v2854
  %v2856 = vand.u32 %v2524, 4294901760
  %2857 = vmatpush.msra.mxu0 %v2856
  %v2858 = vand.u32 %v2523, 4294901760
  %2859 = vmatpush.msra.mxu0 %v2858
  %v2860 = vand.u32 %v2522, 4294901760
  %2861 = vmatpush.msra.mxu0 %v2860
  %v2862 = vand.u32 %v2521, 4294901760
  %2863 = vmatpush.msra.mxu0 %v2862
  %v2864 = vand.u32 %v2520, 4294901760
  %2865 = vmatpush.msra.mxu0 %v2864
  %v2866 = vand.u32 %v2513, 4294901760
  %v2867 = vsub.f32 %v2513, %v2866
  %v2868 = vand.u32 %v2867, 4294901760
  %2869 = vmatmul.f32.gmra.mxu0 %v2868
  %v2870 = vpop.f32.mrf.mxu0
  %v2871 = vadd.f32 %v2802, %v2870
  %v2872 = vand.u32 %v2514, 4294901760
  %v2873 = vsub.f32 %v2514, %v2872
  %v2874 = vand.u32 %v2873, 4294901760
  %2875 = vmatmul.f32.gmra.mxu0 %v2874
  %v2876 = vpop.f32.mrf.mxu0
  %v2877 = vadd.f32 %v2807, %v2876
  %v2878 = vand.u32 %v2515, 4294901760
  %v2879 = vsub.f32 %v2515, %v2878
  %v2880 = vand.u32 %v2879, 4294901760
  %2881 = vmatmul.f32.gmra.mxu0 %v2880
  %v2882 = vpop.f32.mrf.mxu0
  %v2883 = vadd.f32 %v2812, %v2882
  %v2884 = vand.u32 %v2516, 4294901760
  %v2885 = vsub.f32 %v2516, %v2884
  %v2886 = vand.u32 %v2885, 4294901760
  %2887 = vmatmul.f32.gmra.mxu0 %v2886
  %v2888 = vpop.f32.mrf.mxu0
  %v2889 = vadd.f32 %v2817, %v2888
  %v2890 = vand.u32 %v2517, 4294901760
  %v2891 = vsub.f32 %v2517, %v2890
  %v2892 = vand.u32 %v2891, 4294901760
  %2893 = vmatmul.f32.gmra.mxu0 %v2892
  %v2894 = vpop.f32.mrf.mxu0
  %v2895 = vadd.f32 %v2822, %v2894
  %v2896 = vand.u32 %v2518, 4294901760
  %v2897 = vsub.f32 %v2518, %v2896
  %v2898 = vand.u32 %v2897, 4294901760
  %2899 = vmatmul.f32.gmra.mxu0 %v2898
  %v2900 = vpop.f32.mrf.mxu0
  %v2901 = vadd.f32 %v2827, %v2900
  %v2902 = vand.u32 %v2519, 4294901760
  %v2903 = vsub.f32 %v2519, %v2902
  %v2904 = vand.u32 %v2903, 4294901760
  %2905 = vmatmul.f32.gmra.mxu0 %v2904
  %v2906 = vpop.f32.mrf.mxu0
  %v2907 = vadd.f32 %v2832, %v2906
  %2908 = vdwg.mxu0
  %v2909 = vand.u32 %v2535, 4294901760
  %v2910 = vsub.f32 %v2535, %v2909
  %v2911 = vand.u32 %v2910, 4294901760
  %2912 = vmatpush.msra.mxu0 %v2911
  %v2913 = vand.u32 %v2534, 4294901760
  %v2914 = vsub.f32 %v2534, %v2913
  %v2915 = vand.u32 %v2914, 4294901760
  %2916 = vmatpush.msra.mxu0 %v2915
  %v2917 = vand.u32 %v2533, 4294901760
  %v2918 = vsub.f32 %v2533, %v2917
  %v2919 = vand.u32 %v2918, 4294901760
  %2920 = vmatpush.msra.mxu0 %v2919
  %v2921 = vand.u32 %v2532, 4294901760
  %v2922 = vsub.f32 %v2532, %v2921
  %v2923 = vand.u32 %v2922, 4294901760
  %2924 = vmatpush.msra.mxu0 %v2923
  %v2925 = vand.u32 %v2531, 4294901760
  %v2926 = vsub.f32 %v2531, %v2925
  %v2927 = vand.u32 %v2926, 4294901760
  %2928 = vmatpush.msra.mxu0 %v2927
  %v2929 = vand.u32 %v2530, 4294901760
  %v2930 = vsub.f32 %v2530, %v2929
  %v2931 = vand.u32 %v2930, 4294901760
  %2932 = vmatpush.msra.mxu0 %v2931
  %v2933 = vand.u32 %v2529, 4294901760
  %v2934 = vsub.f32 %v2529, %v2933
  %v2935 = vand.u32 %v2934, 4294901760
  %2936 = vmatpush.msra.mxu0 %v2935
  %v2937 = vand.u32 %v2528, 4294901760
  %v2938 = vsub.f32 %v2528, %v2937
  %v2939 = vand.u32 %v2938, 4294901760
  %2940 = vmatpush.msra.mxu0 %v2939
  %v2941 = vand.u32 %v2527, 4294901760
  %v2942 = vsub.f32 %v2527, %v2941
  %v2943 = vand.u32 %v2942, 4294901760
  %2944 = vmatpush.msra.mxu0 %v2943
  %v2945 = vand.u32 %v2526, 4294901760
  %v2946 = vsub.f32 %v2526, %v2945
  %v2947 = vand.u32 %v2946, 4294901760
  %2948 = vmatpush.msra.mxu0 %v2947
  %v2949 = vand.u32 %v2525, 4294901760
  %v2950 = vsub.f32 %v2525, %v2949
  %v2951 = vand.u32 %v2950, 4294901760
  %2952 = vmatpush.msra.mxu0 %v2951
  %v2953 = vand.u32 %v2524, 4294901760
  %v2954 = vsub.f32 %v2524, %v2953
  %v2955 = vand.u32 %v2954, 4294901760
  %2956 = vmatpush.msra.mxu0 %v2955
  %v2957 = vand.u32 %v2523, 4294901760
  %v2958 = vsub.f32 %v2523, %v2957
  %v2959 = vand.u32 %v2958, 4294901760
  %2960 = vmatpush.msra.mxu0 %v2959
  %v2961 = vand.u32 %v2522, 4294901760
  %v2962 = vsub.f32 %v2522, %v2961
  %v2963 = vand.u32 %v2962, 4294901760
  %2964 = vmatpush.msra.mxu0 %v2963
  %v2965 = vand.u32 %v2521, 4294901760
  %v2966 = vsub.f32 %v2521, %v2965
  %v2967 = vand.u32 %v2966, 4294901760
  %2968 = vmatpush.msra.mxu0 %v2967
  %v2969 = vand.u32 %v2520, 4294901760
  %v2970 = vsub.f32 %v2520, %v2969
  %v2971 = vand.u32 %v2970, 4294901760
  %2972 = vmatpush.msra.mxu0 %v2971
  %v2973 = vand.u32 %v2513, 4294901760
  %2974 = vmatmul.f32.gmra.mxu0 %v2973
  %v2975 = vpop.f32.mrf.mxu0
  %v2976 = vadd.f32 %v2871, %v2975
  %v2977 = vand.u32 %v2514, 4294901760
  %2978 = vmatmul.f32.gmra.mxu0 %v2977
  %v2979 = vpop.f32.mrf.mxu0
  %v2980 = vadd.f32 %v2877, %v2979
  %v2981 = vand.u32 %v2515, 4294901760
  %2982 = vmatmul.f32.gmra.mxu0 %v2981
  %v2983 = vpop.f32.mrf.mxu0
  %v2984 = vadd.f32 %v2883, %v2983
  %v2985 = vand.u32 %v2516, 4294901760
  %2986 = vmatmul.f32.gmra.mxu0 %v2985
  %v2987 = vpop.f32.mrf.mxu0
  %v2988 = vadd.f32 %v2889, %v2987
  %v2989 = vand.u32 %v2517, 4294901760
  %2990 = vmatmul.f32.gmra.mxu0 %v2989
  %v2991 = vpop.f32.mrf.mxu0
  %v2992 = vadd.f32 %v2895, %v2991
  %v2993 = vand.u32 %v2518, 4294901760
  %2994 = vmatmul.f32.gmra.mxu0 %v2993
  %v2995 = vpop.f32.mrf.mxu0
  %v2996 = vadd.f32 %v2901, %v2995
  %v2997 = vand.u32 %v2519, 4294901760
  %2998 = vmatmul.f32.gmra.mxu0 %v2997
  %v2999 = vpop.f32.mrf.mxu0
  %v3000 = vadd.f32 %v2907, %v2999
  %3001 = vdwg.mxu0
  %v3002 = vand.u32 %v2535, 4294901760
  %3003 = vmatpush.msra.mxu0 %v3002
  %v3004 = vand.u32 %v2534, 4294901760
  %3005 = vmatpush.msra.mxu0 %v3004
  %v3006 = vand.u32 %v2533, 4294901760
  %3007 = vmatpush.msra.mxu0 %v3006
  %v3008 = vand.u32 %v2532, 4294901760
  %3009 = vmatpush.msra.mxu0 %v3008
  %v3010 = vand.u32 %v2531, 4294901760
  %3011 = vmatpush.msra.mxu0 %v3010
  %v3012 = vand.u32 %v2530, 4294901760
  %3013 = vmatpush.msra.mxu0 %v3012
  %v3014 = vand.u32 %v2529, 4294901760
  %3015 = vmatpush.msra.mxu0 %v3014
  %v3016 = vand.u32 %v2528, 4294901760
  %3017 = vmatpush.msra.mxu0 %v3016
  %v3018 = vand.u32 %v2527, 4294901760
  %3019 = vmatpush.msra.mxu0 %v3018
  %v3020 = vand.u32 %v2526, 4294901760
  %3021 = vmatpush.msra.mxu0 %v3020
  %v3022 = vand.u32 %v2525, 4294901760
  %3023 = vmatpush.msra.mxu0 %v3022
  %v3024 = vand.u32 %v2524, 4294901760
  %3025 = vmatpush.msra.mxu0 %v3024
  %v3026 = vand.u32 %v2523, 4294901760
  %3027 = vmatpush.msra.mxu0 %v3026
  %v3028 = vand.u32 %v2522, 4294901760
  %3029 = vmatpush.msra.mxu0 %v3028
  %v3030 = vand.u32 %v2521, 4294901760
  %3031 = vmatpush.msra.mxu0 %v3030
  %v3032 = vand.u32 %v2520, 4294901760
  %3033 = vmatpush.msra.mxu0 %v3032
  %v3034 = vand.u32 %v2513, 4294901760
  %3035 = vmatmul.f32.gmra.mxu0 %v3034
  %v3036 = vpop.f32.mrf.mxu0
  %v3037 = vadd.f32 %v2976, %v3036
  %v3038 = vand.u32 %v2514, 4294901760
  %3039 = vmatmul.f32.gmra.mxu0 %v3038
  %v3040 = vpop.f32.mrf.mxu0
  %v3041 = vadd.f32 %v2980, %v3040
  %v3042 = vand.u32 %v2515, 4294901760
  %3043 = vmatmul.f32.gmra.mxu0 %v3042
  %v3044 = vpop.f32.mrf.mxu0
  %v3045 = vadd.f32 %v2984, %v3044
  %v3046 = vand.u32 %v2516, 4294901760
  %3047 = vmatmul.f32.gmra.mxu0 %v3046
  %v3048 = vpop.f32.mrf.mxu0
  %v3049 = vadd.f32 %v2988, %v3048
  %v3050 = vand.u32 %v2517, 4294901760
  %3051 = vmatmul.f32.gmra.mxu0 %v3050
  %v3052 = vpop.f32.mrf.mxu0
  %v3053 = vadd.f32 %v2992, %v3052
  %v3054 = vand.u32 %v2518, 4294901760
  %3055 = vmatmul.f32.gmra.mxu0 %v3054
  %v3056 = vpop.f32.mrf.mxu0
  %v3057 = vadd.f32 %v2996, %v3056
  %v3058 = vand.u32 %v2519, 4294901760
  %3059 = vmatmul.f32.gmra.mxu0 %v3058
  %v3060 = vpop.f32.mrf.mxu0
  %v3061 = vadd.f32 %v3000, %v3060
  %3062 = vdwg.mxu0
  %v3063 = vadd.f32 %v2506, %v3037
  %v3064 = vadd.f32 %v2507, %v3041
  %v3065 = vadd.f32 %v2508, %v3045
  %v3066 = vadd.f32 %v2509, %v3049
  %v3067 = vadd.f32 %v2510, %v3053
  %v3068 = vadd.f32 %v2511, %v3057
  %v3069 = vadd.f32 %v2512, %v3061
  %v3070 = vld [vmem:[#allocation2 + $0x9] sm:$0xff]
  %v3071 = vld [vmem:[#allocation2 + $0x11] sm:$0xff]
  %v3072 = vld [vmem:[#allocation2 + $0x19] sm:$0xff]
  %v3073 = vld [vmem:[#allocation2 + $0x21] sm:$0xff]
  %v3074 = vld [vmem:[#allocation2 + $0x29] sm:$0xff]
  %v3075 = vld [vmem:[#allocation2 + $0x31] sm:$0xff]
  %v3076 = vld [vmem:[#allocation2 + $0x39] sm:$0x1]
  %v3077 = vmul.f32 %v3070, %v271
  %v3078 = vmul.f32 %v3071, %v272
  %v3079 = vmul.f32 %v3072, %v273
  %v3080 = vmul.f32 %v3073, %v274
  %v3081 = vmul.f32 %v3074, %v275
  %v3082 = vmul.f32 %v3075, %v276
  %v3083 = vmul.f32 %v3076, %v277
  %v3084 = vld [vmem:[%s1 + $0x280] sm:$0xff]
  %v3085 = vld [vmem:[%s1 + $0x288] sm:$0xff]
  %v3086 = vld [vmem:[%s1 + $0x290] sm:$0xff]
  %v3087 = vld [vmem:[%s1 + $0x298] sm:$0xff]
  %v3088 = vld [vmem:[%s1 + $0x2a0] sm:$0xff]
  %v3089 = vld [vmem:[%s1 + $0x2a8] sm:$0xff]
  %v3090 = vld [vmem:[%s1 + $0x2b0] sm:$0xff]
  %v3091 = vld [vmem:[%s1 + $0x2b8] sm:$0xff]
  %v3092 = vld [vmem:[%s1 + $0x2c0] sm:$0xff]
  %v3093 = vld [vmem:[%s1 + $0x2c8] sm:$0xff]
  %v3094 = vld [vmem:[%s1 + $0x2d0] sm:$0xff]
  %v3095 = vld [vmem:[%s1 + $0x2d8] sm:$0xff]
  %v3096 = vld [vmem:[%s1 + $0x2e0] sm:$0xff]
  %v3097 = vld [vmem:[%s1 + $0x2e8] sm:$0xff]
  %v3098 = vld [vmem:[%s1 + $0x2f0] sm:$0xff]
  %v3099 = vld [vmem:[%s1 + $0x2f8] sm:$0xff]
  %v3100 = vand.u32 %v3099, 4294901760
  %3101 = vmatpush.msra.mxu0 %v3100
  %v3102 = vand.u32 %v3098, 4294901760
  %3103 = vmatpush.msra.mxu0 %v3102
  %v3104 = vand.u32 %v3097, 4294901760
  %3105 = vmatpush.msra.mxu0 %v3104
  %v3106 = vand.u32 %v3096, 4294901760
  %3107 = vmatpush.msra.mxu0 %v3106
  %v3108 = vand.u32 %v3095, 4294901760
  %3109 = vmatpush.msra.mxu0 %v3108
  %v3110 = vand.u32 %v3094, 4294901760
  %3111 = vmatpush.msra.mxu0 %v3110
  %v3112 = vand.u32 %v3093, 4294901760
  %3113 = vmatpush.msra.mxu0 %v3112
  %v3114 = vand.u32 %v3092, 4294901760
  %3115 = vmatpush.msra.mxu0 %v3114
  %v3116 = vand.u32 %v3091, 4294901760
  %3117 = vmatpush.msra.mxu0 %v3116
  %v3118 = vand.u32 %v3090, 4294901760
  %3119 = vmatpush.msra.mxu0 %v3118
  %v3120 = vand.u32 %v3089, 4294901760
  %3121 = vmatpush.msra.mxu0 %v3120
  %v3122 = vand.u32 %v3088, 4294901760
  %3123 = vmatpush.msra.mxu0 %v3122
  %v3124 = vand.u32 %v3087, 4294901760
  %3125 = vmatpush.msra.mxu0 %v3124
  %v3126 = vand.u32 %v3086, 4294901760
  %3127 = vmatpush.msra.mxu0 %v3126
  %v3128 = vand.u32 %v3085, 4294901760
  %3129 = vmatpush.msra.mxu0 %v3128
  %v3130 = vand.u32 %v3084, 4294901760
  %3131 = vmatpush.msra.mxu0 %v3130
  %v3132 = vand.u32 %v3077, 4294901760
  %v3133 = vsub.f32 %v3077, %v3132
  %v3134 = vand.u32 %v3133, 4294901760
  %v3135 = vsub.f32 %v3133, %v3134
  %v3136 = vand.u32 %v3135, 4294901760
  %3137 = vmatmul.f32.gmra.mxu0 %v3136
  %v3138 = vpop.f32.mrf.mxu0
  %v3139 = vadd.f32 0.0, %v3138
  %v3140 = vand.u32 %v3078, 4294901760
  %v3141 = vsub.f32 %v3078, %v3140
  %v3142 = vand.u32 %v3141, 4294901760
  %v3143 = vsub.f32 %v3141, %v3142
  %v3144 = vand.u32 %v3143, 4294901760
  %3145 = vmatmul.f32.gmra.mxu0 %v3144
  %v3146 = vpop.f32.mrf.mxu0
  %v3147 = vadd.f32 0.0, %v3146
  %v3148 = vand.u32 %v3079, 4294901760
  %v3149 = vsub.f32 %v3079, %v3148
  %v3150 = vand.u32 %v3149, 4294901760
  %v3151 = vsub.f32 %v3149, %v3150
  %v3152 = vand.u32 %v3151, 4294901760
  %3153 = vmatmul.f32.gmra.mxu0 %v3152
  %v3154 = vpop.f32.mrf.mxu0
  %v3155 = vadd.f32 0.0, %v3154
  %v3156 = vand.u32 %v3080, 4294901760
  %v3157 = vsub.f32 %v3080, %v3156
  %v3158 = vand.u32 %v3157, 4294901760
  %v3159 = vsub.f32 %v3157, %v3158
  %v3160 = vand.u32 %v3159, 4294901760
  %3161 = vmatmul.f32.gmra.mxu0 %v3160
  %v3162 = vpop.f32.mrf.mxu0
  %v3163 = vadd.f32 0.0, %v3162
  %v3164 = vand.u32 %v3081, 4294901760
  %v3165 = vsub.f32 %v3081, %v3164
  %v3166 = vand.u32 %v3165, 4294901760
  %v3167 = vsub.f32 %v3165, %v3166
  %v3168 = vand.u32 %v3167, 4294901760
  %3169 = vmatmul.f32.gmra.mxu0 %v3168
  %v3170 = vpop.f32.mrf.mxu0
  %v3171 = vadd.f32 0.0, %v3170
  %v3172 = vand.u32 %v3082, 4294901760
  %v3173 = vsub.f32 %v3082, %v3172
  %v3174 = vand.u32 %v3173, 4294901760
  %v3175 = vsub.f32 %v3173, %v3174
  %v3176 = vand.u32 %v3175, 4294901760
  %3177 = vmatmul.f32.gmra.mxu0 %v3176
  %v3178 = vpop.f32.mrf.mxu0
  %v3179 = vadd.f32 0.0, %v3178
  %v3180 = vand.u32 %v3083, 4294901760
  %v3181 = vsub.f32 %v3083, %v3180
  %v3182 = vand.u32 %v3181, 4294901760
  %v3183 = vsub.f32 %v3181, %v3182
  %v3184 = vand.u32 %v3183, 4294901760
  %3185 = vmatmul.f32.gmra.mxu0 %v3184
  %v3186 = vpop.f32.mrf.mxu0
  %v3187 = vadd.f32 0.0, %v3186
  %3188 = vdwg.mxu0
  %v3189 = vand.u32 %v3099, 4294901760
  %v3190 = vsub.f32 %v3099, %v3189
  %v3191 = vand.u32 %v3190, 4294901760
  %v3192 = vsub.f32 %v3190, %v3191
  %v3193 = vand.u32 %v3192, 4294901760
  %3194 = vmatpush.msra.mxu0 %v3193
  %v3195 = vand.u32 %v3098, 4294901760
  %v3196 = vsub.f32 %v3098, %v3195
  %v3197 = vand.u32 %v3196, 4294901760
  %v3198 = vsub.f32 %v3196, %v3197
  %v3199 = vand.u32 %v3198, 4294901760
  %3200 = vmatpush.msra.mxu0 %v3199
  %v3201 = vand.u32 %v3097, 4294901760
  %v3202 = vsub.f32 %v3097, %v3201
  %v3203 = vand.u32 %v3202, 4294901760
  %v3204 = vsub.f32 %v3202, %v3203
  %v3205 = vand.u32 %v3204, 4294901760
  %3206 = vmatpush.msra.mxu0 %v3205
  %v3207 = vand.u32 %v3096, 4294901760
  %v3208 = vsub.f32 %v3096, %v3207
  %v3209 = vand.u32 %v3208, 4294901760
  %v3210 = vsub.f32 %v3208, %v3209
  %v3211 = vand.u32 %v3210, 4294901760
  %3212 = vmatpush.msra.mxu0 %v3211
  %v3213 = vand.u32 %v3095, 4294901760
  %v3214 = vsub.f32 %v3095, %v3213
  %v3215 = vand.u32 %v3214, 4294901760
  %v3216 = vsub.f32 %v3214, %v3215
  %v3217 = vand.u32 %v3216, 4294901760
  %3218 = vmatpush.msra.mxu0 %v3217
  %v3219 = vand.u32 %v3094, 4294901760
  %v3220 = vsub.f32 %v3094, %v3219
  %v3221 = vand.u32 %v3220, 4294901760
  %v3222 = vsub.f32 %v3220, %v3221
  %v3223 = vand.u32 %v3222, 4294901760
  %3224 = vmatpush.msra.mxu0 %v3223
  %v3225 = vand.u32 %v3093, 4294901760
  %v3226 = vsub.f32 %v3093, %v3225
  %v3227 = vand.u32 %v3226, 4294901760
  %v3228 = vsub.f32 %v3226, %v3227
  %v3229 = vand.u32 %v3228, 4294901760
  %3230 = vmatpush.msra.mxu0 %v3229
  %v3231 = vand.u32 %v3092, 4294901760
  %v3232 = vsub.f32 %v3092, %v3231
  %v3233 = vand.u32 %v3232, 4294901760
  %v3234 = vsub.f32 %v3232, %v3233
  %v3235 = vand.u32 %v3234, 4294901760
  %3236 = vmatpush.msra.mxu0 %v3235
  %v3237 = vand.u32 %v3091, 4294901760
  %v3238 = vsub.f32 %v3091, %v3237
  %v3239 = vand.u32 %v3238, 4294901760
  %v3240 = vsub.f32 %v3238, %v3239
  %v3241 = vand.u32 %v3240, 4294901760
  %3242 = vmatpush.msra.mxu0 %v3241
  %v3243 = vand.u32 %v3090, 4294901760
  %v3244 = vsub.f32 %v3090, %v3243
  %v3245 = vand.u32 %v3244, 4294901760
  %v3246 = vsub.f32 %v3244, %v3245
  %v3247 = vand.u32 %v3246, 4294901760
  %3248 = vmatpush.msra.mxu0 %v3247
  %v3249 = vand.u32 %v3089, 4294901760
  %v3250 = vsub.f32 %v3089, %v3249
  %v3251 = vand.u32 %v3250, 4294901760
  %v3252 = vsub.f32 %v3250, %v3251
  %v3253 = vand.u32 %v3252, 4294901760
  %3254 = vmatpush.msra.mxu0 %v3253
  %v3255 = vand.u32 %v3088, 4294901760
  %v3256 = vsub.f32 %v3088, %v3255
  %v3257 = vand.u32 %v3256, 4294901760
  %v3258 = vsub.f32 %v3256, %v3257
  %v3259 = vand.u32 %v3258, 4294901760
  %3260 = vmatpush.msra.mxu0 %v3259
  %v3261 = vand.u32 %v3087, 4294901760
  %v3262 = vsub.f32 %v3087, %v3261
  %v3263 = vand.u32 %v3262, 4294901760
  %v3264 = vsub.f32 %v3262, %v3263
  %v3265 = vand.u32 %v3264, 4294901760
  %3266 = vmatpush.msra.mxu0 %v3265
  %v3267 = vand.u32 %v3086, 4294901760
  %v3268 = vsub.f32 %v3086, %v3267
  %v3269 = vand.u32 %v3268, 4294901760
  %v3270 = vsub.f32 %v3268, %v3269
  %v3271 = vand.u32 %v3270, 4294901760
  %3272 = vmatpush.msra.mxu0 %v3271
  %v3273 = vand.u32 %v3085, 4294901760
  %v3274 = vsub.f32 %v3085, %v3273
  %v3275 = vand.u32 %v3274, 4294901760
  %v3276 = vsub.f32 %v3274, %v3275
  %v3277 = vand.u32 %v3276, 4294901760
  %3278 = vmatpush.msra.mxu0 %v3277
  %v3279 = vand.u32 %v3084, 4294901760
  %v3280 = vsub.f32 %v3084, %v3279
  %v3281 = vand.u32 %v3280, 4294901760
  %v3282 = vsub.f32 %v3280, %v3281
  %v3283 = vand.u32 %v3282, 4294901760
  %3284 = vmatpush.msra.mxu0 %v3283
  %v3285 = vand.u32 %v3077, 4294901760
  %3286 = vmatmul.f32.gmra.mxu0 %v3285
  %v3287 = vpop.f32.mrf.mxu0
  %v3288 = vadd.f32 %v3139, %v3287
  %v3289 = vand.u32 %v3078, 4294901760
  %3290 = vmatmul.f32.gmra.mxu0 %v3289
  %v3291 = vpop.f32.mrf.mxu0
  %v3292 = vadd.f32 %v3147, %v3291
  %v3293 = vand.u32 %v3079, 4294901760
  %3294 = vmatmul.f32.gmra.mxu0 %v3293
  %v3295 = vpop.f32.mrf.mxu0
  %v3296 = vadd.f32 %v3155, %v3295
  %v3297 = vand.u32 %v3080, 4294901760
  %3298 = vmatmul.f32.gmra.mxu0 %v3297
  %v3299 = vpop.f32.mrf.mxu0
  %v3300 = vadd.f32 %v3163, %v3299
  %v3301 = vand.u32 %v3081, 4294901760
  %3302 = vmatmul.f32.gmra.mxu0 %v3301
  %v3303 = vpop.f32.mrf.mxu0
  %v3304 = vadd.f32 %v3171, %v3303
  %v3305 = vand.u32 %v3082, 4294901760
  %3306 = vmatmul.f32.gmra.mxu0 %v3305
  %v3307 = vpop.f32.mrf.mxu0
  %v3308 = vadd.f32 %v3179, %v3307
  %v3309 = vand.u32 %v3083, 4294901760
  %3310 = vmatmul.f32.gmra.mxu0 %v3309
  %v3311 = vpop.f32.mrf.mxu0
  %v3312 = vadd.f32 %v3187, %v3311
  %3313 = vdwg.mxu0
  %v3314 = vand.u32 %v3099, 4294901760
  %v3315 = vsub.f32 %v3099, %v3314
  %3316 = vmatpush.msra.mxu0 %v3315
  %v3317 = vand.u32 %v3098, 4294901760
  %v3318 = vsub.f32 %v3098, %v3317
  %3319 = vmatpush.msra.mxu0 %v3318
  %v3320 = vand.u32 %v3097, 4294901760
  %v3321 = vsub.f32 %v3097, %v3320
  %3322 = vmatpush.msra.mxu0 %v3321
  %v3323 = vand.u32 %v3096, 4294901760
  %v3324 = vsub.f32 %v3096, %v3323
  %3325 = vmatpush.msra.mxu0 %v3324
  %v3326 = vand.u32 %v3095, 4294901760
  %v3327 = vsub.f32 %v3095, %v3326
  %3328 = vmatpush.msra.mxu0 %v3327
  %v3329 = vand.u32 %v3094, 4294901760
  %v3330 = vsub.f32 %v3094, %v3329
  %3331 = vmatpush.msra.mxu0 %v3330
  %v3332 = vand.u32 %v3093, 4294901760
  %v3333 = vsub.f32 %v3093, %v3332
  %3334 = vmatpush.msra.mxu0 %v3333
  %v3335 = vand.u32 %v3092, 4294901760
  %v3336 = vsub.f32 %v3092, %v3335
  %3337 = vmatpush.msra.mxu0 %v3336
  %v3338 = vand.u32 %v3091, 4294901760
  %v3339 = vsub.f32 %v3091, %v3338
  %3340 = vmatpush.msra.mxu0 %v3339
  %v3341 = vand.u32 %v3090, 4294901760
  %v3342 = vsub.f32 %v3090, %v3341
  %3343 = vmatpush.msra.mxu0 %v3342
  %v3344 = vand.u32 %v3089, 4294901760
  %v3345 = vsub.f32 %v3089, %v3344
  %3346 = vmatpush.msra.mxu0 %v3345
  %v3347 = vand.u32 %v3088, 4294901760
  %v3348 = vsub.f32 %v3088, %v3347
  %3349 = vmatpush.msra.mxu0 %v3348
  %v3350 = vand.u32 %v3087, 4294901760
  %v3351 = vsub.f32 %v3087, %v3350
  %3352 = vmatpush.msra.mxu0 %v3351
  %v3353 = vand.u32 %v3086, 4294901760
  %v3354 = vsub.f32 %v3086, %v3353
  %3355 = vmatpush.msra.mxu0 %v3354
  %v3356 = vand.u32 %v3085, 4294901760
  %v3357 = vsub.f32 %v3085, %v3356
  %3358 = vmatpush.msra.mxu0 %v3357
  %v3359 = vand.u32 %v3084, 4294901760
  %v3360 = vsub.f32 %v3084, %v3359
  %3361 = vmatpush.msra.mxu0 %v3360
  %v3362 = vand.u32 %v3077, 4294901760
  %v3363 = vsub.f32 %v3077, %v3362
  %3364 = vmatmul.f32.gmra.mxu0 %v3363
  %v3365 = vpop.f32.mrf.mxu0
  %v3366 = vadd.f32 %v3288, %v3365
  %v3367 = vand.u32 %v3078, 4294901760
  %v3368 = vsub.f32 %v3078, %v3367
  %3369 = vmatmul.f32.gmra.mxu0 %v3368
  %v3370 = vpop.f32.mrf.mxu0
  %v3371 = vadd.f32 %v3292, %v3370
  %v3372 = vand.u32 %v3079, 4294901760
  %v3373 = vsub.f32 %v3079, %v3372
  %3374 = vmatmul.f32.gmra.mxu0 %v3373
  %v3375 = vpop.f32.mrf.mxu0
  %v3376 = vadd.f32 %v3296, %v3375
  %v3377 = vand.u32 %v3080, 4294901760
  %v3378 = vsub.f32 %v3080, %v3377
  %3379 = vmatmul.f32.gmra.mxu0 %v3378
  %v3380 = vpop.f32.mrf.mxu0
  %v3381 = vadd.f32 %v3300, %v3380
  %v3382 = vand.u32 %v3081, 4294901760
  %v3383 = vsub.f32 %v3081, %v3382
  %3384 = vmatmul.f32.gmra.mxu0 %v3383
  %v3385 = vpop.f32.mrf.mxu0
  %v3386 = vadd.f32 %v3304, %v3385
  %v3387 = vand.u32 %v3082, 4294901760
  %v3388 = vsub.f32 %v3082, %v3387
  %3389 = vmatmul.f32.gmra.mxu0 %v3388
  %v3390 = vpop.f32.mrf.mxu0
  %v3391 = vadd.f32 %v3308, %v3390
  %v3392 = vand.u32 %v3083, 4294901760
  %v3393 = vsub.f32 %v3083, %v3392
  %3394 = vmatmul.f32.gmra.mxu0 %v3393
  %v3395 = vpop.f32.mrf.mxu0
  %v3396 = vadd.f32 %v3312, %v3395
  %3397 = vdwg.mxu0
  %v3398 = vand.u32 %v3099, 4294901760
  %3399 = vmatpush.msra.mxu0 %v3398
  %v3400 = vand.u32 %v3098, 4294901760
  %3401 = vmatpush.msra.mxu0 %v3400
  %v3402 = vand.u32 %v3097, 4294901760
  %3403 = vmatpush.msra.mxu0 %v3402
  %v3404 = vand.u32 %v3096, 4294901760
  %3405 = vmatpush.msra.mxu0 %v3404
  %v3406 = vand.u32 %v3095, 4294901760
  %3407 = vmatpush.msra.mxu0 %v3406
  %v3408 = vand.u32 %v3094, 4294901760
  %3409 = vmatpush.msra.mxu0 %v3408
  %v3410 = vand.u32 %v3093, 4294901760
  %3411 = vmatpush.msra.mxu0 %v3410
  %v3412 = vand.u32 %v3092, 4294901760
  %3413 = vmatpush.msra.mxu0 %v3412
  %v3414 = vand.u32 %v3091, 4294901760
  %3415 = vmatpush.msra.mxu0 %v3414
  %v3416 = vand.u32 %v3090, 4294901760
  %3417 = vmatpush.msra.mxu0 %v3416
  %v3418 = vand.u32 %v3089, 4294901760
  %3419 = vmatpush.msra.mxu0 %v3418
  %v3420 = vand.u32 %v3088, 4294901760
  %3421 = vmatpush.msra.mxu0 %v3420
  %v3422 = vand.u32 %v3087, 4294901760
  %3423 = vmatpush.msra.mxu0 %v3422
  %v3424 = vand.u32 %v3086, 4294901760
  %3425 = vmatpush.msra.mxu0 %v3424
  %v3426 = vand.u32 %v3085, 4294901760
  %3427 = vmatpush.msra.mxu0 %v3426
  %v3428 = vand.u32 %v3084, 4294901760
  %3429 = vmatpush.msra.mxu0 %v3428
  %v3430 = vand.u32 %v3077, 4294901760
  %v3431 = vsub.f32 %v3077, %v3430
  %v3432 = vand.u32 %v3431, 4294901760
  %3433 = vmatmul.f32.gmra.mxu0 %v3432
  %v3434 = vpop.f32.mrf.mxu0
  %v3435 = vadd.f32 %v3366, %v3434
  %v3436 = vand.u32 %v3078, 4294901760
  %v3437 = vsub.f32 %v3078, %v3436
  %v3438 = vand.u32 %v3437, 4294901760
  %3439 = vmatmul.f32.gmra.mxu0 %v3438
  %v3440 = vpop.f32.mrf.mxu0
  %v3441 = vadd.f32 %v3371, %v3440
  %v3442 = vand.u32 %v3079, 4294901760
  %v3443 = vsub.f32 %v3079, %v3442
  %v3444 = vand.u32 %v3443, 4294901760
  %3445 = vmatmul.f32.gmra.mxu0 %v3444
  %v3446 = vpop.f32.mrf.mxu0
  %v3447 = vadd.f32 %v3376, %v3446
  %v3448 = vand.u32 %v3080, 4294901760
  %v3449 = vsub.f32 %v3080, %v3448
  %v3450 = vand.u32 %v3449, 4294901760
  %3451 = vmatmul.f32.gmra.mxu0 %v3450
  %v3452 = vpop.f32.mrf.mxu0
  %v3453 = vadd.f32 %v3381, %v3452
  %v3454 = vand.u32 %v3081, 4294901760
  %v3455 = vsub.f32 %v3081, %v3454
  %v3456 = vand.u32 %v3455, 4294901760
  %3457 = vmatmul.f32.gmra.mxu0 %v3456
  %v3458 = vpop.f32.mrf.mxu0
  %v3459 = vadd.f32 %v3386, %v3458
  %v3460 = vand.u32 %v3082, 4294901760
  %v3461 = vsub.f32 %v3082, %v3460
  %v3462 = vand.u32 %v3461, 4294901760
  %3463 = vmatmul.f32.gmra.mxu0 %v3462
  %v3464 = vpop.f32.mrf.mxu0
  %v3465 = vadd.f32 %v3391, %v3464
  %v3466 = vand.u32 %v3083, 4294901760
  %v3467 = vsub.f32 %v3083, %v3466
  %v3468 = vand.u32 %v3467, 4294901760
  %3469 = vmatmul.f32.gmra.mxu0 %v3468
  %v3470 = vpop.f32.mrf.mxu0
  %v3471 = vadd.f32 %v3396, %v3470
  %3472 = vdwg.mxu0
  %v3473 = vand.u32 %v3099, 4294901760
  %v3474 = vsub.f32 %v3099, %v3473
  %v3475 = vand.u32 %v3474, 4294901760
  %3476 = vmatpush.msra.mxu0 %v3475
  %v3477 = vand.u32 %v3098, 4294901760
  %v3478 = vsub.f32 %v3098, %v3477
  %v3479 = vand.u32 %v3478, 4294901760
  %3480 = vmatpush.msra.mxu0 %v3479
  %v3481 = vand.u32 %v3097, 4294901760
  %v3482 = vsub.f32 %v3097, %v3481
  %v3483 = vand.u32 %v3482, 4294901760
  %3484 = vmatpush.msra.mxu0 %v3483
  %v3485 = vand.u32 %v3096, 4294901760
  %v3486 = vsub.f32 %v3096, %v3485
  %v3487 = vand.u32 %v3486, 4294901760
  %3488 = vmatpush.msra.mxu0 %v3487
  %v3489 = vand.u32 %v3095, 4294901760
  %v3490 = vsub.f32 %v3095, %v3489
  %v3491 = vand.u32 %v3490, 4294901760
  %3492 = vmatpush.msra.mxu0 %v3491
  %v3493 = vand.u32 %v3094, 4294901760
  %v3494 = vsub.f32 %v3094, %v3493
  %v3495 = vand.u32 %v3494, 4294901760
  %3496 = vmatpush.msra.mxu0 %v3495
  %v3497 = vand.u32 %v3093, 4294901760
  %v3498 = vsub.f32 %v3093, %v3497
  %v3499 = vand.u32 %v3498, 4294901760
  %3500 = vmatpush.msra.mxu0 %v3499
  %v3501 = vand.u32 %v3092, 4294901760
  %v3502 = vsub.f32 %v3092, %v3501
  %v3503 = vand.u32 %v3502, 4294901760
  %3504 = vmatpush.msra.mxu0 %v3503
  %v3505 = vand.u32 %v3091, 4294901760
  %v3506 = vsub.f32 %v3091, %v3505
  %v3507 = vand.u32 %v3506, 4294901760
  %3508 = vmatpush.msra.mxu0 %v3507
  %v3509 = vand.u32 %v3090, 4294901760
  %v3510 = vsub.f32 %v3090, %v3509
  %v3511 = vand.u32 %v3510, 4294901760
  %3512 = vmatpush.msra.mxu0 %v3511
  %v3513 = vand.u32 %v3089, 4294901760
  %v3514 = vsub.f32 %v3089, %v3513
  %v3515 = vand.u32 %v3514, 4294901760
  %3516 = vmatpush.msra.mxu0 %v3515
  %v3517 = vand.u32 %v3088, 4294901760
  %v3518 = vsub.f32 %v3088, %v3517
  %v3519 = vand.u32 %v3518, 4294901760
  %3520 = vmatpush.msra.mxu0 %v3519
  %v3521 = vand.u32 %v3087, 4294901760
  %v3522 = vsub.f32 %v3087, %v3521
  %v3523 = vand.u32 %v3522, 4294901760
  %3524 = vmatpush.msra.mxu0 %v3523
  %v3525 = vand.u32 %v3086, 4294901760
  %v3526 = vsub.f32 %v3086, %v3525
  %v3527 = vand.u32 %v3526, 4294901760
  %3528 = vmatpush.msra.mxu0 %v3527
  %v3529 = vand.u32 %v3085, 4294901760
  %v3530 = vsub.f32 %v3085, %v3529
  %v3531 = vand.u32 %v3530, 4294901760
  %3532 = vmatpush.msra.mxu0 %v3531
  %v3533 = vand.u32 %v3084, 4294901760
  %v3534 = vsub.f32 %v3084, %v3533
  %v3535 = vand.u32 %v3534, 4294901760
  %3536 = vmatpush.msra.mxu0 %v3535
  %v3537 = vand.u32 %v3077, 4294901760
  %3538 = vmatmul.f32.gmra.mxu0 %v3537
  %v3539 = vpop.f32.mrf.mxu0
  %v3540 = vadd.f32 %v3435, %v3539
  %v3541 = vand.u32 %v3078, 4294901760
  %3542 = vmatmul.f32.gmra.mxu0 %v3541
  %v3543 = vpop.f32.mrf.mxu0
  %v3544 = vadd.f32 %v3441, %v3543
  %v3545 = vand.u32 %v3079, 4294901760
  %3546 = vmatmul.f32.gmra.mxu0 %v3545
  %v3547 = vpop.f32.mrf.mxu0
  %v3548 = vadd.f32 %v3447, %v3547
  %v3549 = vand.u32 %v3080, 4294901760
  %3550 = vmatmul.f32.gmra.mxu0 %v3549
  %v3551 = vpop.f32.mrf.mxu0
  %v3552 = vadd.f32 %v3453, %v3551
  %v3553 = vand.u32 %v3081, 4294901760
  %3554 = vmatmul.f32.gmra.mxu0 %v3553
  %v3555 = vpop.f32.mrf.mxu0
  %v3556 = vadd.f32 %v3459, %v3555
  %v3557 = vand.u32 %v3082, 4294901760
  %3558 = vmatmul.f32.gmra.mxu0 %v3557
  %v3559 = vpop.f32.mrf.mxu0
  %v3560 = vadd.f32 %v3465, %v3559
  %v3561 = vand.u32 %v3083, 4294901760
  %3562 = vmatmul.f32.gmra.mxu0 %v3561
  %v3563 = vpop.f32.mrf.mxu0
  %v3564 = vadd.f32 %v3471, %v3563
  %3565 = vdwg.mxu0
  %v3566 = vand.u32 %v3099, 4294901760
  %3567 = vmatpush.msra.mxu0 %v3566
  %v3568 = vand.u32 %v3098, 4294901760
  %3569 = vmatpush.msra.mxu0 %v3568
  %v3570 = vand.u32 %v3097, 4294901760
  %3571 = vmatpush.msra.mxu0 %v3570
  %v3572 = vand.u32 %v3096, 4294901760
  %3573 = vmatpush.msra.mxu0 %v3572
  %v3574 = vand.u32 %v3095, 4294901760
  %3575 = vmatpush.msra.mxu0 %v3574
  %v3576 = vand.u32 %v3094, 4294901760
  %3577 = vmatpush.msra.mxu0 %v3576
  %v3578 = vand.u32 %v3093, 4294901760
  %3579 = vmatpush.msra.mxu0 %v3578
  %v3580 = vand.u32 %v3092, 4294901760
  %3581 = vmatpush.msra.mxu0 %v3580
  %v3582 = vand.u32 %v3091, 4294901760
  %3583 = vmatpush.msra.mxu0 %v3582
  %v3584 = vand.u32 %v3090, 4294901760
  %3585 = vmatpush.msra.mxu0 %v3584
  %v3586 = vand.u32 %v3089, 4294901760
  %3587 = vmatpush.msra.mxu0 %v3586
  %v3588 = vand.u32 %v3088, 4294901760
  %3589 = vmatpush.msra.mxu0 %v3588
  %v3590 = vand.u32 %v3087, 4294901760
  %3591 = vmatpush.msra.mxu0 %v3590
  %v3592 = vand.u32 %v3086, 4294901760
  %3593 = vmatpush.msra.mxu0 %v3592
  %v3594 = vand.u32 %v3085, 4294901760
  %3595 = vmatpush.msra.mxu0 %v3594
  %v3596 = vand.u32 %v3084, 4294901760
  %3597 = vmatpush.msra.mxu0 %v3596
  %v3598 = vand.u32 %v3077, 4294901760
  %3599 = vmatmul.f32.gmra.mxu0 %v3598
  %v3600 = vpop.f32.mrf.mxu0
  %v3601 = vadd.f32 %v3540, %v3600
  %v3602 = vand.u32 %v3078, 4294901760
  %3603 = vmatmul.f32.gmra.mxu0 %v3602
  %v3604 = vpop.f32.mrf.mxu0
  %v3605 = vadd.f32 %v3544, %v3604
  %v3606 = vand.u32 %v3079, 4294901760
  %3607 = vmatmul.f32.gmra.mxu0 %v3606
  %v3608 = vpop.f32.mrf.mxu0
  %v3609 = vadd.f32 %v3548, %v3608
  %v3610 = vand.u32 %v3080, 4294901760
  %3611 = vmatmul.f32.gmra.mxu0 %v3610
  %v3612 = vpop.f32.mrf.mxu0
  %v3613 = vadd.f32 %v3552, %v3612
  %v3614 = vand.u32 %v3081, 4294901760
  %3615 = vmatmul.f32.gmra.mxu0 %v3614
  %v3616 = vpop.f32.mrf.mxu0
  %v3617 = vadd.f32 %v3556, %v3616
  %v3618 = vand.u32 %v3082, 4294901760
  %3619 = vmatmul.f32.gmra.mxu0 %v3618
  %v3620 = vpop.f32.mrf.mxu0
  %v3621 = vadd.f32 %v3560, %v3620
  %v3622 = vand.u32 %v3083, 4294901760
  %3623 = vmatmul.f32.gmra.mxu0 %v3622
  %v3624 = vpop.f32.mrf.mxu0
  %v3625 = vadd.f32 %v3564, %v3624
  %3626 = vdwg.mxu0
  %v3627 = vadd.f32 %v3063, %v3601
  %v3628 = vadd.f32 %v3064, %v3605
  %v3629 = vadd.f32 %v3065, %v3609
  %v3630 = vadd.f32 %v3066, %v3613
  %v3631 = vadd.f32 %v3067, %v3617
  %v3632 = vadd.f32 %v3068, %v3621
  %v3633 = vadd.f32 %v3069, %v3625
  %v3634 = vld [vmem:[#allocation2 + $0xe] sm:$0xff]
  %v3635 = vld [vmem:[#allocation2 + $0x16] sm:$0xff]
  %v3636 = vld [vmem:[#allocation2 + $0x1e] sm:$0xff]
  %v3637 = vld [vmem:[#allocation2 + $0x26] sm:$0xff]
  %v3638 = vld [vmem:[#allocation2 + $0x2e] sm:$0xff]
  %v3639 = vld [vmem:[#allocation2 + $0x36] sm:$0xff]
  %v3640 = vld [vmem:[#allocation2 + $0x3e] sm:$0x1]
  %v3641 = vmul.f32 %v3634, %v250
  %v3642 = vmul.f32 %v3635, %v251
  %v3643 = vmul.f32 %v3636, %v252
  %v3644 = vmul.f32 %v3637, %v253
  %v3645 = vmul.f32 %v3638, %v254
  %v3646 = vmul.f32 %v3639, %v255
  %v3647 = vmul.f32 %v3640, %v256
  %v3648 = vld [vmem:[%s1 + $0x300] sm:$0xff]
  %v3649 = vld [vmem:[%s1 + $0x308] sm:$0xff]
  %v3650 = vld [vmem:[%s1 + $0x310] sm:$0xff]
  %v3651 = vld [vmem:[%s1 + $0x318] sm:$0xff]
  %v3652 = vld [vmem:[%s1 + $0x320] sm:$0xff]
  %v3653 = vld [vmem:[%s1 + $0x328] sm:$0xff]
  %v3654 = vld [vmem:[%s1 + $0x330] sm:$0xff]
  %v3655 = vld [vmem:[%s1 + $0x338] sm:$0xff]
  %v3656 = vld [vmem:[%s1 + $0x340] sm:$0xff]
  %v3657 = vld [vmem:[%s1 + $0x348] sm:$0xff]
  %v3658 = vld [vmem:[%s1 + $0x350] sm:$0xff]
  %v3659 = vld [vmem:[%s1 + $0x358] sm:$0xff]
  %v3660 = vld [vmem:[%s1 + $0x360] sm:$0xff]
  %v3661 = vld [vmem:[%s1 + $0x368] sm:$0xff]
  %v3662 = vld [vmem:[%s1 + $0x370] sm:$0xff]
  %v3663 = vld [vmem:[%s1 + $0x378] sm:$0xff]
  %v3664 = vand.u32 %v3663, 4294901760
  %3665 = vmatpush.msra.mxu0 %v3664
  %v3666 = vand.u32 %v3662, 4294901760
  %3667 = vmatpush.msra.mxu0 %v3666
  %v3668 = vand.u32 %v3661, 4294901760
  %3669 = vmatpush.msra.mxu0 %v3668
  %v3670 = vand.u32 %v3660, 4294901760
  %3671 = vmatpush.msra.mxu0 %v3670
  %v3672 = vand.u32 %v3659, 4294901760
  %3673 = vmatpush.msra.mxu0 %v3672
  %v3674 = vand.u32 %v3658, 4294901760
  %3675 = vmatpush.msra.mxu0 %v3674
  %v3676 = vand.u32 %v3657, 4294901760
  %3677 = vmatpush.msra.mxu0 %v3676
  %v3678 = vand.u32 %v3656, 4294901760
  %3679 = vmatpush.msra.mxu0 %v3678
  %v3680 = vand.u32 %v3655, 4294901760
  %3681 = vmatpush.msra.mxu0 %v3680
  %v3682 = vand.u32 %v3654, 4294901760
  %3683 = vmatpush.msra.mxu0 %v3682
  %v3684 = vand.u32 %v3653, 4294901760
  %3685 = vmatpush.msra.mxu0 %v3684
  %v3686 = vand.u32 %v3652, 4294901760
  %3687 = vmatpush.msra.mxu0 %v3686
  %v3688 = vand.u32 %v3651, 4294901760
  %3689 = vmatpush.msra.mxu0 %v3688
  %v3690 = vand.u32 %v3650, 4294901760
  %3691 = vmatpush.msra.mxu0 %v3690
  %v3692 = vand.u32 %v3649, 4294901760
  %3693 = vmatpush.msra.mxu0 %v3692
  %v3694 = vand.u32 %v3648, 4294901760
  %3695 = vmatpush.msra.mxu0 %v3694
  %v3696 = vand.u32 %v3641, 4294901760
  %v3697 = vsub.f32 %v3641, %v3696
  %v3698 = vand.u32 %v3697, 4294901760
  %v3699 = vsub.f32 %v3697, %v3698
  %v3700 = vand.u32 %v3699, 4294901760
  %3701 = vmatmul.f32.gmra.mxu0 %v3700
  %v3702 = vpop.f32.mrf.mxu0
  %v3703 = vadd.f32 0.0, %v3702
  %v3704 = vand.u32 %v3642, 4294901760
  %v3705 = vsub.f32 %v3642, %v3704
  %v3706 = vand.u32 %v3705, 4294901760
  %v3707 = vsub.f32 %v3705, %v3706
  %v3708 = vand.u32 %v3707, 4294901760
  %3709 = vmatmul.f32.gmra.mxu0 %v3708
  %v3710 = vpop.f32.mrf.mxu0
  %v3711 = vadd.f32 0.0, %v3710
  %v3712 = vand.u32 %v3643, 4294901760
  %v3713 = vsub.f32 %v3643, %v3712
  %v3714 = vand.u32 %v3713, 4294901760
  %v3715 = vsub.f32 %v3713, %v3714
  %v3716 = vand.u32 %v3715, 4294901760
  %3717 = vmatmul.f32.gmra.mxu0 %v3716
  %v3718 = vpop.f32.mrf.mxu0
  %v3719 = vadd.f32 0.0, %v3718
  %v3720 = vand.u32 %v3644, 4294901760
  %v3721 = vsub.f32 %v3644, %v3720
  %v3722 = vand.u32 %v3721, 4294901760
  %v3723 = vsub.f32 %v3721, %v3722
  %v3724 = vand.u32 %v3723, 4294901760
  %3725 = vmatmul.f32.gmra.mxu0 %v3724
  %v3726 = vpop.f32.mrf.mxu0
  %v3727 = vadd.f32 0.0, %v3726
  %v3728 = vand.u32 %v3645, 4294901760
  %v3729 = vsub.f32 %v3645, %v3728
  %v3730 = vand.u32 %v3729, 4294901760
  %v3731 = vsub.f32 %v3729, %v3730
  %v3732 = vand.u32 %v3731, 4294901760
  %3733 = vmatmul.f32.gmra.mxu0 %v3732
  %v3734 = vpop.f32.mrf.mxu0
  %v3735 = vadd.f32 0.0, %v3734
  %v3736 = vand.u32 %v3646, 4294901760
  %v3737 = vsub.f32 %v3646, %v3736
  %v3738 = vand.u32 %v3737, 4294901760
  %v3739 = vsub.f32 %v3737, %v3738
  %v3740 = vand.u32 %v3739, 4294901760
  %3741 = vmatmul.f32.gmra.mxu0 %v3740
  %v3742 = vpop.f32.mrf.mxu0
  %v3743 = vadd.f32 0.0, %v3742
  %v3744 = vand.u32 %v3647, 4294901760
  %v3745 = vsub.f32 %v3647, %v3744
  %v3746 = vand.u32 %v3745, 4294901760
  %v3747 = vsub.f32 %v3745, %v3746
  %v3748 = vand.u32 %v3747, 4294901760
  %3749 = vmatmul.f32.gmra.mxu0 %v3748
  %v3750 = vpop.f32.mrf.mxu0
  %v3751 = vadd.f32 0.0, %v3750
  %3752 = vdwg.mxu0
  %v3753 = vand.u32 %v3663, 4294901760
  %v3754 = vsub.f32 %v3663, %v3753
  %v3755 = vand.u32 %v3754, 4294901760
  %v3756 = vsub.f32 %v3754, %v3755
  %v3757 = vand.u32 %v3756, 4294901760
  %3758 = vmatpush.msra.mxu0 %v3757
  %v3759 = vand.u32 %v3662, 4294901760
  %v3760 = vsub.f32 %v3662, %v3759
  %v3761 = vand.u32 %v3760, 4294901760
  %v3762 = vsub.f32 %v3760, %v3761
  %v3763 = vand.u32 %v3762, 4294901760
  %3764 = vmatpush.msra.mxu0 %v3763
  %v3765 = vand.u32 %v3661, 4294901760
  %v3766 = vsub.f32 %v3661, %v3765
  %v3767 = vand.u32 %v3766, 4294901760
  %v3768 = vsub.f32 %v3766, %v3767
  %v3769 = vand.u32 %v3768, 4294901760
  %3770 = vmatpush.msra.mxu0 %v3769
  %v3771 = vand.u32 %v3660, 4294901760
  %v3772 = vsub.f32 %v3660, %v3771
  %v3773 = vand.u32 %v3772, 4294901760
  %v3774 = vsub.f32 %v3772, %v3773
  %v3775 = vand.u32 %v3774, 4294901760
  %3776 = vmatpush.msra.mxu0 %v3775
  %v3777 = vand.u32 %v3659, 4294901760
  %v3778 = vsub.f32 %v3659, %v3777
  %v3779 = vand.u32 %v3778, 4294901760
  %v3780 = vsub.f32 %v3778, %v3779
  %v3781 = vand.u32 %v3780, 4294901760
  %3782 = vmatpush.msra.mxu0 %v3781
  %v3783 = vand.u32 %v3658, 4294901760
  %v3784 = vsub.f32 %v3658, %v3783
  %v3785 = vand.u32 %v3784, 4294901760
  %v3786 = vsub.f32 %v3784, %v3785
  %v3787 = vand.u32 %v3786, 4294901760
  %3788 = vmatpush.msra.mxu0 %v3787
  %v3789 = vand.u32 %v3657, 4294901760
  %v3790 = vsub.f32 %v3657, %v3789
  %v3791 = vand.u32 %v3790, 4294901760
  %v3792 = vsub.f32 %v3790, %v3791
  %v3793 = vand.u32 %v3792, 4294901760
  %3794 = vmatpush.msra.mxu0 %v3793
  %v3795 = vand.u32 %v3656, 4294901760
  %v3796 = vsub.f32 %v3656, %v3795
  %v3797 = vand.u32 %v3796, 4294901760
  %v3798 = vsub.f32 %v3796, %v3797
  %v3799 = vand.u32 %v3798, 4294901760
  %3800 = vmatpush.msra.mxu0 %v3799
  %v3801 = vand.u32 %v3655, 4294901760
  %v3802 = vsub.f32 %v3655, %v3801
  %v3803 = vand.u32 %v3802, 4294901760
  %v3804 = vsub.f32 %v3802, %v3803
  %v3805 = vand.u32 %v3804, 4294901760
  %3806 = vmatpush.msra.mxu0 %v3805
  %v3807 = vand.u32 %v3654, 4294901760
  %v3808 = vsub.f32 %v3654, %v3807
  %v3809 = vand.u32 %v3808, 4294901760
  %v3810 = vsub.f32 %v3808, %v3809
  %v3811 = vand.u32 %v3810, 4294901760
  %3812 = vmatpush.msra.mxu0 %v3811
  %v3813 = vand.u32 %v3653, 4294901760
  %v3814 = vsub.f32 %v3653, %v3813
  %v3815 = vand.u32 %v3814, 4294901760
  %v3816 = vsub.f32 %v3814, %v3815
  %v3817 = vand.u32 %v3816, 4294901760
  %3818 = vmatpush.msra.mxu0 %v3817
  %v3819 = vand.u32 %v3652, 4294901760
  %v3820 = vsub.f32 %v3652, %v3819
  %v3821 = vand.u32 %v3820, 4294901760
  %v3822 = vsub.f32 %v3820, %v3821
  %v3823 = vand.u32 %v3822, 4294901760
  %3824 = vmatpush.msra.mxu0 %v3823
  %v3825 = vand.u32 %v3651, 4294901760
  %v3826 = vsub.f32 %v3651, %v3825
  %v3827 = vand.u32 %v3826, 4294901760
  %v3828 = vsub.f32 %v3826, %v3827
  %v3829 = vand.u32 %v3828, 4294901760
  %3830 = vmatpush.msra.mxu0 %v3829
  %v3831 = vand.u32 %v3650, 4294901760
  %v3832 = vsub.f32 %v3650, %v3831
  %v3833 = vand.u32 %v3832, 4294901760
  %v3834 = vsub.f32 %v3832, %v3833
  %v3835 = vand.u32 %v3834, 4294901760
  %3836 = vmatpush.msra.mxu0 %v3835
  %v3837 = vand.u32 %v3649, 4294901760
  %v3838 = vsub.f32 %v3649, %v3837
  %v3839 = vand.u32 %v3838, 4294901760
  %v3840 = vsub.f32 %v3838, %v3839
  %v3841 = vand.u32 %v3840, 4294901760
  %3842 = vmatpush.msra.mxu0 %v3841
  %v3843 = vand.u32 %v3648, 4294901760
  %v3844 = vsub.f32 %v3648, %v3843
  %v3845 = vand.u32 %v3844, 4294901760
  %v3846 = vsub.f32 %v3844, %v3845
  %v3847 = vand.u32 %v3846, 4294901760
  %3848 = vmatpush.msra.mxu0 %v3847
  %v3849 = vand.u32 %v3641, 4294901760
  %3850 = vmatmul.f32.gmra.mxu0 %v3849
  %v3851 = vpop.f32.mrf.mxu0
  %v3852 = vadd.f32 %v3703, %v3851
  %v3853 = vand.u32 %v3642, 4294901760
  %3854 = vmatmul.f32.gmra.mxu0 %v3853
  %v3855 = vpop.f32.mrf.mxu0
  %v3856 = vadd.f32 %v3711, %v3855
  %v3857 = vand.u32 %v3643, 4294901760
  %3858 = vmatmul.f32.gmra.mxu0 %v3857
  %v3859 = vpop.f32.mrf.mxu0
  %v3860 = vadd.f32 %v3719, %v3859
  %v3861 = vand.u32 %v3644, 4294901760
  %3862 = vmatmul.f32.gmra.mxu0 %v3861
  %v3863 = vpop.f32.mrf.mxu0
  %v3864 = vadd.f32 %v3727, %v3863
  %v3865 = vand.u32 %v3645, 4294901760
  %3866 = vmatmul.f32.gmra.mxu0 %v3865
  %v3867 = vpop.f32.mrf.mxu0
  %v3868 = vadd.f32 %v3735, %v3867
  %v3869 = vand.u32 %v3646, 4294901760
  %3870 = vmatmul.f32.gmra.mxu0 %v3869
  %v3871 = vpop.f32.mrf.mxu0
  %v3872 = vadd.f32 %v3743, %v3871
  %v3873 = vand.u32 %v3647, 4294901760
  %3874 = vmatmul.f32.gmra.mxu0 %v3873
  %v3875 = vpop.f32.mrf.mxu0
  %v3876 = vadd.f32 %v3751, %v3875
  %3877 = vdwg.mxu0
  %v3878 = vand.u32 %v3663, 4294901760
  %v3879 = vsub.f32 %v3663, %v3878
  %3880 = vmatpush.msra.mxu0 %v3879
  %v3881 = vand.u32 %v3662, 4294901760
  %v3882 = vsub.f32 %v3662, %v3881
  %3883 = vmatpush.msra.mxu0 %v3882
  %v3884 = vand.u32 %v3661, 4294901760
  %v3885 = vsub.f32 %v3661, %v3884
  %3886 = vmatpush.msra.mxu0 %v3885
  %v3887 = vand.u32 %v3660, 4294901760
  %v3888 = vsub.f32 %v3660, %v3887
  %3889 = vmatpush.msra.mxu0 %v3888
  %v3890 = vand.u32 %v3659, 4294901760
  %v3891 = vsub.f32 %v3659, %v3890
  %3892 = vmatpush.msra.mxu0 %v3891
  %v3893 = vand.u32 %v3658, 4294901760
  %v3894 = vsub.f32 %v3658, %v3893
  %3895 = vmatpush.msra.mxu0 %v3894
  %v3896 = vand.u32 %v3657, 4294901760
  %v3897 = vsub.f32 %v3657, %v3896
  %3898 = vmatpush.msra.mxu0 %v3897
  %v3899 = vand.u32 %v3656, 4294901760
  %v3900 = vsub.f32 %v3656, %v3899
  %3901 = vmatpush.msra.mxu0 %v3900
  %v3902 = vand.u32 %v3655, 4294901760
  %v3903 = vsub.f32 %v3655, %v3902
  %3904 = vmatpush.msra.mxu0 %v3903
  %v3905 = vand.u32 %v3654, 4294901760
  %v3906 = vsub.f32 %v3654, %v3905
  %3907 = vmatpush.msra.mxu0 %v3906
  %v3908 = vand.u32 %v3653, 4294901760
  %v3909 = vsub.f32 %v3653, %v3908
  %3910 = vmatpush.msra.mxu0 %v3909
  %v3911 = vand.u32 %v3652, 4294901760
  %v3912 = vsub.f32 %v3652, %v3911
  %3913 = vmatpush.msra.mxu0 %v3912
  %v3914 = vand.u32 %v3651, 4294901760
  %v3915 = vsub.f32 %v3651, %v3914
  %3916 = vmatpush.msra.mxu0 %v3915
  %v3917 = vand.u32 %v3650, 4294901760
  %v3918 = vsub.f32 %v3650, %v3917
  %3919 = vmatpush.msra.mxu0 %v3918
  %v3920 = vand.u32 %v3649, 4294901760
  %v3921 = vsub.f32 %v3649, %v3920
  %3922 = vmatpush.msra.mxu0 %v3921
  %v3923 = vand.u32 %v3648, 4294901760
  %v3924 = vsub.f32 %v3648, %v3923
  %3925 = vmatpush.msra.mxu0 %v3924
  %v3926 = vand.u32 %v3641, 4294901760
  %v3927 = vsub.f32 %v3641, %v3926
  %3928 = vmatmul.f32.gmra.mxu0 %v3927
  %v3929 = vpop.f32.mrf.mxu0
  %v3930 = vadd.f32 %v3852, %v3929
  %v3931 = vand.u32 %v3642, 4294901760
  %v3932 = vsub.f32 %v3642, %v3931
  %3933 = vmatmul.f32.gmra.mxu0 %v3932
  %v3934 = vpop.f32.mrf.mxu0
  %v3935 = vadd.f32 %v3856, %v3934
  %v3936 = vand.u32 %v3643, 4294901760
  %v3937 = vsub.f32 %v3643, %v3936
  %3938 = vmatmul.f32.gmra.mxu0 %v3937
  %v3939 = vpop.f32.mrf.mxu0
  %v3940 = vadd.f32 %v3860, %v3939
  %v3941 = vand.u32 %v3644, 4294901760
  %v3942 = vsub.f32 %v3644, %v3941
  %3943 = vmatmul.f32.gmra.mxu0 %v3942
  %v3944 = vpop.f32.mrf.mxu0
  %v3945 = vadd.f32 %v3864, %v3944
  %v3946 = vand.u32 %v3645, 4294901760
  %v3947 = vsub.f32 %v3645, %v3946
  %3948 = vmatmul.f32.gmra.mxu0 %v3947
  %v3949 = vpop.f32.mrf.mxu0
  %v3950 = vadd.f32 %v3868, %v3949
  %v3951 = vand.u32 %v3646, 4294901760
  %v3952 = vsub.f32 %v3646, %v3951
  %3953 = vmatmul.f32.gmra.mxu0 %v3952
  %v3954 = vpop.f32.mrf.mxu0
  %v3955 = vadd.f32 %v3872, %v3954
  %v3956 = vand.u32 %v3647, 4294901760
  %v3957 = vsub.f32 %v3647, %v3956
  %3958 = vmatmul.f32.gmra.mxu0 %v3957
  %v3959 = vpop.f32.mrf.mxu0
  %v3960 = vadd.f32 %v3876, %v3959
  %3961 = vdwg.mxu0
  %v3962 = vand.u32 %v3663, 4294901760
  %3963 = vmatpush.msra.mxu0 %v3962
  %v3964 = vand.u32 %v3662, 4294901760
  %3965 = vmatpush.msra.mxu0 %v3964
  %v3966 = vand.u32 %v3661, 4294901760
  %3967 = vmatpush.msra.mxu0 %v3966
  %v3968 = vand.u32 %v3660, 4294901760
  %3969 = vmatpush.msra.mxu0 %v3968
  %v3970 = vand.u32 %v3659, 4294901760
  %3971 = vmatpush.msra.mxu0 %v3970
  %v3972 = vand.u32 %v3658, 4294901760
  %3973 = vmatpush.msra.mxu0 %v3972
  %v3974 = vand.u32 %v3657, 4294901760
  %3975 = vmatpush.msra.mxu0 %v3974
  %v3976 = vand.u32 %v3656, 4294901760
  %3977 = vmatpush.msra.mxu0 %v3976
  %v3978 = vand.u32 %v3655, 4294901760
  %3979 = vmatpush.msra.mxu0 %v3978
  %v3980 = vand.u32 %v3654, 4294901760
  %3981 = vmatpush.msra.mxu0 %v3980
  %v3982 = vand.u32 %v3653, 4294901760
  %3983 = vmatpush.msra.mxu0 %v3982
  %v3984 = vand.u32 %v3652, 4294901760
  %3985 = vmatpush.msra.mxu0 %v3984
  %v3986 = vand.u32 %v3651, 4294901760
  %3987 = vmatpush.msra.mxu0 %v3986
  %v3988 = vand.u32 %v3650, 4294901760
  %3989 = vmatpush.msra.mxu0 %v3988
  %v3990 = vand.u32 %v3649, 4294901760
  %3991 = vmatpush.msra.mxu0 %v3990
  %v3992 = vand.u32 %v3648, 4294901760
  %3993 = vmatpush.msra.mxu0 %v3992
  %v3994 = vand.u32 %v3641, 4294901760
  %v3995 = vsub.f32 %v3641, %v3994
  %v3996 = vand.u32 %v3995, 4294901760
  %3997 = vmatmul.f32.gmra.mxu0 %v3996
  %v3998 = vpop.f32.mrf.mxu0
  %v3999 = vadd.f32 %v3930, %v3998
  %v4000 = vand.u32 %v3642, 4294901760
  %v4001 = vsub.f32 %v3642, %v4000
  %v4002 = vand.u32 %v4001, 4294901760
  %4003 = vmatmul.f32.gmra.mxu0 %v4002
  %v4004 = vpop.f32.mrf.mxu0
  %v4005 = vadd.f32 %v3935, %v4004
  %v4006 = vand.u32 %v3643, 4294901760
  %v4007 = vsub.f32 %v3643, %v4006
  %v4008 = vand.u32 %v4007, 4294901760
  %4009 = vmatmul.f32.gmra.mxu0 %v4008
  %v4010 = vpop.f32.mrf.mxu0
  %v4011 = vadd.f32 %v3940, %v4010
  %v4012 = vand.u32 %v3644, 4294901760
  %v4013 = vsub.f32 %v3644, %v4012
  %v4014 = vand.u32 %v4013, 4294901760
  %4015 = vmatmul.f32.gmra.mxu0 %v4014
  %v4016 = vpop.f32.mrf.mxu0
  %v4017 = vadd.f32 %v3945, %v4016
  %v4018 = vand.u32 %v3645, 4294901760
  %v4019 = vsub.f32 %v3645, %v4018
  %v4020 = vand.u32 %v4019, 4294901760
  %4021 = vmatmul.f32.gmra.mxu0 %v4020
  %v4022 = vpop.f32.mrf.mxu0
  %v4023 = vadd.f32 %v3950, %v4022
  %v4024 = vand.u32 %v3646, 4294901760
  %v4025 = vsub.f32 %v3646, %v4024
  %v4026 = vand.u32 %v4025, 4294901760
  %4027 = vmatmul.f32.gmra.mxu0 %v4026
  %v4028 = vpop.f32.mrf.mxu0
  %v4029 = vadd.f32 %v3955, %v4028
  %v4030 = vand.u32 %v3647, 4294901760
  %v4031 = vsub.f32 %v3647, %v4030
  %v4032 = vand.u32 %v4031, 4294901760
  %4033 = vmatmul.f32.gmra.mxu0 %v4032
  %v4034 = vpop.f32.mrf.mxu0
  %v4035 = vadd.f32 %v3960, %v4034
  %4036 = vdwg.mxu0
  %v4037 = vand.u32 %v3663, 4294901760
  %v4038 = vsub.f32 %v3663, %v4037
  %v4039 = vand.u32 %v4038, 4294901760
  %4040 = vmatpush.msra.mxu0 %v4039
  %v4041 = vand.u32 %v3662, 4294901760
  %v4042 = vsub.f32 %v3662, %v4041
  %v4043 = vand.u32 %v4042, 4294901760
  %4044 = vmatpush.msra.mxu0 %v4043
  %v4045 = vand.u32 %v3661, 4294901760
  %v4046 = vsub.f32 %v3661, %v4045
  %v4047 = vand.u32 %v4046, 4294901760
  %4048 = vmatpush.msra.mxu0 %v4047
  %v4049 = vand.u32 %v3660, 4294901760
  %v4050 = vsub.f32 %v3660, %v4049
  %v4051 = vand.u32 %v4050, 4294901760
  %4052 = vmatpush.msra.mxu0 %v4051
  %v4053 = vand.u32 %v3659, 4294901760
  %v4054 = vsub.f32 %v3659, %v4053
  %v4055 = vand.u32 %v4054, 4294901760
  %4056 = vmatpush.msra.mxu0 %v4055
  %v4057 = vand.u32 %v3658, 4294901760
  %v4058 = vsub.f32 %v3658, %v4057
  %v4059 = vand.u32 %v4058, 4294901760
  %4060 = vmatpush.msra.mxu0 %v4059
  %v4061 = vand.u32 %v3657, 4294901760
  %v4062 = vsub.f32 %v3657, %v4061
  %v4063 = vand.u32 %v4062, 4294901760
  %4064 = vmatpush.msra.mxu0 %v4063
  %v4065 = vand.u32 %v3656, 4294901760
  %v4066 = vsub.f32 %v3656, %v4065
  %v4067 = vand.u32 %v4066, 4294901760
  %4068 = vmatpush.msra.mxu0 %v4067
  %v4069 = vand.u32 %v3655, 4294901760
  %v4070 = vsub.f32 %v3655, %v4069
  %v4071 = vand.u32 %v4070, 4294901760
  %4072 = vmatpush.msra.mxu0 %v4071
  %v4073 = vand.u32 %v3654, 4294901760
  %v4074 = vsub.f32 %v3654, %v4073
  %v4075 = vand.u32 %v4074, 4294901760
  %4076 = vmatpush.msra.mxu0 %v4075
  %v4077 = vand.u32 %v3653, 4294901760
  %v4078 = vsub.f32 %v3653, %v4077
  %v4079 = vand.u32 %v4078, 4294901760
  %4080 = vmatpush.msra.mxu0 %v4079
  %v4081 = vand.u32 %v3652, 4294901760
  %v4082 = vsub.f32 %v3652, %v4081
  %v4083 = vand.u32 %v4082, 4294901760
  %4084 = vmatpush.msra.mxu0 %v4083
  %v4085 = vand.u32 %v3651, 4294901760
  %v4086 = vsub.f32 %v3651, %v4085
  %v4087 = vand.u32 %v4086, 4294901760
  %4088 = vmatpush.msra.mxu0 %v4087
  %v4089 = vand.u32 %v3650, 4294901760
  %v4090 = vsub.f32 %v3650, %v4089
  %v4091 = vand.u32 %v4090, 4294901760
  %4092 = vmatpush.msra.mxu0 %v4091
  %v4093 = vand.u32 %v3649, 4294901760
  %v4094 = vsub.f32 %v3649, %v4093
  %v4095 = vand.u32 %v4094, 4294901760
  %4096 = vmatpush.msra.mxu0 %v4095
  %v4097 = vand.u32 %v3648, 4294901760
  %v4098 = vsub.f32 %v3648, %v4097
  %v4099 = vand.u32 %v4098, 4294901760
  %4100 = vmatpush.msra.mxu0 %v4099
  %v4101 = vand.u32 %v3641, 4294901760
  %4102 = vmatmul.f32.gmra.mxu0 %v4101
  %v4103 = vpop.f32.mrf.mxu0
  %v4104 = vadd.f32 %v3999, %v4103
  %v4105 = vand.u32 %v3642, 4294901760
  %4106 = vmatmul.f32.gmra.mxu0 %v4105
  %v4107 = vpop.f32.mrf.mxu0
  %v4108 = vadd.f32 %v4005, %v4107
  %v4109 = vand.u32 %v3643, 4294901760
  %4110 = vmatmul.f32.gmra.mxu0 %v4109
  %v4111 = vpop.f32.mrf.mxu0
  %v4112 = vadd.f32 %v4011, %v4111
  %v4113 = vand.u32 %v3644, 4294901760
  %4114 = vmatmul.f32.gmra.mxu0 %v4113
  %v4115 = vpop.f32.mrf.mxu0
  %v4116 = vadd.f32 %v4017, %v4115
  %v4117 = vand.u32 %v3645, 4294901760
  %4118 = vmatmul.f32.gmra.mxu0 %v4117
  %v4119 = vpop.f32.mrf.mxu0
  %v4120 = vadd.f32 %v4023, %v4119
  %v4121 = vand.u32 %v3646, 4294901760
  %4122 = vmatmul.f32.gmra.mxu0 %v4121
  %v4123 = vpop.f32.mrf.mxu0
  %v4124 = vadd.f32 %v4029, %v4123
  %v4125 = vand.u32 %v3647, 4294901760
  %4126 = vmatmul.f32.gmra.mxu0 %v4125
  %v4127 = vpop.f32.mrf.mxu0
  %v4128 = vadd.f32 %v4035, %v4127
  %4129 = vdwg.mxu0
  %v4130 = vand.u32 %v3663, 4294901760
  %4131 = vmatpush.msra.mxu0 %v4130
  %v4132 = vand.u32 %v3662, 4294901760
  %4133 = vmatpush.msra.mxu0 %v4132
  %v4134 = vand.u32 %v3661, 4294901760
  %4135 = vmatpush.msra.mxu0 %v4134
  %v4136 = vand.u32 %v3660, 4294901760
  %4137 = vmatpush.msra.mxu0 %v4136
  %v4138 = vand.u32 %v3659, 4294901760
  %4139 = vmatpush.msra.mxu0 %v4138
  %v4140 = vand.u32 %v3658, 4294901760
  %4141 = vmatpush.msra.mxu0 %v4140
  %v4142 = vand.u32 %v3657, 4294901760
  %4143 = vmatpush.msra.mxu0 %v4142
  %v4144 = vand.u32 %v3656, 4294901760
  %4145 = vmatpush.msra.mxu0 %v4144
  %v4146 = vand.u32 %v3655, 4294901760
  %4147 = vmatpush.msra.mxu0 %v4146
  %v4148 = vand.u32 %v3654, 4294901760
  %4149 = vmatpush.msra.mxu0 %v4148
  %v4150 = vand.u32 %v3653, 4294901760
  %4151 = vmatpush.msra.mxu0 %v4150
  %v4152 = vand.u32 %v3652, 4294901760
  %4153 = vmatpush.msra.mxu0 %v4152
  %v4154 = vand.u32 %v3651, 4294901760
  %4155 = vmatpush.msra.mxu0 %v4154
  %v4156 = vand.u32 %v3650, 4294901760
  %4157 = vmatpush.msra.mxu0 %v4156
  %v4158 = vand.u32 %v3649, 4294901760
  %4159 = vmatpush.msra.mxu0 %v4158
  %v4160 = vand.u32 %v3648, 4294901760
  %4161 = vmatpush.msra.mxu0 %v4160
  %v4162 = vand.u32 %v3641, 4294901760
  %4163 = vmatmul.f32.gmra.mxu0 %v4162
  %v4164 = vpop.f32.mrf.mxu0
  %v4165 = vadd.f32 %v4104, %v4164
  %v4166 = vand.u32 %v3642, 4294901760
  %4167 = vmatmul.f32.gmra.mxu0 %v4166
  %v4168 = vpop.f32.mrf.mxu0
  %v4169 = vadd.f32 %v4108, %v4168
  %v4170 = vand.u32 %v3643, 4294901760
  %4171 = vmatmul.f32.gmra.mxu0 %v4170
  %v4172 = vpop.f32.mrf.mxu0
  %v4173 = vadd.f32 %v4112, %v4172
  %v4174 = vand.u32 %v3644, 4294901760
  %4175 = vmatmul.f32.gmra.mxu0 %v4174
  %v4176 = vpop.f32.mrf.mxu0
  %v4177 = vadd.f32 %v4116, %v4176
  %v4178 = vand.u32 %v3645, 4294901760
  %4179 = vmatmul.f32.gmra.mxu0 %v4178
  %v4180 = vpop.f32.mrf.mxu0
  %v4181 = vadd.f32 %v4120, %v4180
  %v4182 = vand.u32 %v3646, 4294901760
  %4183 = vmatmul.f32.gmra.mxu0 %v4182
  %v4184 = vpop.f32.mrf.mxu0
  %v4185 = vadd.f32 %v4124, %v4184
  %v4186 = vand.u32 %v3647, 4294901760
  %4187 = vmatmul.f32.gmra.mxu0 %v4186
  %v4188 = vpop.f32.mrf.mxu0
  %v4189 = vadd.f32 %v4128, %v4188
  %4190 = vdwg.mxu0
  %v4191 = vadd.f32 %v3627, %v4165
  %v4192 = vadd.f32 %v3628, %v4169
  %v4193 = vadd.f32 %v3629, %v4173
  %v4194 = vadd.f32 %v3630, %v4177
  %v4195 = vadd.f32 %v3631, %v4181
  %v4196 = vadd.f32 %v3632, %v4185
  %v4197 = vadd.f32 %v3633, %v4189
  %v4198 = vld [vmem:[#allocation2 + $0xf] sm:$0xff]
  %v4199 = vld [vmem:[#allocation2 + $0x17] sm:$0xff]
  %v4200 = vld [vmem:[#allocation2 + $0x1f] sm:$0xff]
  %v4201 = vld [vmem:[#allocation2 + $0x27] sm:$0xff]
  %v4202 = vld [vmem:[#allocation2 + $0x2f] sm:$0xff]
  %v4203 = vld [vmem:[#allocation2 + $0x37] sm:$0xff]
  %v4204 = vld [vmem:[#allocation2 + $0x3f] sm:$0x1]
  %v4205 = vld [vmem:[%s1 + $0x380] sm:$0xff]
  %v4206 = vld [vmem:[%s1 + $0x388] sm:$0xff]
  %v4207 = vld [vmem:[%s1 + $0x390] sm:$0xff]
  %v4208 = vld [vmem:[%s1 + $0x398] sm:$0xff]
  %v4209 = vld [vmem:[%s1 + $0x3a0] sm:$0xff]
  %v4210 = vld [vmem:[%s1 + $0x3a8] sm:$0xff]
  %v4211 = vld [vmem:[%s1 + $0x3b0] sm:$0xff]
  %v4212 = vld [vmem:[%s1 + $0x3b8] sm:$0xff]
  %v4213 = vld [vmem:[%s1 + $0x3c0] sm:$0xff]
  %v4214 = vld [vmem:[%s1 + $0x3c8] sm:$0xff]
  %v4215 = vld [vmem:[%s1 + $0x3d0] sm:$0xff]
  %v4216 = vld [vmem:[%s1 + $0x3d8] sm:$0xff]
  %v4217 = vld [vmem:[%s1 + $0x3e0] sm:$0xff]
  %v4218 = vld [vmem:[%s1 + $0x3e8] sm:$0xff]
  %v4219 = vld [vmem:[%s1 + $0x3f0] sm:$0xff]
  %v4220 = vld [vmem:[%s1 + $0x3f8] sm:$0xff]
  %v4221 = vand.u32 %v4220, 4294901760
  %4222 = vmatpush.msra.mxu0 %v4221
  %v4223 = vand.u32 %v4219, 4294901760
  %4224 = vmatpush.msra.mxu0 %v4223
  %v4225 = vand.u32 %v4218, 4294901760
  %4226 = vmatpush.msra.mxu0 %v4225
  %v4227 = vand.u32 %v4217, 4294901760
  %4228 = vmatpush.msra.mxu0 %v4227
  %v4229 = vand.u32 %v4216, 4294901760
  %4230 = vmatpush.msra.mxu0 %v4229
  %v4231 = vand.u32 %v4215, 4294901760
  %4232 = vmatpush.msra.mxu0 %v4231
  %v4233 = vand.u32 %v4214, 4294901760
  %4234 = vmatpush.msra.mxu0 %v4233
  %v4235 = vand.u32 %v4213, 4294901760
  %4236 = vmatpush.msra.mxu0 %v4235
  %v4237 = vand.u32 %v4212, 4294901760
  %4238 = vmatpush.msra.mxu0 %v4237
  %v4239 = vand.u32 %v4211, 4294901760
  %4240 = vmatpush.msra.mxu0 %v4239
  %v4241 = vand.u32 %v4210, 4294901760
  %4242 = vmatpush.msra.mxu0 %v4241
  %v4243 = vand.u32 %v4209, 4294901760
  %4244 = vmatpush.msra.mxu0 %v4243
  %v4245 = vand.u32 %v4208, 4294901760
  %4246 = vmatpush.msra.mxu0 %v4245
  %v4247 = vand.u32 %v4207, 4294901760
  %4248 = vmatpush.msra.mxu0 %v4247
  %v4249 = vand.u32 %v4206, 4294901760
  %4250 = vmatpush.msra.mxu0 %v4249
  %v4251 = vand.u32 %v4205, 4294901760
  %4252 = vmatpush.msra.mxu0 %v4251
  %v4253 = vand.u32 %v4198, 4294901760
  %v4254 = vsub.f32 %v4198, %v4253
  %v4255 = vand.u32 %v4254, 4294901760
  %v4256 = vsub.f32 %v4254, %v4255
  %v4257 = vand.u32 %v4256, 4294901760
  %4258 = vmatmul.f32.gmra.mxu0 %v4257
  %v4259 = vpop.f32.mrf.mxu0
  %v4260 = vadd.f32 0.0, %v4259
  %v4261 = vand.u32 %v4199, 4294901760
  %v4262 = vsub.f32 %v4199, %v4261
  %v4263 = vand.u32 %v4262, 4294901760
  %v4264 = vsub.f32 %v4262, %v4263
  %v4265 = vand.u32 %v4264, 4294901760
  %4266 = vmatmul.f32.gmra.mxu0 %v4265
  %v4267 = vpop.f32.mrf.mxu0
  %v4268 = vadd.f32 0.0, %v4267
  %v4269 = vand.u32 %v4200, 4294901760
  %v4270 = vsub.f32 %v4200, %v4269
  %v4271 = vand.u32 %v4270, 4294901760
  %v4272 = vsub.f32 %v4270, %v4271
  %v4273 = vand.u32 %v4272, 4294901760
  %4274 = vmatmul.f32.gmra.mxu0 %v4273
  %v4275 = vpop.f32.mrf.mxu0
  %v4276 = vadd.f32 0.0, %v4275
  %v4277 = vand.u32 %v4201, 4294901760
  %v4278 = vsub.f32 %v4201, %v4277
  %v4279 = vand.u32 %v4278, 4294901760
  %v4280 = vsub.f32 %v4278, %v4279
  %v4281 = vand.u32 %v4280, 4294901760
  %4282 = vmatmul.f32.gmra.mxu0 %v4281
  %v4283 = vpop.f32.mrf.mxu0
  %v4284 = vadd.f32 0.0, %v4283
  %v4285 = vand.u32 %v4202, 4294901760
  %v4286 = vsub.f32 %v4202, %v4285
  %v4287 = vand.u32 %v4286, 4294901760
  %v4288 = vsub.f32 %v4286, %v4287
  %v4289 = vand.u32 %v4288, 4294901760
  %4290 = vmatmul.f32.gmra.mxu0 %v4289
  %v4291 = vpop.f32.mrf.mxu0
  %v4292 = vadd.f32 0.0, %v4291
  %v4293 = vand.u32 %v4203, 4294901760
  %v4294 = vsub.f32 %v4203, %v4293
  %v4295 = vand.u32 %v4294, 4294901760
  %v4296 = vsub.f32 %v4294, %v4295
  %v4297 = vand.u32 %v4296, 4294901760
  %4298 = vmatmul.f32.gmra.mxu0 %v4297
  %v4299 = vpop.f32.mrf.mxu0
  %v4300 = vadd.f32 0.0, %v4299
  %v4301 = vand.u32 %v4204, 4294901760
  %v4302 = vsub.f32 %v4204, %v4301
  %v4303 = vand.u32 %v4302, 4294901760
  %v4304 = vsub.f32 %v4302, %v4303
  %v4305 = vand.u32 %v4304, 4294901760
  %4306 = vmatmul.f32.gmra.mxu0 %v4305
  %v4307 = vpop.f32.mrf.mxu0
  %v4308 = vadd.f32 0.0, %v4307
  %4309 = vdwg.mxu0
  %v4310 = vand.u32 %v4220, 4294901760
  %v4311 = vsub.f32 %v4220, %v4310
  %v4312 = vand.u32 %v4311, 4294901760
  %v4313 = vsub.f32 %v4311, %v4312
  %v4314 = vand.u32 %v4313, 4294901760
  %4315 = vmatpush.msra.mxu0 %v4314
  %v4316 = vand.u32 %v4219, 4294901760
  %v4317 = vsub.f32 %v4219, %v4316
  %v4318 = vand.u32 %v4317, 4294901760
  %v4319 = vsub.f32 %v4317, %v4318
  %v4320 = vand.u32 %v4319, 4294901760
  %4321 = vmatpush.msra.mxu0 %v4320
  %v4322 = vand.u32 %v4218, 4294901760
  %v4323 = vsub.f32 %v4218, %v4322
  %v4324 = vand.u32 %v4323, 4294901760
  %v4325 = vsub.f32 %v4323, %v4324
  %v4326 = vand.u32 %v4325, 4294901760
  %4327 = vmatpush.msra.mxu0 %v4326
  %v4328 = vand.u32 %v4217, 4294901760
  %v4329 = vsub.f32 %v4217, %v4328
  %v4330 = vand.u32 %v4329, 4294901760
  %v4331 = vsub.f32 %v4329, %v4330
  %v4332 = vand.u32 %v4331, 4294901760
  %4333 = vmatpush.msra.mxu0 %v4332
  %v4334 = vand.u32 %v4216, 4294901760
  %v4335 = vsub.f32 %v4216, %v4334
  %v4336 = vand.u32 %v4335, 4294901760
  %v4337 = vsub.f32 %v4335, %v4336
  %v4338 = vand.u32 %v4337, 4294901760
  %4339 = vmatpush.msra.mxu0 %v4338
  %v4340 = vand.u32 %v4215, 4294901760
  %v4341 = vsub.f32 %v4215, %v4340
  %v4342 = vand.u32 %v4341, 4294901760
  %v4343 = vsub.f32 %v4341, %v4342
  %v4344 = vand.u32 %v4343, 4294901760
  %4345 = vmatpush.msra.mxu0 %v4344
  %v4346 = vand.u32 %v4214, 4294901760
  %v4347 = vsub.f32 %v4214, %v4346
  %v4348 = vand.u32 %v4347, 4294901760
  %v4349 = vsub.f32 %v4347, %v4348
  %v4350 = vand.u32 %v4349, 4294901760
  %4351 = vmatpush.msra.mxu0 %v4350
  %v4352 = vand.u32 %v4213, 4294901760
  %v4353 = vsub.f32 %v4213, %v4352
  %v4354 = vand.u32 %v4353, 4294901760
  %v4355 = vsub.f32 %v4353, %v4354
  %v4356 = vand.u32 %v4355, 4294901760
  %4357 = vmatpush.msra.mxu0 %v4356
  %v4358 = vand.u32 %v4212, 4294901760
  %v4359 = vsub.f32 %v4212, %v4358
  %v4360 = vand.u32 %v4359, 4294901760
  %v4361 = vsub.f32 %v4359, %v4360
  %v4362 = vand.u32 %v4361, 4294901760
  %4363 = vmatpush.msra.mxu0 %v4362
  %v4364 = vand.u32 %v4211, 4294901760
  %v4365 = vsub.f32 %v4211, %v4364
  %v4366 = vand.u32 %v4365, 4294901760
  %v4367 = vsub.f32 %v4365, %v4366
  %v4368 = vand.u32 %v4367, 4294901760
  %4369 = vmatpush.msra.mxu0 %v4368
  %v4370 = vand.u32 %v4210, 4294901760
  %v4371 = vsub.f32 %v4210, %v4370
  %v4372 = vand.u32 %v4371, 4294901760
  %v4373 = vsub.f32 %v4371, %v4372
  %v4374 = vand.u32 %v4373, 4294901760
  %4375 = vmatpush.msra.mxu0 %v4374
  %v4376 = vand.u32 %v4209, 4294901760
  %v4377 = vsub.f32 %v4209, %v4376
  %v4378 = vand.u32 %v4377, 4294901760
  %v4379 = vsub.f32 %v4377, %v4378
  %v4380 = vand.u32 %v4379, 4294901760
  %4381 = vmatpush.msra.mxu0 %v4380
  %v4382 = vand.u32 %v4208, 4294901760
  %v4383 = vsub.f32 %v4208, %v4382
  %v4384 = vand.u32 %v4383, 4294901760
  %v4385 = vsub.f32 %v4383, %v4384
  %v4386 = vand.u32 %v4385, 4294901760
  %4387 = vmatpush.msra.mxu0 %v4386
  %v4388 = vand.u32 %v4207, 4294901760
  %v4389 = vsub.f32 %v4207, %v4388
  %v4390 = vand.u32 %v4389, 4294901760
  %v4391 = vsub.f32 %v4389, %v4390
  %v4392 = vand.u32 %v4391, 4294901760
  %4393 = vmatpush.msra.mxu0 %v4392
  %v4394 = vand.u32 %v4206, 4294901760
  %v4395 = vsub.f32 %v4206, %v4394
  %v4396 = vand.u32 %v4395, 4294901760
  %v4397 = vsub.f32 %v4395, %v4396
  %v4398 = vand.u32 %v4397, 4294901760
  %4399 = vmatpush.msra.mxu0 %v4398
  %v4400 = vand.u32 %v4205, 4294901760
  %v4401 = vsub.f32 %v4205, %v4400
  %v4402 = vand.u32 %v4401, 4294901760
  %v4403 = vsub.f32 %v4401, %v4402
  %v4404 = vand.u32 %v4403, 4294901760
  %4405 = vmatpush.msra.mxu0 %v4404
  %v4406 = vand.u32 %v4198, 4294901760
  %4407 = vmatmul.f32.gmra.mxu0 %v4406
  %v4408 = vpop.f32.mrf.mxu0
  %v4409 = vadd.f32 %v4260, %v4408
  %v4410 = vand.u32 %v4199, 4294901760
  %4411 = vmatmul.f32.gmra.mxu0 %v4410
  %v4412 = vpop.f32.mrf.mxu0
  %v4413 = vadd.f32 %v4268, %v4412
  %v4414 = vand.u32 %v4200, 4294901760
  %4415 = vmatmul.f32.gmra.mxu0 %v4414
  %v4416 = vpop.f32.mrf.mxu0
  %v4417 = vadd.f32 %v4276, %v4416
  %v4418 = vand.u32 %v4201, 4294901760
  %4419 = vmatmul.f32.gmra.mxu0 %v4418
  %v4420 = vpop.f32.mrf.mxu0
  %v4421 = vadd.f32 %v4284, %v4420
  %v4422 = vand.u32 %v4202, 4294901760
  %4423 = vmatmul.f32.gmra.mxu0 %v4422
  %v4424 = vpop.f32.mrf.mxu0
  %v4425 = vadd.f32 %v4292, %v4424
  %v4426 = vand.u32 %v4203, 4294901760
  %4427 = vmatmul.f32.gmra.mxu0 %v4426
  %v4428 = vpop.f32.mrf.mxu0
  %v4429 = vadd.f32 %v4300, %v4428
  %v4430 = vand.u32 %v4204, 4294901760
  %4431 = vmatmul.f32.gmra.mxu0 %v4430
  %v4432 = vpop.f32.mrf.mxu0
  %v4433 = vadd.f32 %v4308, %v4432
  %4434 = vdwg.mxu0
  %v4435 = vand.u32 %v4220, 4294901760
  %v4436 = vsub.f32 %v4220, %v4435
  %4437 = vmatpush.msra.mxu0 %v4436
  %v4438 = vand.u32 %v4219, 4294901760
  %v4439 = vsub.f32 %v4219, %v4438
  %4440 = vmatpush.msra.mxu0 %v4439
  %v4441 = vand.u32 %v4218, 4294901760
  %v4442 = vsub.f32 %v4218, %v4441
  %4443 = vmatpush.msra.mxu0 %v4442
  %v4444 = vand.u32 %v4217, 4294901760
  %v4445 = vsub.f32 %v4217, %v4444
  %4446 = vmatpush.msra.mxu0 %v4445
  %v4447 = vand.u32 %v4216, 4294901760
  %v4448 = vsub.f32 %v4216, %v4447
  %4449 = vmatpush.msra.mxu0 %v4448
  %v4450 = vand.u32 %v4215, 4294901760
  %v4451 = vsub.f32 %v4215, %v4450
  %4452 = vmatpush.msra.mxu0 %v4451
  %v4453 = vand.u32 %v4214, 4294901760
  %v4454 = vsub.f32 %v4214, %v4453
  %4455 = vmatpush.msra.mxu0 %v4454
  %v4456 = vand.u32 %v4213, 4294901760
  %v4457 = vsub.f32 %v4213, %v4456
  %4458 = vmatpush.msra.mxu0 %v4457
  %v4459 = vand.u32 %v4212, 4294901760
  %v4460 = vsub.f32 %v4212, %v4459
  %4461 = vmatpush.msra.mxu0 %v4460
  %v4462 = vand.u32 %v4211, 4294901760
  %v4463 = vsub.f32 %v4211, %v4462
  %4464 = vmatpush.msra.mxu0 %v4463
  %v4465 = vand.u32 %v4210, 4294901760
  %v4466 = vsub.f32 %v4210, %v4465
  %4467 = vmatpush.msra.mxu0 %v4466
  %v4468 = vand.u32 %v4209, 4294901760
  %v4469 = vsub.f32 %v4209, %v4468
  %4470 = vmatpush.msra.mxu0 %v4469
  %v4471 = vand.u32 %v4208, 4294901760
  %v4472 = vsub.f32 %v4208, %v4471
  %4473 = vmatpush.msra.mxu0 %v4472
  %v4474 = vand.u32 %v4207, 4294901760
  %v4475 = vsub.f32 %v4207, %v4474
  %4476 = vmatpush.msra.mxu0 %v4475
  %v4477 = vand.u32 %v4206, 4294901760
  %v4478 = vsub.f32 %v4206, %v4477
  %4479 = vmatpush.msra.mxu0 %v4478
  %v4480 = vand.u32 %v4205, 4294901760
  %v4481 = vsub.f32 %v4205, %v4480
  %4482 = vmatpush.msra.mxu0 %v4481
  %v4483 = vand.u32 %v4198, 4294901760
  %v4484 = vsub.f32 %v4198, %v4483
  %4485 = vmatmul.f32.gmra.mxu0 %v4484
  %v4486 = vpop.f32.mrf.mxu0
  %v4487 = vadd.f32 %v4409, %v4486
  %v4488 = vand.u32 %v4199, 4294901760
  %v4489 = vsub.f32 %v4199, %v4488
  %4490 = vmatmul.f32.gmra.mxu0 %v4489
  %v4491 = vpop.f32.mrf.mxu0
  %v4492 = vadd.f32 %v4413, %v4491
  %v4493 = vand.u32 %v4200, 4294901760
  %v4494 = vsub.f32 %v4200, %v4493
  %4495 = vmatmul.f32.gmra.mxu0 %v4494
  %v4496 = vpop.f32.mrf.mxu0
  %v4497 = vadd.f32 %v4417, %v4496
  %v4498 = vand.u32 %v4201, 4294901760
  %v4499 = vsub.f32 %v4201, %v4498
  %4500 = vmatmul.f32.gmra.mxu0 %v4499
  %v4501 = vpop.f32.mrf.mxu0
  %v4502 = vadd.f32 %v4421, %v4501
  %v4503 = vand.u32 %v4202, 4294901760
  %v4504 = vsub.f32 %v4202, %v4503
  %4505 = vmatmul.f32.gmra.mxu0 %v4504
  %v4506 = vpop.f32.mrf.mxu0
  %v4507 = vadd.f32 %v4425, %v4506
  %v4508 = vand.u32 %v4203, 4294901760
  %v4509 = vsub.f32 %v4203, %v4508
  %4510 = vmatmul.f32.gmra.mxu0 %v4509
  %v4511 = vpop.f32.mrf.mxu0
  %v4512 = vadd.f32 %v4429, %v4511
  %v4513 = vand.u32 %v4204, 4294901760
  %v4514 = vsub.f32 %v4204, %v4513
  %4515 = vmatmul.f32.gmra.mxu0 %v4514
  %v4516 = vpop.f32.mrf.mxu0
  %v4517 = vadd.f32 %v4433, %v4516
  %4518 = vdwg.mxu0
  %v4519 = vand.u32 %v4220, 4294901760
  %4520 = vmatpush.msra.mxu0 %v4519
  %v4521 = vand.u32 %v4219, 4294901760
  %4522 = vmatpush.msra.mxu0 %v4521
  %v4523 = vand.u32 %v4218, 4294901760
  %4524 = vmatpush.msra.mxu0 %v4523
  %v4525 = vand.u32 %v4217, 4294901760
  %4526 = vmatpush.msra.mxu0 %v4525
  %v4527 = vand.u32 %v4216, 4294901760
  %4528 = vmatpush.msra.mxu0 %v4527
  %v4529 = vand.u32 %v4215, 4294901760
  %4530 = vmatpush.msra.mxu0 %v4529
  %v4531 = vand.u32 %v4214, 4294901760
  %4532 = vmatpush.msra.mxu0 %v4531
  %v4533 = vand.u32 %v4213, 4294901760
  %4534 = vmatpush.msra.mxu0 %v4533
  %v4535 = vand.u32 %v4212, 4294901760
  %4536 = vmatpush.msra.mxu0 %v4535
  %v4537 = vand.u32 %v4211, 4294901760
  %4538 = vmatpush.msra.mxu0 %v4537
  %v4539 = vand.u32 %v4210, 4294901760
  %4540 = vmatpush.msra.mxu0 %v4539
  %v4541 = vand.u32 %v4209, 4294901760
  %4542 = vmatpush.msra.mxu0 %v4541
  %v4543 = vand.u32 %v4208, 4294901760
  %4544 = vmatpush.msra.mxu0 %v4543
  %v4545 = vand.u32 %v4207, 4294901760
  %4546 = vmatpush.msra.mxu0 %v4545
  %v4547 = vand.u32 %v4206, 4294901760
  %4548 = vmatpush.msra.mxu0 %v4547
  %v4549 = vand.u32 %v4205, 4294901760
  %4550 = vmatpush.msra.mxu0 %v4549
  %v4551 = vand.u32 %v4198, 4294901760
  %v4552 = vsub.f32 %v4198, %v4551
  %v4553 = vand.u32 %v4552, 4294901760
  %4554 = vmatmul.f32.gmra.mxu0 %v4553
  %v4555 = vpop.f32.mrf.mxu0
  %v4556 = vadd.f32 %v4487, %v4555
  %v4557 = vand.u32 %v4199, 4294901760
  %v4558 = vsub.f32 %v4199, %v4557
  %v4559 = vand.u32 %v4558, 4294901760
  %4560 = vmatmul.f32.gmra.mxu0 %v4559
  %v4561 = vpop.f32.mrf.mxu0
  %v4562 = vadd.f32 %v4492, %v4561
  %v4563 = vand.u32 %v4200, 4294901760
  %v4564 = vsub.f32 %v4200, %v4563
  %v4565 = vand.u32 %v4564, 4294901760
  %4566 = vmatmul.f32.gmra.mxu0 %v4565
  %v4567 = vpop.f32.mrf.mxu0
  %v4568 = vadd.f32 %v4497, %v4567
  %v4569 = vand.u32 %v4201, 4294901760
  %v4570 = vsub.f32 %v4201, %v4569
  %v4571 = vand.u32 %v4570, 4294901760
  %4572 = vmatmul.f32.gmra.mxu0 %v4571
  %v4573 = vpop.f32.mrf.mxu0
  %v4574 = vadd.f32 %v4502, %v4573
  %v4575 = vand.u32 %v4202, 4294901760
  %v4576 = vsub.f32 %v4202, %v4575
  %v4577 = vand.u32 %v4576, 4294901760
  %4578 = vmatmul.f32.gmra.mxu0 %v4577
  %v4579 = vpop.f32.mrf.mxu0
  %v4580 = vadd.f32 %v4507, %v4579
  %v4581 = vand.u32 %v4203, 4294901760
  %v4582 = vsub.f32 %v4203, %v4581
  %v4583 = vand.u32 %v4582, 4294901760
  %4584 = vmatmul.f32.gmra.mxu0 %v4583
  %v4585 = vpop.f32.mrf.mxu0
  %v4586 = vadd.f32 %v4512, %v4585
  %v4587 = vand.u32 %v4204, 4294901760
  %v4588 = vsub.f32 %v4204, %v4587
  %v4589 = vand.u32 %v4588, 4294901760
  %4590 = vmatmul.f32.gmra.mxu0 %v4589
  %v4591 = vpop.f32.mrf.mxu0
  %v4592 = vadd.f32 %v4517, %v4591
  %4593 = vdwg.mxu0
  %v4594 = vand.u32 %v4220, 4294901760
  %v4595 = vsub.f32 %v4220, %v4594
  %v4596 = vand.u32 %v4595, 4294901760
  %4597 = vmatpush.msra.mxu0 %v4596
  %v4598 = vand.u32 %v4219, 4294901760
  %v4599 = vsub.f32 %v4219, %v4598
  %v4600 = vand.u32 %v4599, 4294901760
  %4601 = vmatpush.msra.mxu0 %v4600
  %v4602 = vand.u32 %v4218, 4294901760
  %v4603 = vsub.f32 %v4218, %v4602
  %v4604 = vand.u32 %v4603, 4294901760
  %4605 = vmatpush.msra.mxu0 %v4604
  %v4606 = vand.u32 %v4217, 4294901760
  %v4607 = vsub.f32 %v4217, %v4606
  %v4608 = vand.u32 %v4607, 4294901760
  %4609 = vmatpush.msra.mxu0 %v4608
  %v4610 = vand.u32 %v4216, 4294901760
  %v4611 = vsub.f32 %v4216, %v4610
  %v4612 = vand.u32 %v4611, 4294901760
  %4613 = vmatpush.msra.mxu0 %v4612
  %v4614 = vand.u32 %v4215, 4294901760
  %v4615 = vsub.f32 %v4215, %v4614
  %v4616 = vand.u32 %v4615, 4294901760
  %4617 = vmatpush.msra.mxu0 %v4616
  %v4618 = vand.u32 %v4214, 4294901760
  %v4619 = vsub.f32 %v4214, %v4618
  %v4620 = vand.u32 %v4619, 4294901760
  %4621 = vmatpush.msra.mxu0 %v4620
  %v4622 = vand.u32 %v4213, 4294901760
  %v4623 = vsub.f32 %v4213, %v4622
  %v4624 = vand.u32 %v4623, 4294901760
  %4625 = vmatpush.msra.mxu0 %v4624
  %v4626 = vand.u32 %v4212, 4294901760
  %v4627 = vsub.f32 %v4212, %v4626
  %v4628 = vand.u32 %v4627, 4294901760
  %4629 = vmatpush.msra.mxu0 %v4628
  %v4630 = vand.u32 %v4211, 4294901760
  %v4631 = vsub.f32 %v4211, %v4630
  %v4632 = vand.u32 %v4631, 4294901760
  %4633 = vmatpush.msra.mxu0 %v4632
  %v4634 = vand.u32 %v4210, 4294901760
  %v4635 = vsub.f32 %v4210, %v4634
  %v4636 = vand.u32 %v4635, 4294901760
  %4637 = vmatpush.msra.mxu0 %v4636
  %v4638 = vand.u32 %v4209, 4294901760
  %v4639 = vsub.f32 %v4209, %v4638
  %v4640 = vand.u32 %v4639, 4294901760
  %4641 = vmatpush.msra.mxu0 %v4640
  %v4642 = vand.u32 %v4208, 4294901760
  %v4643 = vsub.f32 %v4208, %v4642
  %v4644 = vand.u32 %v4643, 4294901760
  %4645 = vmatpush.msra.mxu0 %v4644
  %v4646 = vand.u32 %v4207, 4294901760
  %v4647 = vsub.f32 %v4207, %v4646
  %v4648 = vand.u32 %v4647, 4294901760
  %4649 = vmatpush.msra.mxu0 %v4648
  %v4650 = vand.u32 %v4206, 4294901760
  %v4651 = vsub.f32 %v4206, %v4650
  %v4652 = vand.u32 %v4651, 4294901760
  %4653 = vmatpush.msra.mxu0 %v4652
  %v4654 = vand.u32 %v4205, 4294901760
  %v4655 = vsub.f32 %v4205, %v4654
  %v4656 = vand.u32 %v4655, 4294901760
  %4657 = vmatpush.msra.mxu0 %v4656
  %v4658 = vand.u32 %v4198, 4294901760
  %4659 = vmatmul.f32.gmra.mxu0 %v4658
  %v4660 = vpop.f32.mrf.mxu0
  %v4661 = vadd.f32 %v4556, %v4660
  %v4662 = vand.u32 %v4199, 4294901760
  %4663 = vmatmul.f32.gmra.mxu0 %v4662
  %v4664 = vpop.f32.mrf.mxu0
  %v4665 = vadd.f32 %v4562, %v4664
  %v4666 = vand.u32 %v4200, 4294901760
  %4667 = vmatmul.f32.gmra.mxu0 %v4666
  %v4668 = vpop.f32.mrf.mxu0
  %v4669 = vadd.f32 %v4568, %v4668
  %v4670 = vand.u32 %v4201, 4294901760
  %4671 = vmatmul.f32.gmra.mxu0 %v4670
  %v4672 = vpop.f32.mrf.mxu0
  %v4673 = vadd.f32 %v4574, %v4672
  %v4674 = vand.u32 %v4202, 4294901760
  %4675 = vmatmul.f32.gmra.mxu0 %v4674
  %v4676 = vpop.f32.mrf.mxu0
  %v4677 = vadd.f32 %v4580, %v4676
  %v4678 = vand.u32 %v4203, 4294901760
  %4679 = vmatmul.f32.gmra.mxu0 %v4678
  %v4680 = vpop.f32.mrf.mxu0
  %v4681 = vadd.f32 %v4586, %v4680
  %v4682 = vand.u32 %v4204, 4294901760
  %4683 = vmatmul.f32.gmra.mxu0 %v4682
  %v4684 = vpop.f32.mrf.mxu0
  %v4685 = vadd.f32 %v4592, %v4684
  %4686 = vdwg.mxu0
  %v4687 = vand.u32 %v4220, 4294901760
  %4688 = vmatpush.msra.mxu0 %v4687
  %v4689 = vand.u32 %v4219, 4294901760
  %4690 = vmatpush.msra.mxu0 %v4689
  %v4691 = vand.u32 %v4218, 4294901760
  %4692 = vmatpush.msra.mxu0 %v4691
  %v4693 = vand.u32 %v4217, 4294901760
  %4694 = vmatpush.msra.mxu0 %v4693
  %v4695 = vand.u32 %v4216, 4294901760
  %4696 = vmatpush.msra.mxu0 %v4695
  %v4697 = vand.u32 %v4215, 4294901760
  %4698 = vmatpush.msra.mxu0 %v4697
  %v4699 = vand.u32 %v4214, 4294901760
  %4700 = vmatpush.msra.mxu0 %v4699
  %v4701 = vand.u32 %v4213, 4294901760
  %4702 = vmatpush.msra.mxu0 %v4701
  %v4703 = vand.u32 %v4212, 4294901760
  %4704 = vmatpush.msra.mxu0 %v4703
  %v4705 = vand.u32 %v4211, 4294901760
  %4706 = vmatpush.msra.mxu0 %v4705
  %v4707 = vand.u32 %v4210, 4294901760
  %4708 = vmatpush.msra.mxu0 %v4707
  %v4709 = vand.u32 %v4209, 4294901760
  %4710 = vmatpush.msra.mxu0 %v4709
  %v4711 = vand.u32 %v4208, 4294901760
  %4712 = vmatpush.msra.mxu0 %v4711
  %v4713 = vand.u32 %v4207, 4294901760
  %4714 = vmatpush.msra.mxu0 %v4713
  %v4715 = vand.u32 %v4206, 4294901760
  %4716 = vmatpush.msra.mxu0 %v4715
  %v4717 = vand.u32 %v4205, 4294901760
  %4718 = vmatpush.msra.mxu0 %v4717
  %v4719 = vand.u32 %v4198, 4294901760
  %4720 = vmatmul.f32.gmra.mxu0 %v4719
  %v4721 = vpop.f32.mrf.mxu0
  %v4722 = vadd.f32 %v4661, %v4721
  %v4723 = vand.u32 %v4199, 4294901760
  %4724 = vmatmul.f32.gmra.mxu0 %v4723
  %v4725 = vpop.f32.mrf.mxu0
  %v4726 = vadd.f32 %v4665, %v4725
  %v4727 = vand.u32 %v4200, 4294901760
  %4728 = vmatmul.f32.gmra.mxu0 %v4727
  %v4729 = vpop.f32.mrf.mxu0
  %v4730 = vadd.f32 %v4669, %v4729
  %v4731 = vand.u32 %v4201, 4294901760
  %4732 = vmatmul.f32.gmra.mxu0 %v4731
  %v4733 = vpop.f32.mrf.mxu0
  %v4734 = vadd.f32 %v4673, %v4733
  %v4735 = vand.u32 %v4202, 4294901760
  %4736 = vmatmul.f32.gmra.mxu0 %v4735
  %v4737 = vpop.f32.mrf.mxu0
  %v4738 = vadd.f32 %v4677, %v4737
  %v4739 = vand.u32 %v4203, 4294901760
  %4740 = vmatmul.f32.gmra.mxu0 %v4739
  %v4741 = vpop.f32.mrf.mxu0
  %v4742 = vadd.f32 %v4681, %v4741
  %v4743 = vand.u32 %v4204, 4294901760
  %4744 = vmatmul.f32.gmra.mxu0 %v4743
  %v4745 = vpop.f32.mrf.mxu0
  %v4746 = vadd.f32 %v4685, %v4745
  %4747 = vdwg.mxu0
  %v4748 = vadd.f32 %v4191, %v4722
  %v4749 = vadd.f32 %v4192, %v4726
  %v4750 = vadd.f32 %v4193, %v4730
  %v4751 = vadd.f32 %v4194, %v4734
  %v4752 = vadd.f32 %v4195, %v4738
  %v4753 = vadd.f32 %v4196, %v4742
  %v4754 = vadd.f32 %v4197, %v4746
  %v4755 = vld [vmem:[#allocation2 + $0x10] sm:$0xff]
  %v4756 = vld [vmem:[#allocation2 + $0x18] sm:$0xff]
  %v4757 = vld [vmem:[#allocation2 + $0x20] sm:$0xff]
  %v4758 = vld [vmem:[#allocation2 + $0x28] sm:$0xff]
  %v4759 = vld [vmem:[#allocation2 + $0x30] sm:$0xff]
  %v4760 = vld [vmem:[#allocation2 + $0x38] sm:$0xff]
  %v4761 = vld [vmem:[#allocation2 + $0x40] sm:$0x1]
  %v4762 = vmul.f32 %v4755, %v271
  %v4763 = vmul.f32 %v4756, %v272
  %v4764 = vmul.f32 %v4757, %v273
  %v4765 = vmul.f32 %v4758, %v274
  %v4766 = vmul.f32 %v4759, %v275
  %v4767 = vmul.f32 %v4760, %v276
  %v4768 = vmul.f32 %v4761, %v277
  %v4769 = vld [vmem:[%s1 + $0x400] sm:$0xff]
  %v4770 = vld [vmem:[%s1 + $0x408] sm:$0xff]
  %v4771 = vld [vmem:[%s1 + $0x410] sm:$0xff]
  %v4772 = vld [vmem:[%s1 + $0x418] sm:$0xff]
  %v4773 = vld [vmem:[%s1 + $0x420] sm:$0xff]
  %v4774 = vld [vmem:[%s1 + $0x428] sm:$0xff]
  %v4775 = vld [vmem:[%s1 + $0x430] sm:$0xff]
  %v4776 = vld [vmem:[%s1 + $0x438] sm:$0xff]
  %v4777 = vld [vmem:[%s1 + $0x440] sm:$0xff]
  %v4778 = vld [vmem:[%s1 + $0x448] sm:$0xff]
  %v4779 = vld [vmem:[%s1 + $0x450] sm:$0xff]
  %v4780 = vld [vmem:[%s1 + $0x458] sm:$0xff]
  %v4781 = vld [vmem:[%s1 + $0x460] sm:$0xff]
  %v4782 = vld [vmem:[%s1 + $0x468] sm:$0xff]
  %v4783 = vld [vmem:[%s1 + $0x470] sm:$0xff]
  %v4784 = vld [vmem:[%s1 + $0x478] sm:$0xff]
  %v4785 = vand.u32 %v4784, 4294901760
  %4786 = vmatpush.msra.mxu0 %v4785
  %v4787 = vand.u32 %v4783, 4294901760
  %4788 = vmatpush.msra.mxu0 %v4787
  %v4789 = vand.u32 %v4782, 4294901760
  %4790 = vmatpush.msra.mxu0 %v4789
  %v4791 = vand.u32 %v4781, 4294901760
  %4792 = vmatpush.msra.mxu0 %v4791
  %v4793 = vand.u32 %v4780, 4294901760
  %4794 = vmatpush.msra.mxu0 %v4793
  %v4795 = vand.u32 %v4779, 4294901760
  %4796 = vmatpush.msra.mxu0 %v4795
  %v4797 = vand.u32 %v4778, 4294901760
  %4798 = vmatpush.msra.mxu0 %v4797
  %v4799 = vand.u32 %v4777, 4294901760
  %4800 = vmatpush.msra.mxu0 %v4799
  %v4801 = vand.u32 %v4776, 4294901760
  %4802 = vmatpush.msra.mxu0 %v4801
  %v4803 = vand.u32 %v4775, 4294901760
  %4804 = vmatpush.msra.mxu0 %v4803
  %v4805 = vand.u32 %v4774, 4294901760
  %4806 = vmatpush.msra.mxu0 %v4805
  %v4807 = vand.u32 %v4773, 4294901760
  %4808 = vmatpush.msra.mxu0 %v4807
  %v4809 = vand.u32 %v4772, 4294901760
  %4810 = vmatpush.msra.mxu0 %v4809
  %v4811 = vand.u32 %v4771, 4294901760
  %4812 = vmatpush.msra.mxu0 %v4811
  %v4813 = vand.u32 %v4770, 4294901760
  %4814 = vmatpush.msra.mxu0 %v4813
  %v4815 = vand.u32 %v4769, 4294901760
  %4816 = vmatpush.msra.mxu0 %v4815
  %v4817 = vand.u32 %v4762, 4294901760
  %v4818 = vsub.f32 %v4762, %v4817
  %v4819 = vand.u32 %v4818, 4294901760
  %v4820 = vsub.f32 %v4818, %v4819
  %v4821 = vand.u32 %v4820, 4294901760
  %4822 = vmatmul.f32.gmra.mxu0 %v4821
  %v4823 = vpop.f32.mrf.mxu0
  %v4824 = vadd.f32 0.0, %v4823
  %v4825 = vand.u32 %v4763, 4294901760
  %v4826 = vsub.f32 %v4763, %v4825
  %v4827 = vand.u32 %v4826, 4294901760
  %v4828 = vsub.f32 %v4826, %v4827
  %v4829 = vand.u32 %v4828, 4294901760
  %4830 = vmatmul.f32.gmra.mxu0 %v4829
  %v4831 = vpop.f32.mrf.mxu0
  %v4832 = vadd.f32 0.0, %v4831
  %v4833 = vand.u32 %v4764, 4294901760
  %v4834 = vsub.f32 %v4764, %v4833
  %v4835 = vand.u32 %v4834, 4294901760
  %v4836 = vsub.f32 %v4834, %v4835
  %v4837 = vand.u32 %v4836, 4294901760
  %4838 = vmatmul.f32.gmra.mxu0 %v4837
  %v4839 = vpop.f32.mrf.mxu0
  %v4840 = vadd.f32 0.0, %v4839
  %v4841 = vand.u32 %v4765, 4294901760
  %v4842 = vsub.f32 %v4765, %v4841
  %v4843 = vand.u32 %v4842, 4294901760
  %v4844 = vsub.f32 %v4842, %v4843
  %v4845 = vand.u32 %v4844, 4294901760
  %4846 = vmatmul.f32.gmra.mxu0 %v4845
  %v4847 = vpop.f32.mrf.mxu0
  %v4848 = vadd.f32 0.0, %v4847
  %v4849 = vand.u32 %v4766, 4294901760
  %v4850 = vsub.f32 %v4766, %v4849
  %v4851 = vand.u32 %v4850, 4294901760
  %v4852 = vsub.f32 %v4850, %v4851
  %v4853 = vand.u32 %v4852, 4294901760
  %4854 = vmatmul.f32.gmra.mxu0 %v4853
  %v4855 = vpop.f32.mrf.mxu0
  %v4856 = vadd.f32 0.0, %v4855
  %v4857 = vand.u32 %v4767, 4294901760
  %v4858 = vsub.f32 %v4767, %v4857
  %v4859 = vand.u32 %v4858, 4294901760
  %v4860 = vsub.f32 %v4858, %v4859
  %v4861 = vand.u32 %v4860, 4294901760
  %4862 = vmatmul.f32.gmra.mxu0 %v4861
  %v4863 = vpop.f32.mrf.mxu0
  %v4864 = vadd.f32 0.0, %v4863
  %v4865 = vand.u32 %v4768, 4294901760
  %v4866 = vsub.f32 %v4768, %v4865
  %v4867 = vand.u32 %v4866, 4294901760
  %v4868 = vsub.f32 %v4866, %v4867
  %v4869 = vand.u32 %v4868, 4294901760
  %4870 = vmatmul.f32.gmra.mxu0 %v4869
  %v4871 = vpop.f32.mrf.mxu0
  %v4872 = vadd.f32 0.0, %v4871
  %4873 = vdwg.mxu0
  %v4874 = vand.u32 %v4784, 4294901760
  %v4875 = vsub.f32 %v4784, %v4874
  %v4876 = vand.u32 %v4875, 4294901760
  %v4877 = vsub.f32 %v4875, %v4876
  %v4878 = vand.u32 %v4877, 4294901760
  %4879 = vmatpush.msra.mxu0 %v4878
  %v4880 = vand.u32 %v4783, 4294901760
  %v4881 = vsub.f32 %v4783, %v4880
  %v4882 = vand.u32 %v4881, 4294901760
  %v4883 = vsub.f32 %v4881, %v4882
  %v4884 = vand.u32 %v4883, 4294901760
  %4885 = vmatpush.msra.mxu0 %v4884
  %v4886 = vand.u32 %v4782, 4294901760
  %v4887 = vsub.f32 %v4782, %v4886
  %v4888 = vand.u32 %v4887, 4294901760
  %v4889 = vsub.f32 %v4887, %v4888
  %v4890 = vand.u32 %v4889, 4294901760
  %4891 = vmatpush.msra.mxu0 %v4890
  %v4892 = vand.u32 %v4781, 4294901760
  %v4893 = vsub.f32 %v4781, %v4892
  %v4894 = vand.u32 %v4893, 4294901760
  %v4895 = vsub.f32 %v4893, %v4894
  %v4896 = vand.u32 %v4895, 4294901760
  %4897 = vmatpush.msra.mxu0 %v4896
  %v4898 = vand.u32 %v4780, 4294901760
  %v4899 = vsub.f32 %v4780, %v4898
  %v4900 = vand.u32 %v4899, 4294901760
  %v4901 = vsub.f32 %v4899, %v4900
  %v4902 = vand.u32 %v4901, 4294901760
  %4903 = vmatpush.msra.mxu0 %v4902
  %v4904 = vand.u32 %v4779, 4294901760
  %v4905 = vsub.f32 %v4779, %v4904
  %v4906 = vand.u32 %v4905, 4294901760
  %v4907 = vsub.f32 %v4905, %v4906
  %v4908 = vand.u32 %v4907, 4294901760
  %4909 = vmatpush.msra.mxu0 %v4908
  %v4910 = vand.u32 %v4778, 4294901760
  %v4911 = vsub.f32 %v4778, %v4910
  %v4912 = vand.u32 %v4911, 4294901760
  %v4913 = vsub.f32 %v4911, %v4912
  %v4914 = vand.u32 %v4913, 4294901760
  %4915 = vmatpush.msra.mxu0 %v4914
  %v4916 = vand.u32 %v4777, 4294901760
  %v4917 = vsub.f32 %v4777, %v4916
  %v4918 = vand.u32 %v4917, 4294901760
  %v4919 = vsub.f32 %v4917, %v4918
  %v4920 = vand.u32 %v4919, 4294901760
  %4921 = vmatpush.msra.mxu0 %v4920
  %v4922 = vand.u32 %v4776, 4294901760
  %v4923 = vsub.f32 %v4776, %v4922
  %v4924 = vand.u32 %v4923, 4294901760
  %v4925 = vsub.f32 %v4923, %v4924
  %v4926 = vand.u32 %v4925, 4294901760
  %4927 = vmatpush.msra.mxu0 %v4926
  %v4928 = vand.u32 %v4775, 4294901760
  %v4929 = vsub.f32 %v4775, %v4928
  %v4930 = vand.u32 %v4929, 4294901760
  %v4931 = vsub.f32 %v4929, %v4930
  %v4932 = vand.u32 %v4931, 4294901760
  %4933 = vmatpush.msra.mxu0 %v4932
  %v4934 = vand.u32 %v4774, 4294901760
  %v4935 = vsub.f32 %v4774, %v4934
  %v4936 = vand.u32 %v4935, 4294901760
  %v4937 = vsub.f32 %v4935, %v4936
  %v4938 = vand.u32 %v4937, 4294901760
  %4939 = vmatpush.msra.mxu0 %v4938
  %v4940 = vand.u32 %v4773, 4294901760
  %v4941 = vsub.f32 %v4773, %v4940
  %v4942 = vand.u32 %v4941, 4294901760
  %v4943 = vsub.f32 %v4941, %v4942
  %v4944 = vand.u32 %v4943, 4294901760
  %4945 = vmatpush.msra.mxu0 %v4944
  %v4946 = vand.u32 %v4772, 4294901760
  %v4947 = vsub.f32 %v4772, %v4946
  %v4948 = vand.u32 %v4947, 4294901760
  %v4949 = vsub.f32 %v4947, %v4948
  %v4950 = vand.u32 %v4949, 4294901760
  %4951 = vmatpush.msra.mxu0 %v4950
  %v4952 = vand.u32 %v4771, 4294901760
  %v4953 = vsub.f32 %v4771, %v4952
  %v4954 = vand.u32 %v4953, 4294901760
  %v4955 = vsub.f32 %v4953, %v4954
  %v4956 = vand.u32 %v4955, 4294901760
  %4957 = vmatpush.msra.mxu0 %v4956
  %v4958 = vand.u32 %v4770, 4294901760
  %v4959 = vsub.f32 %v4770, %v4958
  %v4960 = vand.u32 %v4959, 4294901760
  %v4961 = vsub.f32 %v4959, %v4960
  %v4962 = vand.u32 %v4961, 4294901760
  %4963 = vmatpush.msra.mxu0 %v4962
  %v4964 = vand.u32 %v4769, 4294901760
  %v4965 = vsub.f32 %v4769, %v4964
  %v4966 = vand.u32 %v4965, 4294901760
  %v4967 = vsub.f32 %v4965, %v4966
  %v4968 = vand.u32 %v4967, 4294901760
  %4969 = vmatpush.msra.mxu0 %v4968
  %v4970 = vand.u32 %v4762, 4294901760
  %4971 = vmatmul.f32.gmra.mxu0 %v4970
  %v4972 = vpop.f32.mrf.mxu0
  %v4973 = vadd.f32 %v4824, %v4972
  %v4974 = vand.u32 %v4763, 4294901760
  %4975 = vmatmul.f32.gmra.mxu0 %v4974
  %v4976 = vpop.f32.mrf.mxu0
  %v4977 = vadd.f32 %v4832, %v4976
  %v4978 = vand.u32 %v4764, 4294901760
  %4979 = vmatmul.f32.gmra.mxu0 %v4978
  %v4980 = vpop.f32.mrf.mxu0
  %v4981 = vadd.f32 %v4840, %v4980
  %v4982 = vand.u32 %v4765, 4294901760
  %4983 = vmatmul.f32.gmra.mxu0 %v4982
  %v4984 = vpop.f32.mrf.mxu0
  %v4985 = vadd.f32 %v4848, %v4984
  %v4986 = vand.u32 %v4766, 4294901760
  %4987 = vmatmul.f32.gmra.mxu0 %v4986
  %v4988 = vpop.f32.mrf.mxu0
  %v4989 = vadd.f32 %v4856, %v4988
  %v4990 = vand.u32 %v4767, 4294901760
  %4991 = vmatmul.f32.gmra.mxu0 %v4990
  %v4992 = vpop.f32.mrf.mxu0
  %v4993 = vadd.f32 %v4864, %v4992
  %v4994 = vand.u32 %v4768, 4294901760
  %4995 = vmatmul.f32.gmra.mxu0 %v4994
  %v4996 = vpop.f32.mrf.mxu0
  %v4997 = vadd.f32 %v4872, %v4996
  %4998 = vdwg.mxu0
  %v4999 = vand.u32 %v4784, 4294901760
  %v5000 = vsub.f32 %v4784, %v4999
  %5001 = vmatpush.msra.mxu0 %v5000
  %v5002 = vand.u32 %v4783, 4294901760
  %v5003 = vsub.f32 %v4783, %v5002
  %5004 = vmatpush.msra.mxu0 %v5003
  %v5005 = vand.u32 %v4782, 4294901760
  %v5006 = vsub.f32 %v4782, %v5005
  %5007 = vmatpush.msra.mxu0 %v5006
  %v5008 = vand.u32 %v4781, 4294901760
  %v5009 = vsub.f32 %v4781, %v5008
  %5010 = vmatpush.msra.mxu0 %v5009
  %v5011 = vand.u32 %v4780, 4294901760
  %v5012 = vsub.f32 %v4780, %v5011
  %5013 = vmatpush.msra.mxu0 %v5012
  %v5014 = vand.u32 %v4779, 4294901760
  %v5015 = vsub.f32 %v4779, %v5014
  %5016 = vmatpush.msra.mxu0 %v5015
  %v5017 = vand.u32 %v4778, 4294901760
  %v5018 = vsub.f32 %v4778, %v5017
  %5019 = vmatpush.msra.mxu0 %v5018
  %v5020 = vand.u32 %v4777, 4294901760
  %v5021 = vsub.f32 %v4777, %v5020
  %5022 = vmatpush.msra.mxu0 %v5021
  %v5023 = vand.u32 %v4776, 4294901760
  %v5024 = vsub.f32 %v4776, %v5023
  %5025 = vmatpush.msra.mxu0 %v5024
  %v5026 = vand.u32 %v4775, 4294901760
  %v5027 = vsub.f32 %v4775, %v5026
  %5028 = vmatpush.msra.mxu0 %v5027
  %v5029 = vand.u32 %v4774, 4294901760
  %v5030 = vsub.f32 %v4774, %v5029
  %5031 = vmatpush.msra.mxu0 %v5030
  %v5032 = vand.u32 %v4773, 4294901760
  %v5033 = vsub.f32 %v4773, %v5032
  %5034 = vmatpush.msra.mxu0 %v5033
  %v5035 = vand.u32 %v4772, 4294901760
  %v5036 = vsub.f32 %v4772, %v5035
  %5037 = vmatpush.msra.mxu0 %v5036
  %v5038 = vand.u32 %v4771, 4294901760
  %v5039 = vsub.f32 %v4771, %v5038
  %5040 = vmatpush.msra.mxu0 %v5039
  %v5041 = vand.u32 %v4770, 4294901760
  %v5042 = vsub.f32 %v4770, %v5041
  %5043 = vmatpush.msra.mxu0 %v5042
  %v5044 = vand.u32 %v4769, 4294901760
  %v5045 = vsub.f32 %v4769, %v5044
  %5046 = vmatpush.msra.mxu0 %v5045
  %v5047 = vand.u32 %v4762, 4294901760
  %v5048 = vsub.f32 %v4762, %v5047
  %5049 = vmatmul.f32.gmra.mxu0 %v5048
  %v5050 = vpop.f32.mrf.mxu0
  %v5051 = vadd.f32 %v4973, %v5050
  %v5052 = vand.u32 %v4763, 4294901760
  %v5053 = vsub.f32 %v4763, %v5052
  %5054 = vmatmul.f32.gmra.mxu0 %v5053
  %v5055 = vpop.f32.mrf.mxu0
  %v5056 = vadd.f32 %v4977, %v5055
  %v5057 = vand.u32 %v4764, 4294901760
  %v5058 = vsub.f32 %v4764, %v5057
  %5059 = vmatmul.f32.gmra.mxu0 %v5058
  %v5060 = vpop.f32.mrf.mxu0
  %v5061 = vadd.f32 %v4981, %v5060
  %v5062 = vand.u32 %v4765, 4294901760
  %v5063 = vsub.f32 %v4765, %v5062
  %5064 = vmatmul.f32.gmra.mxu0 %v5063
  %v5065 = vpop.f32.mrf.mxu0
  %v5066 = vadd.f32 %v4985, %v5065
  %v5067 = vand.u32 %v4766, 4294901760
  %v5068 = vsub.f32 %v4766, %v5067
  %5069 = vmatmul.f32.gmra.mxu0 %v5068
  %v5070 = vpop.f32.mrf.mxu0
  %v5071 = vadd.f32 %v4989, %v5070
  %v5072 = vand.u32 %v4767, 4294901760
  %v5073 = vsub.f32 %v4767, %v5072
  %5074 = vmatmul.f32.gmra.mxu0 %v5073
  %v5075 = vpop.f32.mrf.mxu0
  %v5076 = vadd.f32 %v4993, %v5075
  %v5077 = vand.u32 %v4768, 4294901760
  %v5078 = vsub.f32 %v4768, %v5077
  %5079 = vmatmul.f32.gmra.mxu0 %v5078
  %v5080 = vpop.f32.mrf.mxu0
  %v5081 = vadd.f32 %v4997, %v5080
  %5082 = vdwg.mxu0
  %v5083 = vand.u32 %v4784, 4294901760
  %5084 = vmatpush.msra.mxu0 %v5083
  %v5085 = vand.u32 %v4783, 4294901760
  %5086 = vmatpush.msra.mxu0 %v5085
  %v5087 = vand.u32 %v4782, 4294901760
  %5088 = vmatpush.msra.mxu0 %v5087
  %v5089 = vand.u32 %v4781, 4294901760
  %5090 = vmatpush.msra.mxu0 %v5089
  %v5091 = vand.u32 %v4780, 4294901760
  %5092 = vmatpush.msra.mxu0 %v5091
  %v5093 = vand.u32 %v4779, 4294901760
  %5094 = vmatpush.msra.mxu0 %v5093
  %v5095 = vand.u32 %v4778, 4294901760
  %5096 = vmatpush.msra.mxu0 %v5095
  %v5097 = vand.u32 %v4777, 4294901760
  %5098 = vmatpush.msra.mxu0 %v5097
  %v5099 = vand.u32 %v4776, 4294901760
  %5100 = vmatpush.msra.mxu0 %v5099
  %v5101 = vand.u32 %v4775, 4294901760
  %5102 = vmatpush.msra.mxu0 %v5101
  %v5103 = vand.u32 %v4774, 4294901760
  %5104 = vmatpush.msra.mxu0 %v5103
  %v5105 = vand.u32 %v4773, 4294901760
  %5106 = vmatpush.msra.mxu0 %v5105
  %v5107 = vand.u32 %v4772, 4294901760
  %5108 = vmatpush.msra.mxu0 %v5107
  %v5109 = vand.u32 %v4771, 4294901760
  %5110 = vmatpush.msra.mxu0 %v5109
  %v5111 = vand.u32 %v4770, 4294901760
  %5112 = vmatpush.msra.mxu0 %v5111
  %v5113 = vand.u32 %v4769, 4294901760
  %5114 = vmatpush.msra.mxu0 %v5113
  %v5115 = vand.u32 %v4762, 4294901760
  %v5116 = vsub.f32 %v4762, %v5115
  %v5117 = vand.u32 %v5116, 4294901760
  %5118 = vmatmul.f32.gmra.mxu0 %v5117
  %v5119 = vpop.f32.mrf.mxu0
  %v5120 = vadd.f32 %v5051, %v5119
  %v5121 = vand.u32 %v4763, 4294901760
  %v5122 = vsub.f32 %v4763, %v5121
  %v5123 = vand.u32 %v5122, 4294901760
  %5124 = vmatmul.f32.gmra.mxu0 %v5123
  %v5125 = vpop.f32.mrf.mxu0
  %v5126 = vadd.f32 %v5056, %v5125
  %v5127 = vand.u32 %v4764, 4294901760
  %v5128 = vsub.f32 %v4764, %v5127
  %v5129 = vand.u32 %v5128, 4294901760
  %5130 = vmatmul.f32.gmra.mxu0 %v5129
  %v5131 = vpop.f32.mrf.mxu0
  %v5132 = vadd.f32 %v5061, %v5131
  %v5133 = vand.u32 %v4765, 4294901760
  %v5134 = vsub.f32 %v4765, %v5133
  %v5135 = vand.u32 %v5134, 4294901760
  %5136 = vmatmul.f32.gmra.mxu0 %v5135
  %v5137 = vpop.f32.mrf.mxu0
  %v5138 = vadd.f32 %v5066, %v5137
  %v5139 = vand.u32 %v4766, 4294901760
  %v5140 = vsub.f32 %v4766, %v5139
  %v5141 = vand.u32 %v5140, 4294901760
  %5142 = vmatmul.f32.gmra.mxu0 %v5141
  %v5143 = vpop.f32.mrf.mxu0
  %v5144 = vadd.f32 %v5071, %v5143
  %v5145 = vand.u32 %v4767, 4294901760
  %v5146 = vsub.f32 %v4767, %v5145
  %v5147 = vand.u32 %v5146, 4294901760
  %5148 = vmatmul.f32.gmra.mxu0 %v5147
  %v5149 = vpop.f32.mrf.mxu0
  %v5150 = vadd.f32 %v5076, %v5149
  %v5151 = vand.u32 %v4768, 4294901760
  %v5152 = vsub.f32 %v4768, %v5151
  %v5153 = vand.u32 %v5152, 4294901760
  %5154 = vmatmul.f32.gmra.mxu0 %v5153
  %v5155 = vpop.f32.mrf.mxu0
  %v5156 = vadd.f32 %v5081, %v5155
  %5157 = vdwg.mxu0
  %v5158 = vand.u32 %v4784, 4294901760
  %v5159 = vsub.f32 %v4784, %v5158
  %v5160 = vand.u32 %v5159, 4294901760
  %5161 = vmatpush.msra.mxu0 %v5160
  %v5162 = vand.u32 %v4783, 4294901760
  %v5163 = vsub.f32 %v4783, %v5162
  %v5164 = vand.u32 %v5163, 4294901760
  %5165 = vmatpush.msra.mxu0 %v5164
  %v5166 = vand.u32 %v4782, 4294901760
  %v5167 = vsub.f32 %v4782, %v5166
  %v5168 = vand.u32 %v5167, 4294901760
  %5169 = vmatpush.msra.mxu0 %v5168
  %v5170 = vand.u32 %v4781, 4294901760
  %v5171 = vsub.f32 %v4781, %v5170
  %v5172 = vand.u32 %v5171, 4294901760
  %5173 = vmatpush.msra.mxu0 %v5172
  %v5174 = vand.u32 %v4780, 4294901760
  %v5175 = vsub.f32 %v4780, %v5174
  %v5176 = vand.u32 %v5175, 4294901760
  %5177 = vmatpush.msra.mxu0 %v5176
  %v5178 = vand.u32 %v4779, 4294901760
  %v5179 = vsub.f32 %v4779, %v5178
  %v5180 = vand.u32 %v5179, 4294901760
  %5181 = vmatpush.msra.mxu0 %v5180
  %v5182 = vand.u32 %v4778, 4294901760
  %v5183 = vsub.f32 %v4778, %v5182
  %v5184 = vand.u32 %v5183, 4294901760
  %5185 = vmatpush.msra.mxu0 %v5184
  %v5186 = vand.u32 %v4777, 4294901760
  %v5187 = vsub.f32 %v4777, %v5186
  %v5188 = vand.u32 %v5187, 4294901760
  %5189 = vmatpush.msra.mxu0 %v5188
  %v5190 = vand.u32 %v4776, 4294901760
  %v5191 = vsub.f32 %v4776, %v5190
  %v5192 = vand.u32 %v5191, 4294901760
  %5193 = vmatpush.msra.mxu0 %v5192
  %v5194 = vand.u32 %v4775, 4294901760
  %v5195 = vsub.f32 %v4775, %v5194
  %v5196 = vand.u32 %v5195, 4294901760
  %5197 = vmatpush.msra.mxu0 %v5196
  %v5198 = vand.u32 %v4774, 4294901760
  %v5199 = vsub.f32 %v4774, %v5198
  %v5200 = vand.u32 %v5199, 4294901760
  %5201 = vmatpush.msra.mxu0 %v5200
  %v5202 = vand.u32 %v4773, 4294901760
  %v5203 = vsub.f32 %v4773, %v5202
  %v5204 = vand.u32 %v5203, 4294901760
  %5205 = vmatpush.msra.mxu0 %v5204
  %v5206 = vand.u32 %v4772, 4294901760
  %v5207 = vsub.f32 %v4772, %v5206
  %v5208 = vand.u32 %v5207, 4294901760
  %5209 = vmatpush.msra.mxu0 %v5208
  %v5210 = vand.u32 %v4771, 4294901760
  %v5211 = vsub.f32 %v4771, %v5210
  %v5212 = vand.u32 %v5211, 4294901760
  %5213 = vmatpush.msra.mxu0 %v5212
  %v5214 = vand.u32 %v4770, 4294901760
  %v5215 = vsub.f32 %v4770, %v5214
  %v5216 = vand.u32 %v5215, 4294901760
  %5217 = vmatpush.msra.mxu0 %v5216
  %v5218 = vand.u32 %v4769, 4294901760
  %v5219 = vsub.f32 %v4769, %v5218
  %v5220 = vand.u32 %v5219, 4294901760
  %5221 = vmatpush.msra.mxu0 %v5220
  %v5222 = vand.u32 %v4762, 4294901760
  %5223 = vmatmul.f32.gmra.mxu0 %v5222
  %v5224 = vpop.f32.mrf.mxu0
  %v5225 = vadd.f32 %v5120, %v5224
  %v5226 = vand.u32 %v4763, 4294901760
  %5227 = vmatmul.f32.gmra.mxu0 %v5226
  %v5228 = vpop.f32.mrf.mxu0
  %v5229 = vadd.f32 %v5126, %v5228
  %v5230 = vand.u32 %v4764, 4294901760
  %5231 = vmatmul.f32.gmra.mxu0 %v5230
  %v5232 = vpop.f32.mrf.mxu0
  %v5233 = vadd.f32 %v5132, %v5232
  %v5234 = vand.u32 %v4765, 4294901760
  %5235 = vmatmul.f32.gmra.mxu0 %v5234
  %v5236 = vpop.f32.mrf.mxu0
  %v5237 = vadd.f32 %v5138, %v5236
  %v5238 = vand.u32 %v4766, 4294901760
  %5239 = vmatmul.f32.gmra.mxu0 %v5238
  %v5240 = vpop.f32.mrf.mxu0
  %v5241 = vadd.f32 %v5144, %v5240
  %v5242 = vand.u32 %v4767, 4294901760
  %5243 = vmatmul.f32.gmra.mxu0 %v5242
  %v5244 = vpop.f32.mrf.mxu0
  %v5245 = vadd.f32 %v5150, %v5244
  %v5246 = vand.u32 %v4768, 4294901760
  %5247 = vmatmul.f32.gmra.mxu0 %v5246
  %v5248 = vpop.f32.mrf.mxu0
  %v5249 = vadd.f32 %v5156, %v5248
  %5250 = vdwg.mxu0
  %v5251 = vand.u32 %v4784, 4294901760
  %5252 = vmatpush.msra.mxu0 %v5251
  %v5253 = vand.u32 %v4783, 4294901760
  %5254 = vmatpush.msra.mxu0 %v5253
  %v5255 = vand.u32 %v4782, 4294901760
  %5256 = vmatpush.msra.mxu0 %v5255
  %v5257 = vand.u32 %v4781, 4294901760
  %5258 = vmatpush.msra.mxu0 %v5257
  %v5259 = vand.u32 %v4780, 4294901760
  %5260 = vmatpush.msra.mxu0 %v5259
  %v5261 = vand.u32 %v4779, 4294901760
  %5262 = vmatpush.msra.mxu0 %v5261
  %v5263 = vand.u32 %v4778, 4294901760
  %5264 = vmatpush.msra.mxu0 %v5263
  %v5265 = vand.u32 %v4777, 4294901760
  %5266 = vmatpush.msra.mxu0 %v5265
  %v5267 = vand.u32 %v4776, 4294901760
  %5268 = vmatpush.msra.mxu0 %v5267
  %v5269 = vand.u32 %v4775, 4294901760
  %5270 = vmatpush.msra.mxu0 %v5269
  %v5271 = vand.u32 %v4774, 4294901760
  %5272 = vmatpush.msra.mxu0 %v5271
  %v5273 = vand.u32 %v4773, 4294901760
  %5274 = vmatpush.msra.mxu0 %v5273
  %v5275 = vand.u32 %v4772, 4294901760
  %5276 = vmatpush.msra.mxu0 %v5275
  %v5277 = vand.u32 %v4771, 4294901760
  %5278 = vmatpush.msra.mxu0 %v5277
  %v5279 = vand.u32 %v4770, 4294901760
  %5280 = vmatpush.msra.mxu0 %v5279
  %v5281 = vand.u32 %v4769, 4294901760
  %5282 = vmatpush.msra.mxu0 %v5281
  %v5283 = vand.u32 %v4762, 4294901760
  %5284 = vmatmul.f32.gmra.mxu0 %v5283
  %v5285 = vpop.f32.mrf.mxu0
  %v5286 = vadd.f32 %v5225, %v5285
  %v5287 = vand.u32 %v4763, 4294901760
  %5288 = vmatmul.f32.gmra.mxu0 %v5287
  %v5289 = vpop.f32.mrf.mxu0
  %v5290 = vadd.f32 %v5229, %v5289
  %v5291 = vand.u32 %v4764, 4294901760
  %5292 = vmatmul.f32.gmra.mxu0 %v5291
  %v5293 = vpop.f32.mrf.mxu0
  %v5294 = vadd.f32 %v5233, %v5293
  %v5295 = vand.u32 %v4765, 4294901760
  %5296 = vmatmul.f32.gmra.mxu0 %v5295
  %v5297 = vpop.f32.mrf.mxu0
  %v5298 = vadd.f32 %v5237, %v5297
  %v5299 = vand.u32 %v4766, 4294901760
  %5300 = vmatmul.f32.gmra.mxu0 %v5299
  %v5301 = vpop.f32.mrf.mxu0
  %v5302 = vadd.f32 %v5241, %v5301
  %v5303 = vand.u32 %v4767, 4294901760
  %5304 = vmatmul.f32.gmra.mxu0 %v5303
  %v5305 = vpop.f32.mrf.mxu0
  %v5306 = vadd.f32 %v5245, %v5305
  %v5307 = vand.u32 %v4768, 4294901760
  %5308 = vmatmul.f32.gmra.mxu0 %v5307
  %v5309 = vpop.f32.mrf.mxu0
  %v5310 = vadd.f32 %v5249, %v5309
  %5311 = vdwg.mxu0
  %v5312 = vadd.f32 %v4748, %v5286
  %v5313 = vadd.f32 %v4749, %v5290
  %v5314 = vadd.f32 %v4750, %v5294
  %v5315 = vadd.f32 %v4751, %v5298
  %v5316 = vadd.f32 %v4752, %v5302
  %v5317 = vadd.f32 %v4753, %v5306
  %v5318 = vadd.f32 %v4754, %v5310
  %v5319 = vld [vmem:[%s2] sm:$0xff]
  %v5320 = vld [vmem:[%s2 + $0x48] sm:$0xff]
  %v5321 = vld [vmem:[%s2 + $0x90] sm:$0xff]
  %v5322 = vld [vmem:[%s2 + $0xd8] sm:$0xff]
  %v5323 = vld [vmem:[%s2 + $0x120] sm:$0xff]
  %v5324 = vld [vmem:[%s2 + $0x168] sm:$0xff]
  %v5325 = vld [vmem:[%s2 + $0x1b0] sm:$0x1]
  %v5326 = vld [vmem:[%s4] sm:$0x1]
  %v5327 = vld [vmem:[%s5] sm:$0x1]
  %v5328 = vadd.f32 %v5319, %v5320
  %v5329 = vadd.f32 %v5328, %v5321
  %v5330 = vadd.f32 %v5329, %v5322
  %v5331 = vadd.f32 %v5330, %v5323
  %v5332 = vadd.f32 %v5331, %v5324
  %vm5333 = vcmask 1040384
  %v5334 = vsel %vm5333, %v5325, 0.0
  %v5335 = vadd.f32 %v5332, %v5334
  %v5336 = vrot.slane %v5335, 4
  %v5337 = vadd.f32 %v5335, %v5336
  %v5338 = vrot.slane %v5337, 2
  %v5339 = vadd.f32 %v5337, %v5338
  %v5340 = vrot.slane %v5339, 1
  %v5341 = vadd.f32 %v5339, %v5340
  %v5342 = vmul.f32 %v5341, 0.020408163
  %v5343 = vsub.f32 %v5319, %v5342
  %v5344 = vsub.f32 %v5320, %v5342
  %v5345 = vsub.f32 %v5321, %v5342
  %v5346 = vsub.f32 %v5322, %v5342
  %v5347 = vsub.f32 %v5323, %v5342
  %v5348 = vsub.f32 %v5324, %v5342
  %v5349 = vsub.f32 %v5325, %v5342
  %v5350 = vmul.f32 %v5343, %v5343
  %v5351 = vmul.f32 %v5344, %v5344
  %v5352 = vmul.f32 %v5345, %v5345
  %v5353 = vmul.f32 %v5346, %v5346
  %v5354 = vmul.f32 %v5347, %v5347
  %v5355 = vmul.f32 %v5348, %v5348
  %v5356 = vmul.f32 %v5349, %v5349
  %v5357 = vadd.f32 %v5350, %v5351
  %v5358 = vadd.f32 %v5357, %v5352
  %v5359 = vadd.f32 %v5358, %v5353
  %v5360 = vadd.f32 %v5359, %v5354
  %v5361 = vadd.f32 %v5360, %v5355
  %v5362 = vsel %vm5333, %v5356, 0.0
  %v5363 = vadd.f32 %v5361, %v5362
  %v5364 = vrot.slane %v5363, 4
  %v5365 = vadd.f32 %v5363, %v5364
  %v5366 = vrot.slane %v5365, 2
  %v5367 = vadd.f32 %v5365, %v5366
  %v5368 = vrot.slane %v5367, 1
  %v5369 = vadd.f32 %v5367, %v5368
  %v5370 = vmul.f32 %v5369, 0.020408163
  %v5371 = vadd.f32 %v5370, 1e-05
  %v5372 = vrsqrt.pop %v5371
  %v5373 = vmul.f32 %v5372, %v5371
  %v5374 = vmul.f32 %v5373, %v5372
  %v5375 = vmul.f32 0.5, %v5374
  %v5376 = vsub.f32 1.5, %v5375
  %v5377 = vmul.f32 %v5372, %v5376
  %vm5378 = vweird.f32 %v5371
  %vm5379 = vweird.f32 %v5372
  %vm5380 = vmor %vm5378, %vm5379
  %v5381 = vsel %vm5380, %v5372, %v5377
  %v5382 = vmul.f32 %v5381, %v5326
  %v5383 = vperm.slane %v5382, 0
  %v5384 = vmul.f32 %v5343, %v5383
  %v5385 = vmul.f32 %v5344, %v5383
  %v5386 = vmul.f32 %v5345, %v5383
  %v5387 = vmul.f32 %v5346, %v5383
  %v5388 = vmul.f32 %v5347, %v5383
  %v5389 = vmul.f32 %v5348, %v5383
  %v5390 = vmul.f32 %v5349, %v5383
  %v5392 = vperm.slane %v5327, 0
  %v5394 = vadd.f32 %v5384, %v5392
  %v5395 = vadd.f32 %v5385, %v5392
  %v5396 = vadd.f32 %v5386, %v5392
  %v5397 = vadd.f32 %v5387, %v5392
  %v5398 = vadd.f32 %v5388, %v5392
  %v5399 = vadd.f32 %v5389, %v5392
  %v5400 = vadd.f32 %v5390, %v5392
  %5401 = vst [vmem:[%s6] sm:$0xff] %v5394
  %5402 = vst [vmem:[%s6 + $0x50] sm:$0xff] %v5395
  %5403 = vst [vmem:[%s6 + $0xa0] sm:$0xff] %v5396
  %5404 = vst [vmem:[%s6 + $0xf0] sm:$0xff] %v5397
  %5405 = vst [vmem:[%s6 + $0x140] sm:$0xff] %v5398
  %5406 = vst [vmem:[%s6 + $0x190] sm:$0xff] %v5399
  %5407 = vst [vmem:[%s6 + $0x1e0] sm:$0x1] %v5400
  %v5408 = vld [vmem:[%s2 + $0x8] sm:$0xff]
  %v5409 = vld [vmem:[%s2 + $0x50] sm:$0xff]
  %v5410 = vld [vmem:[%s2 + $0x98] sm:$0xff]
  %v5411 = vld [vmem:[%s2 + $0xe0] sm:$0xff]
  %v5412 = vld [vmem:[%s2 + $0x128] sm:$0xff]
  %v5413 = vld [vmem:[%s2 + $0x170] sm:$0xff]
  %v5414 = vld [vmem:[%s2 + $0x1b8] sm:$0x1]
  %v5415 = vld [vmem:[%s4 + $0x1] sm:$0x1]
  %v5416 = vld [vmem:[%s5 + $0x1] sm:$0x1]
  %v5417 = vadd.f32 %v5408, %v5409
  %v5418 = vadd.f32 %v5417, %v5410
  %v5419 = vadd.f32 %v5418, %v5411
  %v5420 = vadd.f32 %v5419, %v5412
  %v5421 = vadd.f32 %v5420, %v5413
  %v5422 = vsel %vm5333, %v5414, 0.0
  %v5423 = vadd.f32 %v5421, %v5422
  %v5424 = vrot.slane %v5423, 4
  %v5425 = vadd.f32 %v5423, %v5424
  %v5426 = vrot.slane %v5425, 2
  %v5427 = vadd.f32 %v5425, %v5426
  %v5428 = vrot.slane %v5427, 1
  %v5429 = vadd.f32 %v5427, %v5428
  %v5430 = vmul.f32 %v5429, 0.020408163
  %v5431 = vsub.f32 %v5408, %v5430
  %v5432 = vsub.f32 %v5409, %v5430
  %v5433 = vsub.f32 %v5410, %v5430
  %v5434 = vsub.f32 %v5411, %v5430
  %v5435 = vsub.f32 %v5412, %v5430
  %v5436 = vsub.f32 %v5413, %v5430
  %v5437 = vsub.f32 %v5414, %v5430
  %v5438 = vmul.f32 %v5431, %v5431
  %v5439 = vmul.f32 %v5432, %v5432
  %v5440 = vmul.f32 %v5433, %v5433
  %v5441 = vmul.f32 %v5434, %v5434
  %v5442 = vmul.f32 %v5435, %v5435
  %v5443 = vmul.f32 %v5436, %v5436
  %v5444 = vmul.f32 %v5437, %v5437
  %v5445 = vadd.f32 %v5438, %v5439
  %v5446 = vadd.f32 %v5445, %v5440
  %v5447 = vadd.f32 %v5446, %v5441
  %v5448 = vadd.f32 %v5447, %v5442
  %v5449 = vadd.f32 %v5448, %v5443
  %v5450 = vsel %vm5333, %v5444, 0.0
  %v5451 = vadd.f32 %v5449, %v5450
  %v5452 = vrot.slane %v5451, 4
  %v5453 = vadd.f32 %v5451, %v5452
  %v5454 = vrot.slane %v5453, 2
  %v5455 = vadd.f32 %v5453, %v5454
  %v5456 = vrot.slane %v5455, 1
  %v5457 = vadd.f32 %v5455, %v5456
  %v5458 = vmul.f32 %v5457, 0.020408163
  %v5459 = vadd.f32 %v5458, 1e-05
  %v5460 = vrsqrt.pop %v5459
  %v5461 = vmul.f32 %v5460, %v5459
  %v5462 = vmul.f32 %v5461, %v5460
  %v5463 = vmul.f32 0.5, %v5462
  %v5464 = vsub.f32 1.5, %v5463
  %v5465 = vmul.f32 %v5460, %v5464
  %vm5466 = vweird.f32 %v5459
  %vm5467 = vweird.f32 %v5460
  %vm5468 = vmor %vm5466, %vm5467
  %v5469 = vsel %vm5468, %v5460, %v5465
  %v5470 = vmul.f32 %v5469, %v5415
  %v5471 = vperm.slane %v5470, 0
  %v5472 = vmul.f32 %v5431, %v5471
  %v5473 = vmul.f32 %v5432, %v5471
  %v5474 = vmul.f32 %v5433, %v5471
  %v5475 = vmul.f32 %v5434, %v5471
  %v5476 = vmul.f32 %v5435, %v5471
  %v5477 = vmul.f32 %v5436, %v5471
  %v5478 = vmul.f32 %v5437, %v5471
  %v5480 = vperm.slane %v5416, 0
  %v5482 = vadd.f32 %v5472, %v5480
  %v5483 = vadd.f32 %v5473, %v5480
  %v5484 = vadd.f32 %v5474, %v5480
  %v5485 = vadd.f32 %v5475, %v5480
  %v5486 = vadd.f32 %v5476, %v5480
  %v5487 = vadd.f32 %v5477, %v5480
  %v5488 = vadd.f32 %v5478, %v5480
  %5489 = vst [vmem:[%s6 + $0x8] sm:$0xff] %v5482
  %5490 = vst [vmem:[%s6 + $0x58] sm:$0xff] %v5483
  %5491 = vst [vmem:[%s6 + $0xa8] sm:$0xff] %v5484
  %5492 = vst [vmem:[%s6 + $0xf8] sm:$0xff] %v5485
  %5493 = vst [vmem:[%s6 + $0x148] sm:$0xff] %v5486
  %5494 = vst [vmem:[%s6 + $0x198] sm:$0xff] %v5487
  %5495 = vst [vmem:[%s6 + $0x1e8] sm:$0x1] %v5488
  %v5496 = vld [vmem:[%s2 + $0x10] sm:$0xff]
  %v5497 = vld [vmem:[%s2 + $0x58] sm:$0xff]
  %v5498 = vld [vmem:[%s2 + $0xa0] sm:$0xff]
  %v5499 = vld [vmem:[%s2 + $0xe8] sm:$0xff]
  %v5500 = vld [vmem:[%s2 + $0x130] sm:$0xff]
  %v5501 = vld [vmem:[%s2 + $0x178] sm:$0xff]
  %v5502 = vld [vmem:[%s2 + $0x1c0] sm:$0x1]
  %v5503 = vld [vmem:[%s4 + $0x2] sm:$0x1]
  %v5504 = vld [vmem:[%s5 + $0x2] sm:$0x1]
  %v5505 = vadd.f32 %v5496, %v5497
  %v5506 = vadd.f32 %v5505, %v5498
  %v5507 = vadd.f32 %v5506, %v5499
  %v5508 = vadd.f32 %v5507, %v5500
  %v5509 = vadd.f32 %v5508, %v5501
  %v5510 = vsel %vm5333, %v5502, 0.0
  %v5511 = vadd.f32 %v5509, %v5510
  %v5512 = vrot.slane %v5511, 4
  %v5513 = vadd.f32 %v5511, %v5512
  %v5514 = vrot.slane %v5513, 2
  %v5515 = vadd.f32 %v5513, %v5514
  %v5516 = vrot.slane %v5515, 1
  %v5517 = vadd.f32 %v5515, %v5516
  %v5518 = vmul.f32 %v5517, 0.020408163
  %v5519 = vsub.f32 %v5496, %v5518
  %v5520 = vsub.f32 %v5497, %v5518
  %v5521 = vsub.f32 %v5498, %v5518
  %v5522 = vsub.f32 %v5499, %v5518
  %v5523 = vsub.f32 %v5500, %v5518
  %v5524 = vsub.f32 %v5501, %v5518
  %v5525 = vsub.f32 %v5502, %v5518
  %v5526 = vmul.f32 %v5519, %v5519
  %v5527 = vmul.f32 %v5520, %v5520
  %v5528 = vmul.f32 %v5521, %v5521
  %v5529 = vmul.f32 %v5522, %v5522
  %v5530 = vmul.f32 %v5523, %v5523
  %v5531 = vmul.f32 %v5524, %v5524
  %v5532 = vmul.f32 %v5525, %v5525
  %v5533 = vadd.f32 %v5526, %v5527
  %v5534 = vadd.f32 %v5533, %v5528
  %v5535 = vadd.f32 %v5534, %v5529
  %v5536 = vadd.f32 %v5535, %v5530
  %v5537 = vadd.f32 %v5536, %v5531
  %v5538 = vsel %vm5333, %v5532, 0.0
  %v5539 = vadd.f32 %v5537, %v5538
  %v5540 = vrot.slane %v5539, 4
  %v5541 = vadd.f32 %v5539, %v5540
  %v5542 = vrot.slane %v5541, 2
  %v5543 = vadd.f32 %v5541, %v5542
  %v5544 = vrot.slane %v5543, 1
  %v5545 = vadd.f32 %v5543, %v5544
  %v5546 = vmul.f32 %v5545, 0.020408163
  %v5547 = vadd.f32 %v5546, 1e-05
  %v5548 = vrsqrt.pop %v5547
  %v5549 = vmul.f32 %v5548, %v5547
  %v5550 = vmul.f32 %v5549, %v5548
  %v5551 = vmul.f32 0.5, %v5550
  %v5552 = vsub.f32 1.5, %v5551
  %v5553 = vmul.f32 %v5548, %v5552
  %vm5554 = vweird.f32 %v5547
  %vm5555 = vweird.f32 %v5548
  %vm5556 = vmor %vm5554, %vm5555
  %v5557 = vsel %vm5556, %v5548, %v5553
  %v5558 = vmul.f32 %v5557, %v5503
  %v5559 = vperm.slane %v5558, 0
  %v5560 = vmul.f32 %v5519, %v5559
  %v5561 = vmul.f32 %v5520, %v5559
  %v5562 = vmul.f32 %v5521, %v5559
  %v5563 = vmul.f32 %v5522, %v5559
  %v5564 = vmul.f32 %v5523, %v5559
  %v5565 = vmul.f32 %v5524, %v5559
  %v5566 = vmul.f32 %v5525, %v5559
  %v5568 = vperm.slane %v5504, 0
  %v5570 = vadd.f32 %v5560, %v5568
  %v5571 = vadd.f32 %v5561, %v5568
  %v5572 = vadd.f32 %v5562, %v5568
  %v5573 = vadd.f32 %v5563, %v5568
  %v5574 = vadd.f32 %v5564, %v5568
  %v5575 = vadd.f32 %v5565, %v5568
  %v5576 = vadd.f32 %v5566, %v5568
  %5577 = vst [vmem:[%s6 + $0x10] sm:$0xff] %v5570
  %5578 = vst [vmem:[%s6 + $0x60] sm:$0xff] %v5571
  %5579 = vst [vmem:[%s6 + $0xb0] sm:$0xff] %v5572
  %5580 = vst [vmem:[%s6 + $0x100] sm:$0xff] %v5573
  %5581 = vst [vmem:[%s6 + $0x150] sm:$0xff] %v5574
  %5582 = vst [vmem:[%s6 + $0x1a0] sm:$0xff] %v5575
  %5583 = vst [vmem:[%s6 + $0x1f0] sm:$0x1] %v5576
  %v5584 = vld [vmem:[%s2 + $0x18] sm:$0xff]
  %v5585 = vld [vmem:[%s2 + $0x60] sm:$0xff]
  %v5586 = vld [vmem:[%s2 + $0xa8] sm:$0xff]
  %v5587 = vld [vmem:[%s2 + $0xf0] sm:$0xff]
  %v5588 = vld [vmem:[%s2 + $0x138] sm:$0xff]
  %v5589 = vld [vmem:[%s2 + $0x180] sm:$0xff]
  %v5590 = vld [vmem:[%s2 + $0x1c8] sm:$0x1]
  %v5591 = vld [vmem:[%s4 + $0x3] sm:$0x1]
  %v5592 = vld [vmem:[%s5 + $0x3] sm:$0x1]
  %v5593 = vadd.f32 %v5584, %v5585
  %v5594 = vadd.f32 %v5593, %v5586
  %v5595 = vadd.f32 %v5594, %v5587
  %v5596 = vadd.f32 %v5595, %v5588
  %v5597 = vadd.f32 %v5596, %v5589
  %v5598 = vsel %vm5333, %v5590, 0.0
  %v5599 = vadd.f32 %v5597, %v5598
  %v5600 = vrot.slane %v5599, 4
  %v5601 = vadd.f32 %v5599, %v5600
  %v5602 = vrot.slane %v5601, 2
  %v5603 = vadd.f32 %v5601, %v5602
  %v5604 = vrot.slane %v5603, 1
  %v5605 = vadd.f32 %v5603, %v5604
  %v5606 = vmul.f32 %v5605, 0.020408163
  %v5607 = vsub.f32 %v5584, %v5606
  %v5608 = vsub.f32 %v5585, %v5606
  %v5609 = vsub.f32 %v5586, %v5606
  %v5610 = vsub.f32 %v5587, %v5606
  %v5611 = vsub.f32 %v5588, %v5606
  %v5612 = vsub.f32 %v5589, %v5606
  %v5613 = vsub.f32 %v5590, %v5606
  %v5614 = vmul.f32 %v5607, %v5607
  %v5615 = vmul.f32 %v5608, %v5608
  %v5616 = vmul.f32 %v5609, %v5609
  %v5617 = vmul.f32 %v5610, %v5610
  %v5618 = vmul.f32 %v5611, %v5611
  %v5619 = vmul.f32 %v5612, %v5612
  %v5620 = vmul.f32 %v5613, %v5613
  %v5621 = vadd.f32 %v5614, %v5615
  %v5622 = vadd.f32 %v5621, %v5616
  %v5623 = vadd.f32 %v5622, %v5617
  %v5624 = vadd.f32 %v5623, %v5618
  %v5625 = vadd.f32 %v5624, %v5619
  %v5626 = vsel %vm5333, %v5620, 0.0
  %v5627 = vadd.f32 %v5625, %v5626
  %v5628 = vrot.slane %v5627, 4
  %v5629 = vadd.f32 %v5627, %v5628
  %v5630 = vrot.slane %v5629, 2
  %v5631 = vadd.f32 %v5629, %v5630
  %v5632 = vrot.slane %v5631, 1
  %v5633 = vadd.f32 %v5631, %v5632
  %v5634 = vmul.f32 %v5633, 0.020408163
  %v5635 = vadd.f32 %v5634, 1e-05
  %v5636 = vrsqrt.pop %v5635
  %v5637 = vmul.f32 %v5636, %v5635
  %v5638 = vmul.f32 %v5637, %v5636
  %v5639 = vmul.f32 0.5, %v5638
  %v5640 = vsub.f32 1.5, %v5639
  %v5641 = vmul.f32 %v5636, %v5640
  %vm5642 = vweird.f32 %v5635
  %vm5643 = vweird.f32 %v5636
  %vm5644 = vmor %vm5642, %vm5643
  %v5645 = vsel %vm5644, %v5636, %v5641
  %v5646 = vmul.f32 %v5645, %v5591
  %v5647 = vperm.slane %v5646, 0
  %v5648 = vmul.f32 %v5607, %v5647
  %v5649 = vmul.f32 %v5608, %v5647
  %v5650 = vmul.f32 %v5609, %v5647
  %v5651 = vmul.f32 %v5610, %v5647
  %v5652 = vmul.f32 %v5611, %v5647
  %v5653 = vmul.f32 %v5612, %v5647
  %v5654 = vmul.f32 %v5613, %v5647
  %v5656 = vperm.slane %v5592, 0
  %v5658 = vadd.f32 %v5648, %v5656
  %v5659 = vadd.f32 %v5649, %v5656
  %v5660 = vadd.f32 %v5650, %v5656
  %v5661 = vadd.f32 %v5651, %v5656
  %v5662 = vadd.f32 %v5652, %v5656
  %v5663 = vadd.f32 %v5653, %v5656
  %v5664 = vadd.f32 %v5654, %v5656
  %5665 = vst [vmem:[%s6 + $0x18] sm:$0xff] %v5658
  %5666 = vst [vmem:[%s6 + $0x68] sm:$0xff] %v5659
  %5667 = vst [vmem:[%s6 + $0xb8] sm:$0xff] %v5660
  %5668 = vst [vmem:[%s6 + $0x108] sm:$0xff] %v5661
  %5669 = vst [vmem:[%s6 + $0x158] sm:$0xff] %v5662
  %5670 = vst [vmem:[%s6 + $0x1a8] sm:$0xff] %v5663
  %5671 = vst [vmem:[%s6 + $0x1f8] sm:$0x1] %v5664
  %v5672 = vld [vmem:[%s2 + $0x20] sm:$0xff]
  %v5673 = vld [vmem:[%s2 + $0x68] sm:$0xff]
  %v5674 = vld [vmem:[%s2 + $0xb0] sm:$0xff]
  %v5675 = vld [vmem:[%s2 + $0xf8] sm:$0xff]
  %v5676 = vld [vmem:[%s2 + $0x140] sm:$0xff]
  %v5677 = vld [vmem:[%s2 + $0x188] sm:$0xff]
  %v5678 = vld [vmem:[%s2 + $0x1d0] sm:$0x1]
  %v5679 = vld [vmem:[%s4 + $0x4] sm:$0x1]
  %v5680 = vld [vmem:[%s5 + $0x4] sm:$0x1]
  %v5681 = vadd.f32 %v5672, %v5673
  %v5682 = vadd.f32 %v5681, %v5674
  %v5683 = vadd.f32 %v5682, %v5675
  %v5684 = vadd.f32 %v5683, %v5676
  %v5685 = vadd.f32 %v5684, %v5677
  %v5686 = vsel %vm5333, %v5678, 0.0
  %v5687 = vadd.f32 %v5685, %v5686
  %v5688 = vrot.slane %v5687, 4
  %v5689 = vadd.f32 %v5687, %v5688
  %v5690 = vrot.slane %v5689, 2
  %v5691 = vadd.f32 %v5689, %v5690
  %v5692 = vrot.slane %v5691, 1
  %v5693 = vadd.f32 %v5691, %v5692
  %v5694 = vmul.f32 %v5693, 0.020408163
  %v5695 = vsub.f32 %v5672, %v5694
  %v5696 = vsub.f32 %v5673, %v5694
  %v5697 = vsub.f32 %v5674, %v5694
  %v5698 = vsub.f32 %v5675, %v5694
  %v5699 = vsub.f32 %v5676, %v5694
  %v5700 = vsub.f32 %v5677, %v5694
  %v5701 = vsub.f32 %v5678, %v5694
  %v5702 = vmul.f32 %v5695, %v5695
  %v5703 = vmul.f32 %v5696, %v5696
  %v5704 = vmul.f32 %v5697, %v5697
  %v5705 = vmul.f32 %v5698, %v5698
  %v5706 = vmul.f32 %v5699, %v5699
  %v5707 = vmul.f32 %v5700, %v5700
  %v5708 = vmul.f32 %v5701, %v5701
  %v5709 = vadd.f32 %v5702, %v5703
  %v5710 = vadd.f32 %v5709, %v5704
  %v5711 = vadd.f32 %v5710, %v5705
  %v5712 = vadd.f32 %v5711, %v5706
  %v5713 = vadd.f32 %v5712, %v5707
  %v5714 = vsel %vm5333, %v5708, 0.0
  %v5715 = vadd.f32 %v5713, %v5714
  %v5716 = vrot.slane %v5715, 4
  %v5717 = vadd.f32 %v5715, %v5716
  %v5718 = vrot.slane %v5717, 2
  %v5719 = vadd.f32 %v5717, %v5718
  %v5720 = vrot.slane %v5719, 1
  %v5721 = vadd.f32 %v5719, %v5720
  %v5722 = vmul.f32 %v5721, 0.020408163
  %v5723 = vadd.f32 %v5722, 1e-05
  %v5724 = vrsqrt.pop %v5723
  %v5725 = vmul.f32 %v5724, %v5723
  %v5726 = vmul.f32 %v5725, %v5724
  %v5727 = vmul.f32 0.5, %v5726
  %v5728 = vsub.f32 1.5, %v5727
  %v5729 = vmul.f32 %v5724, %v5728
  %vm5730 = vweird.f32 %v5723
  %vm5731 = vweird.f32 %v5724
  %vm5732 = vmor %vm5730, %vm5731
  %v5733 = vsel %vm5732, %v5724, %v5729
  %v5734 = vmul.f32 %v5733, %v5679
  %v5735 = vperm.slane %v5734, 0
  %v5736 = vmul.f32 %v5695, %v5735
  %v5737 = vmul.f32 %v5696, %v5735
  %v5738 = vmul.f32 %v5697, %v5735
  %v5739 = vmul.f32 %v5698, %v5735
  %v5740 = vmul.f32 %v5699, %v5735
  %v5741 = vmul.f32 %v5700, %v5735
  %v5742 = vmul.f32 %v5701, %v5735
  %v5744 = vperm.slane %v5680, 0
  %v5746 = vadd.f32 %v5736, %v5744
  %v5747 = vadd.f32 %v5737, %v5744
  %v5748 = vadd.f32 %v5738, %v5744
  %v5749 = vadd.f32 %v5739, %v5744
  %v5750 = vadd.f32 %v5740, %v5744
  %v5751 = vadd.f32 %v5741, %v5744
  %v5752 = vadd.f32 %v5742, %v5744
  %5753 = vst [vmem:[%s6 + $0x20] sm:$0xff] %v5746
  %5754 = vst [vmem:[%s6 + $0x70] sm:$0xff] %v5747
  %5755 = vst [vmem:[%s6 + $0xc0] sm:$0xff] %v5748
  %5756 = vst [vmem:[%s6 + $0x110] sm:$0xff] %v5749
  %5757 = vst [vmem:[%s6 + $0x160] sm:$0xff] %v5750
  %5758 = vst [vmem:[%s6 + $0x1b0] sm:$0xff] %v5751
  %5759 = vst [vmem:[%s6 + $0x200] sm:$0x1] %v5752
  %v5760 = vld [vmem:[%s2 + $0x28] sm:$0xff]
  %v5761 = vld [vmem:[%s2 + $0x70] sm:$0xff]
  %v5762 = vld [vmem:[%s2 + $0xb8] sm:$0xff]
  %v5763 = vld [vmem:[%s2 + $0x100] sm:$0xff]
  %v5764 = vld [vmem:[%s2 + $0x148] sm:$0xff]
  %v5765 = vld [vmem:[%s2 + $0x190] sm:$0xff]
  %v5766 = vld [vmem:[%s2 + $0x1d8] sm:$0x1]
  %v5767 = vld [vmem:[%s4 + $0x5] sm:$0x1]
  %v5768 = vld [vmem:[%s5 + $0x5] sm:$0x1]
  %v5769 = vadd.f32 %v5760, %v5761
  %v5770 = vadd.f32 %v5769, %v5762
  %v5771 = vadd.f32 %v5770, %v5763
  %v5772 = vadd.f32 %v5771, %v5764
  %v5773 = vadd.f32 %v5772, %v5765
  %v5774 = vsel %vm5333, %v5766, 0.0
  %v5775 = vadd.f32 %v5773, %v5774
  %v5776 = vrot.slane %v5775, 4
  %v5777 = vadd.f32 %v5775, %v5776
  %v5778 = vrot.slane %v5777, 2
  %v5779 = vadd.f32 %v5777, %v5778
  %v5780 = vrot.slane %v5779, 1
  %v5781 = vadd.f32 %v5779, %v5780
  %v5782 = vmul.f32 %v5781, 0.020408163
  %v5783 = vsub.f32 %v5760, %v5782
  %v5784 = vsub.f32 %v5761, %v5782
  %v5785 = vsub.f32 %v5762, %v5782
  %v5786 = vsub.f32 %v5763, %v5782
  %v5787 = vsub.f32 %v5764, %v5782
  %v5788 = vsub.f32 %v5765, %v5782
  %v5789 = vsub.f32 %v5766, %v5782
  %v5790 = vmul.f32 %v5783, %v5783
  %v5791 = vmul.f32 %v5784, %v5784
  %v5792 = vmul.f32 %v5785, %v5785
  %v5793 = vmul.f32 %v5786, %v5786
  %v5794 = vmul.f32 %v5787, %v5787
  %v5795 = vmul.f32 %v5788, %v5788
  %v5796 = vmul.f32 %v5789, %v5789
  %v5797 = vadd.f32 %v5790, %v5791
  %v5798 = vadd.f32 %v5797, %v5792
  %v5799 = vadd.f32 %v5798, %v5793
  %v5800 = vadd.f32 %v5799, %v5794
  %v5801 = vadd.f32 %v5800, %v5795
  %v5802 = vsel %vm5333, %v5796, 0.0
  %v5803 = vadd.f32 %v5801, %v5802
  %v5804 = vrot.slane %v5803, 4
  %v5805 = vadd.f32 %v5803, %v5804
  %v5806 = vrot.slane %v5805, 2
  %v5807 = vadd.f32 %v5805, %v5806
  %v5808 = vrot.slane %v5807, 1
  %v5809 = vadd.f32 %v5807, %v5808
  %v5810 = vmul.f32 %v5809, 0.020408163
  %v5811 = vadd.f32 %v5810, 1e-05
  %v5812 = vrsqrt.pop %v5811
  %v5813 = vmul.f32 %v5812, %v5811
  %v5814 = vmul.f32 %v5813, %v5812
  %v5815 = vmul.f32 0.5, %v5814
  %v5816 = vsub.f32 1.5, %v5815
  %v5817 = vmul.f32 %v5812, %v5816
  %vm5818 = vweird.f32 %v5811
  %vm5819 = vweird.f32 %v5812
  %vm5820 = vmor %vm5818, %vm5819
  %v5821 = vsel %vm5820, %v5812, %v5817
  %v5822 = vmul.f32 %v5821, %v5767
  %v5823 = vperm.slane %v5822, 0
  %v5824 = vmul.f32 %v5783, %v5823
  %v5825 = vmul.f32 %v5784, %v5823
  %v5826 = vmul.f32 %v5785, %v5823
  %v5827 = vmul.f32 %v5786, %v5823
  %v5828 = vmul.f32 %v5787, %v5823
  %v5829 = vmul.f32 %v5788, %v5823
  %v5830 = vmul.f32 %v5789, %v5823
  %v5832 = vperm.slane %v5768, 0
  %v5834 = vadd.f32 %v5824, %v5832
  %v5835 = vadd.f32 %v5825, %v5832
  %v5836 = vadd.f32 %v5826, %v5832
  %v5837 = vadd.f32 %v5827, %v5832
  %v5838 = vadd.f32 %v5828, %v5832
  %v5839 = vadd.f32 %v5829, %v5832
  %v5840 = vadd.f32 %v5830, %v5832
  %5841 = vst [vmem:[%s6 + $0x28] sm:$0xff] %v5834
  %5842 = vst [vmem:[%s6 + $0x78] sm:$0xff] %v5835
  %5843 = vst [vmem:[%s6 + $0xc8] sm:$0xff] %v5836
  %5844 = vst [vmem:[%s6 + $0x118] sm:$0xff] %v5837
  %5845 = vst [vmem:[%s6 + $0x168] sm:$0xff] %v5838
  %5846 = vst [vmem:[%s6 + $0x1b8] sm:$0xff] %v5839
  %5847 = vst [vmem:[%s6 + $0x208] sm:$0x1] %v5840
  %v5848 = vld [vmem:[%s2 + $0x30] sm:$0xff]
  %v5849 = vld [vmem:[%s2 + $0x78] sm:$0xff]
  %v5850 = vld [vmem:[%s2 + $0xc0] sm:$0xff]
  %v5851 = vld [vmem:[%s2 + $0x108] sm:$0xff]
  %v5852 = vld [vmem:[%s2 + $0x150] sm:$0xff]
  %v5853 = vld [vmem:[%s2 + $0x198] sm:$0xff]
  %v5854 = vld [vmem:[%s2 + $0x1e0] sm:$0x1]
  %v5855 = vld [vmem:[%s4 + $0x6] sm:$0x1]
  %v5856 = vld [vmem:[%s5 + $0x6] sm:$0x1]
  %v5857 = vadd.f32 %v5848, %v5849
  %v5858 = vadd.f32 %v5857, %v5850
  %v5859 = vadd.f32 %v5858, %v5851
  %v5860 = vadd.f32 %v5859, %v5852
  %v5861 = vadd.f32 %v5860, %v5853
  %v5862 = vsel %vm5333, %v5854, 0.0
  %v5863 = vadd.f32 %v5861, %v5862
  %v5864 = vrot.slane %v5863, 4
  %v5865 = vadd.f32 %v5863, %v5864
  %v5866 = vrot.slane %v5865, 2
  %v5867 = vadd.f32 %v5865, %v5866
  %v5868 = vrot.slane %v5867, 1
  %v5869 = vadd.f32 %v5867, %v5868
  %v5870 = vmul.f32 %v5869, 0.020408163
  %v5871 = vsub.f32 %v5848, %v5870
  %v5872 = vsub.f32 %v5849, %v5870
  %v5873 = vsub.f32 %v5850, %v5870
  %v5874 = vsub.f32 %v5851, %v5870
  %v5875 = vsub.f32 %v5852, %v5870
  %v5876 = vsub.f32 %v5853, %v5870
  %v5877 = vsub.f32 %v5854, %v5870
  %v5878 = vmul.f32 %v5871, %v5871
  %v5879 = vmul.f32 %v5872, %v5872
  %v5880 = vmul.f32 %v5873, %v5873
  %v5881 = vmul.f32 %v5874, %v5874
  %v5882 = vmul.f32 %v5875, %v5875
  %v5883 = vmul.f32 %v5876, %v5876
  %v5884 = vmul.f32 %v5877, %v5877
  %v5885 = vadd.f32 %v5878, %v5879
  %v5886 = vadd.f32 %v5885, %v5880
  %v5887 = vadd.f32 %v5886, %v5881
  %v5888 = vadd.f32 %v5887, %v5882
  %v5889 = vadd.f32 %v5888, %v5883
  %v5890 = vsel %vm5333, %v5884, 0.0
  %v5891 = vadd.f32 %v5889, %v5890
  %v5892 = vrot.slane %v5891, 4
  %v5893 = vadd.f32 %v5891, %v5892
  %v5894 = vrot.slane %v5893, 2
  %v5895 = vadd.f32 %v5893, %v5894
  %v5896 = vrot.slane %v5895, 1
  %v5897 = vadd.f32 %v5895, %v5896
  %v5898 = vmul.f32 %v5897, 0.020408163
  %v5899 = vadd.f32 %v5898, 1e-05
  %v5900 = vrsqrt.pop %v5899
  %v5901 = vmul.f32 %v5900, %v5899
  %v5902 = vmul.f32 %v5901, %v5900
  %v5903 = vmul.f32 0.5, %v5902
  %v5904 = vsub.f32 1.5, %v5903
  %v5905 = vmul.f32 %v5900, %v5904
  %vm5906 = vweird.f32 %v5899
  %vm5907 = vweird.f32 %v5900
  %vm5908 = vmor %vm5906, %vm5907
  %v5909 = vsel %vm5908, %v5900, %v5905
  %v5910 = vmul.f32 %v5909, %v5855
  %v5911 = vperm.slane %v5910, 0
  %v5912 = vmul.f32 %v5871, %v5911
  %v5913 = vmul.f32 %v5872, %v5911
  %v5914 = vmul.f32 %v5873, %v5911
  %v5915 = vmul.f32 %v5874, %v5911
  %v5916 = vmul.f32 %v5875, %v5911
  %v5917 = vmul.f32 %v5876, %v5911
  %v5918 = vmul.f32 %v5877, %v5911
  %v5920 = vperm.slane %v5856, 0
  %v5922 = vadd.f32 %v5912, %v5920
  %v5923 = vadd.f32 %v5913, %v5920
  %v5924 = vadd.f32 %v5914, %v5920
  %v5925 = vadd.f32 %v5915, %v5920
  %v5926 = vadd.f32 %v5916, %v5920
  %v5927 = vadd.f32 %v5917, %v5920
  %v5928 = vadd.f32 %v5918, %v5920
  %5929 = vst [vmem:[%s6 + $0x30] sm:$0xff] %v5922
  %5930 = vst [vmem:[%s6 + $0x80] sm:$0xff] %v5923
  %5931 = vst [vmem:[%s6 + $0xd0] sm:$0xff] %v5924
  %5932 = vst [vmem:[%s6 + $0x120] sm:$0xff] %v5925
  %5933 = vst [vmem:[%s6 + $0x170] sm:$0xff] %v5926
  %5934 = vst [vmem:[%s6 + $0x1c0] sm:$0xff] %v5927
  %5935 = vst [vmem:[%s6 + $0x210] sm:$0x1] %v5928
  %v5936 = vld [vmem:[%s2 + $0x38] sm:$0xff]
  %v5937 = vld [vmem:[%s2 + $0x80] sm:$0xff]
  %v5938 = vld [vmem:[%s2 + $0xc8] sm:$0xff]
  %v5939 = vld [vmem:[%s2 + $0x110] sm:$0xff]
  %v5940 = vld [vmem:[%s2 + $0x158] sm:$0xff]
  %v5941 = vld [vmem:[%s2 + $0x1a0] sm:$0xff]
  %v5942 = vld [vmem:[%s2 + $0x1e8] sm:$0x1]
  %v5943 = vld [vmem:[%s4 + $0x7] sm:$0x1]
  %v5944 = vld [vmem:[%s5 + $0x7] sm:$0x1]
  %v5945 = vadd.f32 %v5936, %v5937
  %v5946 = vadd.f32 %v5945, %v5938
  %v5947 = vadd.f32 %v5946, %v5939
  %v5948 = vadd.f32 %v5947, %v5940
  %v5949 = vadd.f32 %v5948, %v5941
  %v5950 = vsel %vm5333, %v5942, 0.0
  %v5951 = vadd.f32 %v5949, %v5950
  %v5952 = vrot.slane %v5951, 4
  %v5953 = vadd.f32 %v5951, %v5952
  %v5954 = vrot.slane %v5953, 2
  %v5955 = vadd.f32 %v5953, %v5954
  %v5956 = vrot.slane %v5955, 1
  %v5957 = vadd.f32 %v5955, %v5956
  %v5958 = vmul.f32 %v5957, 0.020408163
  %v5959 = vsub.f32 %v5936, %v5958
  %v5960 = vsub.f32 %v5937, %v5958
  %v5961 = vsub.f32 %v5938, %v5958
  %v5962 = vsub.f32 %v5939, %v5958
  %v5963 = vsub.f32 %v5940, %v5958
  %v5964 = vsub.f32 %v5941, %v5958
  %v5965 = vsub.f32 %v5942, %v5958
  %v5966 = vmul.f32 %v5959, %v5959
  %v5967 = vmul.f32 %v5960, %v5960
  %v5968 = vmul.f32 %v5961, %v5961
  %v5969 = vmul.f32 %v5962, %v5962
  %v5970 = vmul.f32 %v5963, %v5963
  %v5971 = vmul.f32 %v5964, %v5964
  %v5972 = vmul.f32 %v5965, %v5965
  %v5973 = vadd.f32 %v5966, %v5967
  %v5974 = vadd.f32 %v5973, %v5968
  %v5975 = vadd.f32 %v5974, %v5969
  %v5976 = vadd.f32 %v5975, %v5970
  %v5977 = vadd.f32 %v5976, %v5971
  %v5978 = vsel %vm5333, %v5972, 0.0
  %v5979 = vadd.f32 %v5977, %v5978
  %v5980 = vrot.slane %v5979, 4
  %v5981 = vadd.f32 %v5979, %v5980
  %v5982 = vrot.slane %v5981, 2
  %v5983 = vadd.f32 %v5981, %v5982
  %v5984 = vrot.slane %v5983, 1
  %v5985 = vadd.f32 %v5983, %v5984
  %v5986 = vmul.f32 %v5985, 0.020408163
  %v5987 = vadd.f32 %v5986, 1e-05
  %v5988 = vrsqrt.pop %v5987
  %v5989 = vmul.f32 %v5988, %v5987
  %v5990 = vmul.f32 %v5989, %v5988
  %v5991 = vmul.f32 0.5, %v5990
  %v5992 = vsub.f32 1.5, %v5991
  %v5993 = vmul.f32 %v5988, %v5992
  %vm5994 = vweird.f32 %v5987
  %vm5995 = vweird.f32 %v5988
  %vm5996 = vmor %vm5994, %vm5995
  %v5997 = vsel %vm5996, %v5988, %v5993
  %v5998 = vmul.f32 %v5997, %v5943
  %v5999 = vperm.slane %v5998, 0
  %v6000 = vmul.f32 %v5959, %v5999
  %v6001 = vmul.f32 %v5960, %v5999
  %v6002 = vmul.f32 %v5961, %v5999
  %v6003 = vmul.f32 %v5962, %v5999
  %v6004 = vmul.f32 %v5963, %v5999
  %v6005 = vmul.f32 %v5964, %v5999
  %v6006 = vmul.f32 %v5965, %v5999
  %v6008 = vperm.slane %v5944, 0
  %v6010 = vadd.f32 %v6000, %v6008
  %v6011 = vadd.f32 %v6001, %v6008
  %v6012 = vadd.f32 %v6002, %v6008
  %v6013 = vadd.f32 %v6003, %v6008
  %v6014 = vadd.f32 %v6004, %v6008
  %v6015 = vadd.f32 %v6005, %v6008
  %v6016 = vadd.f32 %v6006, %v6008
  %6017 = vst [vmem:[%s6 + $0x38] sm:$0xff] %v6010
  %6018 = vst [vmem:[%s6 + $0x88] sm:$0xff] %v6011
  %6019 = vst [vmem:[%s6 + $0xd8] sm:$0xff] %v6012
  %6020 = vst [vmem:[%s6 + $0x128] sm:$0xff] %v6013
  %6021 = vst [vmem:[%s6 + $0x178] sm:$0xff] %v6014
  %6022 = vst [vmem:[%s6 + $0x1c8] sm:$0xff] %v6015
  %6023 = vst [vmem:[%s6 + $0x218] sm:$0x1] %v6016
  %v6024 = vld [vmem:[%s2 + $0x40] sm:$0xff]
  %v6025 = vld [vmem:[%s2 + $0x88] sm:$0xff]
  %v6026 = vld [vmem:[%s2 + $0xd0] sm:$0xff]
  %v6027 = vld [vmem:[%s2 + $0x118] sm:$0xff]
  %v6028 = vld [vmem:[%s2 + $0x160] sm:$0xff]
  %v6029 = vld [vmem:[%s2 + $0x1a8] sm:$0xff]
  %v6030 = vld [vmem:[%s2 + $0x1f0] sm:$0x1]
  %v6031 = vld [vmem:[%s4 + $0x8] sm:$0x1]
  %v6032 = vld [vmem:[%s5 + $0x8] sm:$0x1]
  %v6033 = vadd.f32 %v6024, %v6025
  %v6034 = vadd.f32 %v6033, %v6026
  %v6035 = vadd.f32 %v6034, %v6027
  %v6036 = vadd.f32 %v6035, %v6028
  %v6037 = vadd.f32 %v6036, %v6029
  %v6038 = vsel %vm5333, %v6030, 0.0
  %v6039 = vadd.f32 %v6037, %v6038
  %v6040 = vrot.slane %v6039, 4
  %v6041 = vadd.f32 %v6039, %v6040
  %v6042 = vrot.slane %v6041, 2
  %v6043 = vadd.f32 %v6041, %v6042
  %v6044 = vrot.slane %v6043, 1
  %v6045 = vadd.f32 %v6043, %v6044
  %v6046 = vmul.f32 %v6045, 0.020408163
  %v6047 = vsub.f32 %v6024, %v6046
  %v6048 = vsub.f32 %v6025, %v6046
  %v6049 = vsub.f32 %v6026, %v6046
  %v6050 = vsub.f32 %v6027, %v6046
  %v6051 = vsub.f32 %v6028, %v6046
  %v6052 = vsub.f32 %v6029, %v6046
  %v6053 = vsub.f32 %v6030, %v6046
  %v6054 = vmul.f32 %v6047, %v6047
  %v6055 = vmul.f32 %v6048, %v6048
  %v6056 = vmul.f32 %v6049, %v6049
  %v6057 = vmul.f32 %v6050, %v6050
  %v6058 = vmul.f32 %v6051, %v6051
  %v6059 = vmul.f32 %v6052, %v6052
  %v6060 = vmul.f32 %v6053, %v6053
  %v6061 = vadd.f32 %v6054, %v6055
  %v6062 = vadd.f32 %v6061, %v6056
  %v6063 = vadd.f32 %v6062, %v6057
  %v6064 = vadd.f32 %v6063, %v6058
  %v6065 = vadd.f32 %v6064, %v6059
  %v6066 = vsel %vm5333, %v6060, 0.0
  %v6067 = vadd.f32 %v6065, %v6066
  %v6068 = vrot.slane %v6067, 4
  %v6069 = vadd.f32 %v6067, %v6068
  %v6070 = vrot.slane %v6069, 2
  %v6071 = vadd.f32 %v6069, %v6070
  %v6072 = vrot.slane %v6071, 1
  %v6073 = vadd.f32 %v6071, %v6072
  %v6074 = vmul.f32 %v6073, 0.020408163
  %v6075 = vadd.f32 %v6074, 1e-05
  %v6076 = vrsqrt.pop %v6075
  %v6077 = vmul.f32 %v6076, %v6075
  %v6078 = vmul.f32 %v6077, %v6076
  %v6079 = vmul.f32 0.5, %v6078
  %v6080 = vsub.f32 1.5, %v6079
  %v6081 = vmul.f32 %v6076, %v6080
  %vm6082 = vweird.f32 %v6075
  %vm6083 = vweird.f32 %v6076
  %vm6084 = vmor %vm6082, %vm6083
  %v6085 = vsel %vm6084, %v6076, %v6081
  %v6086 = vmul.f32 %v6085, %v6031
  %v6087 = vperm.slane %v6086, 0
  %v6088 = vmul.f32 %v6047, %v6087
  %v6089 = vmul.f32 %v6048, %v6087
  %v6090 = vmul.f32 %v6049, %v6087
  %v6091 = vmul.f32 %v6050, %v6087
  %v6092 = vmul.f32 %v6051, %v6087
  %v6093 = vmul.f32 %v6052, %v6087
  %v6094 = vmul.f32 %v6053, %v6087
  %v6096 = vperm.slane %v6032, 0
  %v6098 = vadd.f32 %v6088, %v6096
  %v6099 = vadd.f32 %v6089, %v6096
  %v6100 = vadd.f32 %v6090, %v6096
  %v6101 = vadd.f32 %v6091, %v6096
  %v6102 = vadd.f32 %v6092, %v6096
  %v6103 = vadd.f32 %v6093, %v6096
  %v6104 = vadd.f32 %v6094, %v6096
  %6105 = vst [vmem:[%s6 + $0x40] sm:$0xff] %v6098
  %6106 = vst [vmem:[%s6 + $0x90] sm:$0xff] %v6099
  %6107 = vst [vmem:[%s6 + $0xe0] sm:$0xff] %v6100
  %6108 = vst [vmem:[%s6 + $0x130] sm:$0xff] %v6101
  %6109 = vst [vmem:[%s6 + $0x180] sm:$0xff] %v6102
  %6110 = vst [vmem:[%s6 + $0x1d0] sm:$0xff] %v6103
  %6111 = vst [vmem:[%s6 + $0x220] sm:$0x1] %v6104
  %v6112 = vld [vmem:[%s3] sm:$0xff]
  %v6113 = vld [vmem:[%s3 + $0x8] sm:$0xff]
  %v6114 = vld [vmem:[%s3 + $0x10] sm:$0xff]
  %v6115 = vld [vmem:[%s3 + $0x18] sm:$0xff]
  %v6116 = vld [vmem:[%s3 + $0x20] sm:$0xff]
  %v6117 = vld [vmem:[%s3 + $0x28] sm:$0xff]
  %v6118 = vld [vmem:[%s3 + $0x30] sm:$0x1]
  %6126 = vrot.lane.b32.xlu0 %v6112, 32
  %v6127 = vpop.permute.xlu0 %6126
  %6128 = vrot.lane.b32.xlu0 %v6113, 32
  %v6129 = vpop.permute.xlu0 %6128
  %6130 = vrot.lane.b32.xlu0 %v6114, 32
  %v6131 = vpop.permute.xlu0 %6130
  %6132 = vrot.lane.b32.xlu0 %v6115, 32
  %v6133 = vpop.permute.xlu0 %6132
  %6134 = vrot.lane.b32.xlu0 %v6116, 32
  %v6135 = vpop.permute.xlu0 %6134
  %6136 = vrot.lane.b32.xlu0 %v6117, 32
  %v6137 = vpop.permute.xlu0 %6136
  %6138 = vrot.lane.b32.xlu0 %v6118, 32
  %v6139 = vpop.permute.xlu0 %6138
  %vm6147 = vcmask 261120
  %v6148 = vsel %vm6147, %v5312, %v6127
  %v6149 = vsel %vm6147, %v5313, %v6129
  %v6150 = vsel %vm6147, %v5314, %v6131
  %v6151 = vsel %vm6147, %v5315, %v6133
  %v6152 = vsel %vm6147, %v5316, %v6135
  %v6153 = vsel %vm6147, %v5317, %v6137
  %v6154 = vsel %vm6147, %v5318, %v6139
  %v6155 = vld [vmem:[%s4 + $0x9] sm:$0x1]
  %v6156 = vld [vmem:[%s5 + $0x9] sm:$0x1]
  %vm6157 = vcmask 523264
  %v6158 = vsel %vm6157, %v6148, 0.0
  %v6159 = vsel %vm6157, %v6149, 0.0
  %v6160 = vadd.f32 %v6158, %v6159
  %v6161 = vsel %vm6157, %v6150, 0.0
  %v6162 = vadd.f32 %v6160, %v6161
  %v6163 = vsel %vm6157, %v6151, 0.0
  %v6164 = vadd.f32 %v6162, %v6163
  %v6165 = vsel %vm6157, %v6152, 0.0
  %v6166 = vadd.f32 %v6164, %v6165
  %v6167 = vsel %vm6157, %v6153, 0.0
  %v6168 = vadd.f32 %v6166, %v6167
  %vm6169 = vcmask 516096
  %v6170 = vsel %vm6169, %v6154, 0.0
  %v6171 = vadd.f32 %v6168, %v6170
  %v6172 = vrot.slane %v6171, 4
  %v6173 = vadd.f32 %v6171, %v6172
  %v6174 = vrot.slane %v6173, 2
  %v6175 = vadd.f32 %v6173, %v6174
  %v6176 = vrot.slane %v6175, 1
  %v6177 = vadd.f32 %v6175, %v6176
  %v6178 = vmul.f32 %v6177, 0.020408163
  %v6179 = vsub.f32 %v6148, %v6178
  %v6180 = vsub.f32 %v6149, %v6178
  %v6181 = vsub.f32 %v6150, %v6178
  %v6182 = vsub.f32 %v6151, %v6178
  %v6183 = vsub.f32 %v6152, %v6178
  %v6184 = vsub.f32 %v6153, %v6178
  %v6185 = vsub.f32 %v6154, %v6178
  %v6186 = vmul.f32 %v6179, %v6179
  %v6187 = vmul.f32 %v6180, %v6180
  %v6188 = vmul.f32 %v6181, %v6181
  %v6189 = vmul.f32 %v6182, %v6182
  %v6190 = vmul.f32 %v6183, %v6183
  %v6191 = vmul.f32 %v6184, %v6184
  %v6192 = vmul.f32 %v6185, %v6185
  %v6193 = vsel %vm6157, %v6186, 0.0
  %v6194 = vsel %vm6157, %v6187, 0.0
  %v6195 = vadd.f32 %v6193, %v6194
  %v6196 = vsel %vm6157, %v6188, 0.0
  %v6197 = vadd.f32 %v6195, %v6196
  %v6198 = vsel %vm6157, %v6189, 0.0
  %v6199 = vadd.f32 %v6197, %v6198
  %v6200 = vsel %vm6157, %v6190, 0.0
  %v6201 = vadd.f32 %v6199, %v6200
  %v6202 = vsel %vm6157, %v6191, 0.0
  %v6203 = vadd.f32 %v6201, %v6202
  %v6204 = vsel %vm6169, %v6192, 0.0
  %v6205 = vadd.f32 %v6203, %v6204
  %v6206 = vrot.slane %v6205, 4
  %v6207 = vadd.f32 %v6205, %v6206
  %v6208 = vrot.slane %v6207, 2
  %v6209 = vadd.f32 %v6207, %v6208
  %v6210 = vrot.slane %v6209, 1
  %v6211 = vadd.f32 %v6209, %v6210
  %v6212 = vmul.f32 %v6211, 0.020408163
  %v6213 = vadd.f32 %v6212, 1e-05
  %v6214 = vrsqrt.pop %v6213
  %v6215 = vmul.f32 %v6214, %v6213
  %v6216 = vmul.f32 %v6215, %v6214
  %v6217 = vmul.f32 0.5, %v6216
  %v6218 = vsub.f32 1.5, %v6217
  %v6219 = vmul.f32 %v6214, %v6218
  %vm6220 = vweird.f32 %v6213
  %vm6221 = vweird.f32 %v6214
  %vm6222 = vmor %vm6220, %vm6221
  %v6223 = vsel %vm6222, %v6214, %v6219
  %v6224 = vmul.f32 %v6223, %v6155
  %v6225 = vperm.slane %v6224, 0
  %v6226 = vmul.f32 %v6179, %v6225
  %v6227 = vmul.f32 %v6180, %v6225
  %v6228 = vmul.f32 %v6181, %v6225
  %v6229 = vmul.f32 %v6182, %v6225
  %v6230 = vmul.f32 %v6183, %v6225
  %v6231 = vmul.f32 %v6184, %v6225
  %v6232 = vmul.f32 %v6185, %v6225
  %v6234 = vperm.slane %v6156, 0
  %v6236 = vadd.f32 %v6226, %v6234
  %v6237 = vadd.f32 %v6227, %v6234
  %v6238 = vadd.f32 %v6228, %v6234
  %v6239 = vadd.f32 %v6229, %v6234
  %v6240 = vadd.f32 %v6230, %v6234
  %v6241 = vadd.f32 %v6231, %v6234
  %v6242 = vadd.f32 %v6232, %v6234
  %6243 = vst.msk [vmem:[%s6 + $0x48] sm:$0xff] %vm6157, %v6236
  %6244 = vst.msk [vmem:[%s6 + $0x98] sm:$0xff] %vm6157, %v6237
  %6245 = vst.msk [vmem:[%s6 + $0xe8] sm:$0xff] %vm6157, %v6238
  %6246 = vst.msk [vmem:[%s6 + $0x138] sm:$0xff] %vm6157, %v6239
  %6247 = vst.msk [vmem:[%s6 + $0x188] sm:$0xff] %vm6157, %v6240
  %6248 = vst.msk [vmem:[%s6 + $0x1d8] sm:$0xff] %vm6157, %v6241
  %6249 = vst.msk [vmem:[%s6 + $0x228] sm:$0x1] %vm6169, %v6242
  // Predicated region
  $region26: #{forward.1} parent=0 // pred_check
    _
  $region27: #{forward.1} parent=0 // pred_check_branch
    %6251 = sbr.rel (0) target = $region29
  $region28: #{forward.1} parent=0 // pred_region
    _
  $region29: #{forward.1} parent=0 // pred_fallthru
    _
  // Predicated region
  $region30: #{forward.1} parent=0 // pred_check
    _
  $region31: #{forward.1} parent=0 // pred_check_branch
    %6253 = sbr.rel (0) target = $region33
  $region32: #{forward.1} parent=0 // pred_region
    _
  $region33: #{forward.1} parent=0 // pred_fallthru
    _

</llo_original>
